<compile_context>
chip_gen: v5e
topology: v5e:2x2
jax: 0.10.0
libtpu: 0.0.40
codegen_flags: <defaults>
</compile_context>

<pallas_src>
import functools

import jax
import jax.numpy as jnp
from jax.experimental import pallas as pl
from jax.experimental.pallas import tpu as pltpu

BN_EPS = 1e-5
EXPANSION = 1  # Bottleneck.expansion in the reference module


def _round_up(x, m):
    return ((x + m - 1) // m) * m


# ----------------------------- Pallas kernels --------------------------------

def _gemm_bn_kernel(*refs, apply_relu, add_residual):
    """Tiled GEMM (bf16 in, f32 acc) + fused BN scale/bias [+ residual] [+ ReLU]."""
    if add_residual:
        x_ref, w_ref, s_ref, b_ref, r_ref, o_ref, acc_ref = refs
    else:
        x_ref, w_ref, s_ref, b_ref, o_ref, acc_ref = refs
        r_ref = None

    @pl.when(pl.program_id(2) == 0)
    def _():
        acc_ref[...] = jnp.zeros_like(acc_ref)

    acc_ref[...] += jnp.dot(x_ref[...], w_ref[...],
                            preferred_element_type=jnp.float32)

    @pl.when(pl.program_id(2) == pl.num_programs(2) - 1)
    def _():
        y = acc_ref[...] * s_ref[...] + b_ref[...]
        if add_residual:
            y = y + r_ref[...].astype(jnp.float32)
        if apply_relu:
            y = jnp.maximum(y, 0.0)
        o_ref[...] = y.astype(o_ref.dtype)


def _conv3x3_bn_kernel(x_ref, w_ref, s_ref, b_ref, o_ref, acc_ref, *,
                       stride, Wq, Lq, Lf, apply_relu):
    """Direct 3x3 conv (no im2col): 9 shifted contiguous windows of the flattened
    padded input, each a (Lf, Cin) x (Cin, tcout) MXU matmul accumulated in f32."""
    acc_ref[...] = jnp.zeros_like(acc_ref)
    for di in range(3):
        for dj in range(3):
            plane_idx = (di % stride) * stride + (dj % stride)
            off = plane_idx * Lq + (di // stride) * Wq + (dj // stride)
            tap = x_ref[0, off:off + Lf, :]                    # (Lf, Cin) bf16
            acc_ref[...] += jnp.dot(tap, w_ref[di * 3 + dj],
                                    preferred_element_type=jnp.float32)
    y = acc_ref[...] * s_ref[...] + b_ref[...]
    if apply_relu:
        y = jnp.maximum(y, 0.0)
    o_ref[0] = y.astype(o_ref.dtype)


# ----------------------------- Kernel wrappers --------------------------------

def _gemm_bn(A, Wk, scale, bias, apply_relu, residual=None,
             tm=256, tn=256, tk=512):
    """relu?((A @ Wk) * scale + bias [+ residual]) with adaptive tiles."""
    M, K = A.shape
    K2, Nc = Wk.shape
    assert K == K2
    tm = min(tm, _round_up(M, 8))
    tn = min(tn, _round_up(Nc, 128))
    tk = min(tk, _round_up(K, 128))
    Mp, Kp, Np = _round_up(M, tm), _round_up(K, tk), _round_up(Nc, tn)

    A_p = jnp.pad(A.astype(jnp.bfloat16), ((0, Mp - M), (0, Kp - K)))
    W_p = jnp.pad(Wk.astype(jnp.bfloat16), ((0, Kp - K), (0, Np - Nc)))
    s_p = jnp.pad(scale.astype(jnp.float32), (0, Np - Nc)).reshape(1, Np)
    b_p = jnp.pad(bias.astype(jnp.float32), (0, Np - Nc)).reshape(1, Np)

    add_residual = residual is not None
    inputs = [A_p, W_p, s_p, b_p]
    in_specs = [
        pl.BlockSpec((tm, tk), lambda j, i, k: (i, k)),
        pl.BlockSpec((tk, tn), lambda j, i, k: (k, j)),
        pl.BlockSpec((1, tn), lambda j, i, k: (0, j)),
        pl.BlockSpec((1, tn), lambda j, i, k: (0, j)),
    ]
    if add_residual:
        R_p = jnp.pad(residual.astype(jnp.bfloat16), ((0, Mp - M), (0, Np - Nc)))
        inputs.append(R_p)
        in_specs.append(pl.BlockSpec((tm, tn), lambda j, i, k: (i, j)))

    out = pl.pallas_call(
        functools.partial(_gemm_bn_kernel, apply_relu=apply_relu,
                          add_residual=add_residual),
        out_shape=jax.ShapeDtypeStruct((Mp, Np), jnp.bfloat16),
        grid_spec=pltpu.PrefetchScalarGridSpec(
            num_scalar_prefetch=0,
            grid=(Np // tn, Mp // tm, Kp // tk),      # N leads, K innermost
            in_specs=in_specs,
            out_specs=pl.BlockSpec((tm, tn), lambda j, i, k: (i, j)),
            scratch_shapes=[pltpu.VMEM((tm, tn), jnp.float32)],
        ),
        compiler_params=pltpu.CompilerParams(
            dimension_semantics=("parallel", "parallel", "arbitrary")),
    )(*inputs)
    return out[:M, :Nc]


def _build_conv3x3_planes(x, stride):
    """Flatten the zero-padded input into stride*stride parity planes so every
    3x3 tap is a contiguous shifted window (no 9x im2col blow-up)."""
    N, H, W, C = x.shape
    xp = jnp.pad(x, ((0, 0), (1, 1), (1, 1), (0, 0)))
    Hp, Wp = H + 2, W + 2
    OH = (Hp - 3) // stride + 1
    OW = (Wp - 3) // stride + 1
    Hq = -(-Hp // stride)
    Wq = -(-Wp // stride)
    Lf = OH * Wq                                  # computed output frame length
    Lq = _round_up(Lf + (2 // stride) * (Wq + 1), 8)   # per-plane flat length
    planes = []
    for a in range(stride):
        for b in range(stride):
            pab = xp[:, a::stride, b::stride, :]
            ha, wb = pab.shape[1], pab.shape[2]
            pab = jnp.pad(pab, ((0, 0), (0, Hq - ha), (0, Wq - wb), (0, 0)))
            pab = pab.reshape(N, Hq * Wq, C)
            pab = jnp.pad(pab, ((0, 0), (0, Lq - Hq * Wq), (0, 0)))
            planes.append(pab)
    planes = planes[0] if len(planes) == 1 else jnp.concatenate(planes, axis=1)
    return planes, OH, OW, Wq, Lq, Lf


def conv3x3_bn(x, w9, scale, bias, stride, apply_relu, tcout=256):
    """3x3 conv (pad=1, stride in {1,2}) + inference BN [+ ReLU], NHWC bf16."""
    N, H, W, Cin = x.shape
    Cout = w9.shape[-1]
    planes, OH, OW, Wq, Lq, Lf = _build_conv3x3_planes(x.astype(jnp.bfloat16), stride)
    tcout = min(tcout, _round_up(Cout, 128))
    Cp = _round_up(Cout, tcout)
    w_p = jnp.pad(w9.astype(jnp.bfloat16), ((0, 0), (0, 0), (0, Cp - Cout)))
    s_p = jnp.pad(scale.astype(jnp.float32), (0, Cp - Cout)).reshape(1, Cp)
    b_p = jnp.pad(bias.astype(jnp.float32), (0, Cp - Cout)).reshape(1, Cp)
    ss_lq = stride * stride * Lq

    out = pl.pallas_call(
        functools.partial(_conv3x3_bn_kernel, stride=stride, Wq=Wq, Lq=Lq, Lf=Lf,
                          apply_relu=apply_relu),
        out_shape=jax.ShapeDtypeStruct((N, Lf, Cp), jnp.bfloat16),
        grid_spec=pltpu.PrefetchScalarGridSpec(
            num_scalar_prefetch=0,
            grid=(N, Cp // tcout),
            in_specs=[
                pl.BlockSpec((1, ss_lq, Cin), lambda n, j: (n, 0, 0)),
                pl.BlockSpec((9, Cin, tcout), lambda n, j: (0, 0, j)),
                pl.BlockSpec((1, tcout), lambda n, j: (0, j)),
                pl.BlockSpec((1, tcout), lambda n, j: (0, j)),
            ],
            out_specs=pl.BlockSpec((1, Lf, tcout), lambda n, j: (n, 0, j)),
            scratch_shapes=[pltpu.VMEM((Lf, tcout), jnp.float32)],
        ),
        compiler_params=pltpu.CompilerParams(
            dimension_semantics=("parallel", "parallel")),
    )(planes, w_p, s_p, b_p)

    out = out[:, :, :Cout].reshape(N, OH, Wq, Cout)[:, :, :OW, :]
    return out


def conv1x1_bn(x, w_k, scale, bias, stride, apply_relu, residual=None):
    """1x1 conv + inference BN [+ fused residual add + ReLU]. No im2col."""
    if stride > 1:
        x = x[:, ::stride, ::stride, :]
    N, OH, OW, Cin = x.shape
    A = x.reshape(N * OH * OW, Cin)
    R = None
    if residual is not None:
        R = residual.reshape(N * OH * OW, residual.shape[-1])
    y = _gemm_bn(A, w_k, scale, bias, apply_relu, residual=R)
    return y.reshape(N, OH, OW, -1)


# ---------------------------- Parameters --------------------------------------

def _w3x3_to_kernel_layout(w):  # (Cout,Cin,3,3) -> (9, Cin, Cout)
    return jnp.transpose(w, (2, 3, 1, 0)).reshape(9, w.shape[1], w.shape[0])


def _w1x1_to_kernel_layout(w):  # (Cout,Cin,1,1) -> (Cin, Cout)
    return jnp.transpose(w[:, :, 0, 0], (1, 0))


def _bn_fold(c):
    gamma = jnp.ones((c,), jnp.float32)
    beta = jnp.zeros((c,), jnp.float32)
    mean = jnp.zeros((c,), jnp.float32)
    var = jnp.ones((c,), jnp.float32)
    s = gamma / jnp.sqrt(var + BN_EPS)
    b = beta - mean * s
    return s, b


def make_bottleneck_params(key, inplanes, planes, stride=1, downsample=False):
    k1, k2, k3, k4 = jax.random.split(key, 4)

    def conv_w(k, cin, cout, ksz):
        fan = cin * ksz * ksz
        w = jax.random.normal(k, (cout, cin, ksz, ksz), jnp.float32) * (2.0 / fan) ** 0.5
        return w.astype(jnp.bfloat16)

    w1 = conv_w(k1, inplanes, planes, 3)
    w2 = conv_w(k2, planes, planes, 3)
    w3 = conv_w(k3, planes, planes * EXPANSION, 1)
    s1, b1 = _bn_fold(planes)
    s2, b2 = _bn_fold(planes)
    s3, b3 = _bn_fold(planes * EXPANSION)
    p = dict(stride=stride,
             w1_t=w1, w1_k=_w3x3_to_kernel_layout(w1), s1=s1, b1=b1,
             w2_t=w2, w2_k=_w3x3_to_kernel_layout(w2), s2=s2, b2=b2,
             w3_t=w3, w3_k=_w1x1_to_kernel_layout(w3), s3=s3, b3=b3,
             ds=None)
    if downsample:
        wd = conv_w(k4, inplanes, planes * EXPANSION, 1)
        sd, bd = _bn_fold(planes * EXPANSION)
        p["ds"] = dict(w_t=wd, w_k=_w1x1_to_kernel_layout(wd), s=sd, b=bd)
    return p


# ------------------------------ Forward ----------------------------------------

def bottleneck_forward(p, x_nhwc):
    x = x_nhwc.astype(jnp.bfloat16)
    out = conv3x3_bn(x, p["w1_k"], p["s1"], p["b1"], 1, True)
    out = conv3x3_bn(out, p["w2_k"], p["s2"], p["b2"], p["stride"], True)
    if p["ds"] is not None:
        identity = conv1x1_bn(x, p["ds"]["w_k"], p["ds"]["s"], p["ds"]["b"],
                              stride=p["stride"], apply_relu=False)
    else:
        identity = x
    # conv3 + bn3 + residual add + ReLU, all fused in one GEMM epilogue.
    out = conv1x1_bn(out, p["w3_k"], p["s3"], p["b3"], stride=1,
                     apply_relu=True, residual=identity)
    return out


# --------------------------- Pure-JAX reference --------------------------------

def bottleneck_reference(p, x_nhwc_f32):
    def conv(x, w_t, stride, pad):
        return jax.lax.conv_general_dilated(
            x, jnp.transpose(w_t.astype(jnp.float32), (2, 3, 1, 0)),
            window_strides=(stride, stride), padding=((pad, pad), (pad, pad)),
            dimension_numbers=("NHWC", "HWIO", "NHWC"))

    x = x_nhwc_f32.astype(jnp.bfloat16).astype(jnp.float32)
    out = jnp.maximum(conv(x, p["w1_t"], 1, 1) * p["s1"] + p["b1"], 0.0)
    out = jnp.maximum(conv(out, p["w2_t"], p["stride"], 1) * p["s2"] + p["b2"], 0.0)
    out = conv(out, p["w3_t"], 1, 0) * p["s3"] + p["b3"]
    if p["ds"] is not None:
        identity = conv(x, p["ds"]["w_t"], p["stride"], 0) * p["ds"]["s"] + p["ds"]["b"]
    else:
        identity = x
    return jnp.maximum(out + identity, 0.0)


# -------------------------------- Main ------------------------------------------

if __name__ == "__main__":
    key = jax.random.PRNGKey(0)
    kp1, kp2, kx = jax.random.split(key, 3)

    batch, inplanes, planes, H, W = 2, 128, 128, 16, 16
    # Block 1: stride=1, identity shortcut (inplanes == planes * expansion).
    p1 = make_bottleneck_params(kp1, inplanes, planes, stride=1, downsample=False)
    # Block 2: stride=2 with 1x1 downsample shortcut.
    p2 = make_bottleneck_params(kp2, planes * EXPANSION, planes, stride=2, downsample=True)

    x_nchw = jax.random.normal(kx, (batch, inplanes, H, W), jnp.float32)

    def forward(x):
        xh = jnp.transpose(x, (0, 2, 3, 1))                       # NCHW -> NHWC
        y1 = bottleneck_forward(p1, xh)
        y2 = bottleneck_forward(p2, y1)
        return (jnp.transpose(y1, (0, 3, 1, 2)).astype(jnp.float32),
                jnp.transpose(y2, (0, 3, 1, 2)).astype(jnp.float32))

    y1, y2 = jax.jit(forward)(x_nchw)
    jax.block_until_ready((y1, y2))

    assert y1.shape == (batch, planes * EXPANSION, H, W), y1.shape
    assert y2.shape == (batch, planes * EXPANSION, H // 2, W // 2), y2.shape
    assert bool(jnp.isfinite(y1).all()) and bool(jnp.isfinite(y2).all())

    # Per-block correctness check against a plain-JAX (XLA conv) reference.
    xh = jnp.transpose(x_nchw, (0, 2, 3, 1))
    r1 = bottleneck_reference(p1, xh)
    r2 = bottleneck_reference(p2, jnp.transpose(y1, (0, 2, 3, 1)))

    def _check(a_nchw, ref_nhwc, name):
        a = jnp.transpose(a_nchw, (0, 2, 3, 1))
        err = float(jnp.max(jnp.abs(a - ref_nhwc)) /
                    (jnp.max(jnp.abs(ref_nhwc)) + 1e-6))
        assert err < 0.1, f"{name}: rel-to-max error {err}"

    _check(y1, r1, "block1")
    _check(y2, r2, "block2")

    print("KERNEL_OK")
</pallas_src>

<mosaic_0001>
module attributes {stable_mosaic.version = 11 : i64} {
  func.func @_conv3x3_bn_kernel(%arg0: i32, %arg1: i32, %arg2: memref<1x328x128xbf16, #tpu.memory_space<vmem>>, %arg3: memref<9x128x128xbf16, #tpu.memory_space<vmem>>, %arg4: memref<1x128xf32, #tpu.memory_space<vmem>>, %arg5: memref<1x128xf32, #tpu.memory_space<vmem>>, %arg6: memref<1x288x128xbf16, #tpu.memory_space<vmem>>, %arg7: memref<288x128xf32, #tpu.memory_space<vmem>>) attributes {dimension_semantics = [#tpu.dimension_semantics<parallel>, #tpu.dimension_semantics<parallel>], iteration_bounds = array<i64: 2, 1>, scalar_prefetch = 0 : i64, scratch_operands = 1 : i64, tpu.core_type = #tpu.core_type<tc>, window_params = [{transform_indices = @transform_0, window_bounds = array<i64: 1, 328, 128>}, {transform_indices = @transform_1, window_bounds = array<i64: 9, 128, 128>}, {transform_indices = @transform_2, window_bounds = array<i64: 1, 128>}, {transform_indices = @transform_3, window_bounds = array<i64: 1, 128>}, {transform_indices = @transform_4, window_bounds = array<i64: 1, 288, 128>}]} {
    %cst = arith.constant 0.000000e+00 : f32
    %0 = vector.broadcast %cst : f32 to vector<288x128xf32>
    %c0 = arith.constant 0 : index
    %c0_0 = arith.constant 0 : index
    %1 = vector.load %arg7[%c0, %c0_0] : memref<288x128xf32, #tpu.memory_space<vmem>>, vector<288x128xf32>
    tpu.vector_store %arg7[%c0, %c0_0], %0 {strides = array<i32>} : memref<288x128xf32, #tpu.memory_space<vmem>>, vector<288x128xf32>,
    %c0_1 = arith.constant 0 : index
    %c0_2 = arith.constant 0 : index
    %c0_3 = arith.constant 0 : index
    %2 = vector.load %arg2[%c0_1, %c0_2, %c0_3] : memref<1x328x128xbf16, #tpu.memory_space<vmem>>, vector<1x288x128xbf16>
    %3 = vector.shape_cast %2 : vector<1x288x128xbf16> to vector<288x128xbf16>
    %c0_4 = arith.constant 0 : index
    %c0_5 = arith.constant 0 : index
    %4 = vector.load %arg7[%c0_4, %c0_5] : memref<288x128xf32, #tpu.memory_space<vmem>>, vector<288x128xf32>
    %c0_6 = arith.constant 0 : index
    %c0_7 = arith.constant 0 : index
    %c0_8 = arith.constant 0 : index
    %5 = vector.load %arg3[%c0_6, %c0_7, %c0_8] : memref<9x128x128xbf16, #tpu.memory_space<vmem>>, vector<1x128x128xbf16>
    %6 = vector.shape_cast %5 : vector<1x128x128xbf16> to vector<128x128xbf16>
    %cst_9 = arith.constant dense<0.000000e+00> : vector<288x128xf32>
    %7 = tpu.matmul %3, %6, %cst_9 {dimension_numbers = #tpu.dot_dimension_numbers<[1], [0], [0], [1], [0, 0, 1, 1], [], []>} : vector<288x128xbf16>, vector<128x128xbf16>, vector<288x128xf32> -> vector<288x128xf32>
    %8 = arith.addf %4, %7 : vector<288x128xf32>
    %c0_10 = arith.constant 0 : index
    %c0_11 = arith.constant 0 : index
    %9 = vector.load %arg7[%c0_10, %c0_11] : memref<288x128xf32, #tpu.memory_space<vmem>>, vector<288x128xf32>
    tpu.vector_store %arg7[%c0_10, %c0_11], %8 {strides = array<i32>} : memref<288x128xf32, #tpu.memory_space<vmem>>, vector<288x128xf32>,
    %c0_12 = arith.constant 0 : index
    %c1 = arith.constant 1 : index
    %c0_13 = arith.constant 0 : index
    %10 = vector.load %arg2[%c0_12, %c1, %c0_13] : memref<1x328x128xbf16, #tpu.memory_space<vmem>>, vector<1x288x128xbf16>
    %11 = vector.shape_cast %10 : vector<1x288x128xbf16> to vector<288x128xbf16>
    %c0_14 = arith.constant 0 : index
    %c0_15 = arith.constant 0 : index
    %12 = vector.load %arg7[%c0_14, %c0_15] : memref<288x128xf32, #tpu.memory_space<vmem>>, vector<288x128xf32>
    %c1_16 = arith.constant 1 : index
    %c0_17 = arith.constant 0 : index
    %c0_18 = arith.constant 0 : index
    %13 = vector.load %arg3[%c1_16, %c0_17, %c0_18] : memref<9x128x128xbf16, #tpu.memory_space<vmem>>, vector<1x128x128xbf16>
    %14 = vector.shape_cast %13 : vector<1x128x128xbf16> to vector<128x128xbf16>
    %cst_19 = arith.constant dense<0.000000e+00> : vector<288x128xf32>
    %15 = tpu.matmul %11, %14, %cst_19 {dimension_numbers = #tpu.dot_dimension_numbers<[1], [0], [0], [1], [0, 0, 1, 1], [], []>} : vector<288x128xbf16>, vector<128x128xbf16>, vector<288x128xf32> -> vector<288x128xf32>
    %16 = arith.addf %12, %15 : vector<288x128xf32>
    %c0_20 = arith.constant 0 : index
    %c0_21 = arith.constant 0 : index
    %17 = vector.load %arg7[%c0_20, %c0_21] : memref<288x128xf32, #tpu.memory_space<vmem>>, vector<288x128xf32>
    tpu.vector_store %arg7[%c0_20, %c0_21], %16 {strides = array<i32>} : memref<288x128xf32, #tpu.memory_space<vmem>>, vector<288x128xf32>,
    %c0_22 = arith.constant 0 : index
    %c2 = arith.constant 2 : index
    %c0_23 = arith.constant 0 : index
    %18 = vector.load %arg2[%c0_22, %c2, %c0_23] : memref<1x328x128xbf16, #tpu.memory_space<vmem>>, vector<1x288x128xbf16>
    %19 = vector.shape_cast %18 : vector<1x288x128xbf16> to vector<288x128xbf16>
    %c0_24 = arith.constant 0 : index
    %c0_25 = arith.constant 0 : index
    %20 = vector.load %arg7[%c0_24, %c0_25] : memref<288x128xf32, #tpu.memory_space<vmem>>, vector<288x128xf32>
    %c2_26 = arith.constant 2 : index
    %c0_27 = arith.constant 0 : index
    %c0_28 = arith.constant 0 : index
    %21 = vector.load %arg3[%c2_26, %c0_27, %c0_28] : memref<9x128x128xbf16, #tpu.memory_space<vmem>>, vector<1x128x128xbf16>
    %22 = vector.shape_cast %21 : vector<1x128x128xbf16> to vector<128x128xbf16>
    %cst_29 = arith.constant dense<0.000000e+00> : vector<288x128xf32>
    %23 = tpu.matmul %19, %22, %cst_29 {dimension_numbers = #tpu.dot_dimension_numbers<[1], [0], [0], [1], [0, 0, 1, 1], [], []>} : vector<288x128xbf16>, vector<128x128xbf16>, vector<288x128xf32> -> vector<288x128xf32>
    %24 = arith.addf %20, %23 : vector<288x128xf32>
    %c0_30 = arith.constant 0 : index
    %c0_31 = arith.constant 0 : index
    %25 = vector.load %arg7[%c0_30, %c0_31] : memref<288x128xf32, #tpu.memory_space<vmem>>, vector<288x128xf32>
    tpu.vector_store %arg7[%c0_30, %c0_31], %24 {strides = array<i32>} : memref<288x128xf32, #tpu.memory_space<vmem>>, vector<288x128xf32>,
    %c0_32 = arith.constant 0 : index
    %c18 = arith.constant 18 : index
    %c0_33 = arith.constant 0 : index
    %26 = vector.load %arg2[%c0_32, %c18, %c0_33] : memref<1x328x128xbf16, #tpu.memory_space<vmem>>, vector<1x288x128xbf16>
    %27 = vector.shape_cast %26 : vector<1x288x128xbf16> to vector<288x128xbf16>
    %c0_34 = arith.constant 0 : index
    %c0_35 = arith.constant 0 : index
    %28 = vector.load %arg7[%c0_34, %c0_35] : memref<288x128xf32, #tpu.memory_space<vmem>>, vector<288x128xf32>
    %c3 = arith.constant 3 : index
    %c0_36 = arith.constant 0 : index
    %c0_37 = arith.constant 0 : index
    %29 = vector.load %arg3[%c3, %c0_36, %c0_37] : memref<9x128x128xbf16, #tpu.memory_space<vmem>>, vector<1x128x128xbf16>
    %30 = vector.shape_cast %29 : vector<1x128x128xbf16> to vector<128x128xbf16>
    %cst_38 = arith.constant dense<0.000000e+00> : vector<288x128xf32>
    %31 = tpu.matmul %27, %30, %cst_38 {dimension_numbers = #tpu.dot_dimension_numbers<[1], [0], [0], [1], [0, 0, 1, 1], [], []>} : vector<288x128xbf16>, vector<128x128xbf16>, vector<288x128xf32> -> vector<288x128xf32>
    %32 = arith.addf %28, %31 : vector<288x128xf32>
    %c0_39 = arith.constant 0 : index
    %c0_40 = arith.constant 0 : index
    %33 = vector.load %arg7[%c0_39, %c0_40] : memref<288x128xf32, #tpu.memory_space<vmem>>, vector<288x128xf32>
    tpu.vector_store %arg7[%c0_39, %c0_40], %32 {strides = array<i32>} : memref<288x128xf32, #tpu.memory_space<vmem>>, vector<288x128xf32>,
    %c0_41 = arith.constant 0 : index
    %c19 = arith.constant 19 : index
    %c0_42 = arith.constant 0 : index
    %34 = vector.load %arg2[%c0_41, %c19, %c0_42] : memref<1x328x128xbf16, #tpu.memory_space<vmem>>, vector<1x288x128xbf16>
    %35 = vector.shape_cast %34 : vector<1x288x128xbf16> to vector<288x128xbf16>
    %c0_43 = arith.constant 0 : index
    %c0_44 = arith.constant 0 : index
    %36 = vector.load %arg7[%c0_43, %c0_44] : memref<288x128xf32, #tpu.memory_space<vmem>>, vector<288x128xf32>
    %c4 = arith.constant 4 : index
    %c0_45 = arith.constant 0 : index
    %c0_46 = arith.constant 0 : index
    %37 = vector.load %arg3[%c4, %c0_45, %c0_46] : memref<9x128x128xbf16, #tpu.memory_space<vmem>>, vector<1x128x128xbf16>
    %38 = vector.shape_cast %37 : vector<1x128x128xbf16> to vector<128x128xbf16>
    %cst_47 = arith.constant dense<0.000000e+00> : vector<288x128xf32>
    %39 = tpu.matmul %35, %38, %cst_47 {dimension_numbers = #tpu.dot_dimension_numbers<[1], [0], [0], [1], [0, 0, 1, 1], [], []>} : vector<288x128xbf16>, vector<128x128xbf16>, vector<288x128xf32> -> vector<288x128xf32>
    %40 = arith.addf %36, %39 : vector<288x128xf32>
    %c0_48 = arith.constant 0 : index
    %c0_49 = arith.constant 0 : index
    %41 = vector.load %arg7[%c0_48, %c0_49] : memref<288x128xf32, #tpu.memory_space<vmem>>, vector<288x128xf32>
    tpu.vector_store %arg7[%c0_48, %c0_49], %40 {strides = array<i32>} : memref<288x128xf32, #tpu.memory_space<vmem>>, vector<288x128xf32>,
    %c0_50 = arith.constant 0 : index
    %c20 = arith.constant 20 : index
    %c0_51 = arith.constant 0 : index
    %42 = vector.load %arg2[%c0_50, %c20, %c0_51] : memref<1x328x128xbf16, #tpu.memory_space<vmem>>, vector<1x288x128xbf16>
    %43 = vector.shape_cast %42 : vector<1x288x128xbf16> to vector<288x128xbf16>
    %c0_52 = arith.constant 0 : index
    %c0_53 = arith.constant 0 : index
    %44 = vector.load %arg7[%c0_52, %c0_53] : memref<288x128xf32, #tpu.memory_space<vmem>>, vector<288x128xf32>
    %c5 = arith.constant 5 : index
    %c0_54 = arith.constant 0 : index
    %c0_55 = arith.constant 0 : index
    %45 = vector.load %arg3[%c5, %c0_54, %c0_55] : memref<9x128x128xbf16, #tpu.memory_space<vmem>>, vector<1x128x128xbf16>
    %46 = vector.shape_cast %45 : vector<1x128x128xbf16> to vector<128x128xbf16>
    %cst_56 = arith.constant dense<0.000000e+00> : vector<288x128xf32>
    %47 = tpu.matmul %43, %46, %cst_56 {dimension_numbers = #tpu.dot_dimension_numbers<[1], [0], [0], [1], [0, 0, 1, 1], [], []>} : vector<288x128xbf16>, vector<128x128xbf16>, vector<288x128xf32> -> vector<288x128xf32>
    %48 = arith.addf %44, %47 : vector<288x128xf32>
    %c0_57 = arith.constant 0 : index
    %c0_58 = arith.constant 0 : index
    %49 = vector.load %arg7[%c0_57, %c0_58] : memref<288x128xf32, #tpu.memory_space<vmem>>, vector<288x128xf32>
    tpu.vector_store %arg7[%c0_57, %c0_58], %48 {strides = array<i32>} : memref<288x128xf32, #tpu.memory_space<vmem>>, vector<288x128xf32>,
    %c0_59 = arith.constant 0 : index
    %c36 = arith.constant 36 : index
    %c0_60 = arith.constant 0 : index
    %50 = vector.load %arg2[%c0_59, %c36, %c0_60] : memref<1x328x128xbf16, #tpu.memory_space<vmem>>, vector<1x288x128xbf16>
    %51 = vector.shape_cast %50 : vector<1x288x128xbf16> to vector<288x128xbf16>
    %c0_61 = arith.constant 0 : index
    %c0_62 = arith.constant 0 : index
    %52 = vector.load %arg7[%c0_61, %c0_62] : memref<288x128xf32, #tpu.memory_space<vmem>>, vector<288x128xf32>
    %c6 = arith.constant 6 : index
    %c0_63 = arith.constant 0 : index
    %c0_64 = arith.constant 0 : index
    %53 = vector.load %arg3[%c6, %c0_63, %c0_64] : memref<9x128x128xbf16, #tpu.memory_space<vmem>>, vector<1x128x128xbf16>
    %54 = vector.shape_cast %53 : vector<1x128x128xbf16> to vector<128x128xbf16>
    %cst_65 = arith.constant dense<0.000000e+00> : vector<288x128xf32>
    %55 = tpu.matmul %51, %54, %cst_65 {dimension_numbers = #tpu.dot_dimension_numbers<[1], [0], [0], [1], [0, 0, 1, 1], [], []>} : vector<288x128xbf16>, vector<128x128xbf16>, vector<288x128xf32> -> vector<288x128xf32>
    %56 = arith.addf %52, %55 : vector<288x128xf32>
    %c0_66 = arith.constant 0 : index
    %c0_67 = arith.constant 0 : index
    %57 = vector.load %arg7[%c0_66, %c0_67] : memref<288x128xf32, #tpu.memory_space<vmem>>, vector<288x128xf32>
    tpu.vector_store %arg7[%c0_66, %c0_67], %56 {strides = array<i32>} : memref<288x128xf32, #tpu.memory_space<vmem>>, vector<288x128xf32>,
    %c0_68 = arith.constant 0 : index
    %c37 = arith.constant 37 : index
    %c0_69 = arith.constant 0 : index
    %58 = vector.load %arg2[%c0_68, %c37, %c0_69] : memref<1x328x128xbf16, #tpu.memory_space<vmem>>, vector<1x288x128xbf16>
    %59 = vector.shape_cast %58 : vector<1x288x128xbf16> to vector<288x128xbf16>
    %c0_70 = arith.constant 0 : index
    %c0_71 = arith.constant 0 : index
    %60 = vector.load %arg7[%c0_70, %c0_71] : memref<288x128xf32, #tpu.memory_space<vmem>>, vector<288x128xf32>
    %c7 = arith.constant 7 : index
    %c0_72 = arith.constant 0 : index
    %c0_73 = arith.constant 0 : index
    %61 = vector.load %arg3[%c7, %c0_72, %c0_73] : memref<9x128x128xbf16, #tpu.memory_space<vmem>>, vector<1x128x128xbf16>
    %62 = vector.shape_cast %61 : vector<1x128x128xbf16> to vector<128x128xbf16>
    %cst_74 = arith.constant dense<0.000000e+00> : vector<288x128xf32>
    %63 = tpu.matmul %59, %62, %cst_74 {dimension_numbers = #tpu.dot_dimension_numbers<[1], [0], [0], [1], [0, 0, 1, 1], [], []>} : vector<288x128xbf16>, vector<128x128xbf16>, vector<288x128xf32> -> vector<288x128xf32>
    %64 = arith.addf %60, %63 : vector<288x128xf32>
    %c0_75 = arith.constant 0 : index
    %c0_76 = arith.constant 0 : index
    %65 = vector.load %arg7[%c0_75, %c0_76] : memref<288x128xf32, #tpu.memory_space<vmem>>, vector<288x128xf32>
    tpu.vector_store %arg7[%c0_75, %c0_76], %64 {strides = array<i32>} : memref<288x128xf32, #tpu.memory_space<vmem>>, vector<288x128xf32>,
    %c0_77 = arith.constant 0 : index
    %c38 = arith.constant 38 : index
    %c0_78 = arith.constant 0 : index
    %66 = vector.load %arg2[%c0_77, %c38, %c0_78] : memref<1x328x128xbf16, #tpu.memory_space<vmem>>, vector<1x288x128xbf16>
    %67 = vector.shape_cast %66 : vector<1x288x128xbf16> to vector<288x128xbf16>
    %c0_79 = arith.constant 0 : index
    %c0_80 = arith.constant 0 : index
    %68 = vector.load %arg7[%c0_79, %c0_80] : memref<288x128xf32, #tpu.memory_space<vmem>>, vector<288x128xf32>
    %c8 = arith.constant 8 : index
    %c0_81 = arith.constant 0 : index
    %c0_82 = arith.constant 0 : index
    %69 = vector.load %arg3[%c8, %c0_81, %c0_82] : memref<9x128x128xbf16, #tpu.memory_space<vmem>>, vector<1x128x128xbf16>
    %70 = vector.shape_cast %69 : vector<1x128x128xbf16> to vector<128x128xbf16>
    %cst_83 = arith.constant dense<0.000000e+00> : vector<288x128xf32>
    %71 = tpu.matmul %67, %70, %cst_83 {dimension_numbers = #tpu.dot_dimension_numbers<[1], [0], [0], [1], [0, 0, 1, 1], [], []>} : vector<288x128xbf16>, vector<128x128xbf16>, vector<288x128xf32> -> vector<288x128xf32>
    %72 = arith.addf %68, %71 : vector<288x128xf32>
    %c0_84 = arith.constant 0 : index
    %c0_85 = arith.constant 0 : index
    %73 = vector.load %arg7[%c0_84, %c0_85] : memref<288x128xf32, #tpu.memory_space<vmem>>, vector<288x128xf32>
    tpu.vector_store %arg7[%c0_84, %c0_85], %72 {strides = array<i32>} : memref<288x128xf32, #tpu.memory_space<vmem>>, vector<288x128xf32>,
    %c0_86 = arith.constant 0 : index
    %c0_87 = arith.constant 0 : index
    %74 = vector.load %arg7[%c0_86, %c0_87] : memref<288x128xf32, #tpu.memory_space<vmem>>, vector<288x128xf32>
    %c0_88 = arith.constant 0 : index
    %c0_89 = arith.constant 0 : index
    %75 = vector.load %arg4[%c0_88, %c0_89] : memref<1x128xf32, #tpu.memory_space<vmem>>, vector<1x128xf32>
    %76 = vector.broadcast %75 : vector<1x128xf32> to vector<288x128xf32>
    %77 = arith.mulf %74, %76 : vector<288x128xf32>
    %c0_90 = arith.constant 0 : index
    %c0_91 = arith.constant 0 : index
    %78 = vector.load %arg5[%c0_90, %c0_91] : memref<1x128xf32, #tpu.memory_space<vmem>>, vector<1x128xf32>
    %79 = vector.broadcast %78 : vector<1x128xf32> to vector<288x128xf32>
    %80 = arith.addf %77, %79 : vector<288x128xf32>
    %cst_92 = arith.constant 0.000000e+00 : f32
    %81 = vector.broadcast %cst_92 : f32 to vector<288x128xf32>
    %82 = arith.maximumf %80, %81 : vector<288x128xf32>
    %83 = arith.truncf %82 : vector<288x128xf32> to vector<288x128xbf16>
    %c0_93 = arith.constant 0 : index
    %c0_94 = arith.constant 0 : index
    %c0_95 = arith.constant 0 : index
    %84 = vector.load %arg6[%c0_93, %c0_94, %c0_95] : memref<1x288x128xbf16, #tpu.memory_space<vmem>>, vector<1x288x128xbf16>
    %85 = vector.shape_cast %84 : vector<1x288x128xbf16> to vector<288x128xbf16>
    %86 = vector.shape_cast %83 : vector<288x128xbf16> to vector<1x288x128xbf16>
    tpu.vector_store %arg6[%c0_93, %c0_94, %c0_95], %86 {strides = array<i32>} : memref<1x288x128xbf16, #tpu.memory_space<vmem>>, vector<1x288x128xbf16>,
    return
  }
  func.func @transform_0(%arg0: i32, %arg1: i32) -> (i32, i32, i32) {
    %c0_i32 = arith.constant 0 : i32
    %c0_i32_0 = arith.constant 0 : i32
    %c0_i32_1 = arith.constant 0 : i32
    return %arg0, %c0_i32, %c0_i32_0 : i32, i32, i32
  }
  func.func @transform_1(%arg0: i32, %arg1: i32) -> (i32, i32, i32) {
    %c0_i32 = arith.constant 0 : i32
    %c0_i32_0 = arith.constant 0 : i32
    %c0_i32_1 = arith.constant 0 : i32
    return %c0_i32, %c0_i32_0, %arg1 : i32, i32, i32
  }
  func.func @transform_2(%arg0: i32, %arg1: i32) -> (i32, i32) {
    %c0_i32 = arith.constant 0 : i32
    %c0_i32_0 = arith.constant 0 : i32
    return %c0_i32, %arg1 : i32, i32
  }
  func.func @transform_3(%arg0: i32, %arg1: i32) -> (i32, i32) {
    %c0_i32 = arith.constant 0 : i32
    %c0_i32_0 = arith.constant 0 : i32
    return %c0_i32, %arg1 : i32, i32
  }
  func.func @transform_4(%arg0: i32, %arg1: i32) -> (i32, i32, i32) {
    %c0_i32 = arith.constant 0 : i32
    %c0_i32_0 = arith.constant 0 : i32
    return %arg0, %c0_i32, %arg1 : i32, i32, i32
  }
}

module attributes {stable_mosaic.version = 11 : i64} {
  func.func @_gemm_bn_kernel(%arg0: i32, %arg1: i32, %arg2: i32, %arg3: memref<256x128xbf16, #tpu.memory_space<vmem>>, %arg4: memref<128x128xbf16, #tpu.memory_space<vmem>>, %arg5: memref<1x128xf32, #tpu.memory_space<vmem>>, %arg6: memref<1x128xf32, #tpu.memory_space<vmem>>, %arg7: memref<256x128xbf16, #tpu.memory_space<vmem>>, %arg8: memref<256x128xbf16, #tpu.memory_space<vmem>>, %arg9: memref<256x128xf32, #tpu.memory_space<vmem>>) attributes {dimension_semantics = [#tpu.dimension_semantics<parallel>, #tpu.dimension_semantics<parallel>, #tpu.dimension_semantics<arbitrary>], iteration_bounds = array<i64: 1, 2, 1>, scalar_prefetch = 0 : i64, scratch_operands = 1 : i64, tpu.core_type = #tpu.core_type<tc>, window_params = [{transform_indices = @transform_0, window_bounds = array<i64: 256, 128>}, {transform_indices = @transform_1, window_bounds = array<i64: 128, 128>}, {transform_indices = @transform_2, window_bounds = array<i64: 1, 128>}, {transform_indices = @transform_3, window_bounds = array<i64: 1, 128>}, {transform_indices = @transform_4, window_bounds = array<i64: 256, 128>}, {transform_indices = @transform_5, window_bounds = array<i64: 256, 128>}]} {
    %c0_i32 = arith.constant 0 : i32
    %0 = arith.cmpi eq, %arg2, %c0_i32 : i32
    %1 = arith.extui %0 : i1 to i32
    %c0_i32_0 = arith.constant 0 : i32
    %2 = arith.cmpi ne, %1, %c0_i32_0 : i32
    scf.if %2 {
      %cst_10 = arith.constant 0.000000e+00 : f32
      %12 = vector.broadcast %cst_10 : f32 to vector<256x128xf32>
      %c0_11 = arith.constant 0 : index
      %c0_12 = arith.constant 0 : index
      %13 = vector.load %arg9[%c0_11, %c0_12] : memref<256x128xf32, #tpu.memory_space<vmem>>, vector<256x128xf32>
      tpu.vector_store %arg9[%c0_11, %c0_12], %12 {strides = array<i32>} : memref<256x128xf32, #tpu.memory_space<vmem>>, vector<256x128xf32>,
    } else {
    }
    %c0 = arith.constant 0 : index
    %c0_1 = arith.constant 0 : index
    %3 = vector.load %arg9[%c0, %c0_1] : memref<256x128xf32, #tpu.memory_space<vmem>>, vector<256x128xf32>
    %c0_2 = arith.constant 0 : index
    %c0_3 = arith.constant 0 : index
    %4 = vector.load %arg3[%c0_2, %c0_3] : memref<256x128xbf16, #tpu.memory_space<vmem>>, vector<256x128xbf16>
    %c0_4 = arith.constant 0 : index
    %c0_5 = arith.constant 0 : index
    %5 = vector.load %arg4[%c0_4, %c0_5] : memref<128x128xbf16, #tpu.memory_space<vmem>>, vector<128x128xbf16>
    %cst = arith.constant dense<0.000000e+00> : vector<256x128xf32>
    %6 = tpu.matmul %4, %5, %cst {dimension_numbers = #tpu.dot_dimension_numbers<[1], [0], [0], [1], [0, 0, 1, 1], [], []>} : vector<256x128xbf16>, vector<128x128xbf16>, vector<256x128xf32> -> vector<256x128xf32>
    %7 = arith.addf %3, %6 : vector<256x128xf32>
    %c0_6 = arith.constant 0 : index
    %c0_7 = arith.constant 0 : index
    %8 = vector.load %arg9[%c0_6, %c0_7] : memref<256x128xf32, #tpu.memory_space<vmem>>, vector<256x128xf32>
    tpu.vector_store %arg9[%c0_6, %c0_7], %7 {strides = array<i32>} : memref<256x128xf32, #tpu.memory_space<vmem>>, vector<256x128xf32>,
    %c0_i32_8 = arith.constant 0 : i32
    %9 = arith.cmpi eq, %arg2, %c0_i32_8 : i32
    %10 = arith.extui %9 : i1 to i32
    %c0_i32_9 = arith.constant 0 : i32
    %11 = arith.cmpi ne, %10, %c0_i32_9 : i32
    scf.if %11 {
      %c0_10 = arith.constant 0 : index
      %c0_11 = arith.constant 0 : index
      %12 = vector.load %arg9[%c0_10, %c0_11] : memref<256x128xf32, #tpu.memory_space<vmem>>, vector<256x128xf32>
      %c0_12 = arith.constant 0 : index
      %c0_13 = arith.constant 0 : index
      %13 = vector.load %arg5[%c0_12, %c0_13] : memref<1x128xf32, #tpu.memory_space<vmem>>, vector<1x128xf32>
      %14 = vector.broadcast %13 : vector<1x128xf32> to vector<256x128xf32>
      %15 = arith.mulf %12, %14 : vector<256x128xf32>
      %c0_14 = arith.constant 0 : index
      %c0_15 = arith.constant 0 : index
      %16 = vector.load %arg6[%c0_14, %c0_15] : memref<1x128xf32, #tpu.memory_space<vmem>>, vector<1x128xf32>
      %17 = vector.broadcast %16 : vector<1x128xf32> to vector<256x128xf32>
      %18 = arith.addf %15, %17 : vector<256x128xf32>
      %c0_16 = arith.constant 0 : index
      %c0_17 = arith.constant 0 : index
      %19 = vector.load %arg7[%c0_16, %c0_17] : memref<256x128xbf16, #tpu.memory_space<vmem>>, vector<256x128xbf16>
      %20 = arith.extf %19 : vector<256x128xbf16> to vector<256x128xf32>
      %21 = arith.addf %18, %20 : vector<256x128xf32>
      %cst_18 = arith.constant 0.000000e+00 : f32
      %22 = vector.broadcast %cst_18 : f32 to vector<256x128xf32>
      %23 = arith.maximumf %21, %22 : vector<256x128xf32>
      %24 = arith.truncf %23 : vector<256x128xf32> to vector<256x128xbf16>
      %c0_19 = arith.constant 0 : index
      %c0_20 = arith.constant 0 : index
      %25 = vector.load %arg8[%c0_19, %c0_20] : memref<256x128xbf16, #tpu.memory_space<vmem>>, vector<256x128xbf16>
      tpu.vector_store %arg8[%c0_19, %c0_20], %24 {strides = array<i32>} : memref<256x128xbf16, #tpu.memory_space<vmem>>, vector<256x128xbf16>,
    } else {
    }
    return
  }
  func.func @transform_0(%arg0: i32, %arg1: i32, %arg2: i32) -> (i32, i32) {
    %c0_i32 = arith.constant 0 : i32
    return %arg1, %arg2 : i32, i32
  }
  func.func @transform_1(%arg0: i32, %arg1: i32, %arg2: i32) -> (i32, i32) {
    %c0_i32 = arith.constant 0 : i32
    return %arg2, %arg0 : i32, i32
  }
  func.func @transform_2(%arg0: i32, %arg1: i32, %arg2: i32) -> (i32, i32) {
    %c0_i32 = arith.constant 0 : i32
    %c0_i32_0 = arith.constant 0 : i32
    return %c0_i32, %arg0 : i32, i32
  }
  func.func @transform_3(%arg0: i32, %arg1: i32, %arg2: i32) -> (i32, i32) {
    %c0_i32 = arith.constant 0 : i32
    %c0_i32_0 = arith.constant 0 : i32
    return %c0_i32, %arg0 : i32, i32
  }
  func.func @transform_4(%arg0: i32, %arg1: i32, %arg2: i32) -> (i32, i32) {
    %c0_i32 = arith.constant 0 : i32
    return %arg1, %arg0 : i32, i32
  }
  func.func @transform_5(%arg0: i32, %arg1: i32, %arg2: i32) -> (i32, i32) {
    %c0_i32 = arith.constant 0 : i32
    return %arg1, %arg0 : i32, i32
  }
}

module attributes {stable_mosaic.version = 11 : i64} {
  func.func @_conv3x3_bn_kernel(%arg0: i32, %arg1: i32, %arg2: memref<1x352x128xbf16, #tpu.memory_space<vmem>>, %arg3: memref<9x128x128xbf16, #tpu.memory_space<vmem>>, %arg4: memref<1x128xf32, #tpu.memory_space<vmem>>, %arg5: memref<1x128xf32, #tpu.memory_space<vmem>>, %arg6: memref<1x72x128xbf16, #tpu.memory_space<vmem>>, %arg7: memref<72x128xf32, #tpu.memory_space<vmem>>) attributes {dimension_semantics = [#tpu.dimension_semantics<parallel>, #tpu.dimension_semantics<parallel>], iteration_bounds = array<i64: 2, 1>, scalar_prefetch = 0 : i64, scratch_operands = 1 : i64, tpu.core_type = #tpu.core_type<tc>, window_params = [{transform_indices = @transform_0, window_bounds = array<i64: 1, 352, 128>}, {transform_indices = @transform_1, window_bounds = array<i64: 9, 128, 128>}, {transform_indices = @transform_2, window_bounds = array<i64: 1, 128>}, {transform_indices = @transform_3, window_bounds = array<i64: 1, 128>}, {transform_indices = @transform_4, window_bounds = array<i64: 1, 72, 128>}]} {
    %cst = arith.constant 0.000000e+00 : f32
    %0 = vector.broadcast %cst : f32 to vector<72x128xf32>
    %c0 = arith.constant 0 : index
    %c0_0 = arith.constant 0 : index
    %1 = vector.load %arg7[%c0, %c0_0] : memref<72x128xf32, #tpu.memory_space<vmem>>, vector<72x128xf32>
    tpu.vector_store %arg7[%c0, %c0_0], %0 {strides = array<i32>} : memref<72x128xf32, #tpu.memory_space<vmem>>, vector<72x128xf32>,
    %c0_1 = arith.constant 0 : index
    %c0_2 = arith.constant 0 : index
    %c0_3 = arith.constant 0 : index
    %2 = vector.load %arg2[%c0_1, %c0_2, %c0_3] : memref<1x352x128xbf16, #tpu.memory_space<vmem>>, vector<1x72x128xbf16>
    %3 = vector.shape_cast %2 : vector<1x72x128xbf16> to vector<72x128xbf16>
    %c0_4 = arith.constant 0 : index
    %c0_5 = arith.constant 0 : index
    %4 = vector.load %arg7[%c0_4, %c0_5] : memref<72x128xf32, #tpu.memory_space<vmem>>, vector<72x128xf32>
    %c0_6 = arith.constant 0 : index
    %c0_7 = arith.constant 0 : index
    %c0_8 = arith.constant 0 : index
    %5 = vector.load %arg3[%c0_6, %c0_7, %c0_8] : memref<9x128x128xbf16, #tpu.memory_space<vmem>>, vector<1x128x128xbf16>
    %6 = vector.shape_cast %5 : vector<1x128x128xbf16> to vector<128x128xbf16>
    %cst_9 = arith.constant dense<0.000000e+00> : vector<72x128xf32>
    %7 = tpu.matmul %3, %6, %cst_9 {dimension_numbers = #tpu.dot_dimension_numbers<[1], [0], [0], [1], [0, 0, 1, 1], [], []>} : vector<72x128xbf16>, vector<128x128xbf16>, vector<72x128xf32> -> vector<72x128xf32>
    %8 = arith.addf %4, %7 : vector<72x128xf32>
    %c0_10 = arith.constant 0 : index
    %c0_11 = arith.constant 0 : index
    %9 = vector.load %arg7[%c0_10, %c0_11] : memref<72x128xf32, #tpu.memory_space<vmem>>, vector<72x128xf32>
    tpu.vector_store %arg7[%c0_10, %c0_11], %8 {strides = array<i32>} : memref<72x128xf32, #tpu.memory_space<vmem>>, vector<72x128xf32>,
    %c0_12 = arith.constant 0 : index
    %c88 = arith.constant 88 : index
    %c0_13 = arith.constant 0 : index
    %10 = vector.load %arg2[%c0_12, %c88, %c0_13] : memref<1x352x128xbf16, #tpu.memory_space<vmem>>, vector<1x72x128xbf16>
    %11 = vector.shape_cast %10 : vector<1x72x128xbf16> to vector<72x128xbf16>
    %c0_14 = arith.constant 0 : index
    %c0_15 = arith.constant 0 : index
    %12 = vector.load %arg7[%c0_14, %c0_15] : memref<72x128xf32, #tpu.memory_space<vmem>>, vector<72x128xf32>
    %c1 = arith.constant 1 : index
    %c0_16 = arith.constant 0 : index
    %c0_17 = arith.constant 0 : index
    %13 = vector.load %arg3[%c1, %c0_16, %c0_17] : memref<9x128x128xbf16, #tpu.memory_space<vmem>>, vector<1x128x128xbf16>
    %14 = vector.shape_cast %13 : vector<1x128x128xbf16> to vector<128x128xbf16>
    %cst_18 = arith.constant dense<0.000000e+00> : vector<72x128xf32>
    %15 = tpu.matmul %11, %14, %cst_18 {dimension_numbers = #tpu.dot_dimension_numbers<[1], [0], [0], [1], [0, 0, 1, 1], [], []>} : vector<72x128xbf16>, vector<128x128xbf16>, vector<72x128xf32> -> vector<72x128xf32>
    %16 = arith.addf %12, %15 : vector<72x128xf32>
    %c0_19 = arith.constant 0 : index
    %c0_20 = arith.constant 0 : index
    %17 = vector.load %arg7[%c0_19, %c0_20] : memref<72x128xf32, #tpu.memory_space<vmem>>, vector<72x128xf32>
    tpu.vector_store %arg7[%c0_19, %c0_20], %16 {strides = array<i32>} : memref<72x128xf32, #tpu.memory_space<vmem>>, vector<72x128xf32>,
    %c0_21 = arith.constant 0 : index
    %c1_22 = arith.constant 1 : index
    %c0_23 = arith.constant 0 : index
    %18 = vector.load %arg2[%c0_21, %c1_22, %c0_23] : memref<1x352x128xbf16, #tpu.memory_space<vmem>>, vector<1x72x128xbf16>
    %19 = vector.shape_cast %18 : vector<1x72x128xbf16> to vector<72x128xbf16>
    %c0_24 = arith.constant 0 : index
    %c0_25 = arith.constant 0 : index
    %20 = vector.load %arg7[%c0_24, %c0_25] : memref<72x128xf32, #tpu.memory_space<vmem>>, vector<72x128xf32>
    %c2 = arith.constant 2 : index
    %c0_26 = arith.constant 0 : index
    %c0_27 = arith.constant 0 : index
    %21 = vector.load %arg3[%c2, %c0_26, %c0_27] : memref<9x128x128xbf16, #tpu.memory_space<vmem>>, vector<1x128x128xbf16>
    %22 = vector.shape_cast %21 : vector<1x128x128xbf16> to vector<128x128xbf16>
    %cst_28 = arith.constant dense<0.000000e+00> : vector<72x128xf32>
    %23 = tpu.matmul %19, %22, %cst_28 {dimension_numbers = #tpu.dot_dimension_numbers<[1], [0], [0], [1], [0, 0, 1, 1], [], []>} : vector<72x128xbf16>, vector<128x128xbf16>, vector<72x128xf32> -> vector<72x128xf32>
    %24 = arith.addf %20, %23 : vector<72x128xf32>
    %c0_29 = arith.constant 0 : index
    %c0_30 = arith.constant 0 : index
    %25 = vector.load %arg7[%c0_29, %c0_30] : memref<72x128xf32, #tpu.memory_space<vmem>>, vector<72x128xf32>
    tpu.vector_store %arg7[%c0_29, %c0_30], %24 {strides = array<i32>} : memref<72x128xf32, #tpu.memory_space<vmem>>, vector<72x128xf32>,
    %c0_31 = arith.constant 0 : index
    %c176 = arith.constant 176 : index
    %c0_32 = arith.constant 0 : index
    %26 = vector.load %arg2[%c0_31, %c176, %c0_32] : memref<1x352x128xbf16, #tpu.memory_space<vmem>>, vector<1x72x128xbf16>
    %27 = vector.shape_cast %26 : vector<1x72x128xbf16> to vector<72x128xbf16>
    %c0_33 = arith.constant 0 : index
    %c0_34 = arith.constant 0 : index
    %28 = vector.load %arg7[%c0_33, %c0_34] : memref<72x128xf32, #tpu.memory_space<vmem>>, vector<72x128xf32>
    %c3 = arith.constant 3 : index
    %c0_35 = arith.constant 0 : index
    %c0_36 = arith.constant 0 : index
    %29 = vector.load %arg3[%c3, %c0_35, %c0_36] : memref<9x128x128xbf16, #tpu.memory_space<vmem>>, vector<1x128x128xbf16>
    %30 = vector.shape_cast %29 : vector<1x128x128xbf16> to vector<128x128xbf16>
    %cst_37 = arith.constant dense<0.000000e+00> : vector<72x128xf32>
    %31 = tpu.matmul %27, %30, %cst_37 {dimension_numbers = #tpu.dot_dimension_numbers<[1], [0], [0], [1], [0, 0, 1, 1], [], []>} : vector<72x128xbf16>, vector<128x128xbf16>, vector<72x128xf32> -> vector<72x128xf32>
    %32 = arith.addf %28, %31 : vector<72x128xf32>
    %c0_38 = arith.constant 0 : index
    %c0_39 = arith.constant 0 : index
    %33 = vector.load %arg7[%c0_38, %c0_39] : memref<72x128xf32, #tpu.memory_space<vmem>>, vector<72x128xf32>
    tpu.vector_store %arg7[%c0_38, %c0_39], %32 {strides = array<i32>} : memref<72x128xf32, #tpu.memory_space<vmem>>, vector<72x128xf32>,
    %c0_40 = arith.constant 0 : index
    %c264 = arith.constant 264 : index
    %c0_41 = arith.constant 0 : index
    %34 = vector.load %arg2[%c0_40, %c264, %c0_41] : memref<1x352x128xbf16, #tpu.memory_space<vmem>>, vector<1x72x128xbf16>
    %35 = vector.shape_cast %34 : vector<1x72x128xbf16> to vector<72x128xbf16>
    %c0_42 = arith.constant 0 : index
    %c0_43 = arith.constant 0 : index
    %36 = vector.load %arg7[%c0_42, %c0_43] : memref<72x128xf32, #tpu.memory_space<vmem>>, vector<72x128xf32>
    %c4 = arith.constant 4 : index
    %c0_44 = arith.constant 0 : index
    %c0_45 = arith.constant 0 : index
    %37 = vector.load %arg3[%c4, %c0_44, %c0_45] : memref<9x128x128xbf16, #tpu.memory_space<vmem>>, vector<1x128x128xbf16>
    %38 = vector.shape_cast %37 : vector<1x128x128xbf16> to vector<128x128xbf16>
    %cst_46 = arith.constant dense<0.000000e+00> : vector<72x128xf32>
    %39 = tpu.matmul %35, %38, %cst_46 {dimension_numbers = #tpu.dot_dimension_numbers<[1], [0], [0], [1], [0, 0, 1, 1], [], []>} : vector<72x128xbf16>, vector<128x128xbf16>, vector<72x128xf32> -> vector<72x128xf32>
    %40 = arith.addf %36, %39 : vector<72x128xf32>
    %c0_47 = arith.constant 0 : index
    %c0_48 = arith.constant 0 : index
    %41 = vector.load %arg7[%c0_47, %c0_48] : memref<72x128xf32, #tpu.memory_space<vmem>>, vector<72x128xf32>
    tpu.vector_store %arg7[%c0_47, %c0_48], %40 {strides = array<i32>} : memref<72x128xf32, #tpu.memory_space<vmem>>, vector<72x128xf32>,
    %c0_49 = arith.constant 0 : index
    %c177 = arith.constant 177 : index
    %c0_50 = arith.constant 0 : index
    %42 = vector.load %arg2[%c0_49, %c177, %c0_50] : memref<1x352x128xbf16, #tpu.memory_space<vmem>>, vector<1x72x128xbf16>
    %43 = vector.shape_cast %42 : vector<1x72x128xbf16> to vector<72x128xbf16>
    %c0_51 = arith.constant 0 : index
    %c0_52 = arith.constant 0 : index
    %44 = vector.load %arg7[%c0_51, %c0_52] : memref<72x128xf32, #tpu.memory_space<vmem>>, vector<72x128xf32>
    %c5 = arith.constant 5 : index
    %c0_53 = arith.constant 0 : index
    %c0_54 = arith.constant 0 : index
    %45 = vector.load %arg3[%c5, %c0_53, %c0_54] : memref<9x128x128xbf16, #tpu.memory_space<vmem>>, vector<1x128x128xbf16>
    %46 = vector.shape_cast %45 : vector<1x128x128xbf16> to vector<128x128xbf16>
    %cst_55 = arith.constant dense<0.000000e+00> : vector<72x128xf32>
    %47 = tpu.matmul %43, %46, %cst_55 {dimension_numbers = #tpu.dot_dimension_numbers<[1], [0], [0], [1], [0, 0, 1, 1], [], []>} : vector<72x128xbf16>, vector<128x128xbf16>, vector<72x128xf32> -> vector<72x128xf32>
    %48 = arith.addf %44, %47 : vector<72x128xf32>
    %c0_56 = arith.constant 0 : index
    %c0_57 = arith.constant 0 : index
    %49 = vector.load %arg7[%c0_56, %c0_57] : memref<72x128xf32, #tpu.memory_space<vmem>>, vector<72x128xf32>
    tpu.vector_store %arg7[%c0_56, %c0_57], %48 {strides = array<i32>} : memref<72x128xf32, #tpu.memory_space<vmem>>, vector<72x128xf32>,
    %c0_58 = arith.constant 0 : index
    %c9 = arith.constant 9 : index
    %c0_59 = arith.constant 0 : index
    %50 = vector.load %arg2[%c0_58, %c9, %c0_59] : memref<1x352x128xbf16, #tpu.memory_space<vmem>>, vector<1x72x128xbf16>
    %51 = vector.shape_cast %50 : vector<1x72x128xbf16> to vector<72x128xbf16>
    %c0_60 = arith.constant 0 : index
    %c0_61 = arith.constant 0 : index
    %52 = vector.load %arg7[%c0_60, %c0_61] : memref<72x128xf32, #tpu.memory_space<vmem>>, vector<72x128xf32>
    %c6 = arith.constant 6 : index
    %c0_62 = arith.constant 0 : index
    %c0_63 = arith.constant 0 : index
    %53 = vector.load %arg3[%c6, %c0_62, %c0_63] : memref<9x128x128xbf16, #tpu.memory_space<vmem>>, vector<1x128x128xbf16>
    %54 = vector.shape_cast %53 : vector<1x128x128xbf16> to vector<128x128xbf16>
    %cst_64 = arith.constant dense<0.000000e+00> : vector<72x128xf32>
    %55 = tpu.matmul %51, %54, %cst_64 {dimension_numbers = #tpu.dot_dimension_numbers<[1], [0], [0], [1], [0, 0, 1, 1], [], []>} : vector<72x128xbf16>, vector<128x128xbf16>, vector<72x128xf32> -> vector<72x128xf32>
    %56 = arith.addf %52, %55 : vector<72x128xf32>
    %c0_65 = arith.constant 0 : index
    %c0_66 = arith.constant 0 : index
    %57 = vector.load %arg7[%c0_65, %c0_66] : memref<72x128xf32, #tpu.memory_space<vmem>>, vector<72x128xf32>
    tpu.vector_store %arg7[%c0_65, %c0_66], %56 {strides = array<i32>} : memref<72x128xf32, #tpu.memory_space<vmem>>, vector<72x128xf32>,
    %c0_67 = arith.constant 0 : index
    %c97 = arith.constant 97 : index
    %c0_68 = arith.constant 0 : index
    %58 = vector.load %arg2[%c0_67, %c97, %c0_68] : memref<1x352x128xbf16, #tpu.memory_space<vmem>>, vector<1x72x128xbf16>
    %59 = vector.shape_cast %58 : vector<1x72x128xbf16> to vector<72x128xbf16>
    %c0_69 = arith.constant 0 : index
    %c0_70 = arith.constant 0 : index
    %60 = vector.load %arg7[%c0_69, %c0_70] : memref<72x128xf32, #tpu.memory_space<vmem>>, vector<72x128xf32>
    %c7 = arith.constant 7 : index
    %c0_71 = arith.constant 0 : index
    %c0_72 = arith.constant 0 : index
    %61 = vector.load %arg3[%c7, %c0_71, %c0_72] : memref<9x128x128xbf16, #tpu.memory_space<vmem>>, vector<1x128x128xbf16>
    %62 = vector.shape_cast %61 : vector<1x128x128xbf16> to vector<128x128xbf16>
    %cst_73 = arith.constant dense<0.000000e+00> : vector<72x128xf32>
    %63 = tpu.matmul %59, %62, %cst_73 {dimension_numbers = #tpu.dot_dimension_numbers<[1], [0], [0], [1], [0, 0, 1, 1], [], []>} : vector<72x128xbf16>, vector<128x128xbf16>, vector<72x128xf32> -> vector<72x128xf32>
    %64 = arith.addf %60, %63 : vector<72x128xf32>
    %c0_74 = arith.constant 0 : index
    %c0_75 = arith.constant 0 : index
    %65 = vector.load %arg7[%c0_74, %c0_75] : memref<72x128xf32, #tpu.memory_space<vmem>>, vector<72x128xf32>
    tpu.vector_store %arg7[%c0_74, %c0_75], %64 {strides = array<i32>} : memref<72x128xf32, #tpu.memory_space<vmem>>, vector<72x128xf32>,
    %c0_76 = arith.constant 0 : index
    %c10 = arith.constant 10 : index
    %c0_77 = arith.constant 0 : index
    %66 = vector.load %arg2[%c0_76, %c10, %c0_77] : memref<1x352x128xbf16, #tpu.memory_space<vmem>>, vector<1x72x128xbf16>
    %67 = vector.shape_cast %66 : vector<1x72x128xbf16> to vector<72x128xbf16>
    %c0_78 = arith.constant 0 : index
    %c0_79 = arith.constant 0 : index
    %68 = vector.load %arg7[%c0_78, %c0_79] : memref<72x128xf32, #tpu.memory_space<vmem>>, vector<72x128xf32>
    %c8 = arith.constant 8 : index
    %c0_80 = arith.constant 0 : index
    %c0_81 = arith.constant 0 : index
    %69 = vector.load %arg3[%c8, %c0_80, %c0_81] : memref<9x128x128xbf16, #tpu.memory_space<vmem>>, vector<1x128x128xbf16>
    %70 = vector.shape_cast %69 : vector<1x128x128xbf16> to vector<128x128xbf16>
    %cst_82 = arith.constant dense<0.000000e+00> : vector<72x128xf32>
    %71 = tpu.matmul %67, %70, %cst_82 {dimension_numbers = #tpu.dot_dimension_numbers<[1], [0], [0], [1], [0, 0, 1, 1], [], []>} : vector<72x128xbf16>, vector<128x128xbf16>, vector<72x128xf32> -> vector<72x128xf32>
    %72 = arith.addf %68, %71 : vector<72x128xf32>
    %c0_83 = arith.constant 0 : index
    %c0_84 = arith.constant 0 : index
    %73 = vector.load %arg7[%c0_83, %c0_84] : memref<72x128xf32, #tpu.memory_space<vmem>>, vector<72x128xf32>
    tpu.vector_store %arg7[%c0_83, %c0_84], %72 {strides = array<i32>} : memref<72x128xf32, #tpu.memory_space<vmem>>, vector<72x128xf32>,
    %c0_85 = arith.constant 0 : index
    %c0_86 = arith.constant 0 : index
    %74 = vector.load %arg7[%c0_85, %c0_86] : memref<72x128xf32, #tpu.memory_space<vmem>>, vector<72x128xf32>
    %c0_87 = arith.constant 0 : index
    %c0_88 = arith.constant 0 : index
    %75 = vector.load %arg4[%c0_87, %c0_88] : memref<1x128xf32, #tpu.memory_space<vmem>>, vector<1x128xf32>
    %76 = vector.broadcast %75 : vector<1x128xf32> to vector<72x128xf32>
    %77 = arith.mulf %74, %76 : vector<72x128xf32>
    %c0_89 = arith.constant 0 : index
    %c0_90 = arith.constant 0 : index
    %78 = vector.load %arg5[%c0_89, %c0_90] : memref<1x128xf32, #tpu.memory_space<vmem>>, vector<1x128xf32>
    %79 = vector.broadcast %78 : vector<1x128xf32> to vector<72x128xf32>
    %80 = arith.addf %77, %79 : vector<72x128xf32>
    %cst_91 = arith.constant 0.000000e+00 : f32
    %81 = vector.broadcast %cst_91 : f32 to vector<72x128xf32>
    %82 = arith.maximumf %80, %81 : vector<72x128xf32>
    %83 = arith.truncf %82 : vector<72x128xf32> to vector<72x128xbf16>
    %c0_92 = arith.constant 0 : index
    %c0_93 = arith.constant 0 : index
    %c0_94 = arith.constant 0 : index
    %84 = vector.load %arg6[%c0_92, %c0_93, %c0_94] : memref<1x72x128xbf16, #tpu.memory_space<vmem>>, vector<1x72x128xbf16>
    %85 = vector.shape_cast %84 : vector<1x72x128xbf16> to vector<72x128xbf16>
    %86 = vector.shape_cast %83 : vector<72x128xbf16> to vector<1x72x128xbf16>
    tpu.vector_store %arg6[%c0_92, %c0_93, %c0_94], %86 {strides = array<i32>} : memref<1x72x128xbf16, #tpu.memory_space<vmem>>, vector<1x72x128xbf16>,
    return
  }
  func.func @transform_0(%arg0: i32, %arg1: i32) -> (i32, i32, i32) {
    %c0_i32 = arith.constant 0 : i32
    %c0_i32_0 = arith.constant 0 : i32
    %c0_i32_1 = arith.constant 0 : i32
    return %arg0, %c0_i32, %c0_i32_0 : i32, i32, i32
  }
  func.func @transform_1(%arg0: i32, %arg1: i32) -> (i32, i32, i32) {
    %c0_i32 = arith.constant 0 : i32
    %c0_i32_0 = arith.constant 0 : i32
    %c0_i32_1 = arith.constant 0 : i32
    return %c0_i32, %c0_i32_0, %arg1 : i32, i32, i32
  }
  func.func @transform_2(%arg0: i32, %arg1: i32) -> (i32, i32) {
    %c0_i32 = arith.constant 0 : i32
    %c0_i32_0 = arith.constant 0 : i32
    return %c0_i32, %arg1 : i32, i32
  }
  func.func @transform_3(%arg0: i32, %arg1: i32) -> (i32, i32) {
    %c0_i32 = arith.constant 0 : i32
    %c0_i32_0 = arith.constant 0 : i32
    return %c0_i32, %arg1 : i32, i32
  }
  func.func @transform_4(%arg0: i32, %arg1: i32) -> (i32, i32, i32) {
    %c0_i32 = arith.constant 0 : i32
    %c0_i32_0 = arith.constant 0 : i32
    return %arg0, %c0_i32, %arg1 : i32, i32, i32
  }
}

module attributes {stable_mosaic.version = 11 : i64} {
  func.func @_gemm_bn_kernel(%arg0: i32, %arg1: i32, %arg2: i32, %arg3: memref<128x128xbf16, #tpu.memory_space<vmem>>, %arg4: memref<128x128xbf16, #tpu.memory_space<vmem>>, %arg5: memref<1x128xf32, #tpu.memory_space<vmem>>, %arg6: memref<1x128xf32, #tpu.memory_space<vmem>>, %arg7: memref<128x128xbf16, #tpu.memory_space<vmem>>, %arg8: memref<128x128xf32, #tpu.memory_space<vmem>>) attributes {dimension_semantics = [#tpu.dimension_semantics<parallel>, #tpu.dimension_semantics<parallel>, #tpu.dimension_semantics<arbitrary>], iteration_bounds = array<i64: 1, 1, 1>, scalar_prefetch = 0 : i64, scratch_operands = 1 : i64, tpu.core_type = #tpu.core_type<tc>, window_params = [{transform_indices = @transform_0, window_bounds = array<i64: 128, 128>}, {transform_indices = @transform_1, window_bounds = array<i64: 128, 128>}, {transform_indices = @transform_2, window_bounds = array<i64: 1, 128>}, {transform_indices = @transform_3, window_bounds = array<i64: 1, 128>}, {transform_indices = @transform_4, window_bounds = array<i64: 128, 128>}]} {
    %c0_i32 = arith.constant 0 : i32
    %0 = arith.cmpi eq, %arg2, %c0_i32 : i32
    %1 = arith.extui %0 : i1 to i32
    %c0_i32_0 = arith.constant 0 : i32
    %2 = arith.cmpi ne, %1, %c0_i32_0 : i32
    scf.if %2 {
      %cst_10 = arith.constant 0.000000e+00 : f32
      %12 = vector.broadcast %cst_10 : f32 to vector<128x128xf32>
      %c0_11 = arith.constant 0 : index
      %c0_12 = arith.constant 0 : index
      %13 = vector.load %arg8[%c0_11, %c0_12] : memref<128x128xf32, #tpu.memory_space<vmem>>, vector<128x128xf32>
      tpu.vector_store %arg8[%c0_11, %c0_12], %12 {strides = array<i32>} : memref<128x128xf32, #tpu.memory_space<vmem>>, vector<128x128xf32>,
    } else {
    }
    %c0 = arith.constant 0 : index
    %c0_1 = arith.constant 0 : index
    %3 = vector.load %arg8[%c0, %c0_1] : memref<128x128xf32, #tpu.memory_space<vmem>>, vector<128x128xf32>
    %c0_2 = arith.constant 0 : index
    %c0_3 = arith.constant 0 : index
    %4 = vector.load %arg3[%c0_2, %c0_3] : memref<128x128xbf16, #tpu.memory_space<vmem>>, vector<128x128xbf16>
    %c0_4 = arith.constant 0 : index
    %c0_5 = arith.constant 0 : index
    %5 = vector.load %arg4[%c0_4, %c0_5] : memref<128x128xbf16, #tpu.memory_space<vmem>>, vector<128x128xbf16>
    %cst = arith.constant dense<0.000000e+00> : vector<128x128xf32>
    %6 = tpu.matmul %4, %5, %cst {dimension_numbers = #tpu.dot_dimension_numbers<[1], [0], [0], [1], [0, 0, 1, 1], [], []>} : vector<128x128xbf16>, vector<128x128xbf16>, vector<128x128xf32> -> vector<128x128xf32>
    %7 = arith.addf %3, %6 : vector<128x128xf32>
    %c0_6 = arith.constant 0 : index
    %c0_7 = arith.constant 0 : index
    %8 = vector.load %arg8[%c0_6, %c0_7] : memref<128x128xf32, #tpu.memory_space<vmem>>, vector<128x128xf32>
    tpu.vector_store %arg8[%c0_6, %c0_7], %7 {strides = array<i32>} : memref<128x128xf32, #tpu.memory_space<vmem>>, vector<128x128xf32>,
    %c0_i32_8 = arith.constant 0 : i32
    %9 = arith.cmpi eq, %arg2, %c0_i32_8 : i32
    %10 = arith.extui %9 : i1 to i32
    %c0_i32_9 = arith.constant 0 : i32
    %11 = arith.cmpi ne, %10, %c0_i32_9 : i32
    scf.if %11 {
      %c0_10 = arith.constant 0 : index
      %c0_11 = arith.constant 0 : index
      %12 = vector.load %arg8[%c0_10, %c0_11] : memref<128x128xf32, #tpu.memory_space<vmem>>, vector<128x128xf32>
      %c0_12 = arith.constant 0 : index
      %c0_13 = arith.constant 0 : index
      %13 = vector.load %arg5[%c0_12, %c0_13] : memref<1x128xf32, #tpu.memory_space<vmem>>, vector<1x128xf32>
      %14 = vector.broadcast %13 : vector<1x128xf32> to vector<128x128xf32>
      %15 = arith.mulf %12, %14 : vector<128x128xf32>
      %c0_14 = arith.constant 0 : index
      %c0_15 = arith.constant 0 : index
      %16 = vector.load %arg6[%c0_14, %c0_15] : memref<1x128xf32, #tpu.memory_space<vmem>>, vector<1x128xf32>
      %17 = vector.broadcast %16 : vector<1x128xf32> to vector<128x128xf32>
      %18 = arith.addf %15, %17 : vector<128x128xf32>
      %19 = arith.truncf %18 : vector<128x128xf32> to vector<128x128xbf16>
      %c0_16 = arith.constant 0 : index
      %c0_17 = arith.constant 0 : index
      %20 = vector.load %arg7[%c0_16, %c0_17] : memref<128x128xbf16, #tpu.memory_space<vmem>>, vector<128x128xbf16>
      tpu.vector_store %arg7[%c0_16, %c0_17], %19 {strides = array<i32>} : memref<128x128xbf16, #tpu.memory_space<vmem>>, vector<128x128xbf16>,
    } else {
    }
    return
  }
  func.func @transform_0(%arg0: i32, %arg1: i32, %arg2: i32) -> (i32, i32) {
    %c0_i32 = arith.constant 0 : i32
    return %arg1, %arg2 : i32, i32
  }
  func.func @transform_1(%arg0: i32, %arg1: i32, %arg2: i32) -> (i32, i32) {
    %c0_i32 = arith.constant 0 : i32
    return %arg2, %arg0 : i32, i32
  }
  func.func @transform_2(%arg0: i32, %arg1: i32, %arg2: i32) -> (i32, i32) {
    %c0_i32 = arith.constant 0 : i32
    %c0_i32_0 = arith.constant 0 : i32
    return %c0_i32, %arg0 : i32, i32
  }
  func.func @transform_3(%arg0: i32, %arg1: i32, %arg2: i32) -> (i32, i32) {
    %c0_i32 = arith.constant 0 : i32
    %c0_i32_0 = arith.constant 0 : i32
    return %c0_i32, %arg0 : i32, i32
  }
  func.func @transform_4(%arg0: i32, %arg1: i32, %arg2: i32) -> (i32, i32) {
    %c0_i32 = arith.constant 0 : i32
    return %arg1, %arg0 : i32, i32
  }
}

module attributes {stable_mosaic.version = 11 : i64} {
  func.func @_gemm_bn_kernel(%arg0: i32, %arg1: i32, %arg2: i32, %arg3: memref<128x128xbf16, #tpu.memory_space<vmem>>, %arg4: memref<128x128xbf16, #tpu.memory_space<vmem>>, %arg5: memref<1x128xf32, #tpu.memory_space<vmem>>, %arg6: memref<1x128xf32, #tpu.memory_space<vmem>>, %arg7: memref<128x128xbf16, #tpu.memory_space<vmem>>, %arg8: memref<128x128xbf16, #tpu.memory_space<vmem>>, %arg9: memref<128x128xf32, #tpu.memory_space<vmem>>) attributes {dimension_semantics = [#tpu.dimension_semantics<parallel>, #tpu.dimension_semantics<parallel>, #tpu.dimension_semantics<arbitrary>], iteration_bounds = array<i64: 1, 1, 1>, scalar_prefetch = 0 : i64, scratch_operands = 1 : i64, tpu.core_type = #tpu.core_type<tc>, window_params = [{transform_indices = @transform_0, window_bounds = array<i64: 128, 128>}, {transform_indices = @transform_1, window_bounds = array<i64: 128, 128>}, {transform_indices = @transform_2, window_bounds = array<i64: 1, 128>}, {transform_indices = @transform_3, window_bounds = array<i64: 1, 128>}, {transform_indices = @transform_4, window_bounds = array<i64: 128, 128>}, {transform_indices = @transform_5, window_bounds = array<i64: 128, 128>}]} {
    %c0_i32 = arith.constant 0 : i32
    %0 = arith.cmpi eq, %arg2, %c0_i32 : i32
    %1 = arith.extui %0 : i1 to i32
    %c0_i32_0 = arith.constant 0 : i32
    %2 = arith.cmpi ne, %1, %c0_i32_0 : i32
    scf.if %2 {
      %cst_10 = arith.constant 0.000000e+00 : f32
      %12 = vector.broadcast %cst_10 : f32 to vector<128x128xf32>
      %c0_11 = arith.constant 0 : index
      %c0_12 = arith.constant 0 : index
      %13 = vector.load %arg9[%c0_11, %c0_12] : memref<128x128xf32, #tpu.memory_space<vmem>>, vector<128x128xf32>
      tpu.vector_store %arg9[%c0_11, %c0_12], %12 {strides = array<i32>} : memref<128x128xf32, #tpu.memory_space<vmem>>, vector<128x128xf32>,
    } else {
    }
    %c0 = arith.constant 0 : index
    %c0_1 = arith.constant 0 : index
    %3 = vector.load %arg9[%c0, %c0_1] : memref<128x128xf32, #tpu.memory_space<vmem>>, vector<128x128xf32>
    %c0_2 = arith.constant 0 : index
    %c0_3 = arith.constant 0 : index
    %4 = vector.load %arg3[%c0_2, %c0_3] : memref<128x128xbf16, #tpu.memory_space<vmem>>, vector<128x128xbf16>
    %c0_4 = arith.constant 0 : index
    %c0_5 = arith.constant 0 : index
    %5 = vector.load %arg4[%c0_4, %c0_5] : memref<128x128xbf16, #tpu.memory_space<vmem>>, vector<128x128xbf16>
    %cst = arith.constant dense<0.000000e+00> : vector<128x128xf32>
    %6 = tpu.matmul %4, %5, %cst {dimension_numbers = #tpu.dot_dimension_numbers<[1], [0], [0], [1], [0, 0, 1, 1], [], []>} : vector<128x128xbf16>, vector<128x128xbf16>, vector<128x128xf32> -> vector<128x128xf32>
    %7 = arith.addf %3, %6 : vector<128x128xf32>
    %c0_6 = arith.constant 0 : index
    %c0_7 = arith.constant 0 : index
    %8 = vector.load %arg9[%c0_6, %c0_7] : memref<128x128xf32, #tpu.memory_space<vmem>>, vector<128x128xf32>
    tpu.vector_store %arg9[%c0_6, %c0_7], %7 {strides = array<i32>} : memref<128x128xf32, #tpu.memory_space<vmem>>, vector<128x128xf32>,
    %c0_i32_8 = arith.constant 0 : i32
    %9 = arith.cmpi eq, %arg2, %c0_i32_8 : i32
    %10 = arith.extui %9 : i1 to i32
    %c0_i32_9 = arith.constant 0 : i32
    %11 = arith.cmpi ne, %10, %c0_i32_9 : i32
    scf.if %11 {
      %c0_10 = arith.constant 0 : index
      %c0_11 = arith.constant 0 : index
      %12 = vector.load %arg9[%c0_10, %c0_11] : memref<128x128xf32, #tpu.memory_space<vmem>>, vector<128x128xf32>
      %c0_12 = arith.constant 0 : index
      %c0_13 = arith.constant 0 : index
      %13 = vector.load %arg5[%c0_12, %c0_13] : memref<1x128xf32, #tpu.memory_space<vmem>>, vector<1x128xf32>
      %14 = vector.broadcast %13 : vector<1x128xf32> to vector<128x128xf32>
      %15 = arith.mulf %12, %14 : vector<128x128xf32>
      %c0_14 = arith.constant 0 : index
      %c0_15 = arith.constant 0 : index
      %16 = vector.load %arg6[%c0_14, %c0_15] : memref<1x128xf32, #tpu.memory_space<vmem>>, vector<1x128xf32>
      %17 = vector.broadcast %16 : vector<1x128xf32> to vector<128x128xf32>
      %18 = arith.addf %15, %17 : vector<128x128xf32>
      %c0_16 = arith.constant 0 : index
      %c0_17 = arith.constant 0 : index
      %19 = vector.load %arg7[%c0_16, %c0_17] : memref<128x128xbf16, #tpu.memory_space<vmem>>, vector<128x128xbf16>
      %20 = arith.extf %19 : vector<128x128xbf16> to vector<128x128xf32>
      %21 = arith.addf %18, %20 : vector<128x128xf32>
      %cst_18 = arith.constant 0.000000e+00 : f32
      %22 = vector.broadcast %cst_18 : f32 to vector<128x128xf32>
      %23 = arith.maximumf %21, %22 : vector<128x128xf32>
      %24 = arith.truncf %23 : vector<128x128xf32> to vector<128x128xbf16>
      %c0_19 = arith.constant 0 : index
      %c0_20 = arith.constant 0 : index
      %25 = vector.load %arg8[%c0_19, %c0_20] : memref<128x128xbf16, #tpu.memory_space<vmem>>, vector<128x128xbf16>
      tpu.vector_store %arg8[%c0_19, %c0_20], %24 {strides = array<i32>} : memref<128x128xbf16, #tpu.memory_space<vmem>>, vector<128x128xbf16>,
    } else {
    }
    return
  }
  func.func @transform_0(%arg0: i32, %arg1: i32, %arg2: i32) -> (i32, i32) {
    %c0_i32 = arith.constant 0 : i32
    return %arg1, %arg2 : i32, i32
  }
  func.func @transform_1(%arg0: i32, %arg1: i32, %arg2: i32) -> (i32, i32) {
    %c0_i32 = arith.constant 0 : i32
    return %arg2, %arg0 : i32, i32
  }
  func.func @transform_2(%arg0: i32, %arg1: i32, %arg2: i32) -> (i32, i32) {
    %c0_i32 = arith.constant 0 : i32
    %c0_i32_0 = arith.constant 0 : i32
    return %c0_i32, %arg0 : i32, i32
  }
  func.func @transform_3(%arg0: i32, %arg1: i32, %arg2: i32) -> (i32, i32) {
    %c0_i32 = arith.constant 0 : i32
    %c0_i32_0 = arith.constant 0 : i32
    return %c0_i32, %arg0 : i32, i32
  }
  func.func @transform_4(%arg0: i32, %arg1: i32, %arg2: i32) -> (i32, i32) {
    %c0_i32 = arith.constant 0 : i32
    return %arg1, %arg0 : i32, i32
  }
  func.func @transform_5(%arg0: i32, %arg1: i32, %arg2: i32) -> (i32, i32) {
    %c0_i32 = arith.constant 0 : i32
    return %arg1, %arg0 : i32, i32
  }
}

</mosaic_0001>

<llo_original>
// kernel: forward.9
$region0: #{forward.9}
  #allocation0 [shape = 'u32[]', space=smem, size = 0x4, offset = 0x4, fixed_abs, tag = 'smem constant byte address 0x4 - core index']
  #allocation1 [shape = 'u32[72,128]{1,0:T(1,128)}', space=vmem, size = 0x9000, scoped, tag = 'internal scratch']
  #allocation2 [shape = 'f32[256,128]{1,0:T(8,128)}', space=vmem, size = 0x20000, scoped, tag = 'scratch operand']
  %s0 = inlined_call_operand.vmem [shape: bf16[512,128], index: 0, kind: input, shape index: {}]
  %s1 = inlined_call_operand.vmem [shape: bf16[128,128], index: 1, kind: input, shape index: {}]
  %s2 = inlined_call_operand.vmem [shape: f32[1,128], index: 2, kind: input, shape index: {}]
  %s3 = inlined_call_operand.vmem [shape: f32[1,128], index: 3, kind: input, shape index: {}]
  %s4 = inlined_call_operand.vmem [shape: bf16[512,128], index: 4, kind: input, shape index: {}]
  %s5 = inlined_call_operand.vmem [shape: bf16[512,128], index: 5, kind: output, shape index: {}]
  %s6 = sld [smem:[#allocation0]]
  $region61: #{forward.9} parent=0
    _
  %s8 = ssub.s32 1, %s6
  %s9 = scalar_select 0, %s8, %s6
  loop: start=0, step=1, limit=4
  $region2: #{forward.9} parent=0 // loop_pre_header
    _
  $region3: #{forward.9} parent=0 // loop_header
    %s11 = sphi 0, %s15
    %p12 = scmp.ge.s32.totalorder %s11, 4
    %s18 = sphi 0, %s37
    %s19 = sphi 0, %s33
    %s20 = sphi 0, %s29
    %s21 = sphi 0, %s18
    %s22 = sphi 0, %s19
    %s23 = sphi 0, %s20
    %s24 = sphi 0, %s21
    %s25 = sphi 0, %s22
    %s26 = sphi 0, %s23
    %s42 = sphi 0, %s44
    %s45 = sphi 0, %s42
    %s46 = sphi 0, %s45
    %s62 = sphi 0, %s46
    %s70 = sphi 0, %s72
    %s73 = sphi 0, %s70
    %s74 = sphi 0, %s73
    %s90 = sphi 0, %s74
    %s96 = sphi 0, %s98
    %s99 = sphi 0, %s96
    %s100 = sphi 0, %s99
    %s116 = sphi 0, %s100
    %s122 = sphi 0, %s124
    %s125 = sphi 0, %s122
    %s126 = sphi 0, %s125
    %s142 = sphi 0, %s126
    %s150 = sphi 0, %s152
    %s153 = sphi 0, %s150
    %s154 = sphi 0, %s153
    %s170 = sphi 0, %s154
    %s178 = sphi 0, %s180
    %s181 = sphi 0, %s178
    %s182 = sphi 0, %s181
    %s198 = sphi 0, %s182
  $region4: #{forward.9} parent=0 // loop_header_branch
    %14 = sbr.rel (%p12) target = $region8
  $region5: #{forward.9} parent=0 // loop_body
    %s16 = ssub.s32 %s11, 1
    %s17 = ssub.s32 %s11, 2
    %s27 = sadd.s32 1, %s20
    %p28 = scmp.ge.s32.totalorder %s27, 1
    %s29 = scalar_select %p28, 0, %s27
    %s30 = sadd.s32 1, %s19
    %s31 = scalar_select %p28, %s30, %s19
    %p32 = scmp.ge.s32.totalorder %s31, 2
    %s33 = scalar_select %p32, 0, %s31
    %s34 = sadd.s32 1, %s18
    %s35 = scalar_select %p32, %s34, %s18
    %p36 = scmp.ge.s32.totalorder %s35, 1
    %s37 = scalar_select %p36, 0, %s35
    %s38 = ssub.s32 %s19, %s33
    %s39 = ssub.s32 %s20, %s29
    %s40 = sor.u32 %s38, %s39
    %p41 = scmp.eq.s32.totalorder %s40, 0
    %s43 = sadd.s32 %s42, 1
    %s44 = scalar_select %p41, %s42, %s43
    %p47 = pneg %p41
    %p48 = scmp.eq.s32.totalorder %s11, 1
    %p49 = por %p47, %p48
    %p50 = scmp.ne.s32.totalorder %s42, %s45
    %p51 = scmp.eq.s32.totalorder %s11, 0
    %p52 = por %p50, %p51
    %p53 = scmp.ne.s32.totalorder %s42, %s45
    %p54 = scmp.eq.s32.totalorder %s16, 1
    %p55 = por %p53, %p54
    %p56 = scmp.ne.s32.totalorder %s45, %s46
    %p57 = scmp.eq.s32.totalorder %s16, 0
    %p58 = por %p56, %p57
    %p59 = scmp.ne.s32.totalorder %s45, %s46
    %p60 = scmp.eq.s32.totalorder %s17, 1
    %p61 = por %p59, %p60
    %p63 = scmp.ne.s32.totalorder %s46, %s62
    %p64 = scmp.eq.s32.totalorder %s17, 0
    %p65 = por %p63, %p64
    %s66 = ssub.s32 %s20, %s29
    %s67 = ssub.s32 %s18, %s37
    %s68 = sor.u32 %s66, %s67
    %p69 = scmp.eq.s32.totalorder %s68, 0
    %s71 = sadd.s32 %s70, 1
    %s72 = scalar_select %p69, %s70, %s71
    %p75 = pneg %p69
    %p76 = scmp.eq.s32.totalorder %s11, 1
    %p77 = por %p75, %p76
    %p78 = scmp.ne.s32.totalorder %s70, %s73
    %p79 = scmp.eq.s32.totalorder %s11, 0
    %p80 = por %p78, %p79
    %p81 = scmp.ne.s32.totalorder %s70, %s73
    %p82 = scmp.eq.s32.totalorder %s16, 1
    %p83 = por %p81, %p82
    %p84 = scmp.ne.s32.totalorder %s73, %s74
    %p85 = scmp.eq.s32.totalorder %s16, 0
    %p86 = por %p84, %p85
    %p87 = scmp.ne.s32.totalorder %s73, %s74
    %p88 = scmp.eq.s32.totalorder %s17, 1
    %p89 = por %p87, %p88
    %p91 = scmp.ne.s32.totalorder %s74, %s90
    %p92 = scmp.eq.s32.totalorder %s17, 0
    %p93 = por %p91, %p92
    %s94 = ssub.s32 %s18, %s37
    %p95 = scmp.eq.s32.totalorder %s94, 0
    %s97 = sadd.s32 %s96, 1
    %s98 = scalar_select %p95, %s96, %s97
    %p101 = pneg %p95
    %p102 = scmp.eq.s32.totalorder %s11, 1
    %p103 = por %p101, %p102
    %p104 = scmp.ne.s32.totalorder %s96, %s99
    %p105 = scmp.eq.s32.totalorder %s11, 0
    %p106 = por %p104, %p105
    %p107 = scmp.ne.s32.totalorder %s96, %s99
    %p108 = scmp.eq.s32.totalorder %s16, 1
    %p109 = por %p107, %p108
    %p110 = scmp.ne.s32.totalorder %s99, %s100
    %p111 = scmp.eq.s32.totalorder %s16, 0
    %p112 = por %p110, %p111
    %p113 = scmp.ne.s32.totalorder %s99, %s100
    %p114 = scmp.eq.s32.totalorder %s17, 1
    %p115 = por %p113, %p114
    %p117 = scmp.ne.s32.totalorder %s100, %s116
    %p118 = scmp.eq.s32.totalorder %s17, 0
    %p119 = por %p117, %p118
    %s120 = ssub.s32 %s18, %s37
    %p121 = scmp.eq.s32.totalorder %s120, 0
    %s123 = sadd.s32 %s122, 1
    %s124 = scalar_select %p121, %s122, %s123
    %p127 = pneg %p121
    %p128 = scmp.eq.s32.totalorder %s11, 1
    %p129 = por %p127, %p128
    %p130 = scmp.ne.s32.totalorder %s122, %s125
    %p131 = scmp.eq.s32.totalorder %s11, 0
    %p132 = por %p130, %p131
    %p133 = scmp.ne.s32.totalorder %s122, %s125
    %p134 = scmp.eq.s32.totalorder %s16, 1
    %p135 = por %p133, %p134
    %p136 = scmp.ne.s32.totalorder %s125, %s126
    %p137 = scmp.eq.s32.totalorder %s16, 0
    %p138 = por %p136, %p137
    %p139 = scmp.ne.s32.totalorder %s125, %s126
    %p140 = scmp.eq.s32.totalorder %s17, 1
    %p141 = por %p139, %p140
    %p143 = scmp.ne.s32.totalorder %s126, %s142
    %p144 = scmp.eq.s32.totalorder %s17, 0
    %p145 = por %p143, %p144
    %s146 = ssub.s32 %s19, %s33
    %s147 = ssub.s32 %s18, %s37
    %s148 = sor.u32 %s146, %s147
    %p149 = scmp.eq.s32.totalorder %s148, 0
    %s151 = sadd.s32 %s150, 1
    %s152 = scalar_select %p149, %s150, %s151
    %p155 = pneg %p149
    %p156 = scmp.eq.s32.totalorder %s11, 1
    %p157 = por %p155, %p156
    %p158 = scmp.ne.s32.totalorder %s150, %s153
    %p159 = scmp.eq.s32.totalorder %s11, 0
    %p160 = por %p158, %p159
    %p161 = scmp.ne.s32.totalorder %s150, %s153
    %p162 = scmp.eq.s32.totalorder %s16, 1
    %p163 = por %p161, %p162
    %p164 = scmp.ne.s32.totalorder %s153, %s154
    %p165 = scmp.eq.s32.totalorder %s16, 0
    %p166 = por %p164, %p165
    %p167 = scmp.ne.s32.totalorder %s153, %s154
    %p168 = scmp.eq.s32.totalorder %s17, 1
    %p169 = por %p167, %p168
    %p171 = scmp.ne.s32.totalorder %s154, %s170
    %p172 = scmp.eq.s32.totalorder %s17, 0
    %p173 = por %p171, %p172
    %s174 = ssub.s32 %s19, %s33
    %s175 = ssub.s32 %s18, %s37
    %s176 = sor.u32 %s174, %s175
    %p177 = scmp.eq.s32.totalorder %s176, 0
    %s179 = sadd.s32 %s178, 1
    %s180 = scalar_select %p177, %s178, %s179
    %p183 = pneg %p177
    %p184 = scmp.eq.s32.totalorder %s11, 1
    %p185 = por %p183, %p184
    %p186 = scmp.ne.s32.totalorder %s178, %s181
    %p187 = scmp.eq.s32.totalorder %s11, 0
    %p188 = por %p186, %p187
    %p189 = scmp.ne.s32.totalorder %s178, %s181
    %p190 = scmp.eq.s32.totalorder %s16, 1
    %p191 = por %p189, %p190
    %p192 = scmp.ne.s32.totalorder %s181, %s182
    %p193 = scmp.eq.s32.totalorder %s16, 0
    %p194 = por %p192, %p193
    %p195 = scmp.ne.s32.totalorder %s181, %s182
    %p196 = scmp.eq.s32.totalorder %s17, 1
    %p197 = por %p195, %p196
    %p199 = scmp.ne.s32.totalorder %s182, %s198
    %p200 = scmp.eq.s32.totalorder %s17, 0
    %p201 = por %p199, %p200
    %p202 = scmp.le.s32.totalorder 1, %s11
    %p203 = scmp.lt.s32.totalorder %s11, 3
    %p204 = pnand %p202, %p203
    %p205 = pneg %p204
    // Predicated region
    $region9: #{forward.9} parent=5 // pred_check
      _
    $region10: #{forward.9} parent=5 // pred_check_branch
      %207 = sbr.rel (%p204) target = $region12
    $region11: #{forward.9} parent=5 // pred_region
      %s208 = ssub.s32 %s11, 1
      // Predicated region
      $region13: #{forward.9} parent=11 // pred_check
        %p209 = pneg %p86
      $region14: #{forward.9} parent=11 // pred_check_branch
        %211 = sbr.rel (%p209) target = $region16
      $region15: #{forward.9} parent=11 // pred_region
        %s212 = smul.u32 16, %s23
        %p213 = scmp.lt.s32.totalorder %s212, 15
        %s214 = scalar_select %p213, %s212, 15
        %p215 = scmp.lt.s32.totalorder %s21, 0
        %s216 = scalar_select %p215, %s21, 0
        %s217 = sadd.s32 %s216, %s214
        %s218 = smul.addr %s217, 4
        %s219 = scalar_lea.vmem %s1, %s218
        %s220 = smul.u32 16, %s23
      $region16: #{forward.9} parent=11 // pred_fallthru
        _
      // Predicated region
      $region17: #{forward.9} parent=11 // pred_check
        %p221 = pneg %p112
      $region18: #{forward.9} parent=11 // pred_check_branch
        %223 = sbr.rel (%p221) target = $region20
      $region19: #{forward.9} parent=11 // pred_region
        %p224 = scmp.lt.s32.totalorder %s21, 0
        %s225 = scalar_select %p224, %s21, 0
        %s226 = scalar_lea.vmem %s2, %s225
      $region20: #{forward.9} parent=11 // pred_fallthru
        _
      // Predicated region
      $region21: #{forward.9} parent=11 // pred_check
        %p227 = pneg %p138
      $region22: #{forward.9} parent=11 // pred_check_branch
        %229 = sbr.rel (%p227) target = $region24
      $region23: #{forward.9} parent=11 // pred_region
        %p230 = scmp.lt.s32.totalorder %s21, 0
        %s231 = scalar_select %p230, %s21, 0
        %s232 = scalar_lea.vmem %s3, %s231
      $region24: #{forward.9} parent=11 // pred_fallthru
        _
    $region12: #{forward.9} parent=5 // pred_fallthru
      _
    %p233 = scmp.lt.s32.totalorder %s11, 2
    // Predicated region
    $region25: #{forward.9} parent=5 // pred_check
      %p234 = pneg %p233
    $region26: #{forward.9} parent=5 // pred_check_branch
      %236 = sbr.rel (%p234) target = $region28
    $region27: #{forward.9} parent=5 // pred_region
      // Predicated region
      $region29: #{forward.9} parent=27 // pred_check
        %p237 = pneg %p52
      $region30: #{forward.9} parent=27 // pred_check_branch
        %239 = sbr.rel (%p237) target = $region32
      $region31: #{forward.9} parent=27 // pred_region
        %s240 = smul.u32 32, %s19
        %p241 = scmp.lt.s32.totalorder %s240, 63
        %s242 = scalar_select %p241, %s240, 63
        %p243 = scmp.lt.s32.totalorder %s20, 0
        %s244 = scalar_select %p243, %s20, 0
        %s245 = sadd.s32 %s244, %s242
        %s246 = smul.addr %s245, 4
        %s247 = scalar_lea.vmem %s0, %s246
        %s248 = smul.u32 32, %s19
      $region32: #{forward.9} parent=27 // pred_fallthru
        _
      // Predicated region
      $region33: #{forward.9} parent=27 // pred_check
        %p249 = pneg %p160
      $region34: #{forward.9} parent=27 // pred_check_branch
        %251 = sbr.rel (%p249) target = $region36
      $region35: #{forward.9} parent=27 // pred_region
        %s252 = smul.u32 32, %s19
        %p253 = scmp.lt.s32.totalorder %s252, 63
        %s254 = scalar_select %p253, %s252, 63
        %p255 = scmp.lt.s32.totalorder %s18, 0
        %s256 = scalar_select %p255, %s18, 0
        %s257 = sadd.s32 %s256, %s254
        %s258 = smul.addr %s257, 4
        %s259 = scalar_lea.vmem %s4, %s258
        %s260 = smul.u32 32, %s19
      $region36: #{forward.9} parent=27 // pred_fallthru
        _
    $region28: #{forward.9} parent=5 // pred_fallthru
      _
    %p261 = scmp.le.s32.totalorder 1, %s11
    %p262 = scmp.lt.s32.totalorder %s11, 3
    %p263 = pnand %p261, %p262
    %p264 = pneg %p263
    // Predicated region
    $region37: #{forward.9} parent=5 // pred_check
      _
    $region38: #{forward.9} parent=5 // pred_check_branch
      %266 = sbr.rel (%p263) target = $region40
    $region39: #{forward.9} parent=5 // pred_region
      %s267 = ssub.s32 %s11, 1
      %s268 = smul.u32 32, %s22
      %p269 = scmp.lt.s32.totalorder %s268, 63
      %s270 = scalar_select %p269, %s268, 63
      %p271 = scmp.lt.s32.totalorder %s23, 0
      %s272 = scalar_select %p271, %s23, 0
      %s273 = sadd.s32 %s272, %s270
      %s274 = smul.addr %s273, 4
      %s275 = scalar_lea.vmem %s0, %s274
      %p276 = pneg %p58
      %p277 = pneg %p55
      %s278 = smul.u32 16, %s23
      %p279 = scmp.lt.s32.totalorder %s278, 15
      %s280 = scalar_select %p279, %s278, 15
      %p281 = scmp.lt.s32.totalorder %s21, 0
      %s282 = scalar_select %p281, %s21, 0
      %s283 = sadd.s32 %s282, %s280
      %s284 = smul.addr %s283, 4
      %s285 = scalar_lea.vmem %s1, %s284
      %p286 = pneg %p86
      %p287 = pneg %p83
      %p288 = scmp.lt.s32.totalorder %s21, 0
      %s289 = scalar_select %p288, %s21, 0
      %s290 = scalar_lea.vmem %s2, %s289
      %p291 = pneg %p112
      %p292 = pneg %p109
      %p293 = scmp.lt.s32.totalorder %s21, 0
      %s294 = scalar_select %p293, %s21, 0
      %s295 = scalar_lea.vmem %s3, %s294
      %p296 = pneg %p138
      %p297 = pneg %p135
      %s298 = smul.u32 32, %s22
      %p299 = scmp.lt.s32.totalorder %s298, 63
      %s300 = scalar_select %p299, %s298, 63
      %p301 = scmp.lt.s32.totalorder %s21, 0
      %s302 = scalar_select %p301, %s21, 0
      %s303 = sadd.s32 %s302, %s300
      %s304 = smul.addr %s303, 4
      %s305 = scalar_lea.vmem %s4, %s304
      %p306 = pneg %p166
      %p307 = pneg %p163
      %p308 = pneg %p194
      %p309 = pneg %p191
      %s310 = smul.u32 32, %s22
      %p311 = scmp.lt.s32.totalorder %s310, 63
      %s312 = scalar_select %p311, %s310, 63
      %p313 = scmp.lt.s32.totalorder %s21, 0
      %s314 = scalar_select %p313, %s21, 0
      %s315 = sadd.s32 %s314, %s312
      %s316 = smul.addr %s315, 4
      %s317 = scalar_lea.vmem %s5, %s316
      %s318 = smul.u32 32, %s22
      %p319 = scmp.lt.s32.totalorder %s318, 63
      %s320 = scalar_select %p319, %s318, 63
      %p321 = scmp.lt.s32.totalorder %s23, 0
      %s322 = scalar_select %p321, %s23, 0
      %s323 = sadd.s32 %s322, %s320
      %s324 = smul.addr %s323, 4
      %s325 = scalar_lea.vmem %s0, %s324
      %s326 = smul.u32 32, %s22
      %s327 = smul.u32 16, %s23
      %p328 = scmp.lt.s32.totalorder %s327, 15
      %s329 = scalar_select %p328, %s327, 15
      %p330 = scmp.lt.s32.totalorder %s21, 0
      %s331 = scalar_select %p330, %s21, 0
      %s332 = sadd.s32 %s331, %s329
      %s333 = smul.addr %s332, 4
      %s334 = scalar_lea.vmem %s1, %s333
      %s335 = smul.u32 16, %s23
      %p336 = scmp.lt.s32.totalorder %s21, 0
      %s337 = scalar_select %p336, %s21, 0
      %s338 = scalar_lea.vmem %s2, %s337
      %p339 = scmp.lt.s32.totalorder %s21, 0
      %s340 = scalar_select %p339, %s21, 0
      %s341 = scalar_lea.vmem %s3, %s340
      %s342 = smul.u32 32, %s22
      %p343 = scmp.lt.s32.totalorder %s342, 63
      %s344 = scalar_select %p343, %s342, 63
      %p345 = scmp.lt.s32.totalorder %s21, 0
      %s346 = scalar_select %p345, %s21, 0
      %s347 = sadd.s32 %s346, %s344
      %s348 = smul.addr %s347, 4
      %s349 = scalar_lea.vmem %s4, %s348
      %s350 = smul.u32 32, %s22
      %s351 = smul.u32 32, %s22
      %p352 = scmp.lt.s32.totalorder %s351, 63
      %s353 = scalar_select %p352, %s351, 63
      %p354 = scmp.lt.s32.totalorder %s21, 0
      %s355 = scalar_select %p354, %s21, 0
      %s356 = sadd.s32 %s355, %s353
      %s357 = smul.addr %s356, 4
      %s358 = scalar_lea.vmem %s5, %s357
      %s359 = smul.u32 32, %s22
      %p360 = scmp.eq.s32.totalorder %s23, 0
      // Predicated region
      $region41: #{forward.9} parent=39 // pred_check
        %p361 = pneg %p360
      $region42: #{forward.9} parent=39 // pred_check_branch
        %363 = sbr.rel (%p361) target = $region44
      $region43: #{forward.9} parent=39 // pred_region
        %364 = vst [vmem:[#allocation2] sm:$0xff] 0.0
        %365 = vst [vmem:[#allocation2 + $0x8] sm:$0xff] 0.0
        %366 = vst [vmem:[#allocation2 + $0x10] sm:$0xff] 0.0
        %367 = vst [vmem:[#allocation2 + $0x18] sm:$0xff] 0.0
        %368 = vst [vmem:[#allocation2 + $0x20] sm:$0xff] 0.0
        %369 = vst [vmem:[#allocation2 + $0x28] sm:$0xff] 0.0
        %370 = vst [vmem:[#allocation2 + $0x30] sm:$0xff] 0.0
        %371 = vst [vmem:[#allocation2 + $0x38] sm:$0xff] 0.0
        %372 = vst [vmem:[#allocation2 + $0x40] sm:$0xff] 0.0
        %373 = vst [vmem:[#allocation2 + $0x48] sm:$0xff] 0.0
        %374 = vst [vmem:[#allocation2 + $0x50] sm:$0xff] 0.0
        %375 = vst [vmem:[#allocation2 + $0x58] sm:$0xff] 0.0
        %376 = vst [vmem:[#allocation2 + $0x60] sm:$0xff] 0.0
        %377 = vst [vmem:[#allocation2 + $0x68] sm:$0xff] 0.0
        %378 = vst [vmem:[#allocation2 + $0x70] sm:$0xff] 0.0
        %379 = vst [vmem:[#allocation2 + $0x78] sm:$0xff] 0.0
        %380 = vst [vmem:[#allocation2 + $0x80] sm:$0xff] 0.0
        %381 = vst [vmem:[#allocation2 + $0x88] sm:$0xff] 0.0
        %382 = vst [vmem:[#allocation2 + $0x90] sm:$0xff] 0.0
        %383 = vst [vmem:[#allocation2 + $0x98] sm:$0xff] 0.0
        %384 = vst [vmem:[#allocation2 + $0xa0] sm:$0xff] 0.0
        %385 = vst [vmem:[#allocation2 + $0xa8] sm:$0xff] 0.0
        %386 = vst [vmem:[#allocation2 + $0xb0] sm:$0xff] 0.0
        %387 = vst [vmem:[#allocation2 + $0xb8] sm:$0xff] 0.0
        %388 = vst [vmem:[#allocation2 + $0xc0] sm:$0xff] 0.0
        %389 = vst [vmem:[#allocation2 + $0xc8] sm:$0xff] 0.0
        %390 = vst [vmem:[#allocation2 + $0xd0] sm:$0xff] 0.0
        %391 = vst [vmem:[#allocation2 + $0xd8] sm:$0xff] 0.0
        %392 = vst [vmem:[#allocation2 + $0xe0] sm:$0xff] 0.0
        %393 = vst [vmem:[#allocation2 + $0xe8] sm:$0xff] 0.0
        %394 = vst [vmem:[#allocation2 + $0xf0] sm:$0xff] 0.0
        %395 = vst [vmem:[#allocation2 + $0xf8] sm:$0xff] 0.0
      $region44: #{forward.9} parent=39 // pred_fallthru
        _
      %v396 = vld [vmem:[#allocation2] sm:$0xff]
      %v397 = vld [vmem:[#allocation2 + $0x8] sm:$0xff]
      %v398 = vld [vmem:[#allocation2 + $0x10] sm:$0xff]
      %v399 = vld [vmem:[#allocation2 + $0x18] sm:$0xff]
      %v400 = vld [vmem:[#allocation2 + $0x20] sm:$0xff]
      %v401 = vld [vmem:[#allocation2 + $0x28] sm:$0xff]
      %v402 = vld [vmem:[#allocation2 + $0x30] sm:$0xff]
      %v403 = vld [vmem:[#allocation2 + $0x38] sm:$0xff]
      %v404 = vld [vmem:[#allocation2 + $0x40] sm:$0xff]
      %v405 = vld [vmem:[#allocation2 + $0x48] sm:$0xff]
      %v406 = vld [vmem:[#allocation2 + $0x50] sm:$0xff]
      %v407 = vld [vmem:[#allocation2 + $0x58] sm:$0xff]
      %v408 = vld [vmem:[#allocation2 + $0x60] sm:$0xff]
      %v409 = vld [vmem:[#allocation2 + $0x68] sm:$0xff]
      %v410 = vld [vmem:[#allocation2 + $0x70] sm:$0xff]
      %v411 = vld [vmem:[#allocation2 + $0x78] sm:$0xff]
      %v412 = vld [vmem:[#allocation2 + $0x80] sm:$0xff]
      %v413 = vld [vmem:[#allocation2 + $0x88] sm:$0xff]
      %v414 = vld [vmem:[#allocation2 + $0x90] sm:$0xff]
      %v415 = vld [vmem:[#allocation2 + $0x98] sm:$0xff]
      %v416 = vld [vmem:[#allocation2 + $0xa0] sm:$0xff]
      %v417 = vld [vmem:[#allocation2 + $0xa8] sm:$0xff]
      %v418 = vld [vmem:[#allocation2 + $0xb0] sm:$0xff]
      %v419 = vld [vmem:[#allocation2 + $0xb8] sm:$0xff]
      %v420 = vld [vmem:[#allocation2 + $0xc0] sm:$0xff]
      %v421 = vld [vmem:[#allocation2 + $0xc8] sm:$0xff]
      %v422 = vld [vmem:[#allocation2 + $0xd0] sm:$0xff]
      %v423 = vld [vmem:[#allocation2 + $0xd8] sm:$0xff]
      %v424 = vld [vmem:[#allocation2 + $0xe0] sm:$0xff]
      %v425 = vld [vmem:[#allocation2 + $0xe8] sm:$0xff]
      %v426 = vld [vmem:[#allocation2 + $0xf0] sm:$0xff]
      %v427 = vld [vmem:[#allocation2 + $0xf8] sm:$0xff]
      %v428 = vld [vmem:[%s325] sm:$0xf]
      %v429 = vld [vmem:[%s325 + $0x4] sm:$0xf]
      %v430 = vld [vmem:[%s325 + $0x8] sm:$0xf]
      %v431 = vld [vmem:[%s325 + $0xc] sm:$0xf]
      %v432 = vld [vmem:[%s325 + $0x10] sm:$0xf]
      %v433 = vld [vmem:[%s325 + $0x14] sm:$0xf]
      %v434 = vld [vmem:[%s325 + $0x18] sm:$0xf]
      %v435 = vld [vmem:[%s325 + $0x1c] sm:$0xf]
      %v436 = vld [vmem:[%s325 + $0x20] sm:$0xf]
      %v437 = vld [vmem:[%s325 + $0x24] sm:$0xf]
      %v438 = vld [vmem:[%s325 + $0x28] sm:$0xf]
      %v439 = vld [vmem:[%s325 + $0x2c] sm:$0xf]
      %v440 = vld [vmem:[%s325 + $0x30] sm:$0xf]
      %v441 = vld [vmem:[%s325 + $0x34] sm:$0xf]
      %v442 = vld [vmem:[%s325 + $0x38] sm:$0xf]
      %v443 = vld [vmem:[%s325 + $0x3c] sm:$0xf]
      %v444 = vld [vmem:[%s325 + $0x40] sm:$0xf]
      %v445 = vld [vmem:[%s325 + $0x44] sm:$0xf]
      %v446 = vld [vmem:[%s325 + $0x48] sm:$0xf]
      %v447 = vld [vmem:[%s325 + $0x4c] sm:$0xf]
      %v448 = vld [vmem:[%s325 + $0x50] sm:$0xf]
      %v449 = vld [vmem:[%s325 + $0x54] sm:$0xf]
      %v450 = vld [vmem:[%s325 + $0x58] sm:$0xf]
      %v451 = vld [vmem:[%s325 + $0x5c] sm:$0xf]
      %v452 = vld [vmem:[%s325 + $0x60] sm:$0xf]
      %v453 = vld [vmem:[%s325 + $0x64] sm:$0xf]
      %v454 = vld [vmem:[%s325 + $0x68] sm:$0xf]
      %v455 = vld [vmem:[%s325 + $0x6c] sm:$0xf]
      %v456 = vld [vmem:[%s325 + $0x70] sm:$0xf]
      %v457 = vld [vmem:[%s325 + $0x74] sm:$0xf]
      %v458 = vld [vmem:[%s325 + $0x78] sm:$0xf]
      %v459 = vld [vmem:[%s325 + $0x7c] sm:$0xf]
      %v460 = vld [vmem:[%s334] sm:$0xf]
      %v461 = vld [vmem:[%s334 + $0x4] sm:$0xf]
      %v462 = vld [vmem:[%s334 + $0x8] sm:$0xf]
      %v463 = vld [vmem:[%s334 + $0xc] sm:$0xf]
      %v464 = vld [vmem:[%s334 + $0x10] sm:$0xf]
      %v465 = vld [vmem:[%s334 + $0x14] sm:$0xf]
      %v466 = vld [vmem:[%s334 + $0x18] sm:$0xf]
      %v467 = vld [vmem:[%s334 + $0x1c] sm:$0xf]
      %v468 = vld [vmem:[%s334 + $0x20] sm:$0xf]
      %v469 = vld [vmem:[%s334 + $0x24] sm:$0xf]
      %v470 = vld [vmem:[%s334 + $0x28] sm:$0xf]
      %v471 = vld [vmem:[%s334 + $0x2c] sm:$0xf]
      %v472 = vld [vmem:[%s334 + $0x30] sm:$0xf]
      %v473 = vld [vmem:[%s334 + $0x34] sm:$0xf]
      %v474 = vld [vmem:[%s334 + $0x38] sm:$0xf]
      %v475 = vld [vmem:[%s334 + $0x3c] sm:$0xf]
      %v508 = vunpack.c.l.b16 %v428
      %v509 = vunpack.c.l.b16 %v429
      %v510 = vunpack.c.l.b16 %v430
      %v511 = vunpack.c.l.b16 %v431
      %v512 = vunpack.c.l.b16 %v432
      %v513 = vunpack.c.l.b16 %v433
      %v514 = vunpack.c.l.b16 %v434
      %v515 = vunpack.c.l.b16 %v435
      %v516 = vunpack.c.l.b16 %v436
      %v517 = vunpack.c.l.b16 %v437
      %v518 = vunpack.c.l.b16 %v438
      %v519 = vunpack.c.l.b16 %v439
      %v520 = vunpack.c.l.b16 %v440
      %v521 = vunpack.c.l.b16 %v441
      %v522 = vunpack.c.l.b16 %v442
      %v523 = vunpack.c.l.b16 %v443
      %v524 = vunpack.c.l.b16 %v444
      %v525 = vunpack.c.l.b16 %v445
      %v526 = vunpack.c.l.b16 %v446
      %v527 = vunpack.c.l.b16 %v447
      %v528 = vunpack.c.l.b16 %v448
      %v529 = vunpack.c.l.b16 %v449
      %v530 = vunpack.c.l.b16 %v450
      %v531 = vunpack.c.l.b16 %v451
      %v532 = vunpack.c.l.b16 %v452
      %v533 = vunpack.c.l.b16 %v453
      %v534 = vunpack.c.l.b16 %v454
      %v535 = vunpack.c.l.b16 %v455
      %v536 = vunpack.c.l.b16 %v456
      %v537 = vunpack.c.l.b16 %v457
      %v538 = vunpack.c.l.b16 %v458
      %v539 = vunpack.c.l.b16 %v459
      %v540 = vpack.c.b16 %v509, %v508
      %v541 = vpack.c.b16 %v511, %v510
      %v542 = vpack.c.b16 %v513, %v512
      %v543 = vpack.c.b16 %v515, %v514
      %v544 = vpack.c.b16 %v517, %v516
      %v545 = vpack.c.b16 %v519, %v518
      %v546 = vpack.c.b16 %v521, %v520
      %v547 = vpack.c.b16 %v523, %v522
      %v548 = vpack.c.b16 %v525, %v524
      %v549 = vpack.c.b16 %v527, %v526
      %v550 = vpack.c.b16 %v529, %v528
      %v551 = vpack.c.b16 %v531, %v530
      %v552 = vpack.c.b16 %v533, %v532
      %v553 = vpack.c.b16 %v535, %v534
      %v554 = vpack.c.b16 %v537, %v536
      %v555 = vpack.c.b16 %v539, %v538
      %v588 = vunpack.c.l.b16 %v460
      %v589 = vunpack.c.l.b16 %v461
      %v590 = vunpack.c.l.b16 %v462
      %v591 = vunpack.c.l.b16 %v463
      %v592 = vunpack.c.l.b16 %v464
      %v593 = vunpack.c.l.b16 %v465
      %v594 = vunpack.c.l.b16 %v466
      %v595 = vunpack.c.l.b16 %v467
      %v596 = vunpack.c.l.b16 %v468
      %v597 = vunpack.c.l.b16 %v469
      %v598 = vunpack.c.l.b16 %v470
      %v599 = vunpack.c.l.b16 %v471
      %v600 = vunpack.c.l.b16 %v472
      %v601 = vunpack.c.l.b16 %v473
      %v602 = vunpack.c.l.b16 %v474
      %v603 = vunpack.c.l.b16 %v475
      %v604 = vpack.c.b16 %v589, %v588
      %v605 = vpack.c.b16 %v591, %v590
      %v606 = vpack.c.b16 %v593, %v592
      %v607 = vpack.c.b16 %v595, %v594
      %v608 = vpack.c.b16 %v597, %v596
      %v609 = vpack.c.b16 %v599, %v598
      %v610 = vpack.c.b16 %v601, %v600
      %v611 = vpack.c.b16 %v603, %v602
      %620 = vmatpush.bf16.msra.mxu0 %v611
      %621 = vmatpush.bf16.msra.mxu0 %v610
      %622 = vmatpush.bf16.msra.mxu0 %v609
      %623 = vmatpush.bf16.msra.mxu0 %v608
      %624 = vmatpush.bf16.msra.mxu0 %v607
      %625 = vmatpush.bf16.msra.mxu0 %v606
      %626 = vmatpush.bf16.msra.mxu0 %v605
      %627 = vmatpush.bf16.msra.mxu0 %v604
      %628 = vmatmul.bf16.gmra.mxu0 %v540
      %v629 = vpop.f32.mrf.mxu0
      %v630 = vadd.f32 0.0, %v629
      %v631 = vpop.f32.mrf.mxu0
      %v632 = vadd.f32 0.0, %v631
      %633 = vmatmul.bf16.gmra.mxu0 %v541
      %v634 = vpop.f32.mrf.mxu0
      %v635 = vadd.f32 0.0, %v634
      %v636 = vpop.f32.mrf.mxu0
      %v637 = vadd.f32 0.0, %v636
      %638 = vmatmul.bf16.gmra.mxu0 %v542
      %v639 = vpop.f32.mrf.mxu0
      %v640 = vadd.f32 0.0, %v639
      %v641 = vpop.f32.mrf.mxu0
      %v642 = vadd.f32 0.0, %v641
      %643 = vmatmul.bf16.gmra.mxu0 %v543
      %v644 = vpop.f32.mrf.mxu0
      %v645 = vadd.f32 0.0, %v644
      %v646 = vpop.f32.mrf.mxu0
      %v647 = vadd.f32 0.0, %v646
      %648 = vmatmul.bf16.gmra.mxu0 %v544
      %v649 = vpop.f32.mrf.mxu0
      %v650 = vadd.f32 0.0, %v649
      %v651 = vpop.f32.mrf.mxu0
      %v652 = vadd.f32 0.0, %v651
      %653 = vmatmul.bf16.gmra.mxu0 %v545
      %v654 = vpop.f32.mrf.mxu0
      %v655 = vadd.f32 0.0, %v654
      %v656 = vpop.f32.mrf.mxu0
      %v657 = vadd.f32 0.0, %v656
      %658 = vmatmul.bf16.gmra.mxu0 %v546
      %v659 = vpop.f32.mrf.mxu0
      %v660 = vadd.f32 0.0, %v659
      %v661 = vpop.f32.mrf.mxu0
      %v662 = vadd.f32 0.0, %v661
      %663 = vmatmul.bf16.gmra.mxu0 %v547
      %v664 = vpop.f32.mrf.mxu0
      %v665 = vadd.f32 0.0, %v664
      %v666 = vpop.f32.mrf.mxu0
      %v667 = vadd.f32 0.0, %v666
      %668 = vmatmul.bf16.gmra.mxu0 %v548
      %v669 = vpop.f32.mrf.mxu0
      %v670 = vadd.f32 0.0, %v669
      %v671 = vpop.f32.mrf.mxu0
      %v672 = vadd.f32 0.0, %v671
      %673 = vmatmul.bf16.gmra.mxu0 %v549
      %v674 = vpop.f32.mrf.mxu0
      %v675 = vadd.f32 0.0, %v674
      %v676 = vpop.f32.mrf.mxu0
      %v677 = vadd.f32 0.0, %v676
      %678 = vmatmul.bf16.gmra.mxu0 %v550
      %v679 = vpop.f32.mrf.mxu0
      %v680 = vadd.f32 0.0, %v679
      %v681 = vpop.f32.mrf.mxu0
      %v682 = vadd.f32 0.0, %v681
      %683 = vmatmul.bf16.gmra.mxu0 %v551
      %v684 = vpop.f32.mrf.mxu0
      %v685 = vadd.f32 0.0, %v684
      %v686 = vpop.f32.mrf.mxu0
      %v687 = vadd.f32 0.0, %v686
      %688 = vmatmul.bf16.gmra.mxu0 %v552
      %v689 = vpop.f32.mrf.mxu0
      %v690 = vadd.f32 0.0, %v689
      %v691 = vpop.f32.mrf.mxu0
      %v692 = vadd.f32 0.0, %v691
      %693 = vmatmul.bf16.gmra.mxu0 %v553
      %v694 = vpop.f32.mrf.mxu0
      %v695 = vadd.f32 0.0, %v694
      %v696 = vpop.f32.mrf.mxu0
      %v697 = vadd.f32 0.0, %v696
      %698 = vmatmul.bf16.gmra.mxu0 %v554
      %v699 = vpop.f32.mrf.mxu0
      %v700 = vadd.f32 0.0, %v699
      %v701 = vpop.f32.mrf.mxu0
      %v702 = vadd.f32 0.0, %v701
      %703 = vmatmul.bf16.gmra.mxu0 %v555
      %v704 = vpop.f32.mrf.mxu0
      %v705 = vadd.f32 0.0, %v704
      %v706 = vpop.f32.mrf.mxu0
      %v707 = vadd.f32 0.0, %v706
      %708 = vdwg.mxu0
      %v709 = vadd.f32 %v396, %v630
      %v710 = vadd.f32 %v397, %v632
      %v711 = vadd.f32 %v398, %v635
      %v712 = vadd.f32 %v399, %v637
      %v713 = vadd.f32 %v400, %v640
      %v714 = vadd.f32 %v401, %v642
      %v715 = vadd.f32 %v402, %v645
      %v716 = vadd.f32 %v403, %v647
      %v717 = vadd.f32 %v404, %v650
      %v718 = vadd.f32 %v405, %v652
      %v719 = vadd.f32 %v406, %v655
      %v720 = vadd.f32 %v407, %v657
      %v721 = vadd.f32 %v408, %v660
      %v722 = vadd.f32 %v409, %v662
      %v723 = vadd.f32 %v410, %v665
      %v724 = vadd.f32 %v411, %v667
      %v725 = vadd.f32 %v412, %v670
      %v726 = vadd.f32 %v413, %v672
      %v727 = vadd.f32 %v414, %v675
      %v728 = vadd.f32 %v415, %v677
      %v729 = vadd.f32 %v416, %v680
      %v730 = vadd.f32 %v417, %v682
      %v731 = vadd.f32 %v418, %v685
      %v732 = vadd.f32 %v419, %v687
      %v733 = vadd.f32 %v420, %v690
      %v734 = vadd.f32 %v421, %v692
      %v735 = vadd.f32 %v422, %v695
      %v736 = vadd.f32 %v423, %v697
      %v737 = vadd.f32 %v424, %v700
      %v738 = vadd.f32 %v425, %v702
      %v739 = vadd.f32 %v426, %v705
      %v740 = vadd.f32 %v427, %v707
      %741 = vst [vmem:[#allocation2] sm:$0xff] %v709
      %742 = vst [vmem:[#allocation2 + $0x8] sm:$0xff] %v710
      %743 = vst [vmem:[#allocation2 + $0x10] sm:$0xff] %v711
      %744 = vst [vmem:[#allocation2 + $0x18] sm:$0xff] %v712
      %745 = vst [vmem:[#allocation2 + $0x20] sm:$0xff] %v713
      %746 = vst [vmem:[#allocation2 + $0x28] sm:$0xff] %v714
      %747 = vst [vmem:[#allocation2 + $0x30] sm:$0xff] %v715
      %748 = vst [vmem:[#allocation2 + $0x38] sm:$0xff] %v716
      %749 = vst [vmem:[#allocation2 + $0x40] sm:$0xff] %v717
      %750 = vst [vmem:[#allocation2 + $0x48] sm:$0xff] %v718
      %751 = vst [vmem:[#allocation2 + $0x50] sm:$0xff] %v719
      %752 = vst [vmem:[#allocation2 + $0x58] sm:$0xff] %v720
      %753 = vst [vmem:[#allocation2 + $0x60] sm:$0xff] %v721
      %754 = vst [vmem:[#allocation2 + $0x68] sm:$0xff] %v722
      %755 = vst [vmem:[#allocation2 + $0x70] sm:$0xff] %v723
      %756 = vst [vmem:[#allocation2 + $0x78] sm:$0xff] %v724
      %757 = vst [vmem:[#allocation2 + $0x80] sm:$0xff] %v725
      %758 = vst [vmem:[#allocation2 + $0x88] sm:$0xff] %v726
      %759 = vst [vmem:[#allocation2 + $0x90] sm:$0xff] %v727
      %760 = vst [vmem:[#allocation2 + $0x98] sm:$0xff] %v728
      %761 = vst [vmem:[#allocation2 + $0xa0] sm:$0xff] %v729
      %762 = vst [vmem:[#allocation2 + $0xa8] sm:$0xff] %v730
      %763 = vst [vmem:[#allocation2 + $0xb0] sm:$0xff] %v731
      %764 = vst [vmem:[#allocation2 + $0xb8] sm:$0xff] %v732
      %765 = vst [vmem:[#allocation2 + $0xc0] sm:$0xff] %v733
      %766 = vst [vmem:[#allocation2 + $0xc8] sm:$0xff] %v734
      %767 = vst [vmem:[#allocation2 + $0xd0] sm:$0xff] %v735
      %768 = vst [vmem:[#allocation2 + $0xd8] sm:$0xff] %v736
      %769 = vst [vmem:[#allocation2 + $0xe0] sm:$0xff] %v737
      %770 = vst [vmem:[#allocation2 + $0xe8] sm:$0xff] %v738
      %771 = vst [vmem:[#allocation2 + $0xf0] sm:$0xff] %v739
      %772 = vst [vmem:[#allocation2 + $0xf8] sm:$0xff] %v740
      // Predicated region
      $region45: #{forward.9} parent=39 // pred_check
        %p773 = pneg %p360
      $region46: #{forward.9} parent=39 // pred_check_branch
        %775 = sbr.rel (%p773) target = $region48
      $region47: #{forward.9} parent=39 // pred_region
        %v776 = vld [vmem:[#allocation2] sm:$0xff]
        %v777 = vld [vmem:[#allocation2 + $0x8] sm:$0xff]
        %v778 = vld [vmem:[#allocation2 + $0x10] sm:$0xff]
        %v779 = vld [vmem:[#allocation2 + $0x18] sm:$0xff]
        %v780 = vld [vmem:[#allocation2 + $0x20] sm:$0xff]
        %v781 = vld [vmem:[#allocation2 + $0x28] sm:$0xff]
        %v782 = vld [vmem:[#allocation2 + $0x30] sm:$0xff]
        %v783 = vld [vmem:[#allocation2 + $0x38] sm:$0xff]
        %v784 = vld [vmem:[#allocation2 + $0x40] sm:$0xff]
        %v785 = vld [vmem:[#allocation2 + $0x48] sm:$0xff]
        %v786 = vld [vmem:[#allocation2 + $0x50] sm:$0xff]
        %v787 = vld [vmem:[#allocation2 + $0x58] sm:$0xff]
        %v788 = vld [vmem:[#allocation2 + $0x60] sm:$0xff]
        %v789 = vld [vmem:[#allocation2 + $0x68] sm:$0xff]
        %v790 = vld [vmem:[#allocation2 + $0x70] sm:$0xff]
        %v791 = vld [vmem:[#allocation2 + $0x78] sm:$0xff]
        %v792 = vld [vmem:[#allocation2 + $0x80] sm:$0xff]
        %v793 = vld [vmem:[#allocation2 + $0x88] sm:$0xff]
        %v794 = vld [vmem:[#allocation2 + $0x90] sm:$0xff]
        %v795 = vld [vmem:[#allocation2 + $0x98] sm:$0xff]
        %v796 = vld [vmem:[#allocation2 + $0xa0] sm:$0xff]
        %v797 = vld [vmem:[#allocation2 + $0xa8] sm:$0xff]
        %v798 = vld [vmem:[#allocation2 + $0xb0] sm:$0xff]
        %v799 = vld [vmem:[#allocation2 + $0xb8] sm:$0xff]
        %v800 = vld [vmem:[#allocation2 + $0xc0] sm:$0xff]
        %v801 = vld [vmem:[#allocation2 + $0xc8] sm:$0xff]
        %v802 = vld [vmem:[#allocation2 + $0xd0] sm:$0xff]
        %v803 = vld [vmem:[#allocation2 + $0xd8] sm:$0xff]
        %v804 = vld [vmem:[#allocation2 + $0xe0] sm:$0xff]
        %v805 = vld [vmem:[#allocation2 + $0xe8] sm:$0xff]
        %v806 = vld [vmem:[#allocation2 + $0xf0] sm:$0xff]
        %v807 = vld [vmem:[#allocation2 + $0xf8] sm:$0xff]
        %v808 = vld [vmem:[%s338] sm:$0x1]
        %v810 = vperm.slane %v808, 0
        %v812 = vmul.f32 %v776, %v810
        %v813 = vmul.f32 %v777, %v810
        %v814 = vmul.f32 %v778, %v810
        %v815 = vmul.f32 %v779, %v810
        %v816 = vmul.f32 %v780, %v810
        %v817 = vmul.f32 %v781, %v810
        %v818 = vmul.f32 %v782, %v810
        %v819 = vmul.f32 %v783, %v810
        %v820 = vmul.f32 %v784, %v810
        %v821 = vmul.f32 %v785, %v810
        %v822 = vmul.f32 %v786, %v810
        %v823 = vmul.f32 %v787, %v810
        %v824 = vmul.f32 %v788, %v810
        %v825 = vmul.f32 %v789, %v810
        %v826 = vmul.f32 %v790, %v810
        %v827 = vmul.f32 %v791, %v810
        %v828 = vmul.f32 %v792, %v810
        %v829 = vmul.f32 %v793, %v810
        %v830 = vmul.f32 %v794, %v810
        %v831 = vmul.f32 %v795, %v810
        %v832 = vmul.f32 %v796, %v810
        %v833 = vmul.f32 %v797, %v810
        %v834 = vmul.f32 %v798, %v810
        %v835 = vmul.f32 %v799, %v810
        %v836 = vmul.f32 %v800, %v810
        %v837 = vmul.f32 %v801, %v810
        %v838 = vmul.f32 %v802, %v810
        %v839 = vmul.f32 %v803, %v810
        %v840 = vmul.f32 %v804, %v810
        %v841 = vmul.f32 %v805, %v810
        %v842 = vmul.f32 %v806, %v810
        %v843 = vmul.f32 %v807, %v810
        %v844 = vld [vmem:[%s341] sm:$0x1]
        %v846 = vperm.slane %v844, 0
        %v848 = vadd.f32 %v812, %v846
        %v849 = vadd.f32 %v813, %v846
        %v850 = vadd.f32 %v814, %v846
        %v851 = vadd.f32 %v815, %v846
        %v852 = vadd.f32 %v816, %v846
        %v853 = vadd.f32 %v817, %v846
        %v854 = vadd.f32 %v818, %v846
        %v855 = vadd.f32 %v819, %v846
        %v856 = vadd.f32 %v820, %v846
        %v857 = vadd.f32 %v821, %v846
        %v858 = vadd.f32 %v822, %v846
        %v859 = vadd.f32 %v823, %v846
        %v860 = vadd.f32 %v824, %v846
        %v861 = vadd.f32 %v825, %v846
        %v862 = vadd.f32 %v826, %v846
        %v863 = vadd.f32 %v827, %v846
        %v864 = vadd.f32 %v828, %v846
        %v865 = vadd.f32 %v829, %v846
        %v866 = vadd.f32 %v830, %v846
        %v867 = vadd.f32 %v831, %v846
        %v868 = vadd.f32 %v832, %v846
        %v869 = vadd.f32 %v833, %v846
        %v870 = vadd.f32 %v834, %v846
        %v871 = vadd.f32 %v835, %v846
        %v872 = vadd.f32 %v836, %v846
        %v873 = vadd.f32 %v837, %v846
        %v874 = vadd.f32 %v838, %v846
        %v875 = vadd.f32 %v839, %v846
        %v876 = vadd.f32 %v840, %v846
        %v877 = vadd.f32 %v841, %v846
        %v878 = vadd.f32 %v842, %v846
        %v879 = vadd.f32 %v843, %v846
        %v880 = vld [vmem:[%s349] sm:$0xf]
        %v881 = vld [vmem:[%s349 + $0x4] sm:$0xf]
        %v882 = vld [vmem:[%s349 + $0x8] sm:$0xf]
        %v883 = vld [vmem:[%s349 + $0xc] sm:$0xf]
        %v884 = vld [vmem:[%s349 + $0x10] sm:$0xf]
        %v885 = vld [vmem:[%s349 + $0x14] sm:$0xf]
        %v886 = vld [vmem:[%s349 + $0x18] sm:$0xf]
        %v887 = vld [vmem:[%s349 + $0x1c] sm:$0xf]
        %v888 = vld [vmem:[%s349 + $0x20] sm:$0xf]
        %v889 = vld [vmem:[%s349 + $0x24] sm:$0xf]
        %v890 = vld [vmem:[%s349 + $0x28] sm:$0xf]
        %v891 = vld [vmem:[%s349 + $0x2c] sm:$0xf]
        %v892 = vld [vmem:[%s349 + $0x30] sm:$0xf]
        %v893 = vld [vmem:[%s349 + $0x34] sm:$0xf]
        %v894 = vld [vmem:[%s349 + $0x38] sm:$0xf]
        %v895 = vld [vmem:[%s349 + $0x3c] sm:$0xf]
        %v896 = vld [vmem:[%s349 + $0x40] sm:$0xf]
        %v897 = vld [vmem:[%s349 + $0x44] sm:$0xf]
        %v898 = vld [vmem:[%s349 + $0x48] sm:$0xf]
        %v899 = vld [vmem:[%s349 + $0x4c] sm:$0xf]
        %v900 = vld [vmem:[%s349 + $0x50] sm:$0xf]
        %v901 = vld [vmem:[%s349 + $0x54] sm:$0xf]
        %v902 = vld [vmem:[%s349 + $0x58] sm:$0xf]
        %v903 = vld [vmem:[%s349 + $0x5c] sm:$0xf]
        %v904 = vld [vmem:[%s349 + $0x60] sm:$0xf]
        %v905 = vld [vmem:[%s349 + $0x64] sm:$0xf]
        %v906 = vld [vmem:[%s349 + $0x68] sm:$0xf]
        %v907 = vld [vmem:[%s349 + $0x6c] sm:$0xf]
        %v908 = vld [vmem:[%s349 + $0x70] sm:$0xf]
        %v909 = vld [vmem:[%s349 + $0x74] sm:$0xf]
        %v910 = vld [vmem:[%s349 + $0x78] sm:$0xf]
        %v911 = vld [vmem:[%s349 + $0x7c] sm:$0xf]
        %v912 = vunpack.c.l.bf16 %v880
        %v913 = vunpack.c.l.bf16 %v881
        %v914 = vunpack.c.l.bf16 %v882
        %v915 = vunpack.c.l.bf16 %v883
        %v916 = vunpack.c.l.bf16 %v884
        %v917 = vunpack.c.l.bf16 %v885
        %v918 = vunpack.c.l.bf16 %v886
        %v919 = vunpack.c.l.bf16 %v887
        %v920 = vunpack.c.l.bf16 %v888
        %v921 = vunpack.c.l.bf16 %v889
        %v922 = vunpack.c.l.bf16 %v890
        %v923 = vunpack.c.l.bf16 %v891
        %v924 = vunpack.c.l.bf16 %v892
        %v925 = vunpack.c.l.bf16 %v893
        %v926 = vunpack.c.l.bf16 %v894
        %v927 = vunpack.c.l.bf16 %v895
        %v928 = vunpack.c.l.bf16 %v896
        %v929 = vunpack.c.l.bf16 %v897
        %v930 = vunpack.c.l.bf16 %v898
        %v931 = vunpack.c.l.bf16 %v899
        %v932 = vunpack.c.l.bf16 %v900
        %v933 = vunpack.c.l.bf16 %v901
        %v934 = vunpack.c.l.bf16 %v902
        %v935 = vunpack.c.l.bf16 %v903
        %v936 = vunpack.c.l.bf16 %v904
        %v937 = vunpack.c.l.bf16 %v905
        %v938 = vunpack.c.l.bf16 %v906
        %v939 = vunpack.c.l.bf16 %v907
        %v940 = vunpack.c.l.bf16 %v908
        %v941 = vunpack.c.l.bf16 %v909
        %v942 = vunpack.c.l.bf16 %v910
        %v943 = vunpack.c.l.bf16 %v911
        %v944 = vadd.f32 %v848, %v912
        %v945 = vadd.f32 %v849, %v913
        %v946 = vadd.f32 %v850, %v914
        %v947 = vadd.f32 %v851, %v915
        %v948 = vadd.f32 %v852, %v916
        %v949 = vadd.f32 %v853, %v917
        %v950 = vadd.f32 %v854, %v918
        %v951 = vadd.f32 %v855, %v919
        %v952 = vadd.f32 %v856, %v920
        %v953 = vadd.f32 %v857, %v921
        %v954 = vadd.f32 %v858, %v922
        %v955 = vadd.f32 %v859, %v923
        %v956 = vadd.f32 %v860, %v924
        %v957 = vadd.f32 %v861, %v925
        %v958 = vadd.f32 %v862, %v926
        %v959 = vadd.f32 %v863, %v927
        %v960 = vadd.f32 %v864, %v928
        %v961 = vadd.f32 %v865, %v929
        %v962 = vadd.f32 %v866, %v930
        %v963 = vadd.f32 %v867, %v931
        %v964 = vadd.f32 %v868, %v932
        %v965 = vadd.f32 %v869, %v933
        %v966 = vadd.f32 %v870, %v934
        %v967 = vadd.f32 %v871, %v935
        %v968 = vadd.f32 %v872, %v936
        %v969 = vadd.f32 %v873, %v937
        %v970 = vadd.f32 %v874, %v938
        %v971 = vadd.f32 %v875, %v939
        %v972 = vadd.f32 %v876, %v940
        %v973 = vadd.f32 %v877, %v941
        %v974 = vadd.f32 %v878, %v942
        %v975 = vadd.f32 %v879, %v943
        %v976 = vmax.f32 %v944, 0.0
        %v977 = vmax.f32 %v945, 0.0
        %v978 = vmax.f32 %v946, 0.0
        %v979 = vmax.f32 %v947, 0.0
        %v980 = vmax.f32 %v948, 0.0
        %v981 = vmax.f32 %v949, 0.0
        %v982 = vmax.f32 %v950, 0.0
        %v983 = vmax.f32 %v951, 0.0
        %v984 = vmax.f32 %v952, 0.0
        %v985 = vmax.f32 %v953, 0.0
        %v986 = vmax.f32 %v954, 0.0
        %v987 = vmax.f32 %v955, 0.0
        %v988 = vmax.f32 %v956, 0.0
        %v989 = vmax.f32 %v957, 0.0
        %v990 = vmax.f32 %v958, 0.0
        %v991 = vmax.f32 %v959, 0.0
        %v992 = vmax.f32 %v960, 0.0
        %v993 = vmax.f32 %v961, 0.0
        %v994 = vmax.f32 %v962, 0.0
        %v995 = vmax.f32 %v963, 0.0
        %v996 = vmax.f32 %v964, 0.0
        %v997 = vmax.f32 %v965, 0.0
        %v998 = vmax.f32 %v966, 0.0
        %v999 = vmax.f32 %v967, 0.0
        %v1000 = vmax.f32 %v968, 0.0
        %v1001 = vmax.f32 %v969, 0.0
        %v1002 = vmax.f32 %v970, 0.0
        %v1003 = vmax.f32 %v971, 0.0
        %v1004 = vmax.f32 %v972, 0.0
        %v1005 = vmax.f32 %v973, 0.0
        %v1006 = vmax.f32 %v974, 0.0
        %v1007 = vmax.f32 %v975, 0.0
        %v1008 = vpack.c.bf16 %v976, %v976
        %v1009 = vpack.c.bf16 %v977, %v977
        %v1010 = vpack.c.bf16 %v978, %v978
        %v1011 = vpack.c.bf16 %v979, %v979
        %v1012 = vpack.c.bf16 %v980, %v980
        %v1013 = vpack.c.bf16 %v981, %v981
        %v1014 = vpack.c.bf16 %v982, %v982
        %v1015 = vpack.c.bf16 %v983, %v983
        %v1016 = vpack.c.bf16 %v984, %v984
        %v1017 = vpack.c.bf16 %v985, %v985
        %v1018 = vpack.c.bf16 %v986, %v986
        %v1019 = vpack.c.bf16 %v987, %v987
        %v1020 = vpack.c.bf16 %v988, %v988
        %v1021 = vpack.c.bf16 %v989, %v989
        %v1022 = vpack.c.bf16 %v990, %v990
        %v1023 = vpack.c.bf16 %v991, %v991
        %v1024 = vpack.c.bf16 %v992, %v992
        %v1025 = vpack.c.bf16 %v993, %v993
        %v1026 = vpack.c.bf16 %v994, %v994
        %v1027 = vpack.c.bf16 %v995, %v995
        %v1028 = vpack.c.bf16 %v996, %v996
        %v1029 = vpack.c.bf16 %v997, %v997
        %v1030 = vpack.c.bf16 %v998, %v998
        %v1031 = vpack.c.bf16 %v999, %v999
        %v1032 = vpack.c.bf16 %v1000, %v1000
        %v1033 = vpack.c.bf16 %v1001, %v1001
        %v1034 = vpack.c.bf16 %v1002, %v1002
        %v1035 = vpack.c.bf16 %v1003, %v1003
        %v1036 = vpack.c.bf16 %v1004, %v1004
        %v1037 = vpack.c.bf16 %v1005, %v1005
        %v1038 = vpack.c.bf16 %v1006, %v1006
        %v1039 = vpack.c.bf16 %v1007, %v1007
        %1040 = vst [vmem:[%s358] sm:$0xf] %v1008
        %1041 = vst [vmem:[%s358 + $0x4] sm:$0xf] %v1009
        %1042 = vst [vmem:[%s358 + $0x8] sm:$0xf] %v1010
        %1043 = vst [vmem:[%s358 + $0xc] sm:$0xf] %v1011
        %1044 = vst [vmem:[%s358 + $0x10] sm:$0xf] %v1012
        %1045 = vst [vmem:[%s358 + $0x14] sm:$0xf] %v1013
        %1046 = vst [vmem:[%s358 + $0x18] sm:$0xf] %v1014
        %1047 = vst [vmem:[%s358 + $0x1c] sm:$0xf] %v1015
        %1048 = vst [vmem:[%s358 + $0x20] sm:$0xf] %v1016
        %1049 = vst [vmem:[%s358 + $0x24] sm:$0xf] %v1017
        %1050 = vst [vmem:[%s358 + $0x28] sm:$0xf] %v1018
        %1051 = vst [vmem:[%s358 + $0x2c] sm:$0xf] %v1019
        %1052 = vst [vmem:[%s358 + $0x30] sm:$0xf] %v1020
        %1053 = vst [vmem:[%s358 + $0x34] sm:$0xf] %v1021
        %1054 = vst [vmem:[%s358 + $0x38] sm:$0xf] %v1022
        %1055 = vst [vmem:[%s358 + $0x3c] sm:$0xf] %v1023
        %1056 = vst [vmem:[%s358 + $0x40] sm:$0xf] %v1024
        %1057 = vst [vmem:[%s358 + $0x44] sm:$0xf] %v1025
        %1058 = vst [vmem:[%s358 + $0x48] sm:$0xf] %v1026
        %1059 = vst [vmem:[%s358 + $0x4c] sm:$0xf] %v1027
        %1060 = vst [vmem:[%s358 + $0x50] sm:$0xf] %v1028
        %1061 = vst [vmem:[%s358 + $0x54] sm:$0xf] %v1029
        %1062 = vst [vmem:[%s358 + $0x58] sm:$0xf] %v1030
        %1063 = vst [vmem:[%s358 + $0x5c] sm:$0xf] %v1031
        %1064 = vst [vmem:[%s358 + $0x60] sm:$0xf] %v1032
        %1065 = vst [vmem:[%s358 + $0x64] sm:$0xf] %v1033
        %1066 = vst [vmem:[%s358 + $0x68] sm:$0xf] %v1034
        %1067 = vst [vmem:[%s358 + $0x6c] sm:$0xf] %v1035
        %1068 = vst [vmem:[%s358 + $0x70] sm:$0xf] %v1036
        %1069 = vst [vmem:[%s358 + $0x74] sm:$0xf] %v1037
        %1070 = vst [vmem:[%s358 + $0x78] sm:$0xf] %v1038
        %1071 = vst [vmem:[%s358 + $0x7c] sm:$0xf] %v1039
      $region48: #{forward.9} parent=39 // pred_fallthru
        _
      %s1072 = smul.u32 32, %s22
      %p1073 = scmp.lt.s32.totalorder %s1072, 63
      %s1074 = scalar_select %p1073, %s1072, 63
      %p1075 = scmp.lt.s32.totalorder %s21, 0
      %s1076 = scalar_select %p1075, %s21, 0
      %s1077 = sadd.s32 %s1076, %s1074
      %s1078 = smul.addr %s1077, 4
      %s1079 = scalar_lea.vmem %s5, %s1078
      // Predicated region
      $region49: #{forward.9} parent=39 // pred_check
        %p1080 = pneg %p191
      $region50: #{forward.9} parent=39 // pred_check_branch
        %1082 = sbr.rel (%p1080) target = $region52
      $region51: #{forward.9} parent=39 // pred_region
        %s1083 = smul.u32 32, %s22
      $region52: #{forward.9} parent=39 // pred_fallthru
        _
    $region40: #{forward.9} parent=5 // pred_fallthru
      _
    %p1084 = scmp.le.s32.totalorder 2, %s11
    // Predicated region
    $region53: #{forward.9} parent=5 // pred_check
      %p1085 = pneg %p1084
    $region54: #{forward.9} parent=5 // pred_check_branch
      %1087 = sbr.rel (%p1085) target = $region56
    $region55: #{forward.9} parent=5 // pred_region
      %s1088 = ssub.s32 %s11, 2
      // Predicated region
      $region57: #{forward.9} parent=55 // pred_check
        %p1089 = pneg %p197
      $region58: #{forward.9} parent=55 // pred_check_branch
        %1091 = sbr.rel (%p1089) target = $region60
      $region59: #{forward.9} parent=55 // pred_region
        %s1092 = smul.u32 32, %s25
        %p1093 = scmp.lt.s32.totalorder %s1092, 63
        %s1094 = scalar_select %p1093, %s1092, 63
        %p1095 = scmp.lt.s32.totalorder %s24, 0
        %s1096 = scalar_select %p1095, %s24, 0
        %s1097 = sadd.s32 %s1096, %s1094
        %s1098 = smul.addr %s1097, 4
        %s1099 = scalar_lea.vmem %s5, %s1098
      $region60: #{forward.9} parent=55 // pred_fallthru
        _
    $region56: #{forward.9} parent=5 // pred_fallthru
      _
  $region6: #{forward.9} parent=0 // loop_footer
    %s15 = sadd.s32 1, %s11
  $region7: #{forward.9} parent=0 // loop_footer_branch
    %10 = sbr.rel target = $region3
  $region8: #{forward.9} parent=0 // loop_exit
    _

// kernel: forward.12
$region0: #{forward.12}
  #allocation0 [shape = 'u32[]', space=smem, size = 0x4, offset = 0x4, fixed_abs, tag = 'smem constant byte address 0x4 - core index']
  #allocation1 [shape = 'u32[72,128]{1,0:T(1,128)}', space=vmem, size = 0x9000, scoped, tag = 'internal scratch']
  #allocation2 [shape = 'f32[128,128]{1,0:T(8,128)}', space=vmem, size = 0x10000, scoped, tag = 'scratch operand']
  %s0 = inlined_call_operand.vmem [shape: bf16[128,128], index: 0, kind: input, shape index: {}]
  %s1 = inlined_call_operand.vmem [shape: bf16[128,128], index: 1, kind: input, shape index: {}]
  %s2 = inlined_call_operand.vmem [shape: f32[1,128], index: 2, kind: input, shape index: {}]
  %s3 = inlined_call_operand.vmem [shape: f32[1,128], index: 3, kind: input, shape index: {}]
  %s4 = inlined_call_operand.vmem [shape: bf16[128,128], index: 4, kind: output, shape index: {}]
  %s5 = sld [smem:[#allocation0]]
  $region34: #{forward.12} parent=0
    _
  %s7 = ssub.s32 1, %s5
  %s8 = scalar_select 0, %s7, %s5
  // Predicated region
  $region2: #{forward.12} parent=0 // pred_check
    _
  $region3: #{forward.12} parent=0 // pred_check_branch
    %10 = sbr.rel (0) target = $region5
  $region4: #{forward.12} parent=0 // pred_region
    _
  $region5: #{forward.12} parent=0 // pred_fallthru
    _
  // Predicated region
  $region6: #{forward.12} parent=0 // pred_check
    _
  $region7: #{forward.12} parent=0 // pred_check_branch
    %12 = sbr.rel (0) target = $region9
  $region8: #{forward.12} parent=0 // pred_region
    _
  $region9: #{forward.12} parent=0 // pred_fallthru
    _
  // Predicated region
  $region10: #{forward.12} parent=0 // pred_check
    _
  $region11: #{forward.12} parent=0 // pred_check_branch
    %14 = sbr.rel (0) target = $region13
  $region12: #{forward.12} parent=0 // pred_region
    _
  $region13: #{forward.12} parent=0 // pred_fallthru
    _
  // Predicated region
  $region14: #{forward.12} parent=0 // pred_check
    _
  $region15: #{forward.12} parent=0 // pred_check_branch
    %16 = sbr.rel (0) target = $region17
  $region16: #{forward.12} parent=0 // pred_region
    _
  $region17: #{forward.12} parent=0 // pred_fallthru
    _
  %p17 = scmp.eq.s32.totalorder 0, 0
  // Predicated region
  $region18: #{forward.12} parent=0 // pred_check
    %p18 = pneg %p17
  $region19: #{forward.12} parent=0 // pred_check_branch
    %20 = sbr.rel (%p18) target = $region21
  $region20: #{forward.12} parent=0 // pred_region
    %21 = vst [vmem:[#allocation2] sm:$0xff] 0.0
    %22 = vst [vmem:[#allocation2 + $0x8] sm:$0xff] 0.0
    %23 = vst [vmem:[#allocation2 + $0x10] sm:$0xff] 0.0
    %24 = vst [vmem:[#allocation2 + $0x18] sm:$0xff] 0.0
    %25 = vst [vmem:[#allocation2 + $0x20] sm:$0xff] 0.0
    %26 = vst [vmem:[#allocation2 + $0x28] sm:$0xff] 0.0
    %27 = vst [vmem:[#allocation2 + $0x30] sm:$0xff] 0.0
    %28 = vst [vmem:[#allocation2 + $0x38] sm:$0xff] 0.0
    %29 = vst [vmem:[#allocation2 + $0x40] sm:$0xff] 0.0
    %30 = vst [vmem:[#allocation2 + $0x48] sm:$0xff] 0.0
    %31 = vst [vmem:[#allocation2 + $0x50] sm:$0xff] 0.0
    %32 = vst [vmem:[#allocation2 + $0x58] sm:$0xff] 0.0
    %33 = vst [vmem:[#allocation2 + $0x60] sm:$0xff] 0.0
    %34 = vst [vmem:[#allocation2 + $0x68] sm:$0xff] 0.0
    %35 = vst [vmem:[#allocation2 + $0x70] sm:$0xff] 0.0
    %36 = vst [vmem:[#allocation2 + $0x78] sm:$0xff] 0.0
  $region21: #{forward.12} parent=0 // pred_fallthru
    _
  %v37 = vld [vmem:[#allocation2] sm:$0xff]
  %v38 = vld [vmem:[#allocation2 + $0x8] sm:$0xff]
  %v39 = vld [vmem:[#allocation2 + $0x10] sm:$0xff]
  %v40 = vld [vmem:[#allocation2 + $0x18] sm:$0xff]
  %v41 = vld [vmem:[#allocation2 + $0x20] sm:$0xff]
  %v42 = vld [vmem:[#allocation2 + $0x28] sm:$0xff]
  %v43 = vld [vmem:[#allocation2 + $0x30] sm:$0xff]
  %v44 = vld [vmem:[#allocation2 + $0x38] sm:$0xff]
  %v45 = vld [vmem:[#allocation2 + $0x40] sm:$0xff]
  %v46 = vld [vmem:[#allocation2 + $0x48] sm:$0xff]
  %v47 = vld [vmem:[#allocation2 + $0x50] sm:$0xff]
  %v48 = vld [vmem:[#allocation2 + $0x58] sm:$0xff]
  %v49 = vld [vmem:[#allocation2 + $0x60] sm:$0xff]
  %v50 = vld [vmem:[#allocation2 + $0x68] sm:$0xff]
  %v51 = vld [vmem:[#allocation2 + $0x70] sm:$0xff]
  %v52 = vld [vmem:[#allocation2 + $0x78] sm:$0xff]
  %v53 = vld [vmem:[%s0] sm:$0xf]
  %v54 = vld [vmem:[%s0 + $0x4] sm:$0xf]
  %v55 = vld [vmem:[%s0 + $0x8] sm:$0xf]
  %v56 = vld [vmem:[%s0 + $0xc] sm:$0xf]
  %v57 = vld [vmem:[%s0 + $0x10] sm:$0xf]
  %v58 = vld [vmem:[%s0 + $0x14] sm:$0xf]
  %v59 = vld [vmem:[%s0 + $0x18] sm:$0xf]
  %v60 = vld [vmem:[%s0 + $0x1c] sm:$0xf]
  %v61 = vld [vmem:[%s0 + $0x20] sm:$0xf]
  %v62 = vld [vmem:[%s0 + $0x24] sm:$0xf]
  %v63 = vld [vmem:[%s0 + $0x28] sm:$0xf]
  %v64 = vld [vmem:[%s0 + $0x2c] sm:$0xf]
  %v65 = vld [vmem:[%s0 + $0x30] sm:$0xf]
  %v66 = vld [vmem:[%s0 + $0x34] sm:$0xf]
  %v67 = vld [vmem:[%s0 + $0x38] sm:$0xf]
  %v68 = vld [vmem:[%s0 + $0x3c] sm:$0xf]
  %v69 = vld [vmem:[%s1] sm:$0xf]
  %v70 = vld [vmem:[%s1 + $0x4] sm:$0xf]
  %v71 = vld [vmem:[%s1 + $0x8] sm:$0xf]
  %v72 = vld [vmem:[%s1 + $0xc] sm:$0xf]
  %v73 = vld [vmem:[%s1 + $0x10] sm:$0xf]
  %v74 = vld [vmem:[%s1 + $0x14] sm:$0xf]
  %v75 = vld [vmem:[%s1 + $0x18] sm:$0xf]
  %v76 = vld [vmem:[%s1 + $0x1c] sm:$0xf]
  %v77 = vld [vmem:[%s1 + $0x20] sm:$0xf]
  %v78 = vld [vmem:[%s1 + $0x24] sm:$0xf]
  %v79 = vld [vmem:[%s1 + $0x28] sm:$0xf]
  %v80 = vld [vmem:[%s1 + $0x2c] sm:$0xf]
  %v81 = vld [vmem:[%s1 + $0x30] sm:$0xf]
  %v82 = vld [vmem:[%s1 + $0x34] sm:$0xf]
  %v83 = vld [vmem:[%s1 + $0x38] sm:$0xf]
  %v84 = vld [vmem:[%s1 + $0x3c] sm:$0xf]
  %v101 = vunpack.c.l.b16 %v53
  %v102 = vunpack.c.l.b16 %v54
  %v103 = vunpack.c.l.b16 %v55
  %v104 = vunpack.c.l.b16 %v56
  %v105 = vunpack.c.l.b16 %v57
  %v106 = vunpack.c.l.b16 %v58
  %v107 = vunpack.c.l.b16 %v59
  %v108 = vunpack.c.l.b16 %v60
  %v109 = vunpack.c.l.b16 %v61
  %v110 = vunpack.c.l.b16 %v62
  %v111 = vunpack.c.l.b16 %v63
  %v112 = vunpack.c.l.b16 %v64
  %v113 = vunpack.c.l.b16 %v65
  %v114 = vunpack.c.l.b16 %v66
  %v115 = vunpack.c.l.b16 %v67
  %v116 = vunpack.c.l.b16 %v68
  %v117 = vpack.c.b16 %v102, %v101
  %v118 = vpack.c.b16 %v104, %v103
  %v119 = vpack.c.b16 %v106, %v105
  %v120 = vpack.c.b16 %v108, %v107
  %v121 = vpack.c.b16 %v110, %v109
  %v122 = vpack.c.b16 %v112, %v111
  %v123 = vpack.c.b16 %v114, %v113
  %v124 = vpack.c.b16 %v116, %v115
  %v149 = vunpack.c.l.b16 %v69
  %v150 = vunpack.c.l.b16 %v70
  %v151 = vunpack.c.l.b16 %v71
  %v152 = vunpack.c.l.b16 %v72
  %v153 = vunpack.c.l.b16 %v73
  %v154 = vunpack.c.l.b16 %v74
  %v155 = vunpack.c.l.b16 %v75
  %v156 = vunpack.c.l.b16 %v76
  %v157 = vunpack.c.l.b16 %v77
  %v158 = vunpack.c.l.b16 %v78
  %v159 = vunpack.c.l.b16 %v79
  %v160 = vunpack.c.l.b16 %v80
  %v161 = vunpack.c.l.b16 %v81
  %v162 = vunpack.c.l.b16 %v82
  %v163 = vunpack.c.l.b16 %v83
  %v164 = vunpack.c.l.b16 %v84
  %v165 = vpack.c.b16 %v150, %v149
  %v166 = vpack.c.b16 %v152, %v151
  %v167 = vpack.c.b16 %v154, %v153
  %v168 = vpack.c.b16 %v156, %v155
  %v169 = vpack.c.b16 %v158, %v157
  %v170 = vpack.c.b16 %v160, %v159
  %v171 = vpack.c.b16 %v162, %v161
  %v172 = vpack.c.b16 %v164, %v163
  %181 = vmatpush.bf16.msra.mxu0 %v172
  %182 = vmatpush.bf16.msra.mxu0 %v171
  %183 = vmatpush.bf16.msra.mxu0 %v170
  %184 = vmatpush.bf16.msra.mxu0 %v169
  %185 = vmatpush.bf16.msra.mxu0 %v168
  %186 = vmatpush.bf16.msra.mxu0 %v167
  %187 = vmatpush.bf16.msra.mxu0 %v166
  %188 = vmatpush.bf16.msra.mxu0 %v165
  %189 = vmatmul.bf16.gmra.mxu0 %v117
  %v190 = vpop.f32.mrf.mxu0
  %v191 = vadd.f32 0.0, %v190
  %v192 = vpop.f32.mrf.mxu0
  %v193 = vadd.f32 0.0, %v192
  %194 = vmatmul.bf16.gmra.mxu0 %v118
  %v195 = vpop.f32.mrf.mxu0
  %v196 = vadd.f32 0.0, %v195
  %v197 = vpop.f32.mrf.mxu0
  %v198 = vadd.f32 0.0, %v197
  %199 = vmatmul.bf16.gmra.mxu0 %v119
  %v200 = vpop.f32.mrf.mxu0
  %v201 = vadd.f32 0.0, %v200
  %v202 = vpop.f32.mrf.mxu0
  %v203 = vadd.f32 0.0, %v202
  %204 = vmatmul.bf16.gmra.mxu0 %v120
  %v205 = vpop.f32.mrf.mxu0
  %v206 = vadd.f32 0.0, %v205
  %v207 = vpop.f32.mrf.mxu0
  %v208 = vadd.f32 0.0, %v207
  %209 = vmatmul.bf16.gmra.mxu0 %v121
  %v210 = vpop.f32.mrf.mxu0
  %v211 = vadd.f32 0.0, %v210
  %v212 = vpop.f32.mrf.mxu0
  %v213 = vadd.f32 0.0, %v212
  %214 = vmatmul.bf16.gmra.mxu0 %v122
  %v215 = vpop.f32.mrf.mxu0
  %v216 = vadd.f32 0.0, %v215
  %v217 = vpop.f32.mrf.mxu0
  %v218 = vadd.f32 0.0, %v217
  %219 = vmatmul.bf16.gmra.mxu0 %v123
  %v220 = vpop.f32.mrf.mxu0
  %v221 = vadd.f32 0.0, %v220
  %v222 = vpop.f32.mrf.mxu0
  %v223 = vadd.f32 0.0, %v222
  %224 = vmatmul.bf16.gmra.mxu0 %v124
  %v225 = vpop.f32.mrf.mxu0
  %v226 = vadd.f32 0.0, %v225
  %v227 = vpop.f32.mrf.mxu0
  %v228 = vadd.f32 0.0, %v227
  %229 = vdwg.mxu0
  %v230 = vadd.f32 %v37, %v191
  %v231 = vadd.f32 %v38, %v193
  %v232 = vadd.f32 %v39, %v196
  %v233 = vadd.f32 %v40, %v198
  %v234 = vadd.f32 %v41, %v201
  %v235 = vadd.f32 %v42, %v203
  %v236 = vadd.f32 %v43, %v206
  %v237 = vadd.f32 %v44, %v208
  %v238 = vadd.f32 %v45, %v211
  %v239 = vadd.f32 %v46, %v213
  %v240 = vadd.f32 %v47, %v216
  %v241 = vadd.f32 %v48, %v218
  %v242 = vadd.f32 %v49, %v221
  %v243 = vadd.f32 %v50, %v223
  %v244 = vadd.f32 %v51, %v226
  %v245 = vadd.f32 %v52, %v228
  %246 = vst [vmem:[#allocation2] sm:$0xff] %v230
  %247 = vst [vmem:[#allocation2 + $0x8] sm:$0xff] %v231
  %248 = vst [vmem:[#allocation2 + $0x10] sm:$0xff] %v232
  %249 = vst [vmem:[#allocation2 + $0x18] sm:$0xff] %v233
  %250 = vst [vmem:[#allocation2 + $0x20] sm:$0xff] %v234
  %251 = vst [vmem:[#allocation2 + $0x28] sm:$0xff] %v235
  %252 = vst [vmem:[#allocation2 + $0x30] sm:$0xff] %v236
  %253 = vst [vmem:[#allocation2 + $0x38] sm:$0xff] %v237
  %254 = vst [vmem:[#allocation2 + $0x40] sm:$0xff] %v238
  %255 = vst [vmem:[#allocation2 + $0x48] sm:$0xff] %v239
  %256 = vst [vmem:[#allocation2 + $0x50] sm:$0xff] %v240
  %257 = vst [vmem:[#allocation2 + $0x58] sm:$0xff] %v241
  %258 = vst [vmem:[#allocation2 + $0x60] sm:$0xff] %v242
  %259 = vst [vmem:[#allocation2 + $0x68] sm:$0xff] %v243
  %260 = vst [vmem:[#allocation2 + $0x70] sm:$0xff] %v244
  %261 = vst [vmem:[#allocation2 + $0x78] sm:$0xff] %v245
  // Predicated region
  $region22: #{forward.12} parent=0 // pred_check
    %p262 = pneg %p17
  $region23: #{forward.12} parent=0 // pred_check_branch
    %264 = sbr.rel (%p262) target = $region25
  $region24: #{forward.12} parent=0 // pred_region
    %v265 = vld [vmem:[#allocation2] sm:$0xff]
    %v266 = vld [vmem:[#allocation2 + $0x8] sm:$0xff]
    %v267 = vld [vmem:[#allocation2 + $0x10] sm:$0xff]
    %v268 = vld [vmem:[#allocation2 + $0x18] sm:$0xff]
    %v269 = vld [vmem:[#allocation2 + $0x20] sm:$0xff]
    %v270 = vld [vmem:[#allocation2 + $0x28] sm:$0xff]
    %v271 = vld [vmem:[#allocation2 + $0x30] sm:$0xff]
    %v272 = vld [vmem:[#allocation2 + $0x38] sm:$0xff]
    %v273 = vld [vmem:[#allocation2 + $0x40] sm:$0xff]
    %v274 = vld [vmem:[#allocation2 + $0x48] sm:$0xff]
    %v275 = vld [vmem:[#allocation2 + $0x50] sm:$0xff]
    %v276 = vld [vmem:[#allocation2 + $0x58] sm:$0xff]
    %v277 = vld [vmem:[#allocation2 + $0x60] sm:$0xff]
    %v278 = vld [vmem:[#allocation2 + $0x68] sm:$0xff]
    %v279 = vld [vmem:[#allocation2 + $0x70] sm:$0xff]
    %v280 = vld [vmem:[#allocation2 + $0x78] sm:$0xff]
    %v281 = vld [vmem:[%s2] sm:$0x1]
    %v283 = vperm.slane %v281, 0
    %v285 = vmul.f32 %v265, %v283
    %v286 = vmul.f32 %v266, %v283
    %v287 = vmul.f32 %v267, %v283
    %v288 = vmul.f32 %v268, %v283
    %v289 = vmul.f32 %v269, %v283
    %v290 = vmul.f32 %v270, %v283
    %v291 = vmul.f32 %v271, %v283
    %v292 = vmul.f32 %v272, %v283
    %v293 = vmul.f32 %v273, %v283
    %v294 = vmul.f32 %v274, %v283
    %v295 = vmul.f32 %v275, %v283
    %v296 = vmul.f32 %v276, %v283
    %v297 = vmul.f32 %v277, %v283
    %v298 = vmul.f32 %v278, %v283
    %v299 = vmul.f32 %v279, %v283
    %v300 = vmul.f32 %v280, %v283
    %v301 = vld [vmem:[%s3] sm:$0x1]
    %v303 = vperm.slane %v301, 0
    %v305 = vadd.f32 %v285, %v303
    %v306 = vadd.f32 %v286, %v303
    %v307 = vadd.f32 %v287, %v303
    %v308 = vadd.f32 %v288, %v303
    %v309 = vadd.f32 %v289, %v303
    %v310 = vadd.f32 %v290, %v303
    %v311 = vadd.f32 %v291, %v303
    %v312 = vadd.f32 %v292, %v303
    %v313 = vadd.f32 %v293, %v303
    %v314 = vadd.f32 %v294, %v303
    %v315 = vadd.f32 %v295, %v303
    %v316 = vadd.f32 %v296, %v303
    %v317 = vadd.f32 %v297, %v303
    %v318 = vadd.f32 %v298, %v303
    %v319 = vadd.f32 %v299, %v303
    %v320 = vadd.f32 %v300, %v303
    %v321 = vpack.c.bf16 %v305, %v305
    %v322 = vpack.c.bf16 %v306, %v306
    %v323 = vpack.c.bf16 %v307, %v307
    %v324 = vpack.c.bf16 %v308, %v308
    %v325 = vpack.c.bf16 %v309, %v309
    %v326 = vpack.c.bf16 %v310, %v310
    %v327 = vpack.c.bf16 %v311, %v311
    %v328 = vpack.c.bf16 %v312, %v312
    %v329 = vpack.c.bf16 %v313, %v313
    %v330 = vpack.c.bf16 %v314, %v314
    %v331 = vpack.c.bf16 %v315, %v315
    %v332 = vpack.c.bf16 %v316, %v316
    %v333 = vpack.c.bf16 %v317, %v317
    %v334 = vpack.c.bf16 %v318, %v318
    %v335 = vpack.c.bf16 %v319, %v319
    %v336 = vpack.c.bf16 %v320, %v320
    %337 = vst [vmem:[%s4] sm:$0xf] %v321
    %338 = vst [vmem:[%s4 + $0x4] sm:$0xf] %v322
    %339 = vst [vmem:[%s4 + $0x8] sm:$0xf] %v323
    %340 = vst [vmem:[%s4 + $0xc] sm:$0xf] %v324
    %341 = vst [vmem:[%s4 + $0x10] sm:$0xf] %v325
    %342 = vst [vmem:[%s4 + $0x14] sm:$0xf] %v326
    %343 = vst [vmem:[%s4 + $0x18] sm:$0xf] %v327
    %344 = vst [vmem:[%s4 + $0x1c] sm:$0xf] %v328
    %345 = vst [vmem:[%s4 + $0x20] sm:$0xf] %v329
    %346 = vst [vmem:[%s4 + $0x24] sm:$0xf] %v330
    %347 = vst [vmem:[%s4 + $0x28] sm:$0xf] %v331
    %348 = vst [vmem:[%s4 + $0x2c] sm:$0xf] %v332
    %349 = vst [vmem:[%s4 + $0x30] sm:$0xf] %v333
    %350 = vst [vmem:[%s4 + $0x34] sm:$0xf] %v334
    %351 = vst [vmem:[%s4 + $0x38] sm:$0xf] %v335
    %352 = vst [vmem:[%s4 + $0x3c] sm:$0xf] %v336
  $region25: #{forward.12} parent=0 // pred_fallthru
    _
  // Predicated region
  $region26: #{forward.12} parent=0 // pred_check
    _
  $region27: #{forward.12} parent=0 // pred_check_branch
    %354 = sbr.rel (0) target = $region29
  $region28: #{forward.12} parent=0 // pred_region
    _
  $region29: #{forward.12} parent=0 // pred_fallthru
    _
  // Predicated region
  $region30: #{forward.12} parent=0 // pred_check
    _
  $region31: #{forward.12} parent=0 // pred_check_branch
    %356 = sbr.rel (0) target = $region33
  $region32: #{forward.12} parent=0 // pred_region
    _
  $region33: #{forward.12} parent=0 // pred_fallthru
    _

// kernel: forward.13
$region0: #{forward.13}
  #allocation0 [shape = 'u32[]', space=smem, size = 0x4, offset = 0x4, fixed_abs, tag = 'smem constant byte address 0x4 - core index']
  #allocation1 [shape = 'u32[72,128]{1,0:T(1,128)}', space=vmem, size = 0x9000, scoped, tag = 'internal scratch']
  #allocation2 [shape = 'f32[128,128]{1,0:T(8,128)}', space=vmem, size = 0x10000, scoped, tag = 'scratch operand']
  %s0 = inlined_call_operand.vmem [shape: bf16[128,128], index: 0, kind: input, shape index: {}]
  %s1 = inlined_call_operand.vmem [shape: bf16[128,128], index: 1, kind: input, shape index: {}]
  %s2 = inlined_call_operand.vmem [shape: f32[1,128], index: 2, kind: input, shape index: {}]
  %s3 = inlined_call_operand.vmem [shape: f32[1,128], index: 3, kind: input, shape index: {}]
  %s4 = inlined_call_operand.vmem [shape: bf16[128,128], index: 4, kind: input, shape index: {}]
  %s5 = inlined_call_operand.vmem [shape: bf16[128,128], index: 5, kind: output, shape index: {}]
  %s6 = sld [smem:[#allocation0]]
  $region38: #{forward.13} parent=0
    _
  %s8 = ssub.s32 1, %s6
  %s9 = scalar_select 0, %s8, %s6
  // Predicated region
  $region2: #{forward.13} parent=0 // pred_check
    _
  $region3: #{forward.13} parent=0 // pred_check_branch
    %11 = sbr.rel (0) target = $region5
  $region4: #{forward.13} parent=0 // pred_region
    _
  $region5: #{forward.13} parent=0 // pred_fallthru
    _
  // Predicated region
  $region6: #{forward.13} parent=0 // pred_check
    _
  $region7: #{forward.13} parent=0 // pred_check_branch
    %13 = sbr.rel (0) target = $region9
  $region8: #{forward.13} parent=0 // pred_region
    _
  $region9: #{forward.13} parent=0 // pred_fallthru
    _
  // Predicated region
  $region10: #{forward.13} parent=0 // pred_check
    _
  $region11: #{forward.13} parent=0 // pred_check_branch
    %15 = sbr.rel (0) target = $region13
  $region12: #{forward.13} parent=0 // pred_region
    _
  $region13: #{forward.13} parent=0 // pred_fallthru
    _
  // Predicated region
  $region14: #{forward.13} parent=0 // pred_check
    _
  $region15: #{forward.13} parent=0 // pred_check_branch
    %17 = sbr.rel (0) target = $region17
  $region16: #{forward.13} parent=0 // pred_region
    _
  $region17: #{forward.13} parent=0 // pred_fallthru
    _
  // Predicated region
  $region18: #{forward.13} parent=0 // pred_check
    _
  $region19: #{forward.13} parent=0 // pred_check_branch
    %19 = sbr.rel (0) target = $region21
  $region20: #{forward.13} parent=0 // pred_region
    _
  $region21: #{forward.13} parent=0 // pred_fallthru
    _
  %p20 = scmp.eq.s32.totalorder 0, 0
  // Predicated region
  $region22: #{forward.13} parent=0 // pred_check
    %p21 = pneg %p20
  $region23: #{forward.13} parent=0 // pred_check_branch
    %23 = sbr.rel (%p21) target = $region25
  $region24: #{forward.13} parent=0 // pred_region
    %24 = vst [vmem:[#allocation2] sm:$0xff] 0.0
    %25 = vst [vmem:[#allocation2 + $0x8] sm:$0xff] 0.0
    %26 = vst [vmem:[#allocation2 + $0x10] sm:$0xff] 0.0
    %27 = vst [vmem:[#allocation2 + $0x18] sm:$0xff] 0.0
    %28 = vst [vmem:[#allocation2 + $0x20] sm:$0xff] 0.0
    %29 = vst [vmem:[#allocation2 + $0x28] sm:$0xff] 0.0
    %30 = vst [vmem:[#allocation2 + $0x30] sm:$0xff] 0.0
    %31 = vst [vmem:[#allocation2 + $0x38] sm:$0xff] 0.0
    %32 = vst [vmem:[#allocation2 + $0x40] sm:$0xff] 0.0
    %33 = vst [vmem:[#allocation2 + $0x48] sm:$0xff] 0.0
    %34 = vst [vmem:[#allocation2 + $0x50] sm:$0xff] 0.0
    %35 = vst [vmem:[#allocation2 + $0x58] sm:$0xff] 0.0
    %36 = vst [vmem:[#allocation2 + $0x60] sm:$0xff] 0.0
    %37 = vst [vmem:[#allocation2 + $0x68] sm:$0xff] 0.0
    %38 = vst [vmem:[#allocation2 + $0x70] sm:$0xff] 0.0
    %39 = vst [vmem:[#allocation2 + $0x78] sm:$0xff] 0.0
  $region25: #{forward.13} parent=0 // pred_fallthru
    _
  %v40 = vld [vmem:[#allocation2] sm:$0xff]
  %v41 = vld [vmem:[#allocation2 + $0x8] sm:$0xff]
  %v42 = vld [vmem:[#allocation2 + $0x10] sm:$0xff]
  %v43 = vld [vmem:[#allocation2 + $0x18] sm:$0xff]
  %v44 = vld [vmem:[#allocation2 + $0x20] sm:$0xff]
  %v45 = vld [vmem:[#allocation2 + $0x28] sm:$0xff]
  %v46 = vld [vmem:[#allocation2 + $0x30] sm:$0xff]
  %v47 = vld [vmem:[#allocation2 + $0x38] sm:$0xff]
  %v48 = vld [vmem:[#allocation2 + $0x40] sm:$0xff]
  %v49 = vld [vmem:[#allocation2 + $0x48] sm:$0xff]
  %v50 = vld [vmem:[#allocation2 + $0x50] sm:$0xff]
  %v51 = vld [vmem:[#allocation2 + $0x58] sm:$0xff]
  %v52 = vld [vmem:[#allocation2 + $0x60] sm:$0xff]
  %v53 = vld [vmem:[#allocation2 + $0x68] sm:$0xff]
  %v54 = vld [vmem:[#allocation2 + $0x70] sm:$0xff]
  %v55 = vld [vmem:[#allocation2 + $0x78] sm:$0xff]
  %v56 = vld [vmem:[%s0] sm:$0xf]
  %v57 = vld [vmem:[%s0 + $0x4] sm:$0xf]
  %v58 = vld [vmem:[%s0 + $0x8] sm:$0xf]
  %v59 = vld [vmem:[%s0 + $0xc] sm:$0xf]
  %v60 = vld [vmem:[%s0 + $0x10] sm:$0xf]
  %v61 = vld [vmem:[%s0 + $0x14] sm:$0xf]
  %v62 = vld [vmem:[%s0 + $0x18] sm:$0xf]
  %v63 = vld [vmem:[%s0 + $0x1c] sm:$0xf]
  %v64 = vld [vmem:[%s0 + $0x20] sm:$0xf]
  %v65 = vld [vmem:[%s0 + $0x24] sm:$0xf]
  %v66 = vld [vmem:[%s0 + $0x28] sm:$0xf]
  %v67 = vld [vmem:[%s0 + $0x2c] sm:$0xf]
  %v68 = vld [vmem:[%s0 + $0x30] sm:$0xf]
  %v69 = vld [vmem:[%s0 + $0x34] sm:$0xf]
  %v70 = vld [vmem:[%s0 + $0x38] sm:$0xf]
  %v71 = vld [vmem:[%s0 + $0x3c] sm:$0xf]
  %v72 = vld [vmem:[%s1] sm:$0xf]
  %v73 = vld [vmem:[%s1 + $0x4] sm:$0xf]
  %v74 = vld [vmem:[%s1 + $0x8] sm:$0xf]
  %v75 = vld [vmem:[%s1 + $0xc] sm:$0xf]
  %v76 = vld [vmem:[%s1 + $0x10] sm:$0xf]
  %v77 = vld [vmem:[%s1 + $0x14] sm:$0xf]
  %v78 = vld [vmem:[%s1 + $0x18] sm:$0xf]
  %v79 = vld [vmem:[%s1 + $0x1c] sm:$0xf]
  %v80 = vld [vmem:[%s1 + $0x20] sm:$0xf]
  %v81 = vld [vmem:[%s1 + $0x24] sm:$0xf]
  %v82 = vld [vmem:[%s1 + $0x28] sm:$0xf]
  %v83 = vld [vmem:[%s1 + $0x2c] sm:$0xf]
  %v84 = vld [vmem:[%s1 + $0x30] sm:$0xf]
  %v85 = vld [vmem:[%s1 + $0x34] sm:$0xf]
  %v86 = vld [vmem:[%s1 + $0x38] sm:$0xf]
  %v87 = vld [vmem:[%s1 + $0x3c] sm:$0xf]
  %v104 = vunpack.c.l.b16 %v56
  %v105 = vunpack.c.l.b16 %v57
  %v106 = vunpack.c.l.b16 %v58
  %v107 = vunpack.c.l.b16 %v59
  %v108 = vunpack.c.l.b16 %v60
  %v109 = vunpack.c.l.b16 %v61
  %v110 = vunpack.c.l.b16 %v62
  %v111 = vunpack.c.l.b16 %v63
  %v112 = vunpack.c.l.b16 %v64
  %v113 = vunpack.c.l.b16 %v65
  %v114 = vunpack.c.l.b16 %v66
  %v115 = vunpack.c.l.b16 %v67
  %v116 = vunpack.c.l.b16 %v68
  %v117 = vunpack.c.l.b16 %v69
  %v118 = vunpack.c.l.b16 %v70
  %v119 = vunpack.c.l.b16 %v71
  %v120 = vpack.c.b16 %v105, %v104
  %v121 = vpack.c.b16 %v107, %v106
  %v122 = vpack.c.b16 %v109, %v108
  %v123 = vpack.c.b16 %v111, %v110
  %v124 = vpack.c.b16 %v113, %v112
  %v125 = vpack.c.b16 %v115, %v114
  %v126 = vpack.c.b16 %v117, %v116
  %v127 = vpack.c.b16 %v119, %v118
  %v152 = vunpack.c.l.b16 %v72
  %v153 = vunpack.c.l.b16 %v73
  %v154 = vunpack.c.l.b16 %v74
  %v155 = vunpack.c.l.b16 %v75
  %v156 = vunpack.c.l.b16 %v76
  %v157 = vunpack.c.l.b16 %v77
  %v158 = vunpack.c.l.b16 %v78
  %v159 = vunpack.c.l.b16 %v79
  %v160 = vunpack.c.l.b16 %v80
  %v161 = vunpack.c.l.b16 %v81
  %v162 = vunpack.c.l.b16 %v82
  %v163 = vunpack.c.l.b16 %v83
  %v164 = vunpack.c.l.b16 %v84
  %v165 = vunpack.c.l.b16 %v85
  %v166 = vunpack.c.l.b16 %v86
  %v167 = vunpack.c.l.b16 %v87
  %v168 = vpack.c.b16 %v153, %v152
  %v169 = vpack.c.b16 %v155, %v154
  %v170 = vpack.c.b16 %v157, %v156
  %v171 = vpack.c.b16 %v159, %v158
  %v172 = vpack.c.b16 %v161, %v160
  %v173 = vpack.c.b16 %v163, %v162
  %v174 = vpack.c.b16 %v165, %v164
  %v175 = vpack.c.b16 %v167, %v166
  %184 = vmatpush.bf16.msra.mxu0 %v175
  %185 = vmatpush.bf16.msra.mxu0 %v174
  %186 = vmatpush.bf16.msra.mxu0 %v173
  %187 = vmatpush.bf16.msra.mxu0 %v172
  %188 = vmatpush.bf16.msra.mxu0 %v171
  %189 = vmatpush.bf16.msra.mxu0 %v170
  %190 = vmatpush.bf16.msra.mxu0 %v169
  %191 = vmatpush.bf16.msra.mxu0 %v168
  %192 = vmatmul.bf16.gmra.mxu0 %v120
  %v193 = vpop.f32.mrf.mxu0
  %v194 = vadd.f32 0.0, %v193
  %v195 = vpop.f32.mrf.mxu0
  %v196 = vadd.f32 0.0, %v195
  %197 = vmatmul.bf16.gmra.mxu0 %v121
  %v198 = vpop.f32.mrf.mxu0
  %v199 = vadd.f32 0.0, %v198
  %v200 = vpop.f32.mrf.mxu0
  %v201 = vadd.f32 0.0, %v200
  %202 = vmatmul.bf16.gmra.mxu0 %v122
  %v203 = vpop.f32.mrf.mxu0
  %v204 = vadd.f32 0.0, %v203
  %v205 = vpop.f32.mrf.mxu0
  %v206 = vadd.f32 0.0, %v205
  %207 = vmatmul.bf16.gmra.mxu0 %v123
  %v208 = vpop.f32.mrf.mxu0
  %v209 = vadd.f32 0.0, %v208
  %v210 = vpop.f32.mrf.mxu0
  %v211 = vadd.f32 0.0, %v210
  %212 = vmatmul.bf16.gmra.mxu0 %v124
  %v213 = vpop.f32.mrf.mxu0
  %v214 = vadd.f32 0.0, %v213
  %v215 = vpop.f32.mrf.mxu0
  %v216 = vadd.f32 0.0, %v215
  %217 = vmatmul.bf16.gmra.mxu0 %v125
  %v218 = vpop.f32.mrf.mxu0
  %v219 = vadd.f32 0.0, %v218
  %v220 = vpop.f32.mrf.mxu0
  %v221 = vadd.f32 0.0, %v220
  %222 = vmatmul.bf16.gmra.mxu0 %v126
  %v223 = vpop.f32.mrf.mxu0
  %v224 = vadd.f32 0.0, %v223
  %v225 = vpop.f32.mrf.mxu0
  %v226 = vadd.f32 0.0, %v225
  %227 = vmatmul.bf16.gmra.mxu0 %v127
  %v228 = vpop.f32.mrf.mxu0
  %v229 = vadd.f32 0.0, %v228
  %v230 = vpop.f32.mrf.mxu0
  %v231 = vadd.f32 0.0, %v230
  %232 = vdwg.mxu0
  %v233 = vadd.f32 %v40, %v194
  %v234 = vadd.f32 %v41, %v196
  %v235 = vadd.f32 %v42, %v199
  %v236 = vadd.f32 %v43, %v201
  %v237 = vadd.f32 %v44, %v204
  %v238 = vadd.f32 %v45, %v206
  %v239 = vadd.f32 %v46, %v209
  %v240 = vadd.f32 %v47, %v211
  %v241 = vadd.f32 %v48, %v214
  %v242 = vadd.f32 %v49, %v216
  %v243 = vadd.f32 %v50, %v219
  %v244 = vadd.f32 %v51, %v221
  %v245 = vadd.f32 %v52, %v224
  %v246 = vadd.f32 %v53, %v226
  %v247 = vadd.f32 %v54, %v229
  %v248 = vadd.f32 %v55, %v231
  %249 = vst [vmem:[#allocation2] sm:$0xff] %v233
  %250 = vst [vmem:[#allocation2 + $0x8] sm:$0xff] %v234
  %251 = vst [vmem:[#allocation2 + $0x10] sm:$0xff] %v235
  %252 = vst [vmem:[#allocation2 + $0x18] sm:$0xff] %v236
  %253 = vst [vmem:[#allocation2 + $0x20] sm:$0xff] %v237
  %254 = vst [vmem:[#allocation2 + $0x28] sm:$0xff] %v238
  %255 = vst [vmem:[#allocation2 + $0x30] sm:$0xff] %v239
  %256 = vst [vmem:[#allocation2 + $0x38] sm:$0xff] %v240
  %257 = vst [vmem:[#allocation2 + $0x40] sm:$0xff] %v241
  %258 = vst [vmem:[#allocation2 + $0x48] sm:$0xff] %v242
  %259 = vst [vmem:[#allocation2 + $0x50] sm:$0xff] %v243
  %260 = vst [vmem:[#allocation2 + $0x58] sm:$0xff] %v244
  %261 = vst [vmem:[#allocation2 + $0x60] sm:$0xff] %v245
  %262 = vst [vmem:[#allocation2 + $0x68] sm:$0xff] %v246
  %263 = vst [vmem:[#allocation2 + $0x70] sm:$0xff] %v247
  %264 = vst [vmem:[#allocation2 + $0x78] sm:$0xff] %v248
  // Predicated region
  $region26: #{forward.13} parent=0 // pred_check
    %p265 = pneg %p20
  $region27: #{forward.13} parent=0 // pred_check_branch
    %267 = sbr.rel (%p265) target = $region29
  $region28: #{forward.13} parent=0 // pred_region
    %v268 = vld [vmem:[#allocation2] sm:$0xff]
    %v269 = vld [vmem:[#allocation2 + $0x8] sm:$0xff]
    %v270 = vld [vmem:[#allocation2 + $0x10] sm:$0xff]
    %v271 = vld [vmem:[#allocation2 + $0x18] sm:$0xff]
    %v272 = vld [vmem:[#allocation2 + $0x20] sm:$0xff]
    %v273 = vld [vmem:[#allocation2 + $0x28] sm:$0xff]
    %v274 = vld [vmem:[#allocation2 + $0x30] sm:$0xff]
    %v275 = vld [vmem:[#allocation2 + $0x38] sm:$0xff]
    %v276 = vld [vmem:[#allocation2 + $0x40] sm:$0xff]
    %v277 = vld [vmem:[#allocation2 + $0x48] sm:$0xff]
    %v278 = vld [vmem:[#allocation2 + $0x50] sm:$0xff]
    %v279 = vld [vmem:[#allocation2 + $0x58] sm:$0xff]
    %v280 = vld [vmem:[#allocation2 + $0x60] sm:$0xff]
    %v281 = vld [vmem:[#allocation2 + $0x68] sm:$0xff]
    %v282 = vld [vmem:[#allocation2 + $0x70] sm:$0xff]
    %v283 = vld [vmem:[#allocation2 + $0x78] sm:$0xff]
    %v284 = vld [vmem:[%s2] sm:$0x1]
    %v286 = vperm.slane %v284, 0
    %v288 = vmul.f32 %v268, %v286
    %v289 = vmul.f32 %v269, %v286
    %v290 = vmul.f32 %v270, %v286
    %v291 = vmul.f32 %v271, %v286
    %v292 = vmul.f32 %v272, %v286
    %v293 = vmul.f32 %v273, %v286
    %v294 = vmul.f32 %v274, %v286
    %v295 = vmul.f32 %v275, %v286
    %v296 = vmul.f32 %v276, %v286
    %v297 = vmul.f32 %v277, %v286
    %v298 = vmul.f32 %v278, %v286
    %v299 = vmul.f32 %v279, %v286
    %v300 = vmul.f32 %v280, %v286
    %v301 = vmul.f32 %v281, %v286
    %v302 = vmul.f32 %v282, %v286
    %v303 = vmul.f32 %v283, %v286
    %v304 = vld [vmem:[%s3] sm:$0x1]
    %v306 = vperm.slane %v304, 0
    %v308 = vadd.f32 %v288, %v306
    %v309 = vadd.f32 %v289, %v306
    %v310 = vadd.f32 %v290, %v306
    %v311 = vadd.f32 %v291, %v306
    %v312 = vadd.f32 %v292, %v306
    %v313 = vadd.f32 %v293, %v306
    %v314 = vadd.f32 %v294, %v306
    %v315 = vadd.f32 %v295, %v306
    %v316 = vadd.f32 %v296, %v306
    %v317 = vadd.f32 %v297, %v306
    %v318 = vadd.f32 %v298, %v306
    %v319 = vadd.f32 %v299, %v306
    %v320 = vadd.f32 %v300, %v306
    %v321 = vadd.f32 %v301, %v306
    %v322 = vadd.f32 %v302, %v306
    %v323 = vadd.f32 %v303, %v306
    %v324 = vld [vmem:[%s4] sm:$0xf]
    %v325 = vld [vmem:[%s4 + $0x4] sm:$0xf]
    %v326 = vld [vmem:[%s4 + $0x8] sm:$0xf]
    %v327 = vld [vmem:[%s4 + $0xc] sm:$0xf]
    %v328 = vld [vmem:[%s4 + $0x10] sm:$0xf]
    %v329 = vld [vmem:[%s4 + $0x14] sm:$0xf]
    %v330 = vld [vmem:[%s4 + $0x18] sm:$0xf]
    %v331 = vld [vmem:[%s4 + $0x1c] sm:$0xf]
    %v332 = vld [vmem:[%s4 + $0x20] sm:$0xf]
    %v333 = vld [vmem:[%s4 + $0x24] sm:$0xf]
    %v334 = vld [vmem:[%s4 + $0x28] sm:$0xf]
    %v335 = vld [vmem:[%s4 + $0x2c] sm:$0xf]
    %v336 = vld [vmem:[%s4 + $0x30] sm:$0xf]
    %v337 = vld [vmem:[%s4 + $0x34] sm:$0xf]
    %v338 = vld [vmem:[%s4 + $0x38] sm:$0xf]
    %v339 = vld [vmem:[%s4 + $0x3c] sm:$0xf]
    %v340 = vunpack.c.l.bf16 %v324
    %v341 = vunpack.c.l.bf16 %v325
    %v342 = vunpack.c.l.bf16 %v326
    %v343 = vunpack.c.l.bf16 %v327
    %v344 = vunpack.c.l.bf16 %v328
    %v345 = vunpack.c.l.bf16 %v329
    %v346 = vunpack.c.l.bf16 %v330
    %v347 = vunpack.c.l.bf16 %v331
    %v348 = vunpack.c.l.bf16 %v332
    %v349 = vunpack.c.l.bf16 %v333
    %v350 = vunpack.c.l.bf16 %v334
    %v351 = vunpack.c.l.bf16 %v335
    %v352 = vunpack.c.l.bf16 %v336
    %v353 = vunpack.c.l.bf16 %v337
    %v354 = vunpack.c.l.bf16 %v338
    %v355 = vunpack.c.l.bf16 %v339
    %v356 = vadd.f32 %v308, %v340
    %v357 = vadd.f32 %v309, %v341
    %v358 = vadd.f32 %v310, %v342
    %v359 = vadd.f32 %v311, %v343
    %v360 = vadd.f32 %v312, %v344
    %v361 = vadd.f32 %v313, %v345
    %v362 = vadd.f32 %v314, %v346
    %v363 = vadd.f32 %v315, %v347
    %v364 = vadd.f32 %v316, %v348
    %v365 = vadd.f32 %v317, %v349
    %v366 = vadd.f32 %v318, %v350
    %v367 = vadd.f32 %v319, %v351
    %v368 = vadd.f32 %v320, %v352
    %v369 = vadd.f32 %v321, %v353
    %v370 = vadd.f32 %v322, %v354
    %v371 = vadd.f32 %v323, %v355
    %v372 = vmax.f32 %v356, 0.0
    %v373 = vmax.f32 %v357, 0.0
    %v374 = vmax.f32 %v358, 0.0
    %v375 = vmax.f32 %v359, 0.0
    %v376 = vmax.f32 %v360, 0.0
    %v377 = vmax.f32 %v361, 0.0
    %v378 = vmax.f32 %v362, 0.0
    %v379 = vmax.f32 %v363, 0.0
    %v380 = vmax.f32 %v364, 0.0
    %v381 = vmax.f32 %v365, 0.0
    %v382 = vmax.f32 %v366, 0.0
    %v383 = vmax.f32 %v367, 0.0
    %v384 = vmax.f32 %v368, 0.0
    %v385 = vmax.f32 %v369, 0.0
    %v386 = vmax.f32 %v370, 0.0
    %v387 = vmax.f32 %v371, 0.0
    %v388 = vpack.c.bf16 %v372, %v372
    %v389 = vpack.c.bf16 %v373, %v373
    %v390 = vpack.c.bf16 %v374, %v374
    %v391 = vpack.c.bf16 %v375, %v375
    %v392 = vpack.c.bf16 %v376, %v376
    %v393 = vpack.c.bf16 %v377, %v377
    %v394 = vpack.c.bf16 %v378, %v378
    %v395 = vpack.c.bf16 %v379, %v379
    %v396 = vpack.c.bf16 %v380, %v380
    %v397 = vpack.c.bf16 %v381, %v381
    %v398 = vpack.c.bf16 %v382, %v382
    %v399 = vpack.c.bf16 %v383, %v383
    %v400 = vpack.c.bf16 %v384, %v384
    %v401 = vpack.c.bf16 %v385, %v385
    %v402 = vpack.c.bf16 %v386, %v386
    %v403 = vpack.c.bf16 %v387, %v387
    %404 = vst [vmem:[%s5] sm:$0xf] %v388
    %405 = vst [vmem:[%s5 + $0x4] sm:$0xf] %v389
    %406 = vst [vmem:[%s5 + $0x8] sm:$0xf] %v390
    %407 = vst [vmem:[%s5 + $0xc] sm:$0xf] %v391
    %408 = vst [vmem:[%s5 + $0x10] sm:$0xf] %v392
    %409 = vst [vmem:[%s5 + $0x14] sm:$0xf] %v393
    %410 = vst [vmem:[%s5 + $0x18] sm:$0xf] %v394
    %411 = vst [vmem:[%s5 + $0x1c] sm:$0xf] %v395
    %412 = vst [vmem:[%s5 + $0x20] sm:$0xf] %v396
    %413 = vst [vmem:[%s5 + $0x24] sm:$0xf] %v397
    %414 = vst [vmem:[%s5 + $0x28] sm:$0xf] %v398
    %415 = vst [vmem:[%s5 + $0x2c] sm:$0xf] %v399
    %416 = vst [vmem:[%s5 + $0x30] sm:$0xf] %v400
    %417 = vst [vmem:[%s5 + $0x34] sm:$0xf] %v401
    %418 = vst [vmem:[%s5 + $0x38] sm:$0xf] %v402
    %419 = vst [vmem:[%s5 + $0x3c] sm:$0xf] %v403
  $region29: #{forward.13} parent=0 // pred_fallthru
    _
  // Predicated region
  $region30: #{forward.13} parent=0 // pred_check
    _
  $region31: #{forward.13} parent=0 // pred_check_branch
    %421 = sbr.rel (0) target = $region33
  $region32: #{forward.13} parent=0 // pred_region
    _
  $region33: #{forward.13} parent=0 // pred_fallthru
    _
  // Predicated region
  $region34: #{forward.13} parent=0 // pred_check
    _
  $region35: #{forward.13} parent=0 // pred_check_branch
    %423 = sbr.rel (0) target = $region37
  $region36: #{forward.13} parent=0 // pred_region
    _
  $region37: #{forward.13} parent=0 // pred_fallthru
    _

// kernel: forward.11
$region0: #{forward.11}
  #allocation0 [shape = 'u32[]', space=smem, size = 0x4, offset = 0x4, fixed_abs, tag = 'smem constant byte address 0x4 - core index']
  #allocation1 [shape = 'u32[72,128]{1,0:T(1,128)}', space=vmem, size = 0x9000, scoped, tag = 'internal scratch']
  #allocation2 [shape = 'f32[72,128]{1,0:T(8,128)}', space=vmem, size = 0x9000, scoped, tag = 'scratch operand']
  %s0 = inlined_call_operand.vmem [shape: bf16[2,352,128], index: 0, kind: input, shape index: {}]
  %s1 = inlined_call_operand.vmem [shape: bf16[9,128,128], index: 1, kind: input, shape index: {}]
  %s2 = inlined_call_operand.vmem [shape: f32[1,128], index: 2, kind: input, shape index: {}]
  %s3 = inlined_call_operand.vmem [shape: f32[1,128], index: 3, kind: input, shape index: {}]
  %s4 = inlined_call_operand.vmem [shape: bf16[2,72,128], index: 4, kind: output, shape index: {}]
  %s5 = sld [smem:[#allocation0]]
  $region49: #{forward.11} parent=0
    _
  %s7 = ssub.s32 1, %s5
  %s8 = scalar_select 0, %s7, %s5
  loop: start=0, step=1, limit=4
  $region2: #{forward.11} parent=0 // loop_pre_header
    _
  $region3: #{forward.11} parent=0 // loop_header
    %s10 = sphi 0, %s14
    %p11 = scmp.ge.s32.totalorder %s10, 4
    %s17 = sphi 0, %s29
    %s18 = sphi 0, %s25
    %s19 = sphi 0, %s17
    %s20 = sphi 0, %s18
    %s21 = sphi 0, %s19
    %s22 = sphi 0, %s20
    %s32 = sphi 0, %s34
    %s35 = sphi 0, %s32
    %s36 = sphi 0, %s35
    %s52 = sphi 0, %s36
    %s58 = sphi 0, %s60
    %s61 = sphi 0, %s58
    %s62 = sphi 0, %s61
    %s78 = sphi 0, %s62
    %s84 = sphi 0, %s86
    %s87 = sphi 0, %s84
    %s88 = sphi 0, %s87
    %s104 = sphi 0, %s88
    %s110 = sphi 0, %s112
    %s113 = sphi 0, %s110
    %s114 = sphi 0, %s113
    %s130 = sphi 0, %s114
    %s138 = sphi 0, %s140
    %s141 = sphi 0, %s138
    %s142 = sphi 0, %s141
    %s158 = sphi 0, %s142
  $region4: #{forward.11} parent=0 // loop_header_branch
    %13 = sbr.rel (%p11) target = $region8
  $region5: #{forward.11} parent=0 // loop_body
    %s15 = ssub.s32 %s10, 1
    %s16 = ssub.s32 %s10, 2
    %s23 = sadd.s32 1, %s18
    %p24 = scmp.ge.s32.totalorder %s23, 1
    %s25 = scalar_select %p24, 0, %s23
    %s26 = sadd.s32 1, %s17
    %s27 = scalar_select %p24, %s26, %s17
    %p28 = scmp.ge.s32.totalorder %s27, 2
    %s29 = scalar_select %p28, 0, %s27
    %s30 = ssub.s32 %s17, %s29
    %p31 = scmp.eq.s32.totalorder %s30, 0
    %s33 = sadd.s32 %s32, 1
    %s34 = scalar_select %p31, %s32, %s33
    %p37 = pneg %p31
    %p38 = scmp.eq.s32.totalorder %s10, 1
    %p39 = por %p37, %p38
    %p40 = scmp.ne.s32.totalorder %s32, %s35
    %p41 = scmp.eq.s32.totalorder %s10, 0
    %p42 = por %p40, %p41
    %p43 = scmp.ne.s32.totalorder %s32, %s35
    %p44 = scmp.eq.s32.totalorder %s15, 1
    %p45 = por %p43, %p44
    %p46 = scmp.ne.s32.totalorder %s35, %s36
    %p47 = scmp.eq.s32.totalorder %s15, 0
    %p48 = por %p46, %p47
    %p49 = scmp.ne.s32.totalorder %s35, %s36
    %p50 = scmp.eq.s32.totalorder %s16, 1
    %p51 = por %p49, %p50
    %p53 = scmp.ne.s32.totalorder %s36, %s52
    %p54 = scmp.eq.s32.totalorder %s16, 0
    %p55 = por %p53, %p54
    %s56 = ssub.s32 %s18, %s25
    %p57 = scmp.eq.s32.totalorder %s56, 0
    %s59 = sadd.s32 %s58, 1
    %s60 = scalar_select %p57, %s58, %s59
    %p63 = pneg %p57
    %p64 = scmp.eq.s32.totalorder %s10, 1
    %p65 = por %p63, %p64
    %p66 = scmp.ne.s32.totalorder %s58, %s61
    %p67 = scmp.eq.s32.totalorder %s10, 0
    %p68 = por %p66, %p67
    %p69 = scmp.ne.s32.totalorder %s58, %s61
    %p70 = scmp.eq.s32.totalorder %s15, 1
    %p71 = por %p69, %p70
    %p72 = scmp.ne.s32.totalorder %s61, %s62
    %p73 = scmp.eq.s32.totalorder %s15, 0
    %p74 = por %p72, %p73
    %p75 = scmp.ne.s32.totalorder %s61, %s62
    %p76 = scmp.eq.s32.totalorder %s16, 1
    %p77 = por %p75, %p76
    %p79 = scmp.ne.s32.totalorder %s62, %s78
    %p80 = scmp.eq.s32.totalorder %s16, 0
    %p81 = por %p79, %p80
    %s82 = ssub.s32 %s18, %s25
    %p83 = scmp.eq.s32.totalorder %s82, 0
    %s85 = sadd.s32 %s84, 1
    %s86 = scalar_select %p83, %s84, %s85
    %p89 = pneg %p83
    %p90 = scmp.eq.s32.totalorder %s10, 1
    %p91 = por %p89, %p90
    %p92 = scmp.ne.s32.totalorder %s84, %s87
    %p93 = scmp.eq.s32.totalorder %s10, 0
    %p94 = por %p92, %p93
    %p95 = scmp.ne.s32.totalorder %s84, %s87
    %p96 = scmp.eq.s32.totalorder %s15, 1
    %p97 = por %p95, %p96
    %p98 = scmp.ne.s32.totalorder %s87, %s88
    %p99 = scmp.eq.s32.totalorder %s15, 0
    %p100 = por %p98, %p99
    %p101 = scmp.ne.s32.totalorder %s87, %s88
    %p102 = scmp.eq.s32.totalorder %s16, 1
    %p103 = por %p101, %p102
    %p105 = scmp.ne.s32.totalorder %s88, %s104
    %p106 = scmp.eq.s32.totalorder %s16, 0
    %p107 = por %p105, %p106
    %s108 = ssub.s32 %s18, %s25
    %p109 = scmp.eq.s32.totalorder %s108, 0
    %s111 = sadd.s32 %s110, 1
    %s112 = scalar_select %p109, %s110, %s111
    %p115 = pneg %p109
    %p116 = scmp.eq.s32.totalorder %s10, 1
    %p117 = por %p115, %p116
    %p118 = scmp.ne.s32.totalorder %s110, %s113
    %p119 = scmp.eq.s32.totalorder %s10, 0
    %p120 = por %p118, %p119
    %p121 = scmp.ne.s32.totalorder %s110, %s113
    %p122 = scmp.eq.s32.totalorder %s15, 1
    %p123 = por %p121, %p122
    %p124 = scmp.ne.s32.totalorder %s113, %s114
    %p125 = scmp.eq.s32.totalorder %s15, 0
    %p126 = por %p124, %p125
    %p127 = scmp.ne.s32.totalorder %s113, %s114
    %p128 = scmp.eq.s32.totalorder %s16, 1
    %p129 = por %p127, %p128
    %p131 = scmp.ne.s32.totalorder %s114, %s130
    %p132 = scmp.eq.s32.totalorder %s16, 0
    %p133 = por %p131, %p132
    %s134 = ssub.s32 %s17, %s29
    %s135 = ssub.s32 %s18, %s25
    %s136 = sor.u32 %s134, %s135
    %p137 = scmp.eq.s32.totalorder %s136, 0
    %s139 = sadd.s32 %s138, 1
    %s140 = scalar_select %p137, %s138, %s139
    %p143 = pneg %p137
    %p144 = scmp.eq.s32.totalorder %s10, 1
    %p145 = por %p143, %p144
    %p146 = scmp.ne.s32.totalorder %s138, %s141
    %p147 = scmp.eq.s32.totalorder %s10, 0
    %p148 = por %p146, %p147
    %p149 = scmp.ne.s32.totalorder %s138, %s141
    %p150 = scmp.eq.s32.totalorder %s15, 1
    %p151 = por %p149, %p150
    %p152 = scmp.ne.s32.totalorder %s141, %s142
    %p153 = scmp.eq.s32.totalorder %s15, 0
    %p154 = por %p152, %p153
    %p155 = scmp.ne.s32.totalorder %s141, %s142
    %p156 = scmp.eq.s32.totalorder %s16, 1
    %p157 = por %p155, %p156
    %p159 = scmp.ne.s32.totalorder %s142, %s158
    %p160 = scmp.eq.s32.totalorder %s16, 0
    %p161 = por %p159, %p160
    %p162 = scmp.le.s32.totalorder 1, %s10
    %p163 = scmp.lt.s32.totalorder %s10, 3
    %p164 = pnand %p162, %p163
    %p165 = pneg %p164
    // Predicated region
    $region9: #{forward.11} parent=5 // pred_check
      _
    $region10: #{forward.11} parent=5 // pred_check_branch
      %167 = sbr.rel (%p164) target = $region12
    $region11: #{forward.11} parent=5 // pred_region
      %s168 = ssub.s32 %s10, 1
      // Predicated region
      $region13: #{forward.11} parent=11 // pred_check
        %p169 = pneg %p74
      $region14: #{forward.11} parent=11 // pred_check_branch
        %171 = sbr.rel (%p169) target = $region16
      $region15: #{forward.11} parent=11 // pred_region
        %p172 = scmp.lt.s32.totalorder %s20, 0
        %s173 = scalar_select %p172, %s20, 0
        %s174 = smul.addr %s173, 4
        %s175 = scalar_lea.vmem %s1, %s174
      $region16: #{forward.11} parent=11 // pred_fallthru
        _
      // Predicated region
      $region17: #{forward.11} parent=11 // pred_check
        %p176 = pneg %p100
      $region18: #{forward.11} parent=11 // pred_check_branch
        %178 = sbr.rel (%p176) target = $region20
      $region19: #{forward.11} parent=11 // pred_region
        %p179 = scmp.lt.s32.totalorder %s20, 0
        %s180 = scalar_select %p179, %s20, 0
        %s181 = scalar_lea.vmem %s2, %s180
      $region20: #{forward.11} parent=11 // pred_fallthru
        _
      // Predicated region
      $region21: #{forward.11} parent=11 // pred_check
        %p182 = pneg %p126
      $region22: #{forward.11} parent=11 // pred_check_branch
        %184 = sbr.rel (%p182) target = $region24
      $region23: #{forward.11} parent=11 // pred_region
        %p185 = scmp.lt.s32.totalorder %s20, 0
        %s186 = scalar_select %p185, %s20, 0
        %s187 = scalar_lea.vmem %s3, %s186
      $region24: #{forward.11} parent=11 // pred_fallthru
        _
    $region12: #{forward.11} parent=5 // pred_fallthru
      _
    %p188 = scmp.lt.s32.totalorder %s10, 2
    // Predicated region
    $region25: #{forward.11} parent=5 // pred_check
      %p189 = pneg %p188
    $region26: #{forward.11} parent=5 // pred_check_branch
      %191 = sbr.rel (%p189) target = $region28
    $region27: #{forward.11} parent=5 // pred_region
      // Predicated region
      $region29: #{forward.11} parent=27 // pred_check
        %p192 = pneg %p42
      $region30: #{forward.11} parent=27 // pred_check_branch
        %194 = sbr.rel (%p192) target = $region32
      $region31: #{forward.11} parent=27 // pred_region
        %p195 = scmp.lt.s32.totalorder %s17, 1
        %s196 = scalar_select %p195, %s17, 1
        %s197 = smul.addr %s196, 44
        %s198 = smul.addr %s197, 4
        %s199 = scalar_lea.vmem %s0, %s198
      $region32: #{forward.11} parent=27 // pred_fallthru
        _
    $region28: #{forward.11} parent=5 // pred_fallthru
      _
    %p200 = scmp.le.s32.totalorder 1, %s10
    %p201 = scmp.lt.s32.totalorder %s10, 3
    %p202 = pnand %p200, %p201
    %p203 = pneg %p202
    // Predicated region
    $region33: #{forward.11} parent=5 // pred_check
      _
    $region34: #{forward.11} parent=5 // pred_check_branch
      %205 = sbr.rel (%p202) target = $region36
    $region35: #{forward.11} parent=5 // pred_region
      %s206 = ssub.s32 %s10, 1
      %p207 = scmp.lt.s32.totalorder %s19, 1
      %s208 = scalar_select %p207, %s19, 1
      %s209 = smul.addr %s208, 44
      %s210 = smul.addr %s209, 4
      %s211 = scalar_lea.vmem %s0, %s210
      %p212 = pneg %p48
      %p213 = pneg %p45
      %p214 = scmp.lt.s32.totalorder %s20, 0
      %s215 = scalar_select %p214, %s20, 0
      %s216 = smul.addr %s215, 4
      %s217 = scalar_lea.vmem %s1, %s216
      %p218 = pneg %p74
      %p219 = pneg %p71
      %p220 = scmp.lt.s32.totalorder %s20, 0
      %s221 = scalar_select %p220, %s20, 0
      %s222 = scalar_lea.vmem %s2, %s221
      %p223 = pneg %p100
      %p224 = pneg %p97
      %p225 = scmp.lt.s32.totalorder %s20, 0
      %s226 = scalar_select %p225, %s20, 0
      %s227 = scalar_lea.vmem %s3, %s226
      %p228 = pneg %p126
      %p229 = pneg %p123
      %p230 = pneg %p154
      %p231 = pneg %p151
      %p232 = scmp.lt.s32.totalorder %s19, 1
      %s233 = scalar_select %p232, %s19, 1
      %p234 = scmp.lt.s32.totalorder %s20, 0
      %s235 = scalar_select %p234, %s20, 0
      %s236 = smul.addr %s233, 9
      %s237 = sadd.s32 %s235, %s236
      %s238 = smul.addr %s237, 4
      %s239 = scalar_lea.vmem %s4, %s238
      %p240 = scmp.lt.s32.totalorder %s19, 1
      %s241 = scalar_select %p240, %s19, 1
      %s242 = smul.addr %s241, 44
      %s243 = smul.addr %s242, 4
      %s244 = scalar_lea.vmem %s0, %s243
      %p245 = scmp.lt.s32.totalorder %s20, 0
      %s246 = scalar_select %p245, %s20, 0
      %s247 = smul.addr %s246, 4
      %s248 = scalar_lea.vmem %s1, %s247
      %p249 = scmp.lt.s32.totalorder %s20, 0
      %s250 = scalar_select %p249, %s20, 0
      %s251 = scalar_lea.vmem %s2, %s250
      %p252 = scmp.lt.s32.totalorder %s20, 0
      %s253 = scalar_select %p252, %s20, 0
      %s254 = scalar_lea.vmem %s3, %s253
      %p255 = scmp.lt.s32.totalorder %s19, 1
      %s256 = scalar_select %p255, %s19, 1
      %p257 = scmp.lt.s32.totalorder %s20, 0
      %s258 = scalar_select %p257, %s20, 0
      %s259 = smul.addr %s256, 9
      %s260 = sadd.s32 %s258, %s259
      %s261 = smul.addr %s260, 4
      %s262 = scalar_lea.vmem %s4, %s261
      %263 = vst [vmem:[#allocation2] sm:$0xff] 0.0
      %264 = vst [vmem:[#allocation2 + $0x8] sm:$0xff] 0.0
      %265 = vst [vmem:[#allocation2 + $0x10] sm:$0xff] 0.0
      %266 = vst [vmem:[#allocation2 + $0x18] sm:$0xff] 0.0
      %267 = vst [vmem:[#allocation2 + $0x20] sm:$0xff] 0.0
      %268 = vst [vmem:[#allocation2 + $0x28] sm:$0xff] 0.0
      %269 = vst [vmem:[#allocation2 + $0x30] sm:$0xff] 0.0
      %270 = vst [vmem:[#allocation2 + $0x38] sm:$0xff] 0.0
      %271 = vst [vmem:[#allocation2 + $0x40] sm:$0xff] 0.0
      %v272 = vld [vmem:[%s244] sm:$0xf]
      %v273 = vld [vmem:[%s244 + $0x4] sm:$0xf]
      %v274 = vld [vmem:[%s244 + $0x8] sm:$0xf]
      %v275 = vld [vmem:[%s244 + $0xc] sm:$0xf]
      %v276 = vld [vmem:[%s244 + $0x10] sm:$0xf]
      %v277 = vld [vmem:[%s244 + $0x14] sm:$0xf]
      %v278 = vld [vmem:[%s244 + $0x18] sm:$0xf]
      %v279 = vld [vmem:[%s244 + $0x1c] sm:$0xf]
      %v280 = vld [vmem:[%s244 + $0x20] sm:$0xf]
      %v281 = vld [vmem:[#allocation2] sm:$0xff]
      %v282 = vld [vmem:[#allocation2 + $0x8] sm:$0xff]
      %v283 = vld [vmem:[#allocation2 + $0x10] sm:$0xff]
      %v284 = vld [vmem:[#allocation2 + $0x18] sm:$0xff]
      %v285 = vld [vmem:[#allocation2 + $0x20] sm:$0xff]
      %v286 = vld [vmem:[#allocation2 + $0x28] sm:$0xff]
      %v287 = vld [vmem:[#allocation2 + $0x30] sm:$0xff]
      %v288 = vld [vmem:[#allocation2 + $0x38] sm:$0xff]
      %v289 = vld [vmem:[#allocation2 + $0x40] sm:$0xff]
      %v290 = vld [vmem:[%s248] sm:$0xf]
      %v291 = vld [vmem:[%s248 + $0x4] sm:$0xf]
      %v292 = vld [vmem:[%s248 + $0x8] sm:$0xf]
      %v293 = vld [vmem:[%s248 + $0xc] sm:$0xf]
      %v294 = vld [vmem:[%s248 + $0x10] sm:$0xf]
      %v295 = vld [vmem:[%s248 + $0x14] sm:$0xf]
      %v296 = vld [vmem:[%s248 + $0x18] sm:$0xf]
      %v297 = vld [vmem:[%s248 + $0x1c] sm:$0xf]
      %v298 = vld [vmem:[%s248 + $0x20] sm:$0xf]
      %v299 = vld [vmem:[%s248 + $0x24] sm:$0xf]
      %v300 = vld [vmem:[%s248 + $0x28] sm:$0xf]
      %v301 = vld [vmem:[%s248 + $0x2c] sm:$0xf]
      %v302 = vld [vmem:[%s248 + $0x30] sm:$0xf]
      %v303 = vld [vmem:[%s248 + $0x34] sm:$0xf]
      %v304 = vld [vmem:[%s248 + $0x38] sm:$0xf]
      %v305 = vld [vmem:[%s248 + $0x3c] sm:$0xf]
      %v315 = vunpack.c.l.b16 %v272
      %v316 = vunpack.c.l.b16 %v273
      %v317 = vunpack.c.l.b16 %v274
      %v318 = vunpack.c.l.b16 %v275
      %v319 = vunpack.c.l.b16 %v276
      %v320 = vunpack.c.l.b16 %v277
      %v321 = vunpack.c.l.b16 %v278
      %v322 = vunpack.c.l.b16 %v279
      %v323 = vunpack.c.l.b16 %v280
      %v324 = vpack.c.b16 %v316, %v315
      %v325 = vpack.c.b16 %v318, %v317
      %v326 = vpack.c.b16 %v320, %v319
      %v327 = vpack.c.b16 %v322, %v321
      %v328 = vpack.c.b16 %v323, %v323
      %v350 = vunpack.c.l.b16 %v290
      %v351 = vunpack.c.l.b16 %v291
      %v352 = vunpack.c.l.b16 %v292
      %v353 = vunpack.c.l.b16 %v293
      %v354 = vunpack.c.l.b16 %v294
      %v355 = vunpack.c.l.b16 %v295
      %v356 = vunpack.c.l.b16 %v296
      %v357 = vunpack.c.l.b16 %v297
      %v358 = vunpack.c.l.b16 %v298
      %v359 = vunpack.c.l.b16 %v299
      %v360 = vunpack.c.l.b16 %v300
      %v361 = vunpack.c.l.b16 %v301
      %v362 = vunpack.c.l.b16 %v302
      %v363 = vunpack.c.l.b16 %v303
      %v364 = vunpack.c.l.b16 %v304
      %v365 = vunpack.c.l.b16 %v305
      %v366 = vpack.c.b16 %v351, %v350
      %v367 = vpack.c.b16 %v353, %v352
      %v368 = vpack.c.b16 %v355, %v354
      %v369 = vpack.c.b16 %v357, %v356
      %v370 = vpack.c.b16 %v359, %v358
      %v371 = vpack.c.b16 %v361, %v360
      %v372 = vpack.c.b16 %v363, %v362
      %v373 = vpack.c.b16 %v365, %v364
      %382 = vmatpush.bf16.msra.mxu0 %v373
      %383 = vmatpush.bf16.msra.mxu0 %v372
      %384 = vmatpush.bf16.msra.mxu0 %v371
      %385 = vmatpush.bf16.msra.mxu0 %v370
      %386 = vmatpush.bf16.msra.mxu0 %v369
      %387 = vmatpush.bf16.msra.mxu0 %v368
      %388 = vmatpush.bf16.msra.mxu0 %v367
      %389 = vmatpush.bf16.msra.mxu0 %v366
      %390 = vmatmul.bf16.gmra.mxu0 %v324
      %v391 = vpop.f32.mrf.mxu0
      %v392 = vadd.f32 0.0, %v391
      %v393 = vpop.f32.mrf.mxu0
      %v394 = vadd.f32 0.0, %v393
      %395 = vmatmul.bf16.gmra.mxu0 %v325
      %v396 = vpop.f32.mrf.mxu0
      %v397 = vadd.f32 0.0, %v396
      %v398 = vpop.f32.mrf.mxu0
      %v399 = vadd.f32 0.0, %v398
      %400 = vmatmul.bf16.gmra.mxu0 %v326
      %v401 = vpop.f32.mrf.mxu0
      %v402 = vadd.f32 0.0, %v401
      %v403 = vpop.f32.mrf.mxu0
      %v404 = vadd.f32 0.0, %v403
      %405 = vmatmul.bf16.gmra.mxu0 %v327
      %v406 = vpop.f32.mrf.mxu0
      %v407 = vadd.f32 0.0, %v406
      %v408 = vpop.f32.mrf.mxu0
      %v409 = vadd.f32 0.0, %v408
      %410 = vmatmul.bf16.gmra.mxu0 %v328
      %v411 = vpop.f32.mrf.mxu0
      %v412 = vadd.f32 0.0, %v411
      %v413 = vpop.f32.mrf.mxu0
      %414 = vdwg.mxu0
      %v415 = vadd.f32 %v281, %v392
      %v416 = vadd.f32 %v282, %v394
      %v417 = vadd.f32 %v283, %v397
      %v418 = vadd.f32 %v284, %v399
      %v419 = vadd.f32 %v285, %v402
      %v420 = vadd.f32 %v286, %v404
      %v421 = vadd.f32 %v287, %v407
      %v422 = vadd.f32 %v288, %v409
      %v423 = vadd.f32 %v289, %v412
      %424 = vst [vmem:[#allocation2] sm:$0xff] %v415
      %425 = vst [vmem:[#allocation2 + $0x8] sm:$0xff] %v416
      %426 = vst [vmem:[#allocation2 + $0x10] sm:$0xff] %v417
      %427 = vst [vmem:[#allocation2 + $0x18] sm:$0xff] %v418
      %428 = vst [vmem:[#allocation2 + $0x20] sm:$0xff] %v419
      %429 = vst [vmem:[#allocation2 + $0x28] sm:$0xff] %v420
      %430 = vst [vmem:[#allocation2 + $0x30] sm:$0xff] %v421
      %431 = vst [vmem:[#allocation2 + $0x38] sm:$0xff] %v422
      %432 = vst [vmem:[#allocation2 + $0x40] sm:$0xff] %v423
      %v433 = vld [vmem:[%s244 + $0x2c] sm:$0xf]
      %v434 = vld [vmem:[%s244 + $0x30] sm:$0xf]
      %v435 = vld [vmem:[%s244 + $0x34] sm:$0xf]
      %v436 = vld [vmem:[%s244 + $0x38] sm:$0xf]
      %v437 = vld [vmem:[%s244 + $0x3c] sm:$0xf]
      %v438 = vld [vmem:[%s244 + $0x40] sm:$0xf]
      %v439 = vld [vmem:[%s244 + $0x44] sm:$0xf]
      %v440 = vld [vmem:[%s244 + $0x48] sm:$0xf]
      %v441 = vld [vmem:[%s244 + $0x4c] sm:$0xf]
      %v442 = vld [vmem:[#allocation2] sm:$0xff]
      %v443 = vld [vmem:[#allocation2 + $0x8] sm:$0xff]
      %v444 = vld [vmem:[#allocation2 + $0x10] sm:$0xff]
      %v445 = vld [vmem:[#allocation2 + $0x18] sm:$0xff]
      %v446 = vld [vmem:[#allocation2 + $0x20] sm:$0xff]
      %v447 = vld [vmem:[#allocation2 + $0x28] sm:$0xff]
      %v448 = vld [vmem:[#allocation2 + $0x30] sm:$0xff]
      %v449 = vld [vmem:[#allocation2 + $0x38] sm:$0xff]
      %v450 = vld [vmem:[#allocation2 + $0x40] sm:$0xff]
      %s451 = scalar_lea.vmem %s248, 64
      %v452 = vld [vmem:[%s451] sm:$0xf]
      %v453 = vld [vmem:[%s451 + $0x4] sm:$0xf]
      %v454 = vld [vmem:[%s451 + $0x8] sm:$0xf]
      %v455 = vld [vmem:[%s451 + $0xc] sm:$0xf]
      %v456 = vld [vmem:[%s451 + $0x10] sm:$0xf]
      %v457 = vld [vmem:[%s451 + $0x14] sm:$0xf]
      %v458 = vld [vmem:[%s451 + $0x18] sm:$0xf]
      %v459 = vld [vmem:[%s451 + $0x1c] sm:$0xf]
      %v460 = vld [vmem:[%s451 + $0x20] sm:$0xf]
      %v461 = vld [vmem:[%s451 + $0x24] sm:$0xf]
      %v462 = vld [vmem:[%s451 + $0x28] sm:$0xf]
      %v463 = vld [vmem:[%s451 + $0x2c] sm:$0xf]
      %v464 = vld [vmem:[%s451 + $0x30] sm:$0xf]
      %v465 = vld [vmem:[%s451 + $0x34] sm:$0xf]
      %v466 = vld [vmem:[%s451 + $0x38] sm:$0xf]
      %v467 = vld [vmem:[%s451 + $0x3c] sm:$0xf]
      %v477 = vunpack.c.l.b16 %v433
      %v478 = vunpack.c.l.b16 %v434
      %v479 = vunpack.c.l.b16 %v435
      %v480 = vunpack.c.l.b16 %v436
      %v481 = vunpack.c.l.b16 %v437
      %v482 = vunpack.c.l.b16 %v438
      %v483 = vunpack.c.l.b16 %v439
      %v484 = vunpack.c.l.b16 %v440
      %v485 = vunpack.c.l.b16 %v441
      %v486 = vpack.c.b16 %v478, %v477
      %v487 = vpack.c.b16 %v480, %v479
      %v488 = vpack.c.b16 %v482, %v481
      %v489 = vpack.c.b16 %v484, %v483
      %v490 = vpack.c.b16 %v485, %v485
      %v512 = vunpack.c.l.b16 %v452
      %v513 = vunpack.c.l.b16 %v453
      %v514 = vunpack.c.l.b16 %v454
      %v515 = vunpack.c.l.b16 %v455
      %v516 = vunpack.c.l.b16 %v456
      %v517 = vunpack.c.l.b16 %v457
      %v518 = vunpack.c.l.b16 %v458
      %v519 = vunpack.c.l.b16 %v459
      %v520 = vunpack.c.l.b16 %v460
      %v521 = vunpack.c.l.b16 %v461
      %v522 = vunpack.c.l.b16 %v462
      %v523 = vunpack.c.l.b16 %v463
      %v524 = vunpack.c.l.b16 %v464
      %v525 = vunpack.c.l.b16 %v465
      %v526 = vunpack.c.l.b16 %v466
      %v527 = vunpack.c.l.b16 %v467
      %v528 = vpack.c.b16 %v513, %v512
      %v529 = vpack.c.b16 %v515, %v514
      %v530 = vpack.c.b16 %v517, %v516
      %v531 = vpack.c.b16 %v519, %v518
      %v532 = vpack.c.b16 %v521, %v520
      %v533 = vpack.c.b16 %v523, %v522
      %v534 = vpack.c.b16 %v525, %v524
      %v535 = vpack.c.b16 %v527, %v526
      %544 = vmatpush.bf16.msra.mxu0 %v535
      %545 = vmatpush.bf16.msra.mxu0 %v534
      %546 = vmatpush.bf16.msra.mxu0 %v533
      %547 = vmatpush.bf16.msra.mxu0 %v532
      %548 = vmatpush.bf16.msra.mxu0 %v531
      %549 = vmatpush.bf16.msra.mxu0 %v530
      %550 = vmatpush.bf16.msra.mxu0 %v529
      %551 = vmatpush.bf16.msra.mxu0 %v528
      %552 = vmatmul.bf16.gmra.mxu0 %v486
      %v553 = vpop.f32.mrf.mxu0
      %v554 = vadd.f32 0.0, %v553
      %v555 = vpop.f32.mrf.mxu0
      %v556 = vadd.f32 0.0, %v555
      %557 = vmatmul.bf16.gmra.mxu0 %v487
      %v558 = vpop.f32.mrf.mxu0
      %v559 = vadd.f32 0.0, %v558
      %v560 = vpop.f32.mrf.mxu0
      %v561 = vadd.f32 0.0, %v560
      %562 = vmatmul.bf16.gmra.mxu0 %v488
      %v563 = vpop.f32.mrf.mxu0
      %v564 = vadd.f32 0.0, %v563
      %v565 = vpop.f32.mrf.mxu0
      %v566 = vadd.f32 0.0, %v565
      %567 = vmatmul.bf16.gmra.mxu0 %v489
      %v568 = vpop.f32.mrf.mxu0
      %v569 = vadd.f32 0.0, %v568
      %v570 = vpop.f32.mrf.mxu0
      %v571 = vadd.f32 0.0, %v570
      %572 = vmatmul.bf16.gmra.mxu0 %v490
      %v573 = vpop.f32.mrf.mxu0
      %v574 = vadd.f32 0.0, %v573
      %v575 = vpop.f32.mrf.mxu0
      %576 = vdwg.mxu0
      %v577 = vadd.f32 %v442, %v554
      %v578 = vadd.f32 %v443, %v556
      %v579 = vadd.f32 %v444, %v559
      %v580 = vadd.f32 %v445, %v561
      %v581 = vadd.f32 %v446, %v564
      %v582 = vadd.f32 %v447, %v566
      %v583 = vadd.f32 %v448, %v569
      %v584 = vadd.f32 %v449, %v571
      %v585 = vadd.f32 %v450, %v574
      %586 = vst [vmem:[#allocation2] sm:$0xff] %v577
      %587 = vst [vmem:[#allocation2 + $0x8] sm:$0xff] %v578
      %588 = vst [vmem:[#allocation2 + $0x10] sm:$0xff] %v579
      %589 = vst [vmem:[#allocation2 + $0x18] sm:$0xff] %v580
      %590 = vst [vmem:[#allocation2 + $0x20] sm:$0xff] %v581
      %591 = vst [vmem:[#allocation2 + $0x28] sm:$0xff] %v582
      %592 = vst [vmem:[#allocation2 + $0x30] sm:$0xff] %v583
      %593 = vst [vmem:[#allocation2 + $0x38] sm:$0xff] %v584
      %594 = vst [vmem:[#allocation2 + $0x40] sm:$0xff] %v585
      %v595 = vld [vmem:[%s244] sm:$0xf]
      %v596 = vld [vmem:[%s244 + $0x4] sm:$0xf]
      %v597 = vld [vmem:[%s244 + $0x8] sm:$0xf]
      %v598 = vld [vmem:[%s244 + $0xc] sm:$0xf]
      %v599 = vld [vmem:[%s244 + $0x10] sm:$0xf]
      %v600 = vld [vmem:[%s244 + $0x14] sm:$0xf]
      %v601 = vld [vmem:[%s244 + $0x18] sm:$0xf]
      %v602 = vld [vmem:[%s244 + $0x1c] sm:$0xf]
      %v603 = vld [vmem:[%s244 + $0x20] sm:$0xf]
      %v604 = vld [vmem:[%s244 + $0x24] sm:$0x1]
      %v605 = vld [vmem:[#allocation2] sm:$0xff]
      %v606 = vld [vmem:[#allocation2 + $0x8] sm:$0xff]
      %v607 = vld [vmem:[#allocation2 + $0x10] sm:$0xff]
      %v608 = vld [vmem:[#allocation2 + $0x18] sm:$0xff]
      %v609 = vld [vmem:[#allocation2 + $0x20] sm:$0xff]
      %v610 = vld [vmem:[#allocation2 + $0x28] sm:$0xff]
      %v611 = vld [vmem:[#allocation2 + $0x30] sm:$0xff]
      %v612 = vld [vmem:[#allocation2 + $0x38] sm:$0xff]
      %v613 = vld [vmem:[#allocation2 + $0x40] sm:$0xff]
      %s614 = scalar_lea.vmem %s248, 128
      %v615 = vld [vmem:[%s614] sm:$0xf]
      %v616 = vld [vmem:[%s614 + $0x4] sm:$0xf]
      %v617 = vld [vmem:[%s614 + $0x8] sm:$0xf]
      %v618 = vld [vmem:[%s614 + $0xc] sm:$0xf]
      %v619 = vld [vmem:[%s614 + $0x10] sm:$0xf]
      %v620 = vld [vmem:[%s614 + $0x14] sm:$0xf]
      %v621 = vld [vmem:[%s614 + $0x18] sm:$0xf]
      %v622 = vld [vmem:[%s614 + $0x1c] sm:$0xf]
      %v623 = vld [vmem:[%s614 + $0x20] sm:$0xf]
      %v624 = vld [vmem:[%s614 + $0x24] sm:$0xf]
      %v625 = vld [vmem:[%s614 + $0x28] sm:$0xf]
      %v626 = vld [vmem:[%s614 + $0x2c] sm:$0xf]
      %v627 = vld [vmem:[%s614 + $0x30] sm:$0xf]
      %v628 = vld [vmem:[%s614 + $0x34] sm:$0xf]
      %v629 = vld [vmem:[%s614 + $0x38] sm:$0xf]
      %v630 = vld [vmem:[%s614 + $0x3c] sm:$0xf]
      %v641 = vunpack.c.l.b16 %v595
      %v642 = vunpack.c.l.b16 %v596
      %v643 = vunpack.c.l.b16 %v597
      %v644 = vunpack.c.l.b16 %v598
      %v645 = vunpack.c.l.b16 %v599
      %v646 = vunpack.c.l.b16 %v600
      %v647 = vunpack.c.l.b16 %v601
      %v648 = vunpack.c.l.b16 %v602
      %v649 = vunpack.c.l.b16 %v603
      %v650 = vunpack.c.l.b16 %v604
      %v651 = vpack.c.b16 %v642, %v641
      %v652 = vpack.c.b16 %v644, %v643
      %v653 = vpack.c.b16 %v646, %v645
      %v654 = vpack.c.b16 %v648, %v647
      %v655 = vpack.c.b16 %v650, %v649
      %vm656 = vsmask.f32 7424
      %v658 = vshrl.u32 %v651, 16
      %v660 = vshll.u32 %v651, 16
      %v662 = vrot.slane %v660, 1
      %v663 = vor.u32 %v658, %v662
      %v665 = vshll.u32 %v652, 16
      %v667 = vrot.slane %v665, 1
      %v668 = vsel %vm656, %v663, %v667
      %v669 = vshrl.u32 %v652, 16
      %v671 = vor.u32 %v669, %v667
      %v673 = vshll.u32 %v653, 16
      %v675 = vrot.slane %v673, 1
      %v676 = vsel %vm656, %v671, %v675
      %v677 = vshrl.u32 %v653, 16
      %v679 = vor.u32 %v677, %v675
      %v681 = vshll.u32 %v654, 16
      %v683 = vrot.slane %v681, 1
      %v684 = vsel %vm656, %v679, %v683
      %v685 = vshrl.u32 %v654, 16
      %v687 = vor.u32 %v685, %v683
      %v689 = vshll.u32 %v655, 16
      %v691 = vrot.slane %v689, 1
      %v692 = vsel %vm656, %v687, %v691
      %v693 = vshrl.u32 %v655, 16
      %v695 = vor.u32 %v693, %v691
      %v717 = vunpack.c.l.b16 %v615
      %v718 = vunpack.c.l.b16 %v616
      %v719 = vunpack.c.l.b16 %v617
      %v720 = vunpack.c.l.b16 %v618
      %v721 = vunpack.c.l.b16 %v619
      %v722 = vunpack.c.l.b16 %v620
      %v723 = vunpack.c.l.b16 %v621
      %v724 = vunpack.c.l.b16 %v622
      %v725 = vunpack.c.l.b16 %v623
      %v726 = vunpack.c.l.b16 %v624
      %v727 = vunpack.c.l.b16 %v625
      %v728 = vunpack.c.l.b16 %v626
      %v729 = vunpack.c.l.b16 %v627
      %v730 = vunpack.c.l.b16 %v628
      %v731 = vunpack.c.l.b16 %v629
      %v732 = vunpack.c.l.b16 %v630
      %v733 = vpack.c.b16 %v718, %v717
      %v734 = vpack.c.b16 %v720, %v719
      %v735 = vpack.c.b16 %v722, %v721
      %v736 = vpack.c.b16 %v724, %v723
      %v737 = vpack.c.b16 %v726, %v725
      %v738 = vpack.c.b16 %v728, %v727
      %v739 = vpack.c.b16 %v730, %v729
      %v740 = vpack.c.b16 %v732, %v731
      %749 = vmatpush.bf16.msra.mxu0 %v740
      %750 = vmatpush.bf16.msra.mxu0 %v739
      %751 = vmatpush.bf16.msra.mxu0 %v738
      %752 = vmatpush.bf16.msra.mxu0 %v737
      %753 = vmatpush.bf16.msra.mxu0 %v736
      %754 = vmatpush.bf16.msra.mxu0 %v735
      %755 = vmatpush.bf16.msra.mxu0 %v734
      %756 = vmatpush.bf16.msra.mxu0 %v733
      %757 = vmatmul.bf16.gmra.mxu0 %v668
      %v758 = vpop.f32.mrf.mxu0
      %v759 = vadd.f32 0.0, %v758
      %v760 = vpop.f32.mrf.mxu0
      %v761 = vadd.f32 0.0, %v760
      %762 = vmatmul.bf16.gmra.mxu0 %v676
      %v763 = vpop.f32.mrf.mxu0
      %v764 = vadd.f32 0.0, %v763
      %v765 = vpop.f32.mrf.mxu0
      %v766 = vadd.f32 0.0, %v765
      %767 = vmatmul.bf16.gmra.mxu0 %v684
      %v768 = vpop.f32.mrf.mxu0
      %v769 = vadd.f32 0.0, %v768
      %v770 = vpop.f32.mrf.mxu0
      %v771 = vadd.f32 0.0, %v770
      %772 = vmatmul.bf16.gmra.mxu0 %v692
      %v773 = vpop.f32.mrf.mxu0
      %v774 = vadd.f32 0.0, %v773
      %v775 = vpop.f32.mrf.mxu0
      %v776 = vadd.f32 0.0, %v775
      %777 = vmatmul.bf16.gmra.mxu0 %v695
      %v778 = vpop.f32.mrf.mxu0
      %v779 = vadd.f32 0.0, %v778
      %v780 = vpop.f32.mrf.mxu0
      %781 = vdwg.mxu0
      %v782 = vadd.f32 %v605, %v759
      %v783 = vadd.f32 %v606, %v761
      %v784 = vadd.f32 %v607, %v764
      %v785 = vadd.f32 %v608, %v766
      %v786 = vadd.f32 %v609, %v769
      %v787 = vadd.f32 %v610, %v771
      %v788 = vadd.f32 %v611, %v774
      %v789 = vadd.f32 %v612, %v776
      %v790 = vadd.f32 %v613, %v779
      %791 = vst [vmem:[#allocation2] sm:$0xff] %v782
      %792 = vst [vmem:[#allocation2 + $0x8] sm:$0xff] %v783
      %793 = vst [vmem:[#allocation2 + $0x10] sm:$0xff] %v784
      %794 = vst [vmem:[#allocation2 + $0x18] sm:$0xff] %v785
      %795 = vst [vmem:[#allocation2 + $0x20] sm:$0xff] %v786
      %796 = vst [vmem:[#allocation2 + $0x28] sm:$0xff] %v787
      %797 = vst [vmem:[#allocation2 + $0x30] sm:$0xff] %v788
      %798 = vst [vmem:[#allocation2 + $0x38] sm:$0xff] %v789
      %799 = vst [vmem:[#allocation2 + $0x40] sm:$0xff] %v790
      %v800 = vld [vmem:[%s244 + $0x58] sm:$0xf]
      %v801 = vld [vmem:[%s244 + $0x5c] sm:$0xf]
      %v802 = vld [vmem:[%s244 + $0x60] sm:$0xf]
      %v803 = vld [vmem:[%s244 + $0x64] sm:$0xf]
      %v804 = vld [vmem:[%s244 + $0x68] sm:$0xf]
      %v805 = vld [vmem:[%s244 + $0x6c] sm:$0xf]
      %v806 = vld [vmem:[%s244 + $0x70] sm:$0xf]
      %v807 = vld [vmem:[%s244 + $0x74] sm:$0xf]
      %v808 = vld [vmem:[%s244 + $0x78] sm:$0xf]
      %v809 = vld [vmem:[#allocation2] sm:$0xff]
      %v810 = vld [vmem:[#allocation2 + $0x8] sm:$0xff]
      %v811 = vld [vmem:[#allocation2 + $0x10] sm:$0xff]
      %v812 = vld [vmem:[#allocation2 + $0x18] sm:$0xff]
      %v813 = vld [vmem:[#allocation2 + $0x20] sm:$0xff]
      %v814 = vld [vmem:[#allocation2 + $0x28] sm:$0xff]
      %v815 = vld [vmem:[#allocation2 + $0x30] sm:$0xff]
      %v816 = vld [vmem:[#allocation2 + $0x38] sm:$0xff]
      %v817 = vld [vmem:[#allocation2 + $0x40] sm:$0xff]
      %s818 = scalar_lea.vmem %s248, 192
      %v819 = vld [vmem:[%s818] sm:$0xf]
      %v820 = vld [vmem:[%s818 + $0x4] sm:$0xf]
      %v821 = vld [vmem:[%s818 + $0x8] sm:$0xf]
      %v822 = vld [vmem:[%s818 + $0xc] sm:$0xf]
      %v823 = vld [vmem:[%s818 + $0x10] sm:$0xf]
      %v824 = vld [vmem:[%s818 + $0x14] sm:$0xf]
      %v825 = vld [vmem:[%s818 + $0x18] sm:$0xf]
      %v826 = vld [vmem:[%s818 + $0x1c] sm:$0xf]
      %v827 = vld [vmem:[%s818 + $0x20] sm:$0xf]
      %v828 = vld [vmem:[%s818 + $0x24] sm:$0xf]
      %v829 = vld [vmem:[%s818 + $0x28] sm:$0xf]
      %v830 = vld [vmem:[%s818 + $0x2c] sm:$0xf]
      %v831 = vld [vmem:[%s818 + $0x30] sm:$0xf]
      %v832 = vld [vmem:[%s818 + $0x34] sm:$0xf]
      %v833 = vld [vmem:[%s818 + $0x38] sm:$0xf]
      %v834 = vld [vmem:[%s818 + $0x3c] sm:$0xf]
      %v844 = vunpack.c.l.b16 %v800
      %v845 = vunpack.c.l.b16 %v801
      %v846 = vunpack.c.l.b16 %v802
      %v847 = vunpack.c.l.b16 %v803
      %v848 = vunpack.c.l.b16 %v804
      %v849 = vunpack.c.l.b16 %v805
      %v850 = vunpack.c.l.b16 %v806
      %v851 = vunpack.c.l.b16 %v807
      %v852 = vunpack.c.l.b16 %v808
      %v853 = vpack.c.b16 %v845, %v844
      %v854 = vpack.c.b16 %v847, %v846
      %v855 = vpack.c.b16 %v849, %v848
      %v856 = vpack.c.b16 %v851, %v850
      %v857 = vpack.c.b16 %v852, %v852
      %v879 = vunpack.c.l.b16 %v819
      %v880 = vunpack.c.l.b16 %v820
      %v881 = vunpack.c.l.b16 %v821
      %v882 = vunpack.c.l.b16 %v822
      %v883 = vunpack.c.l.b16 %v823
      %v884 = vunpack.c.l.b16 %v824
      %v885 = vunpack.c.l.b16 %v825
      %v886 = vunpack.c.l.b16 %v826
      %v887 = vunpack.c.l.b16 %v827
      %v888 = vunpack.c.l.b16 %v828
      %v889 = vunpack.c.l.b16 %v829
      %v890 = vunpack.c.l.b16 %v830
      %v891 = vunpack.c.l.b16 %v831
      %v892 = vunpack.c.l.b16 %v832
      %v893 = vunpack.c.l.b16 %v833
      %v894 = vunpack.c.l.b16 %v834
      %v895 = vpack.c.b16 %v880, %v879
      %v896 = vpack.c.b16 %v882, %v881
      %v897 = vpack.c.b16 %v884, %v883
      %v898 = vpack.c.b16 %v886, %v885
      %v899 = vpack.c.b16 %v888, %v887
      %v900 = vpack.c.b16 %v890, %v889
      %v901 = vpack.c.b16 %v892, %v891
      %v902 = vpack.c.b16 %v894, %v893
      %911 = vmatpush.bf16.msra.mxu0 %v902
      %912 = vmatpush.bf16.msra.mxu0 %v901
      %913 = vmatpush.bf16.msra.mxu0 %v900
      %914 = vmatpush.bf16.msra.mxu0 %v899
      %915 = vmatpush.bf16.msra.mxu0 %v898
      %916 = vmatpush.bf16.msra.mxu0 %v897
      %917 = vmatpush.bf16.msra.mxu0 %v896
      %918 = vmatpush.bf16.msra.mxu0 %v895
      %919 = vmatmul.bf16.gmra.mxu0 %v853
      %v920 = vpop.f32.mrf.mxu0
      %v921 = vadd.f32 0.0, %v920
      %v922 = vpop.f32.mrf.mxu0
      %v923 = vadd.f32 0.0, %v922
      %924 = vmatmul.bf16.gmra.mxu0 %v854
      %v925 = vpop.f32.mrf.mxu0
      %v926 = vadd.f32 0.0, %v925
      %v927 = vpop.f32.mrf.mxu0
      %v928 = vadd.f32 0.0, %v927
      %929 = vmatmul.bf16.gmra.mxu0 %v855
      %v930 = vpop.f32.mrf.mxu0
      %v931 = vadd.f32 0.0, %v930
      %v932 = vpop.f32.mrf.mxu0
      %v933 = vadd.f32 0.0, %v932
      %934 = vmatmul.bf16.gmra.mxu0 %v856
      %v935 = vpop.f32.mrf.mxu0
      %v936 = vadd.f32 0.0, %v935
      %v937 = vpop.f32.mrf.mxu0
      %v938 = vadd.f32 0.0, %v937
      %939 = vmatmul.bf16.gmra.mxu0 %v857
      %v940 = vpop.f32.mrf.mxu0
      %v941 = vadd.f32 0.0, %v940
      %v942 = vpop.f32.mrf.mxu0
      %943 = vdwg.mxu0
      %v944 = vadd.f32 %v809, %v921
      %v945 = vadd.f32 %v810, %v923
      %v946 = vadd.f32 %v811, %v926
      %v947 = vadd.f32 %v812, %v928
      %v948 = vadd.f32 %v813, %v931
      %v949 = vadd.f32 %v814, %v933
      %v950 = vadd.f32 %v815, %v936
      %v951 = vadd.f32 %v816, %v938
      %v952 = vadd.f32 %v817, %v941
      %953 = vst [vmem:[#allocation2] sm:$0xff] %v944
      %954 = vst [vmem:[#allocation2 + $0x8] sm:$0xff] %v945
      %955 = vst [vmem:[#allocation2 + $0x10] sm:$0xff] %v946
      %956 = vst [vmem:[#allocation2 + $0x18] sm:$0xff] %v947
      %957 = vst [vmem:[#allocation2 + $0x20] sm:$0xff] %v948
      %958 = vst [vmem:[#allocation2 + $0x28] sm:$0xff] %v949
      %959 = vst [vmem:[#allocation2 + $0x30] sm:$0xff] %v950
      %960 = vst [vmem:[#allocation2 + $0x38] sm:$0xff] %v951
      %961 = vst [vmem:[#allocation2 + $0x40] sm:$0xff] %v952
      %v962 = vld [vmem:[%s244 + $0x84] sm:$0xf]
      %v963 = vld [vmem:[%s244 + $0x88] sm:$0xf]
      %v964 = vld [vmem:[%s244 + $0x8c] sm:$0xf]
      %v965 = vld [vmem:[%s244 + $0x90] sm:$0xf]
      %v966 = vld [vmem:[%s244 + $0x94] sm:$0xf]
      %v967 = vld [vmem:[%s244 + $0x98] sm:$0xf]
      %v968 = vld [vmem:[%s244 + $0x9c] sm:$0xf]
      %v969 = vld [vmem:[%s244 + $0xa0] sm:$0xf]
      %v970 = vld [vmem:[%s244 + $0xa4] sm:$0xf]
      %v971 = vld [vmem:[#allocation2] sm:$0xff]
      %v972 = vld [vmem:[#allocation2 + $0x8] sm:$0xff]
      %v973 = vld [vmem:[#allocation2 + $0x10] sm:$0xff]
      %v974 = vld [vmem:[#allocation2 + $0x18] sm:$0xff]
      %v975 = vld [vmem:[#allocation2 + $0x20] sm:$0xff]
      %v976 = vld [vmem:[#allocation2 + $0x28] sm:$0xff]
      %v977 = vld [vmem:[#allocation2 + $0x30] sm:$0xff]
      %v978 = vld [vmem:[#allocation2 + $0x38] sm:$0xff]
      %v979 = vld [vmem:[#allocation2 + $0x40] sm:$0xff]
      %s980 = scalar_lea.vmem %s248, 256
      %v981 = vld [vmem:[%s980] sm:$0xf]
      %v982 = vld [vmem:[%s980 + $0x4] sm:$0xf]
      %v983 = vld [vmem:[%s980 + $0x8] sm:$0xf]
      %v984 = vld [vmem:[%s980 + $0xc] sm:$0xf]
      %v985 = vld [vmem:[%s980 + $0x10] sm:$0xf]
      %v986 = vld [vmem:[%s980 + $0x14] sm:$0xf]
      %v987 = vld [vmem:[%s980 + $0x18] sm:$0xf]
      %v988 = vld [vmem:[%s980 + $0x1c] sm:$0xf]
      %v989 = vld [vmem:[%s980 + $0x20] sm:$0xf]
      %v990 = vld [vmem:[%s980 + $0x24] sm:$0xf]
      %v991 = vld [vmem:[%s980 + $0x28] sm:$0xf]
      %v992 = vld [vmem:[%s980 + $0x2c] sm:$0xf]
      %v993 = vld [vmem:[%s980 + $0x30] sm:$0xf]
      %v994 = vld [vmem:[%s980 + $0x34] sm:$0xf]
      %v995 = vld [vmem:[%s980 + $0x38] sm:$0xf]
      %v996 = vld [vmem:[%s980 + $0x3c] sm:$0xf]
      %v1006 = vunpack.c.l.b16 %v962
      %v1007 = vunpack.c.l.b16 %v963
      %v1008 = vunpack.c.l.b16 %v964
      %v1009 = vunpack.c.l.b16 %v965
      %v1010 = vunpack.c.l.b16 %v966
      %v1011 = vunpack.c.l.b16 %v967
      %v1012 = vunpack.c.l.b16 %v968
      %v1013 = vunpack.c.l.b16 %v969
      %v1014 = vunpack.c.l.b16 %v970
      %v1015 = vpack.c.b16 %v1007, %v1006
      %v1016 = vpack.c.b16 %v1009, %v1008
      %v1017 = vpack.c.b16 %v1011, %v1010
      %v1018 = vpack.c.b16 %v1013, %v1012
      %v1019 = vpack.c.b16 %v1014, %v1014
      %v1041 = vunpack.c.l.b16 %v981
      %v1042 = vunpack.c.l.b16 %v982
      %v1043 = vunpack.c.l.b16 %v983
      %v1044 = vunpack.c.l.b16 %v984
      %v1045 = vunpack.c.l.b16 %v985
      %v1046 = vunpack.c.l.b16 %v986
      %v1047 = vunpack.c.l.b16 %v987
      %v1048 = vunpack.c.l.b16 %v988
      %v1049 = vunpack.c.l.b16 %v989
      %v1050 = vunpack.c.l.b16 %v990
      %v1051 = vunpack.c.l.b16 %v991
      %v1052 = vunpack.c.l.b16 %v992
      %v1053 = vunpack.c.l.b16 %v993
      %v1054 = vunpack.c.l.b16 %v994
      %v1055 = vunpack.c.l.b16 %v995
      %v1056 = vunpack.c.l.b16 %v996
      %v1057 = vpack.c.b16 %v1042, %v1041
      %v1058 = vpack.c.b16 %v1044, %v1043
      %v1059 = vpack.c.b16 %v1046, %v1045
      %v1060 = vpack.c.b16 %v1048, %v1047
      %v1061 = vpack.c.b16 %v1050, %v1049
      %v1062 = vpack.c.b16 %v1052, %v1051
      %v1063 = vpack.c.b16 %v1054, %v1053
      %v1064 = vpack.c.b16 %v1056, %v1055
      %1073 = vmatpush.bf16.msra.mxu0 %v1064
      %1074 = vmatpush.bf16.msra.mxu0 %v1063
      %1075 = vmatpush.bf16.msra.mxu0 %v1062
      %1076 = vmatpush.bf16.msra.mxu0 %v1061
      %1077 = vmatpush.bf16.msra.mxu0 %v1060
      %1078 = vmatpush.bf16.msra.mxu0 %v1059
      %1079 = vmatpush.bf16.msra.mxu0 %v1058
      %1080 = vmatpush.bf16.msra.mxu0 %v1057
      %1081 = vmatmul.bf16.gmra.mxu0 %v1015
      %v1082 = vpop.f32.mrf.mxu0
      %v1083 = vadd.f32 0.0, %v1082
      %v1084 = vpop.f32.mrf.mxu0
      %v1085 = vadd.f32 0.0, %v1084
      %1086 = vmatmul.bf16.gmra.mxu0 %v1016
      %v1087 = vpop.f32.mrf.mxu0
      %v1088 = vadd.f32 0.0, %v1087
      %v1089 = vpop.f32.mrf.mxu0
      %v1090 = vadd.f32 0.0, %v1089
      %1091 = vmatmul.bf16.gmra.mxu0 %v1017
      %v1092 = vpop.f32.mrf.mxu0
      %v1093 = vadd.f32 0.0, %v1092
      %v1094 = vpop.f32.mrf.mxu0
      %v1095 = vadd.f32 0.0, %v1094
      %1096 = vmatmul.bf16.gmra.mxu0 %v1018
      %v1097 = vpop.f32.mrf.mxu0
      %v1098 = vadd.f32 0.0, %v1097
      %v1099 = vpop.f32.mrf.mxu0
      %v1100 = vadd.f32 0.0, %v1099
      %1101 = vmatmul.bf16.gmra.mxu0 %v1019
      %v1102 = vpop.f32.mrf.mxu0
      %v1103 = vadd.f32 0.0, %v1102
      %v1104 = vpop.f32.mrf.mxu0
      %1105 = vdwg.mxu0
      %v1106 = vadd.f32 %v971, %v1083
      %v1107 = vadd.f32 %v972, %v1085
      %v1108 = vadd.f32 %v973, %v1088
      %v1109 = vadd.f32 %v974, %v1090
      %v1110 = vadd.f32 %v975, %v1093
      %v1111 = vadd.f32 %v976, %v1095
      %v1112 = vadd.f32 %v977, %v1098
      %v1113 = vadd.f32 %v978, %v1100
      %v1114 = vadd.f32 %v979, %v1103
      %1115 = vst [vmem:[#allocation2] sm:$0xff] %v1106
      %1116 = vst [vmem:[#allocation2 + $0x8] sm:$0xff] %v1107
      %1117 = vst [vmem:[#allocation2 + $0x10] sm:$0xff] %v1108
      %1118 = vst [vmem:[#allocation2 + $0x18] sm:$0xff] %v1109
      %1119 = vst [vmem:[#allocation2 + $0x20] sm:$0xff] %v1110
      %1120 = vst [vmem:[#allocation2 + $0x28] sm:$0xff] %v1111
      %1121 = vst [vmem:[#allocation2 + $0x30] sm:$0xff] %v1112
      %1122 = vst [vmem:[#allocation2 + $0x38] sm:$0xff] %v1113
      %1123 = vst [vmem:[#allocation2 + $0x40] sm:$0xff] %v1114
      %v1124 = vld [vmem:[%s244 + $0x58] sm:$0xf]
      %v1125 = vld [vmem:[%s244 + $0x5c] sm:$0xf]
      %v1126 = vld [vmem:[%s244 + $0x60] sm:$0xf]
      %v1127 = vld [vmem:[%s244 + $0x64] sm:$0xf]
      %v1128 = vld [vmem:[%s244 + $0x68] sm:$0xf]
      %v1129 = vld [vmem:[%s244 + $0x6c] sm:$0xf]
      %v1130 = vld [vmem:[%s244 + $0x70] sm:$0xf]
      %v1131 = vld [vmem:[%s244 + $0x74] sm:$0xf]
      %v1132 = vld [vmem:[%s244 + $0x78] sm:$0xf]
      %v1133 = vld [vmem:[%s244 + $0x7c] sm:$0x1]
      %v1134 = vld [vmem:[#allocation2] sm:$0xff]
      %v1135 = vld [vmem:[#allocation2 + $0x8] sm:$0xff]
      %v1136 = vld [vmem:[#allocation2 + $0x10] sm:$0xff]
      %v1137 = vld [vmem:[#allocation2 + $0x18] sm:$0xff]
      %v1138 = vld [vmem:[#allocation2 + $0x20] sm:$0xff]
      %v1139 = vld [vmem:[#allocation2 + $0x28] sm:$0xff]
      %v1140 = vld [vmem:[#allocation2 + $0x30] sm:$0xff]
      %v1141 = vld [vmem:[#allocation2 + $0x38] sm:$0xff]
      %v1142 = vld [vmem:[#allocation2 + $0x40] sm:$0xff]
      %s1143 = scalar_lea.vmem %s248, 320
      %v1144 = vld [vmem:[%s1143] sm:$0xf]
      %v1145 = vld [vmem:[%s1143 + $0x4] sm:$0xf]
      %v1146 = vld [vmem:[%s1143 + $0x8] sm:$0xf]
      %v1147 = vld [vmem:[%s1143 + $0xc] sm:$0xf]
      %v1148 = vld [vmem:[%s1143 + $0x10] sm:$0xf]
      %v1149 = vld [vmem:[%s1143 + $0x14] sm:$0xf]
      %v1150 = vld [vmem:[%s1143 + $0x18] sm:$0xf]
      %v1151 = vld [vmem:[%s1143 + $0x1c] sm:$0xf]
      %v1152 = vld [vmem:[%s1143 + $0x20] sm:$0xf]
      %v1153 = vld [vmem:[%s1143 + $0x24] sm:$0xf]
      %v1154 = vld [vmem:[%s1143 + $0x28] sm:$0xf]
      %v1155 = vld [vmem:[%s1143 + $0x2c] sm:$0xf]
      %v1156 = vld [vmem:[%s1143 + $0x30] sm:$0xf]
      %v1157 = vld [vmem:[%s1143 + $0x34] sm:$0xf]
      %v1158 = vld [vmem:[%s1143 + $0x38] sm:$0xf]
      %v1159 = vld [vmem:[%s1143 + $0x3c] sm:$0xf]
      %v1170 = vunpack.c.l.b16 %v1124
      %v1171 = vunpack.c.l.b16 %v1125
      %v1172 = vunpack.c.l.b16 %v1126
      %v1173 = vunpack.c.l.b16 %v1127
      %v1174 = vunpack.c.l.b16 %v1128
      %v1175 = vunpack.c.l.b16 %v1129
      %v1176 = vunpack.c.l.b16 %v1130
      %v1177 = vunpack.c.l.b16 %v1131
      %v1178 = vunpack.c.l.b16 %v1132
      %v1179 = vunpack.c.l.b16 %v1133
      %v1180 = vpack.c.b16 %v1171, %v1170
      %v1181 = vpack.c.b16 %v1173, %v1172
      %v1182 = vpack.c.b16 %v1175, %v1174
      %v1183 = vpack.c.b16 %v1177, %v1176
      %v1184 = vpack.c.b16 %v1179, %v1178
      %v1186 = vshrl.u32 %v1180, 16
      %v1188 = vshll.u32 %v1180, 16
      %v1190 = vrot.slane %v1188, 1
      %v1191 = vor.u32 %v1186, %v1190
      %v1193 = vshll.u32 %v1181, 16
      %v1195 = vrot.slane %v1193, 1
      %v1196 = vsel %vm656, %v1191, %v1195
      %v1197 = vshrl.u32 %v1181, 16
      %v1199 = vor.u32 %v1197, %v1195
      %v1201 = vshll.u32 %v1182, 16
      %v1203 = vrot.slane %v1201, 1
      %v1204 = vsel %vm656, %v1199, %v1203
      %v1205 = vshrl.u32 %v1182, 16
      %v1207 = vor.u32 %v1205, %v1203
      %v1209 = vshll.u32 %v1183, 16
      %v1211 = vrot.slane %v1209, 1
      %v1212 = vsel %vm656, %v1207, %v1211
      %v1213 = vshrl.u32 %v1183, 16
      %v1215 = vor.u32 %v1213, %v1211
      %v1217 = vshll.u32 %v1184, 16
      %v1219 = vrot.slane %v1217, 1
      %v1220 = vsel %vm656, %v1215, %v1219
      %v1221 = vshrl.u32 %v1184, 16
      %v1223 = vor.u32 %v1221, %v1219
      %v1245 = vunpack.c.l.b16 %v1144
      %v1246 = vunpack.c.l.b16 %v1145
      %v1247 = vunpack.c.l.b16 %v1146
      %v1248 = vunpack.c.l.b16 %v1147
      %v1249 = vunpack.c.l.b16 %v1148
      %v1250 = vunpack.c.l.b16 %v1149
      %v1251 = vunpack.c.l.b16 %v1150
      %v1252 = vunpack.c.l.b16 %v1151
      %v1253 = vunpack.c.l.b16 %v1152
      %v1254 = vunpack.c.l.b16 %v1153
      %v1255 = vunpack.c.l.b16 %v1154
      %v1256 = vunpack.c.l.b16 %v1155
      %v1257 = vunpack.c.l.b16 %v1156
      %v1258 = vunpack.c.l.b16 %v1157
      %v1259 = vunpack.c.l.b16 %v1158
      %v1260 = vunpack.c.l.b16 %v1159
      %v1261 = vpack.c.b16 %v1246, %v1245
      %v1262 = vpack.c.b16 %v1248, %v1247
      %v1263 = vpack.c.b16 %v1250, %v1249
      %v1264 = vpack.c.b16 %v1252, %v1251
      %v1265 = vpack.c.b16 %v1254, %v1253
      %v1266 = vpack.c.b16 %v1256, %v1255
      %v1267 = vpack.c.b16 %v1258, %v1257
      %v1268 = vpack.c.b16 %v1260, %v1259
      %1277 = vmatpush.bf16.msra.mxu0 %v1268
      %1278 = vmatpush.bf16.msra.mxu0 %v1267
      %1279 = vmatpush.bf16.msra.mxu0 %v1266
      %1280 = vmatpush.bf16.msra.mxu0 %v1265
      %1281 = vmatpush.bf16.msra.mxu0 %v1264
      %1282 = vmatpush.bf16.msra.mxu0 %v1263
      %1283 = vmatpush.bf16.msra.mxu0 %v1262
      %1284 = vmatpush.bf16.msra.mxu0 %v1261
      %1285 = vmatmul.bf16.gmra.mxu0 %v1196
      %v1286 = vpop.f32.mrf.mxu0
      %v1287 = vadd.f32 0.0, %v1286
      %v1288 = vpop.f32.mrf.mxu0
      %v1289 = vadd.f32 0.0, %v1288
      %1290 = vmatmul.bf16.gmra.mxu0 %v1204
      %v1291 = vpop.f32.mrf.mxu0
      %v1292 = vadd.f32 0.0, %v1291
      %v1293 = vpop.f32.mrf.mxu0
      %v1294 = vadd.f32 0.0, %v1293
      %1295 = vmatmul.bf16.gmra.mxu0 %v1212
      %v1296 = vpop.f32.mrf.mxu0
      %v1297 = vadd.f32 0.0, %v1296
      %v1298 = vpop.f32.mrf.mxu0
      %v1299 = vadd.f32 0.0, %v1298
      %1300 = vmatmul.bf16.gmra.mxu0 %v1220
      %v1301 = vpop.f32.mrf.mxu0
      %v1302 = vadd.f32 0.0, %v1301
      %v1303 = vpop.f32.mrf.mxu0
      %v1304 = vadd.f32 0.0, %v1303
      %1305 = vmatmul.bf16.gmra.mxu0 %v1223
      %v1306 = vpop.f32.mrf.mxu0
      %v1307 = vadd.f32 0.0, %v1306
      %v1308 = vpop.f32.mrf.mxu0
      %1309 = vdwg.mxu0
      %v1310 = vadd.f32 %v1134, %v1287
      %v1311 = vadd.f32 %v1135, %v1289
      %v1312 = vadd.f32 %v1136, %v1292
      %v1313 = vadd.f32 %v1137, %v1294
      %v1314 = vadd.f32 %v1138, %v1297
      %v1315 = vadd.f32 %v1139, %v1299
      %v1316 = vadd.f32 %v1140, %v1302
      %v1317 = vadd.f32 %v1141, %v1304
      %v1318 = vadd.f32 %v1142, %v1307
      %1319 = vst [vmem:[#allocation2] sm:$0xff] %v1310
      %1320 = vst [vmem:[#allocation2 + $0x8] sm:$0xff] %v1311
      %1321 = vst [vmem:[#allocation2 + $0x10] sm:$0xff] %v1312
      %1322 = vst [vmem:[#allocation2 + $0x18] sm:$0xff] %v1313
      %1323 = vst [vmem:[#allocation2 + $0x20] sm:$0xff] %v1314
      %1324 = vst [vmem:[#allocation2 + $0x28] sm:$0xff] %v1315
      %1325 = vst [vmem:[#allocation2 + $0x30] sm:$0xff] %v1316
      %1326 = vst [vmem:[#allocation2 + $0x38] sm:$0xff] %v1317
      %1327 = vst [vmem:[#allocation2 + $0x40] sm:$0xff] %v1318
      %v1328 = vld [vmem:[%s244 + $0x4] sm:$0xf]
      %v1329 = vld [vmem:[%s244 + $0x8] sm:$0xf]
      %v1330 = vld [vmem:[%s244 + $0xc] sm:$0xf]
      %v1331 = vld [vmem:[%s244 + $0x10] sm:$0xf]
      %v1332 = vld [vmem:[%s244 + $0x14] sm:$0xf]
      %v1333 = vld [vmem:[%s244 + $0x18] sm:$0xf]
      %v1334 = vld [vmem:[%s244 + $0x1c] sm:$0xf]
      %v1335 = vld [vmem:[%s244 + $0x20] sm:$0xf]
      %v1336 = vld [vmem:[%s244 + $0x24] sm:$0xf]
      %v1337 = vld [vmem:[%s244 + $0x28] sm:$0x1]
      %v1338 = vld [vmem:[#allocation2] sm:$0xff]
      %v1339 = vld [vmem:[#allocation2 + $0x8] sm:$0xff]
      %v1340 = vld [vmem:[#allocation2 + $0x10] sm:$0xff]
      %v1341 = vld [vmem:[#allocation2 + $0x18] sm:$0xff]
      %v1342 = vld [vmem:[#allocation2 + $0x20] sm:$0xff]
      %v1343 = vld [vmem:[#allocation2 + $0x28] sm:$0xff]
      %v1344 = vld [vmem:[#allocation2 + $0x30] sm:$0xff]
      %v1345 = vld [vmem:[#allocation2 + $0x38] sm:$0xff]
      %v1346 = vld [vmem:[#allocation2 + $0x40] sm:$0xff]
      %s1347 = scalar_lea.vmem %s248, 384
      %v1348 = vld [vmem:[%s1347] sm:$0xf]
      %v1349 = vld [vmem:[%s1347 + $0x4] sm:$0xf]
      %v1350 = vld [vmem:[%s1347 + $0x8] sm:$0xf]
      %v1351 = vld [vmem:[%s1347 + $0xc] sm:$0xf]
      %v1352 = vld [vmem:[%s1347 + $0x10] sm:$0xf]
      %v1353 = vld [vmem:[%s1347 + $0x14] sm:$0xf]
      %v1354 = vld [vmem:[%s1347 + $0x18] sm:$0xf]
      %v1355 = vld [vmem:[%s1347 + $0x1c] sm:$0xf]
      %v1356 = vld [vmem:[%s1347 + $0x20] sm:$0xf]
      %v1357 = vld [vmem:[%s1347 + $0x24] sm:$0xf]
      %v1358 = vld [vmem:[%s1347 + $0x28] sm:$0xf]
      %v1359 = vld [vmem:[%s1347 + $0x2c] sm:$0xf]
      %v1360 = vld [vmem:[%s1347 + $0x30] sm:$0xf]
      %v1361 = vld [vmem:[%s1347 + $0x34] sm:$0xf]
      %v1362 = vld [vmem:[%s1347 + $0x38] sm:$0xf]
      %v1363 = vld [vmem:[%s1347 + $0x3c] sm:$0xf]
      %v1374 = vunpack.c.l.b16 %v1328
      %v1375 = vunpack.c.l.b16 %v1329
      %v1376 = vunpack.c.l.b16 %v1330
      %v1377 = vunpack.c.l.b16 %v1331
      %v1378 = vunpack.c.l.b16 %v1332
      %v1379 = vunpack.c.l.b16 %v1333
      %v1380 = vunpack.c.l.b16 %v1334
      %v1381 = vunpack.c.l.b16 %v1335
      %v1382 = vunpack.c.l.b16 %v1336
      %v1383 = vunpack.c.l.b16 %v1337
      %v1384 = vpack.c.b16 %v1375, %v1374
      %v1385 = vpack.c.b16 %v1377, %v1376
      %v1386 = vpack.c.b16 %v1379, %v1378
      %v1387 = vpack.c.b16 %v1381, %v1380
      %v1388 = vpack.c.b16 %v1383, %v1382
      %v1390 = vshrl.u32 %v1384, 16
      %v1392 = vshll.u32 %v1384, 16
      %v1394 = vrot.slane %v1392, 1
      %v1395 = vor.u32 %v1390, %v1394
      %v1397 = vshll.u32 %v1385, 16
      %v1399 = vrot.slane %v1397, 1
      %v1400 = vsel %vm656, %v1395, %v1399
      %v1401 = vshrl.u32 %v1385, 16
      %v1403 = vor.u32 %v1401, %v1399
      %v1405 = vshll.u32 %v1386, 16
      %v1407 = vrot.slane %v1405, 1
      %v1408 = vsel %vm656, %v1403, %v1407
      %v1409 = vshrl.u32 %v1386, 16
      %v1411 = vor.u32 %v1409, %v1407
      %v1413 = vshll.u32 %v1387, 16
      %v1415 = vrot.slane %v1413, 1
      %v1416 = vsel %vm656, %v1411, %v1415
      %v1417 = vshrl.u32 %v1387, 16
      %v1419 = vor.u32 %v1417, %v1415
      %v1421 = vshll.u32 %v1388, 16
      %v1423 = vrot.slane %v1421, 1
      %v1424 = vsel %vm656, %v1419, %v1423
      %v1425 = vshrl.u32 %v1388, 16
      %v1427 = vor.u32 %v1425, %v1423
      %v1449 = vunpack.c.l.b16 %v1348
      %v1450 = vunpack.c.l.b16 %v1349
      %v1451 = vunpack.c.l.b16 %v1350
      %v1452 = vunpack.c.l.b16 %v1351
      %v1453 = vunpack.c.l.b16 %v1352
      %v1454 = vunpack.c.l.b16 %v1353
      %v1455 = vunpack.c.l.b16 %v1354
      %v1456 = vunpack.c.l.b16 %v1355
      %v1457 = vunpack.c.l.b16 %v1356
      %v1458 = vunpack.c.l.b16 %v1357
      %v1459 = vunpack.c.l.b16 %v1358
      %v1460 = vunpack.c.l.b16 %v1359
      %v1461 = vunpack.c.l.b16 %v1360
      %v1462 = vunpack.c.l.b16 %v1361
      %v1463 = vunpack.c.l.b16 %v1362
      %v1464 = vunpack.c.l.b16 %v1363
      %v1465 = vpack.c.b16 %v1450, %v1449
      %v1466 = vpack.c.b16 %v1452, %v1451
      %v1467 = vpack.c.b16 %v1454, %v1453
      %v1468 = vpack.c.b16 %v1456, %v1455
      %v1469 = vpack.c.b16 %v1458, %v1457
      %v1470 = vpack.c.b16 %v1460, %v1459
      %v1471 = vpack.c.b16 %v1462, %v1461
      %v1472 = vpack.c.b16 %v1464, %v1463
      %1481 = vmatpush.bf16.msra.mxu0 %v1472
      %1482 = vmatpush.bf16.msra.mxu0 %v1471
      %1483 = vmatpush.bf16.msra.mxu0 %v1470
      %1484 = vmatpush.bf16.msra.mxu0 %v1469
      %1485 = vmatpush.bf16.msra.mxu0 %v1468
      %1486 = vmatpush.bf16.msra.mxu0 %v1467
      %1487 = vmatpush.bf16.msra.mxu0 %v1466
      %1488 = vmatpush.bf16.msra.mxu0 %v1465
      %1489 = vmatmul.bf16.gmra.mxu0 %v1400
      %v1490 = vpop.f32.mrf.mxu0
      %v1491 = vadd.f32 0.0, %v1490
      %v1492 = vpop.f32.mrf.mxu0
      %v1493 = vadd.f32 0.0, %v1492
      %1494 = vmatmul.bf16.gmra.mxu0 %v1408
      %v1495 = vpop.f32.mrf.mxu0
      %v1496 = vadd.f32 0.0, %v1495
      %v1497 = vpop.f32.mrf.mxu0
      %v1498 = vadd.f32 0.0, %v1497
      %1499 = vmatmul.bf16.gmra.mxu0 %v1416
      %v1500 = vpop.f32.mrf.mxu0
      %v1501 = vadd.f32 0.0, %v1500
      %v1502 = vpop.f32.mrf.mxu0
      %v1503 = vadd.f32 0.0, %v1502
      %1504 = vmatmul.bf16.gmra.mxu0 %v1424
      %v1505 = vpop.f32.mrf.mxu0
      %v1506 = vadd.f32 0.0, %v1505
      %v1507 = vpop.f32.mrf.mxu0
      %v1508 = vadd.f32 0.0, %v1507
      %1509 = vmatmul.bf16.gmra.mxu0 %v1427
      %v1510 = vpop.f32.mrf.mxu0
      %v1511 = vadd.f32 0.0, %v1510
      %v1512 = vpop.f32.mrf.mxu0
      %1513 = vdwg.mxu0
      %v1514 = vadd.f32 %v1338, %v1491
      %v1515 = vadd.f32 %v1339, %v1493
      %v1516 = vadd.f32 %v1340, %v1496
      %v1517 = vadd.f32 %v1341, %v1498
      %v1518 = vadd.f32 %v1342, %v1501
      %v1519 = vadd.f32 %v1343, %v1503
      %v1520 = vadd.f32 %v1344, %v1506
      %v1521 = vadd.f32 %v1345, %v1508
      %v1522 = vadd.f32 %v1346, %v1511
      %1523 = vst [vmem:[#allocation2] sm:$0xff] %v1514
      %1524 = vst [vmem:[#allocation2 + $0x8] sm:$0xff] %v1515
      %1525 = vst [vmem:[#allocation2 + $0x10] sm:$0xff] %v1516
      %1526 = vst [vmem:[#allocation2 + $0x18] sm:$0xff] %v1517
      %1527 = vst [vmem:[#allocation2 + $0x20] sm:$0xff] %v1518
      %1528 = vst [vmem:[#allocation2 + $0x28] sm:$0xff] %v1519
      %1529 = vst [vmem:[#allocation2 + $0x30] sm:$0xff] %v1520
      %1530 = vst [vmem:[#allocation2 + $0x38] sm:$0xff] %v1521
      %1531 = vst [vmem:[#allocation2 + $0x40] sm:$0xff] %v1522
      %v1532 = vld [vmem:[%s244 + $0x30] sm:$0xf]
      %v1533 = vld [vmem:[%s244 + $0x34] sm:$0xf]
      %v1534 = vld [vmem:[%s244 + $0x38] sm:$0xf]
      %v1535 = vld [vmem:[%s244 + $0x3c] sm:$0xf]
      %v1536 = vld [vmem:[%s244 + $0x40] sm:$0xf]
      %v1537 = vld [vmem:[%s244 + $0x44] sm:$0xf]
      %v1538 = vld [vmem:[%s244 + $0x48] sm:$0xf]
      %v1539 = vld [vmem:[%s244 + $0x4c] sm:$0xf]
      %v1540 = vld [vmem:[%s244 + $0x50] sm:$0xf]
      %v1541 = vld [vmem:[%s244 + $0x54] sm:$0x1]
      %v1542 = vld [vmem:[#allocation2] sm:$0xff]
      %v1543 = vld [vmem:[#allocation2 + $0x8] sm:$0xff]
      %v1544 = vld [vmem:[#allocation2 + $0x10] sm:$0xff]
      %v1545 = vld [vmem:[#allocation2 + $0x18] sm:$0xff]
      %v1546 = vld [vmem:[#allocation2 + $0x20] sm:$0xff]
      %v1547 = vld [vmem:[#allocation2 + $0x28] sm:$0xff]
      %v1548 = vld [vmem:[#allocation2 + $0x30] sm:$0xff]
      %v1549 = vld [vmem:[#allocation2 + $0x38] sm:$0xff]
      %v1550 = vld [vmem:[#allocation2 + $0x40] sm:$0xff]
      %s1551 = scalar_lea.vmem %s248, 448
      %v1552 = vld [vmem:[%s1551] sm:$0xf]
      %v1553 = vld [vmem:[%s1551 + $0x4] sm:$0xf]
      %v1554 = vld [vmem:[%s1551 + $0x8] sm:$0xf]
      %v1555 = vld [vmem:[%s1551 + $0xc] sm:$0xf]
      %v1556 = vld [vmem:[%s1551 + $0x10] sm:$0xf]
      %v1557 = vld [vmem:[%s1551 + $0x14] sm:$0xf]
      %v1558 = vld [vmem:[%s1551 + $0x18] sm:$0xf]
      %v1559 = vld [vmem:[%s1551 + $0x1c] sm:$0xf]
      %v1560 = vld [vmem:[%s1551 + $0x20] sm:$0xf]
      %v1561 = vld [vmem:[%s1551 + $0x24] sm:$0xf]
      %v1562 = vld [vmem:[%s1551 + $0x28] sm:$0xf]
      %v1563 = vld [vmem:[%s1551 + $0x2c] sm:$0xf]
      %v1564 = vld [vmem:[%s1551 + $0x30] sm:$0xf]
      %v1565 = vld [vmem:[%s1551 + $0x34] sm:$0xf]
      %v1566 = vld [vmem:[%s1551 + $0x38] sm:$0xf]
      %v1567 = vld [vmem:[%s1551 + $0x3c] sm:$0xf]
      %v1578 = vunpack.c.l.b16 %v1532
      %v1579 = vunpack.c.l.b16 %v1533
      %v1580 = vunpack.c.l.b16 %v1534
      %v1581 = vunpack.c.l.b16 %v1535
      %v1582 = vunpack.c.l.b16 %v1536
      %v1583 = vunpack.c.l.b16 %v1537
      %v1584 = vunpack.c.l.b16 %v1538
      %v1585 = vunpack.c.l.b16 %v1539
      %v1586 = vunpack.c.l.b16 %v1540
      %v1587 = vunpack.c.l.b16 %v1541
      %v1588 = vpack.c.b16 %v1579, %v1578
      %v1589 = vpack.c.b16 %v1581, %v1580
      %v1590 = vpack.c.b16 %v1583, %v1582
      %v1591 = vpack.c.b16 %v1585, %v1584
      %v1592 = vpack.c.b16 %v1587, %v1586
      %v1594 = vshrl.u32 %v1588, 16
      %v1596 = vshll.u32 %v1588, 16
      %v1598 = vrot.slane %v1596, 1
      %v1599 = vor.u32 %v1594, %v1598
      %v1601 = vshll.u32 %v1589, 16
      %v1603 = vrot.slane %v1601, 1
      %v1604 = vsel %vm656, %v1599, %v1603
      %v1605 = vshrl.u32 %v1589, 16
      %v1607 = vor.u32 %v1605, %v1603
      %v1609 = vshll.u32 %v1590, 16
      %v1611 = vrot.slane %v1609, 1
      %v1612 = vsel %vm656, %v1607, %v1611
      %v1613 = vshrl.u32 %v1590, 16
      %v1615 = vor.u32 %v1613, %v1611
      %v1617 = vshll.u32 %v1591, 16
      %v1619 = vrot.slane %v1617, 1
      %v1620 = vsel %vm656, %v1615, %v1619
      %v1621 = vshrl.u32 %v1591, 16
      %v1623 = vor.u32 %v1621, %v1619
      %v1625 = vshll.u32 %v1592, 16
      %v1627 = vrot.slane %v1625, 1
      %v1628 = vsel %vm656, %v1623, %v1627
      %v1629 = vshrl.u32 %v1592, 16
      %v1631 = vor.u32 %v1629, %v1627
      %v1653 = vunpack.c.l.b16 %v1552
      %v1654 = vunpack.c.l.b16 %v1553
      %v1655 = vunpack.c.l.b16 %v1554
      %v1656 = vunpack.c.l.b16 %v1555
      %v1657 = vunpack.c.l.b16 %v1556
      %v1658 = vunpack.c.l.b16 %v1557
      %v1659 = vunpack.c.l.b16 %v1558
      %v1660 = vunpack.c.l.b16 %v1559
      %v1661 = vunpack.c.l.b16 %v1560
      %v1662 = vunpack.c.l.b16 %v1561
      %v1663 = vunpack.c.l.b16 %v1562
      %v1664 = vunpack.c.l.b16 %v1563
      %v1665 = vunpack.c.l.b16 %v1564
      %v1666 = vunpack.c.l.b16 %v1565
      %v1667 = vunpack.c.l.b16 %v1566
      %v1668 = vunpack.c.l.b16 %v1567
      %v1669 = vpack.c.b16 %v1654, %v1653
      %v1670 = vpack.c.b16 %v1656, %v1655
      %v1671 = vpack.c.b16 %v1658, %v1657
      %v1672 = vpack.c.b16 %v1660, %v1659
      %v1673 = vpack.c.b16 %v1662, %v1661
      %v1674 = vpack.c.b16 %v1664, %v1663
      %v1675 = vpack.c.b16 %v1666, %v1665
      %v1676 = vpack.c.b16 %v1668, %v1667
      %1685 = vmatpush.bf16.msra.mxu0 %v1676
      %1686 = vmatpush.bf16.msra.mxu0 %v1675
      %1687 = vmatpush.bf16.msra.mxu0 %v1674
      %1688 = vmatpush.bf16.msra.mxu0 %v1673
      %1689 = vmatpush.bf16.msra.mxu0 %v1672
      %1690 = vmatpush.bf16.msra.mxu0 %v1671
      %1691 = vmatpush.bf16.msra.mxu0 %v1670
      %1692 = vmatpush.bf16.msra.mxu0 %v1669
      %1693 = vmatmul.bf16.gmra.mxu0 %v1604
      %v1694 = vpop.f32.mrf.mxu0
      %v1695 = vadd.f32 0.0, %v1694
      %v1696 = vpop.f32.mrf.mxu0
      %v1697 = vadd.f32 0.0, %v1696
      %1698 = vmatmul.bf16.gmra.mxu0 %v1612
      %v1699 = vpop.f32.mrf.mxu0
      %v1700 = vadd.f32 0.0, %v1699
      %v1701 = vpop.f32.mrf.mxu0
      %v1702 = vadd.f32 0.0, %v1701
      %1703 = vmatmul.bf16.gmra.mxu0 %v1620
      %v1704 = vpop.f32.mrf.mxu0
      %v1705 = vadd.f32 0.0, %v1704
      %v1706 = vpop.f32.mrf.mxu0
      %v1707 = vadd.f32 0.0, %v1706
      %1708 = vmatmul.bf16.gmra.mxu0 %v1628
      %v1709 = vpop.f32.mrf.mxu0
      %v1710 = vadd.f32 0.0, %v1709
      %v1711 = vpop.f32.mrf.mxu0
      %v1712 = vadd.f32 0.0, %v1711
      %1713 = vmatmul.bf16.gmra.mxu0 %v1631
      %v1714 = vpop.f32.mrf.mxu0
      %v1715 = vadd.f32 0.0, %v1714
      %v1716 = vpop.f32.mrf.mxu0
      %1717 = vdwg.mxu0
      %v1718 = vadd.f32 %v1542, %v1695
      %v1719 = vadd.f32 %v1543, %v1697
      %v1720 = vadd.f32 %v1544, %v1700
      %v1721 = vadd.f32 %v1545, %v1702
      %v1722 = vadd.f32 %v1546, %v1705
      %v1723 = vadd.f32 %v1547, %v1707
      %v1724 = vadd.f32 %v1548, %v1710
      %v1725 = vadd.f32 %v1549, %v1712
      %v1726 = vadd.f32 %v1550, %v1715
      %1727 = vst [vmem:[#allocation2] sm:$0xff] %v1718
      %1728 = vst [vmem:[#allocation2 + $0x8] sm:$0xff] %v1719
      %1729 = vst [vmem:[#allocation2 + $0x10] sm:$0xff] %v1720
      %1730 = vst [vmem:[#allocation2 + $0x18] sm:$0xff] %v1721
      %1731 = vst [vmem:[#allocation2 + $0x20] sm:$0xff] %v1722
      %1732 = vst [vmem:[#allocation2 + $0x28] sm:$0xff] %v1723
      %1733 = vst [vmem:[#allocation2 + $0x30] sm:$0xff] %v1724
      %1734 = vst [vmem:[#allocation2 + $0x38] sm:$0xff] %v1725
      %1735 = vst [vmem:[#allocation2 + $0x40] sm:$0xff] %v1726
      %v1736 = vld [vmem:[%s244 + $0x4] sm:$0xe]
      %v1737 = vld [vmem:[%s244 + $0x8] sm:$0xf]
      %v1738 = vld [vmem:[%s244 + $0xc] sm:$0xf]
      %v1739 = vld [vmem:[%s244 + $0x10] sm:$0xf]
      %v1740 = vld [vmem:[%s244 + $0x14] sm:$0xf]
      %v1741 = vld [vmem:[%s244 + $0x18] sm:$0xf]
      %v1742 = vld [vmem:[%s244 + $0x1c] sm:$0xf]
      %v1743 = vld [vmem:[%s244 + $0x20] sm:$0xf]
      %v1744 = vld [vmem:[%s244 + $0x24] sm:$0xf]
      %v1745 = vld [vmem:[%s244 + $0x28] sm:$0x1]
      %v1746 = vld [vmem:[#allocation2] sm:$0xff]
      %v1747 = vld [vmem:[#allocation2 + $0x8] sm:$0xff]
      %v1748 = vld [vmem:[#allocation2 + $0x10] sm:$0xff]
      %v1749 = vld [vmem:[#allocation2 + $0x18] sm:$0xff]
      %v1750 = vld [vmem:[#allocation2 + $0x20] sm:$0xff]
      %v1751 = vld [vmem:[#allocation2 + $0x28] sm:$0xff]
      %v1752 = vld [vmem:[#allocation2 + $0x30] sm:$0xff]
      %v1753 = vld [vmem:[#allocation2 + $0x38] sm:$0xff]
      %v1754 = vld [vmem:[#allocation2 + $0x40] sm:$0xff]
      %s1755 = scalar_lea.vmem %s248, 512
      %v1756 = vld [vmem:[%s1755] sm:$0xf]
      %v1757 = vld [vmem:[%s1755 + $0x4] sm:$0xf]
      %v1758 = vld [vmem:[%s1755 + $0x8] sm:$0xf]
      %v1759 = vld [vmem:[%s1755 + $0xc] sm:$0xf]
      %v1760 = vld [vmem:[%s1755 + $0x10] sm:$0xf]
      %v1761 = vld [vmem:[%s1755 + $0x14] sm:$0xf]
      %v1762 = vld [vmem:[%s1755 + $0x18] sm:$0xf]
      %v1763 = vld [vmem:[%s1755 + $0x1c] sm:$0xf]
      %v1764 = vld [vmem:[%s1755 + $0x20] sm:$0xf]
      %v1765 = vld [vmem:[%s1755 + $0x24] sm:$0xf]
      %v1766 = vld [vmem:[%s1755 + $0x28] sm:$0xf]
      %v1767 = vld [vmem:[%s1755 + $0x2c] sm:$0xf]
      %v1768 = vld [vmem:[%s1755 + $0x30] sm:$0xf]
      %v1769 = vld [vmem:[%s1755 + $0x34] sm:$0xf]
      %v1770 = vld [vmem:[%s1755 + $0x38] sm:$0xf]
      %v1771 = vld [vmem:[%s1755 + $0x3c] sm:$0xf]
      %v1782 = vunpack.c.l.b16 %v1736
      %v1783 = vunpack.c.l.b16 %v1737
      %v1784 = vunpack.c.l.b16 %v1738
      %v1785 = vunpack.c.l.b16 %v1739
      %v1786 = vunpack.c.l.b16 %v1740
      %v1787 = vunpack.c.l.b16 %v1741
      %v1788 = vunpack.c.l.b16 %v1742
      %v1789 = vunpack.c.l.b16 %v1743
      %v1790 = vunpack.c.l.b16 %v1744
      %v1791 = vunpack.c.l.b16 %v1745
      %v1792 = vpack.c.b16 %v1783, %v1782
      %v1793 = vpack.c.b16 %v1785, %v1784
      %v1794 = vpack.c.b16 %v1787, %v1786
      %v1795 = vpack.c.b16 %v1789, %v1788
      %v1796 = vpack.c.b16 %v1791, %v1790
      %vm1797 = vcmask 1046528
      %v1798 = vrot.slane %v1792, 1
      %v1799 = vrot.slane %v1793, 1
      %v1800 = vsel %vm1797, %v1798, %v1799
      %v1801 = vrot.slane %v1794, 1
      %v1802 = vsel %vm1797, %v1799, %v1801
      %v1803 = vrot.slane %v1795, 1
      %v1804 = vsel %vm1797, %v1801, %v1803
      %v1805 = vrot.slane %v1796, 1
      %v1806 = vsel %vm1797, %v1803, %v1805
      %v1828 = vunpack.c.l.b16 %v1756
      %v1829 = vunpack.c.l.b16 %v1757
      %v1830 = vunpack.c.l.b16 %v1758
      %v1831 = vunpack.c.l.b16 %v1759
      %v1832 = vunpack.c.l.b16 %v1760
      %v1833 = vunpack.c.l.b16 %v1761
      %v1834 = vunpack.c.l.b16 %v1762
      %v1835 = vunpack.c.l.b16 %v1763
      %v1836 = vunpack.c.l.b16 %v1764
      %v1837 = vunpack.c.l.b16 %v1765
      %v1838 = vunpack.c.l.b16 %v1766
      %v1839 = vunpack.c.l.b16 %v1767
      %v1840 = vunpack.c.l.b16 %v1768
      %v1841 = vunpack.c.l.b16 %v1769
      %v1842 = vunpack.c.l.b16 %v1770
      %v1843 = vunpack.c.l.b16 %v1771
      %v1844 = vpack.c.b16 %v1829, %v1828
      %v1845 = vpack.c.b16 %v1831, %v1830
      %v1846 = vpack.c.b16 %v1833, %v1832
      %v1847 = vpack.c.b16 %v1835, %v1834
      %v1848 = vpack.c.b16 %v1837, %v1836
      %v1849 = vpack.c.b16 %v1839, %v1838
      %v1850 = vpack.c.b16 %v1841, %v1840
      %v1851 = vpack.c.b16 %v1843, %v1842
      %1860 = vmatpush.bf16.msra.mxu0 %v1851
      %1861 = vmatpush.bf16.msra.mxu0 %v1850
      %1862 = vmatpush.bf16.msra.mxu0 %v1849
      %1863 = vmatpush.bf16.msra.mxu0 %v1848
      %1864 = vmatpush.bf16.msra.mxu0 %v1847
      %1865 = vmatpush.bf16.msra.mxu0 %v1846
      %1866 = vmatpush.bf16.msra.mxu0 %v1845
      %1867 = vmatpush.bf16.msra.mxu0 %v1844
      %1868 = vmatmul.bf16.gmra.mxu0 %v1800
      %v1869 = vpop.f32.mrf.mxu0
      %v1870 = vadd.f32 0.0, %v1869
      %v1871 = vpop.f32.mrf.mxu0
      %v1872 = vadd.f32 0.0, %v1871
      %1873 = vmatmul.bf16.gmra.mxu0 %v1802
      %v1874 = vpop.f32.mrf.mxu0
      %v1875 = vadd.f32 0.0, %v1874
      %v1876 = vpop.f32.mrf.mxu0
      %v1877 = vadd.f32 0.0, %v1876
      %1878 = vmatmul.bf16.gmra.mxu0 %v1804
      %v1879 = vpop.f32.mrf.mxu0
      %v1880 = vadd.f32 0.0, %v1879
      %v1881 = vpop.f32.mrf.mxu0
      %v1882 = vadd.f32 0.0, %v1881
      %1883 = vmatmul.bf16.gmra.mxu0 %v1806
      %v1884 = vpop.f32.mrf.mxu0
      %v1885 = vadd.f32 0.0, %v1884
      %v1886 = vpop.f32.mrf.mxu0
      %v1887 = vadd.f32 0.0, %v1886
      %1888 = vmatmul.bf16.gmra.mxu0 %v1805
      %v1889 = vpop.f32.mrf.mxu0
      %v1890 = vadd.f32 0.0, %v1889
      %v1891 = vpop.f32.mrf.mxu0
      %1892 = vdwg.mxu0
      %v1893 = vadd.f32 %v1746, %v1870
      %v1894 = vadd.f32 %v1747, %v1872
      %v1895 = vadd.f32 %v1748, %v1875
      %v1896 = vadd.f32 %v1749, %v1877
      %v1897 = vadd.f32 %v1750, %v1880
      %v1898 = vadd.f32 %v1751, %v1882
      %v1899 = vadd.f32 %v1752, %v1885
      %v1900 = vadd.f32 %v1753, %v1887
      %v1901 = vadd.f32 %v1754, %v1890
      %1902 = vst [vmem:[#allocation2] sm:$0xff] %v1893
      %1903 = vst [vmem:[#allocation2 + $0x8] sm:$0xff] %v1894
      %1904 = vst [vmem:[#allocation2 + $0x10] sm:$0xff] %v1895
      %1905 = vst [vmem:[#allocation2 + $0x18] sm:$0xff] %v1896
      %1906 = vst [vmem:[#allocation2 + $0x20] sm:$0xff] %v1897
      %1907 = vst [vmem:[#allocation2 + $0x28] sm:$0xff] %v1898
      %1908 = vst [vmem:[#allocation2 + $0x30] sm:$0xff] %v1899
      %1909 = vst [vmem:[#allocation2 + $0x38] sm:$0xff] %v1900
      %1910 = vst [vmem:[#allocation2 + $0x40] sm:$0xff] %v1901
      %v1911 = vld [vmem:[#allocation2] sm:$0xff]
      %v1912 = vld [vmem:[#allocation2 + $0x8] sm:$0xff]
      %v1913 = vld [vmem:[#allocation2 + $0x10] sm:$0xff]
      %v1914 = vld [vmem:[#allocation2 + $0x18] sm:$0xff]
      %v1915 = vld [vmem:[#allocation2 + $0x20] sm:$0xff]
      %v1916 = vld [vmem:[#allocation2 + $0x28] sm:$0xff]
      %v1917 = vld [vmem:[#allocation2 + $0x30] sm:$0xff]
      %v1918 = vld [vmem:[#allocation2 + $0x38] sm:$0xff]
      %v1919 = vld [vmem:[#allocation2 + $0x40] sm:$0xff]
      %v1920 = vld [vmem:[%s251] sm:$0x1]
      %v1922 = vperm.slane %v1920, 0
      %v1924 = vmul.f32 %v1911, %v1922
      %v1925 = vmul.f32 %v1912, %v1922
      %v1926 = vmul.f32 %v1913, %v1922
      %v1927 = vmul.f32 %v1914, %v1922
      %v1928 = vmul.f32 %v1915, %v1922
      %v1929 = vmul.f32 %v1916, %v1922
      %v1930 = vmul.f32 %v1917, %v1922
      %v1931 = vmul.f32 %v1918, %v1922
      %v1932 = vmul.f32 %v1919, %v1922
      %v1933 = vld [vmem:[%s254] sm:$0x1]
      %v1935 = vperm.slane %v1933, 0
      %v1937 = vadd.f32 %v1924, %v1935
      %v1938 = vadd.f32 %v1925, %v1935
      %v1939 = vadd.f32 %v1926, %v1935
      %v1940 = vadd.f32 %v1927, %v1935
      %v1941 = vadd.f32 %v1928, %v1935
      %v1942 = vadd.f32 %v1929, %v1935
      %v1943 = vadd.f32 %v1930, %v1935
      %v1944 = vadd.f32 %v1931, %v1935
      %v1945 = vadd.f32 %v1932, %v1935
      %v1946 = vmax.f32 %v1937, 0.0
      %v1947 = vmax.f32 %v1938, 0.0
      %v1948 = vmax.f32 %v1939, 0.0
      %v1949 = vmax.f32 %v1940, 0.0
      %v1950 = vmax.f32 %v1941, 0.0
      %v1951 = vmax.f32 %v1942, 0.0
      %v1952 = vmax.f32 %v1943, 0.0
      %v1953 = vmax.f32 %v1944, 0.0
      %v1954 = vmax.f32 %v1945, 0.0
      %v1955 = vpack.c.bf16 %v1946, %v1946
      %v1956 = vpack.c.bf16 %v1947, %v1947
      %v1957 = vpack.c.bf16 %v1948, %v1948
      %v1958 = vpack.c.bf16 %v1949, %v1949
      %v1959 = vpack.c.bf16 %v1950, %v1950
      %v1960 = vpack.c.bf16 %v1951, %v1951
      %v1961 = vpack.c.bf16 %v1952, %v1952
      %v1962 = vpack.c.bf16 %v1953, %v1953
      %v1963 = vpack.c.bf16 %v1954, %v1954
      %1964 = vst [vmem:[%s262] sm:$0xf] %v1955
      %1965 = vst [vmem:[%s262 + $0x4] sm:$0xf] %v1956
      %1966 = vst [vmem:[%s262 + $0x8] sm:$0xf] %v1957
      %1967 = vst [vmem:[%s262 + $0xc] sm:$0xf] %v1958
      %1968 = vst [vmem:[%s262 + $0x10] sm:$0xf] %v1959
      %1969 = vst [vmem:[%s262 + $0x14] sm:$0xf] %v1960
      %1970 = vst [vmem:[%s262 + $0x18] sm:$0xf] %v1961
      %1971 = vst [vmem:[%s262 + $0x1c] sm:$0xf] %v1962
      %1972 = vst [vmem:[%s262 + $0x20] sm:$0xf] %v1963
      %p1973 = scmp.lt.s32.totalorder %s19, 1
      %s1974 = scalar_select %p1973, %s19, 1
      %p1975 = scmp.lt.s32.totalorder %s20, 0
      %s1976 = scalar_select %p1975, %s20, 0
      %s1977 = smul.addr %s1974, 9
      %s1978 = sadd.s32 %s1976, %s1977
      %s1979 = smul.addr %s1978, 4
      %s1980 = scalar_lea.vmem %s4, %s1979
      // Predicated region
      $region37: #{forward.11} parent=35 // pred_check
        %p1981 = pneg %p151
      $region38: #{forward.11} parent=35 // pred_check_branch
        %1983 = sbr.rel (%p1981) target = $region40
      $region39: #{forward.11} parent=35 // pred_region
        _
      $region40: #{forward.11} parent=35 // pred_fallthru
        _
    $region36: #{forward.11} parent=5 // pred_fallthru
      _
    %p1984 = scmp.le.s32.totalorder 2, %s10
    // Predicated region
    $region41: #{forward.11} parent=5 // pred_check
      %p1985 = pneg %p1984
    $region42: #{forward.11} parent=5 // pred_check_branch
      %1987 = sbr.rel (%p1985) target = $region44
    $region43: #{forward.11} parent=5 // pred_region
      %s1988 = ssub.s32 %s10, 2
      // Predicated region
      $region45: #{forward.11} parent=43 // pred_check
        %p1989 = pneg %p157
      $region46: #{forward.11} parent=43 // pred_check_branch
        %1991 = sbr.rel (%p1989) target = $region48
      $region47: #{forward.11} parent=43 // pred_region
        %p1992 = scmp.lt.s32.totalorder %s21, 1
        %s1993 = scalar_select %p1992, %s21, 1
        %p1994 = scmp.lt.s32.totalorder %s22, 0
        %s1995 = scalar_select %p1994, %s22, 0
        %s1996 = smul.addr %s1993, 9
        %s1997 = sadd.s32 %s1995, %s1996
        %s1998 = smul.addr %s1997, 4
        %s1999 = scalar_lea.vmem %s4, %s1998
      $region48: #{forward.11} parent=43 // pred_fallthru
        _
    $region44: #{forward.11} parent=5 // pred_fallthru
      _
  $region6: #{forward.11} parent=0 // loop_footer
    %s14 = sadd.s32 1, %s10
  $region7: #{forward.11} parent=0 // loop_footer_branch
    %9 = sbr.rel target = $region3
  $region8: #{forward.11} parent=0 // loop_exit
    _

// kernel: forward.7
$region0: #{forward.7}
  #allocation0 [shape = 'u32[]', space=smem, size = 0x4, offset = 0x4, fixed_abs, tag = 'smem constant byte address 0x4 - core index']
  #allocation1 [shape = 'u32[72,128]{1,0:T(1,128)}', space=vmem, size = 0x9000, scoped, tag = 'internal scratch']
  #allocation2 [shape = 'f32[288,128]{1,0:T(8,128)}', space=vmem, size = 0x24000, scoped, tag = 'scratch operand']
  %s0 = inlined_call_operand.vmem [shape: bf16[2,328,128], index: 0, kind: input, shape index: {}]
  %s1 = inlined_call_operand.vmem [shape: bf16[9,128,128], index: 1, kind: input, shape index: {}]
  %s2 = inlined_call_operand.vmem [shape: f32[1,128], index: 2, kind: input, shape index: {}]
  %s3 = inlined_call_operand.vmem [shape: f32[1,128], index: 3, kind: input, shape index: {}]
  %s4 = inlined_call_operand.vmem [shape: bf16[2,288,128], index: 4, kind: output, shape index: {}]
  %s5 = sld [smem:[#allocation0]]
  $region49: #{forward.7} parent=0
    _
  %s7 = ssub.s32 1, %s5
  %s8 = scalar_select 0, %s7, %s5
  loop: start=0, step=1, limit=4
  $region2: #{forward.7} parent=0 // loop_pre_header
    _
  $region3: #{forward.7} parent=0 // loop_header
    %s10 = sphi 0, %s14
    %p11 = scmp.ge.s32.totalorder %s10, 4
    %s17 = sphi 0, %s29
    %s18 = sphi 0, %s25
    %s19 = sphi 0, %s17
    %s20 = sphi 0, %s18
    %s21 = sphi 0, %s19
    %s22 = sphi 0, %s20
    %s32 = sphi 0, %s34
    %s35 = sphi 0, %s32
    %s36 = sphi 0, %s35
    %s52 = sphi 0, %s36
    %s58 = sphi 0, %s60
    %s61 = sphi 0, %s58
    %s62 = sphi 0, %s61
    %s78 = sphi 0, %s62
    %s84 = sphi 0, %s86
    %s87 = sphi 0, %s84
    %s88 = sphi 0, %s87
    %s104 = sphi 0, %s88
    %s110 = sphi 0, %s112
    %s113 = sphi 0, %s110
    %s114 = sphi 0, %s113
    %s130 = sphi 0, %s114
    %s138 = sphi 0, %s140
    %s141 = sphi 0, %s138
    %s142 = sphi 0, %s141
    %s158 = sphi 0, %s142
  $region4: #{forward.7} parent=0 // loop_header_branch
    %13 = sbr.rel (%p11) target = $region8
  $region5: #{forward.7} parent=0 // loop_body
    %s15 = ssub.s32 %s10, 1
    %s16 = ssub.s32 %s10, 2
    %s23 = sadd.s32 1, %s18
    %p24 = scmp.ge.s32.totalorder %s23, 1
    %s25 = scalar_select %p24, 0, %s23
    %s26 = sadd.s32 1, %s17
    %s27 = scalar_select %p24, %s26, %s17
    %p28 = scmp.ge.s32.totalorder %s27, 2
    %s29 = scalar_select %p28, 0, %s27
    %s30 = ssub.s32 %s17, %s29
    %p31 = scmp.eq.s32.totalorder %s30, 0
    %s33 = sadd.s32 %s32, 1
    %s34 = scalar_select %p31, %s32, %s33
    %p37 = pneg %p31
    %p38 = scmp.eq.s32.totalorder %s10, 1
    %p39 = por %p37, %p38
    %p40 = scmp.ne.s32.totalorder %s32, %s35
    %p41 = scmp.eq.s32.totalorder %s10, 0
    %p42 = por %p40, %p41
    %p43 = scmp.ne.s32.totalorder %s32, %s35
    %p44 = scmp.eq.s32.totalorder %s15, 1
    %p45 = por %p43, %p44
    %p46 = scmp.ne.s32.totalorder %s35, %s36
    %p47 = scmp.eq.s32.totalorder %s15, 0
    %p48 = por %p46, %p47
    %p49 = scmp.ne.s32.totalorder %s35, %s36
    %p50 = scmp.eq.s32.totalorder %s16, 1
    %p51 = por %p49, %p50
    %p53 = scmp.ne.s32.totalorder %s36, %s52
    %p54 = scmp.eq.s32.totalorder %s16, 0
    %p55 = por %p53, %p54
    %s56 = ssub.s32 %s18, %s25
    %p57 = scmp.eq.s32.totalorder %s56, 0
    %s59 = sadd.s32 %s58, 1
    %s60 = scalar_select %p57, %s58, %s59
    %p63 = pneg %p57
    %p64 = scmp.eq.s32.totalorder %s10, 1
    %p65 = por %p63, %p64
    %p66 = scmp.ne.s32.totalorder %s58, %s61
    %p67 = scmp.eq.s32.totalorder %s10, 0
    %p68 = por %p66, %p67
    %p69 = scmp.ne.s32.totalorder %s58, %s61
    %p70 = scmp.eq.s32.totalorder %s15, 1
    %p71 = por %p69, %p70
    %p72 = scmp.ne.s32.totalorder %s61, %s62
    %p73 = scmp.eq.s32.totalorder %s15, 0
    %p74 = por %p72, %p73
    %p75 = scmp.ne.s32.totalorder %s61, %s62
    %p76 = scmp.eq.s32.totalorder %s16, 1
    %p77 = por %p75, %p76
    %p79 = scmp.ne.s32.totalorder %s62, %s78
    %p80 = scmp.eq.s32.totalorder %s16, 0
    %p81 = por %p79, %p80
    %s82 = ssub.s32 %s18, %s25
    %p83 = scmp.eq.s32.totalorder %s82, 0
    %s85 = sadd.s32 %s84, 1
    %s86 = scalar_select %p83, %s84, %s85
    %p89 = pneg %p83
    %p90 = scmp.eq.s32.totalorder %s10, 1
    %p91 = por %p89, %p90
    %p92 = scmp.ne.s32.totalorder %s84, %s87
    %p93 = scmp.eq.s32.totalorder %s10, 0
    %p94 = por %p92, %p93
    %p95 = scmp.ne.s32.totalorder %s84, %s87
    %p96 = scmp.eq.s32.totalorder %s15, 1
    %p97 = por %p95, %p96
    %p98 = scmp.ne.s32.totalorder %s87, %s88
    %p99 = scmp.eq.s32.totalorder %s15, 0
    %p100 = por %p98, %p99
    %p101 = scmp.ne.s32.totalorder %s87, %s88
    %p102 = scmp.eq.s32.totalorder %s16, 1
    %p103 = por %p101, %p102
    %p105 = scmp.ne.s32.totalorder %s88, %s104
    %p106 = scmp.eq.s32.totalorder %s16, 0
    %p107 = por %p105, %p106
    %s108 = ssub.s32 %s18, %s25
    %p109 = scmp.eq.s32.totalorder %s108, 0
    %s111 = sadd.s32 %s110, 1
    %s112 = scalar_select %p109, %s110, %s111
    %p115 = pneg %p109
    %p116 = scmp.eq.s32.totalorder %s10, 1
    %p117 = por %p115, %p116
    %p118 = scmp.ne.s32.totalorder %s110, %s113
    %p119 = scmp.eq.s32.totalorder %s10, 0
    %p120 = por %p118, %p119
    %p121 = scmp.ne.s32.totalorder %s110, %s113
    %p122 = scmp.eq.s32.totalorder %s15, 1
    %p123 = por %p121, %p122
    %p124 = scmp.ne.s32.totalorder %s113, %s114
    %p125 = scmp.eq.s32.totalorder %s15, 0
    %p126 = por %p124, %p125
    %p127 = scmp.ne.s32.totalorder %s113, %s114
    %p128 = scmp.eq.s32.totalorder %s16, 1
    %p129 = por %p127, %p128
    %p131 = scmp.ne.s32.totalorder %s114, %s130
    %p132 = scmp.eq.s32.totalorder %s16, 0
    %p133 = por %p131, %p132
    %s134 = ssub.s32 %s17, %s29
    %s135 = ssub.s32 %s18, %s25
    %s136 = sor.u32 %s134, %s135
    %p137 = scmp.eq.s32.totalorder %s136, 0
    %s139 = sadd.s32 %s138, 1
    %s140 = scalar_select %p137, %s138, %s139
    %p143 = pneg %p137
    %p144 = scmp.eq.s32.totalorder %s10, 1
    %p145 = por %p143, %p144
    %p146 = scmp.ne.s32.totalorder %s138, %s141
    %p147 = scmp.eq.s32.totalorder %s10, 0
    %p148 = por %p146, %p147
    %p149 = scmp.ne.s32.totalorder %s138, %s141
    %p150 = scmp.eq.s32.totalorder %s15, 1
    %p151 = por %p149, %p150
    %p152 = scmp.ne.s32.totalorder %s141, %s142
    %p153 = scmp.eq.s32.totalorder %s15, 0
    %p154 = por %p152, %p153
    %p155 = scmp.ne.s32.totalorder %s141, %s142
    %p156 = scmp.eq.s32.totalorder %s16, 1
    %p157 = por %p155, %p156
    %p159 = scmp.ne.s32.totalorder %s142, %s158
    %p160 = scmp.eq.s32.totalorder %s16, 0
    %p161 = por %p159, %p160
    %p162 = scmp.le.s32.totalorder 1, %s10
    %p163 = scmp.lt.s32.totalorder %s10, 3
    %p164 = pnand %p162, %p163
    %p165 = pneg %p164
    // Predicated region
    $region9: #{forward.7} parent=5 // pred_check
      _
    $region10: #{forward.7} parent=5 // pred_check_branch
      %167 = sbr.rel (%p164) target = $region12
    $region11: #{forward.7} parent=5 // pred_region
      %s168 = ssub.s32 %s10, 1
      // Predicated region
      $region13: #{forward.7} parent=11 // pred_check
        %p169 = pneg %p74
      $region14: #{forward.7} parent=11 // pred_check_branch
        %171 = sbr.rel (%p169) target = $region16
      $region15: #{forward.7} parent=11 // pred_region
        %p172 = scmp.lt.s32.totalorder %s20, 0
        %s173 = scalar_select %p172, %s20, 0
        %s174 = smul.addr %s173, 4
        %s175 = scalar_lea.vmem %s1, %s174
      $region16: #{forward.7} parent=11 // pred_fallthru
        _
      // Predicated region
      $region17: #{forward.7} parent=11 // pred_check
        %p176 = pneg %p100
      $region18: #{forward.7} parent=11 // pred_check_branch
        %178 = sbr.rel (%p176) target = $region20
      $region19: #{forward.7} parent=11 // pred_region
        %p179 = scmp.lt.s32.totalorder %s20, 0
        %s180 = scalar_select %p179, %s20, 0
        %s181 = scalar_lea.vmem %s2, %s180
      $region20: #{forward.7} parent=11 // pred_fallthru
        _
      // Predicated region
      $region21: #{forward.7} parent=11 // pred_check
        %p182 = pneg %p126
      $region22: #{forward.7} parent=11 // pred_check_branch
        %184 = sbr.rel (%p182) target = $region24
      $region23: #{forward.7} parent=11 // pred_region
        %p185 = scmp.lt.s32.totalorder %s20, 0
        %s186 = scalar_select %p185, %s20, 0
        %s187 = scalar_lea.vmem %s3, %s186
      $region24: #{forward.7} parent=11 // pred_fallthru
        _
    $region12: #{forward.7} parent=5 // pred_fallthru
      _
    %p188 = scmp.lt.s32.totalorder %s10, 2
    // Predicated region
    $region25: #{forward.7} parent=5 // pred_check
      %p189 = pneg %p188
    $region26: #{forward.7} parent=5 // pred_check_branch
      %191 = sbr.rel (%p189) target = $region28
    $region27: #{forward.7} parent=5 // pred_region
      // Predicated region
      $region29: #{forward.7} parent=27 // pred_check
        %p192 = pneg %p42
      $region30: #{forward.7} parent=27 // pred_check_branch
        %194 = sbr.rel (%p192) target = $region32
      $region31: #{forward.7} parent=27 // pred_region
        %p195 = scmp.lt.s32.totalorder %s17, 1
        %s196 = scalar_select %p195, %s17, 1
        %s197 = smul.addr %s196, 41
        %s198 = smul.addr %s197, 4
        %s199 = scalar_lea.vmem %s0, %s198
      $region32: #{forward.7} parent=27 // pred_fallthru
        _
    $region28: #{forward.7} parent=5 // pred_fallthru
      _
    %p200 = scmp.le.s32.totalorder 1, %s10
    %p201 = scmp.lt.s32.totalorder %s10, 3
    %p202 = pnand %p200, %p201
    %p203 = pneg %p202
    // Predicated region
    $region33: #{forward.7} parent=5 // pred_check
      _
    $region34: #{forward.7} parent=5 // pred_check_branch
      %205 = sbr.rel (%p202) target = $region36
    $region35: #{forward.7} parent=5 // pred_region
      %s206 = ssub.s32 %s10, 1
      %p207 = scmp.lt.s32.totalorder %s19, 1
      %s208 = scalar_select %p207, %s19, 1
      %s209 = smul.addr %s208, 41
      %s210 = smul.addr %s209, 4
      %s211 = scalar_lea.vmem %s0, %s210
      %p212 = pneg %p48
      %p213 = pneg %p45
      %p214 = scmp.lt.s32.totalorder %s20, 0
      %s215 = scalar_select %p214, %s20, 0
      %s216 = smul.addr %s215, 4
      %s217 = scalar_lea.vmem %s1, %s216
      %p218 = pneg %p74
      %p219 = pneg %p71
      %p220 = scmp.lt.s32.totalorder %s20, 0
      %s221 = scalar_select %p220, %s20, 0
      %s222 = scalar_lea.vmem %s2, %s221
      %p223 = pneg %p100
      %p224 = pneg %p97
      %p225 = scmp.lt.s32.totalorder %s20, 0
      %s226 = scalar_select %p225, %s20, 0
      %s227 = scalar_lea.vmem %s3, %s226
      %p228 = pneg %p126
      %p229 = pneg %p123
      %p230 = pneg %p154
      %p231 = pneg %p151
      %p232 = scmp.lt.s32.totalorder %s19, 1
      %s233 = scalar_select %p232, %s19, 1
      %p234 = scmp.lt.s32.totalorder %s20, 0
      %s235 = scalar_select %p234, %s20, 0
      %s236 = smul.addr %s233, 36
      %s237 = sadd.s32 %s235, %s236
      %s238 = smul.addr %s237, 4
      %s239 = scalar_lea.vmem %s4, %s238
      %p240 = scmp.lt.s32.totalorder %s19, 1
      %s241 = scalar_select %p240, %s19, 1
      %s242 = smul.addr %s241, 41
      %s243 = smul.addr %s242, 4
      %s244 = scalar_lea.vmem %s0, %s243
      %p245 = scmp.lt.s32.totalorder %s20, 0
      %s246 = scalar_select %p245, %s20, 0
      %s247 = smul.addr %s246, 4
      %s248 = scalar_lea.vmem %s1, %s247
      %p249 = scmp.lt.s32.totalorder %s20, 0
      %s250 = scalar_select %p249, %s20, 0
      %s251 = scalar_lea.vmem %s2, %s250
      %p252 = scmp.lt.s32.totalorder %s20, 0
      %s253 = scalar_select %p252, %s20, 0
      %s254 = scalar_lea.vmem %s3, %s253
      %p255 = scmp.lt.s32.totalorder %s19, 1
      %s256 = scalar_select %p255, %s19, 1
      %p257 = scmp.lt.s32.totalorder %s20, 0
      %s258 = scalar_select %p257, %s20, 0
      %s259 = smul.addr %s256, 36
      %s260 = sadd.s32 %s258, %s259
      %s261 = smul.addr %s260, 4
      %s262 = scalar_lea.vmem %s4, %s261
      %263 = vst [vmem:[#allocation2] sm:$0xff] 0.0
      %264 = vst [vmem:[#allocation2 + $0x8] sm:$0xff] 0.0
      %265 = vst [vmem:[#allocation2 + $0x10] sm:$0xff] 0.0
      %266 = vst [vmem:[#allocation2 + $0x18] sm:$0xff] 0.0
      %267 = vst [vmem:[#allocation2 + $0x20] sm:$0xff] 0.0
      %268 = vst [vmem:[#allocation2 + $0x28] sm:$0xff] 0.0
      %269 = vst [vmem:[#allocation2 + $0x30] sm:$0xff] 0.0
      %270 = vst [vmem:[#allocation2 + $0x38] sm:$0xff] 0.0
      %271 = vst [vmem:[#allocation2 + $0x40] sm:$0xff] 0.0
      %272 = vst [vmem:[#allocation2 + $0x48] sm:$0xff] 0.0
      %273 = vst [vmem:[#allocation2 + $0x50] sm:$0xff] 0.0
      %274 = vst [vmem:[#allocation2 + $0x58] sm:$0xff] 0.0
      %275 = vst [vmem:[#allocation2 + $0x60] sm:$0xff] 0.0
      %276 = vst [vmem:[#allocation2 + $0x68] sm:$0xff] 0.0
      %277 = vst [vmem:[#allocation2 + $0x70] sm:$0xff] 0.0
      %278 = vst [vmem:[#allocation2 + $0x78] sm:$0xff] 0.0
      %279 = vst [vmem:[#allocation2 + $0x80] sm:$0xff] 0.0
      %280 = vst [vmem:[#allocation2 + $0x88] sm:$0xff] 0.0
      %281 = vst [vmem:[#allocation2 + $0x90] sm:$0xff] 0.0
      %282 = vst [vmem:[#allocation2 + $0x98] sm:$0xff] 0.0
      %283 = vst [vmem:[#allocation2 + $0xa0] sm:$0xff] 0.0
      %284 = vst [vmem:[#allocation2 + $0xa8] sm:$0xff] 0.0
      %285 = vst [vmem:[#allocation2 + $0xb0] sm:$0xff] 0.0
      %286 = vst [vmem:[#allocation2 + $0xb8] sm:$0xff] 0.0
      %287 = vst [vmem:[#allocation2 + $0xc0] sm:$0xff] 0.0
      %288 = vst [vmem:[#allocation2 + $0xc8] sm:$0xff] 0.0
      %289 = vst [vmem:[#allocation2 + $0xd0] sm:$0xff] 0.0
      %290 = vst [vmem:[#allocation2 + $0xd8] sm:$0xff] 0.0
      %291 = vst [vmem:[#allocation2 + $0xe0] sm:$0xff] 0.0
      %292 = vst [vmem:[#allocation2 + $0xe8] sm:$0xff] 0.0
      %293 = vst [vmem:[#allocation2 + $0xf0] sm:$0xff] 0.0
      %294 = vst [vmem:[#allocation2 + $0xf8] sm:$0xff] 0.0
      %295 = vst [vmem:[#allocation2 + $0x100] sm:$0xff] 0.0
      %296 = vst [vmem:[#allocation2 + $0x108] sm:$0xff] 0.0
      %297 = vst [vmem:[#allocation2 + $0x110] sm:$0xff] 0.0
      %298 = vst [vmem:[#allocation2 + $0x118] sm:$0xff] 0.0
      %v299 = vld [vmem:[%s244] sm:$0xf]
      %v300 = vld [vmem:[%s244 + $0x4] sm:$0xf]
      %v301 = vld [vmem:[%s244 + $0x8] sm:$0xf]
      %v302 = vld [vmem:[%s244 + $0xc] sm:$0xf]
      %v303 = vld [vmem:[%s244 + $0x10] sm:$0xf]
      %v304 = vld [vmem:[%s244 + $0x14] sm:$0xf]
      %v305 = vld [vmem:[%s244 + $0x18] sm:$0xf]
      %v306 = vld [vmem:[%s244 + $0x1c] sm:$0xf]
      %v307 = vld [vmem:[%s244 + $0x20] sm:$0xf]
      %v308 = vld [vmem:[%s244 + $0x24] sm:$0xf]
      %v309 = vld [vmem:[%s244 + $0x28] sm:$0xf]
      %v310 = vld [vmem:[%s244 + $0x2c] sm:$0xf]
      %v311 = vld [vmem:[%s244 + $0x30] sm:$0xf]
      %v312 = vld [vmem:[%s244 + $0x34] sm:$0xf]
      %v313 = vld [vmem:[%s244 + $0x38] sm:$0xf]
      %v314 = vld [vmem:[%s244 + $0x3c] sm:$0xf]
      %v315 = vld [vmem:[%s244 + $0x40] sm:$0xf]
      %v316 = vld [vmem:[%s244 + $0x44] sm:$0xf]
      %v317 = vld [vmem:[%s244 + $0x48] sm:$0xf]
      %v318 = vld [vmem:[%s244 + $0x4c] sm:$0xf]
      %v319 = vld [vmem:[%s244 + $0x50] sm:$0xf]
      %v320 = vld [vmem:[%s244 + $0x54] sm:$0xf]
      %v321 = vld [vmem:[%s244 + $0x58] sm:$0xf]
      %v322 = vld [vmem:[%s244 + $0x5c] sm:$0xf]
      %v323 = vld [vmem:[%s244 + $0x60] sm:$0xf]
      %v324 = vld [vmem:[%s244 + $0x64] sm:$0xf]
      %v325 = vld [vmem:[%s244 + $0x68] sm:$0xf]
      %v326 = vld [vmem:[%s244 + $0x6c] sm:$0xf]
      %v327 = vld [vmem:[%s244 + $0x70] sm:$0xf]
      %v328 = vld [vmem:[%s244 + $0x74] sm:$0xf]
      %v329 = vld [vmem:[%s244 + $0x78] sm:$0xf]
      %v330 = vld [vmem:[%s244 + $0x7c] sm:$0xf]
      %v331 = vld [vmem:[%s244 + $0x80] sm:$0xf]
      %v332 = vld [vmem:[%s244 + $0x84] sm:$0xf]
      %v333 = vld [vmem:[%s244 + $0x88] sm:$0xf]
      %v334 = vld [vmem:[%s244 + $0x8c] sm:$0xf]
      %v335 = vld [vmem:[#allocation2] sm:$0xff]
      %v336 = vld [vmem:[#allocation2 + $0x8] sm:$0xff]
      %v337 = vld [vmem:[#allocation2 + $0x10] sm:$0xff]
      %v338 = vld [vmem:[#allocation2 + $0x18] sm:$0xff]
      %v339 = vld [vmem:[#allocation2 + $0x20] sm:$0xff]
      %v340 = vld [vmem:[#allocation2 + $0x28] sm:$0xff]
      %v341 = vld [vmem:[#allocation2 + $0x30] sm:$0xff]
      %v342 = vld [vmem:[#allocation2 + $0x38] sm:$0xff]
      %v343 = vld [vmem:[#allocation2 + $0x40] sm:$0xff]
      %v344 = vld [vmem:[#allocation2 + $0x48] sm:$0xff]
      %v345 = vld [vmem:[#allocation2 + $0x50] sm:$0xff]
      %v346 = vld [vmem:[#allocation2 + $0x58] sm:$0xff]
      %v347 = vld [vmem:[#allocation2 + $0x60] sm:$0xff]
      %v348 = vld [vmem:[#allocation2 + $0x68] sm:$0xff]
      %v349 = vld [vmem:[#allocation2 + $0x70] sm:$0xff]
      %v350 = vld [vmem:[#allocation2 + $0x78] sm:$0xff]
      %v351 = vld [vmem:[#allocation2 + $0x80] sm:$0xff]
      %v352 = vld [vmem:[#allocation2 + $0x88] sm:$0xff]
      %v353 = vld [vmem:[#allocation2 + $0x90] sm:$0xff]
      %v354 = vld [vmem:[#allocation2 + $0x98] sm:$0xff]
      %v355 = vld [vmem:[#allocation2 + $0xa0] sm:$0xff]
      %v356 = vld [vmem:[#allocation2 + $0xa8] sm:$0xff]
      %v357 = vld [vmem:[#allocation2 + $0xb0] sm:$0xff]
      %v358 = vld [vmem:[#allocation2 + $0xb8] sm:$0xff]
      %v359 = vld [vmem:[#allocation2 + $0xc0] sm:$0xff]
      %v360 = vld [vmem:[#allocation2 + $0xc8] sm:$0xff]
      %v361 = vld [vmem:[#allocation2 + $0xd0] sm:$0xff]
      %v362 = vld [vmem:[#allocation2 + $0xd8] sm:$0xff]
      %v363 = vld [vmem:[#allocation2 + $0xe0] sm:$0xff]
      %v364 = vld [vmem:[#allocation2 + $0xe8] sm:$0xff]
      %v365 = vld [vmem:[#allocation2 + $0xf0] sm:$0xff]
      %v366 = vld [vmem:[#allocation2 + $0xf8] sm:$0xff]
      %v367 = vld [vmem:[#allocation2 + $0x100] sm:$0xff]
      %v368 = vld [vmem:[#allocation2 + $0x108] sm:$0xff]
      %v369 = vld [vmem:[#allocation2 + $0x110] sm:$0xff]
      %v370 = vld [vmem:[#allocation2 + $0x118] sm:$0xff]
      %v371 = vld [vmem:[%s248] sm:$0xf]
      %v372 = vld [vmem:[%s248 + $0x4] sm:$0xf]
      %v373 = vld [vmem:[%s248 + $0x8] sm:$0xf]
      %v374 = vld [vmem:[%s248 + $0xc] sm:$0xf]
      %v375 = vld [vmem:[%s248 + $0x10] sm:$0xf]
      %v376 = vld [vmem:[%s248 + $0x14] sm:$0xf]
      %v377 = vld [vmem:[%s248 + $0x18] sm:$0xf]
      %v378 = vld [vmem:[%s248 + $0x1c] sm:$0xf]
      %v379 = vld [vmem:[%s248 + $0x20] sm:$0xf]
      %v380 = vld [vmem:[%s248 + $0x24] sm:$0xf]
      %v381 = vld [vmem:[%s248 + $0x28] sm:$0xf]
      %v382 = vld [vmem:[%s248 + $0x2c] sm:$0xf]
      %v383 = vld [vmem:[%s248 + $0x30] sm:$0xf]
      %v384 = vld [vmem:[%s248 + $0x34] sm:$0xf]
      %v385 = vld [vmem:[%s248 + $0x38] sm:$0xf]
      %v386 = vld [vmem:[%s248 + $0x3c] sm:$0xf]
      %v423 = vunpack.c.l.b16 %v299
      %v424 = vunpack.c.l.b16 %v300
      %v425 = vunpack.c.l.b16 %v301
      %v426 = vunpack.c.l.b16 %v302
      %v427 = vunpack.c.l.b16 %v303
      %v428 = vunpack.c.l.b16 %v304
      %v429 = vunpack.c.l.b16 %v305
      %v430 = vunpack.c.l.b16 %v306
      %v431 = vunpack.c.l.b16 %v307
      %v432 = vunpack.c.l.b16 %v308
      %v433 = vunpack.c.l.b16 %v309
      %v434 = vunpack.c.l.b16 %v310
      %v435 = vunpack.c.l.b16 %v311
      %v436 = vunpack.c.l.b16 %v312
      %v437 = vunpack.c.l.b16 %v313
      %v438 = vunpack.c.l.b16 %v314
      %v439 = vunpack.c.l.b16 %v315
      %v440 = vunpack.c.l.b16 %v316
      %v441 = vunpack.c.l.b16 %v317
      %v442 = vunpack.c.l.b16 %v318
      %v443 = vunpack.c.l.b16 %v319
      %v444 = vunpack.c.l.b16 %v320
      %v445 = vunpack.c.l.b16 %v321
      %v446 = vunpack.c.l.b16 %v322
      %v447 = vunpack.c.l.b16 %v323
      %v448 = vunpack.c.l.b16 %v324
      %v449 = vunpack.c.l.b16 %v325
      %v450 = vunpack.c.l.b16 %v326
      %v451 = vunpack.c.l.b16 %v327
      %v452 = vunpack.c.l.b16 %v328
      %v453 = vunpack.c.l.b16 %v329
      %v454 = vunpack.c.l.b16 %v330
      %v455 = vunpack.c.l.b16 %v331
      %v456 = vunpack.c.l.b16 %v332
      %v457 = vunpack.c.l.b16 %v333
      %v458 = vunpack.c.l.b16 %v334
      %v459 = vpack.c.b16 %v424, %v423
      %v460 = vpack.c.b16 %v426, %v425
      %v461 = vpack.c.b16 %v428, %v427
      %v462 = vpack.c.b16 %v430, %v429
      %v463 = vpack.c.b16 %v432, %v431
      %v464 = vpack.c.b16 %v434, %v433
      %v465 = vpack.c.b16 %v436, %v435
      %v466 = vpack.c.b16 %v438, %v437
      %v467 = vpack.c.b16 %v440, %v439
      %v468 = vpack.c.b16 %v442, %v441
      %v469 = vpack.c.b16 %v444, %v443
      %v470 = vpack.c.b16 %v446, %v445
      %v471 = vpack.c.b16 %v448, %v447
      %v472 = vpack.c.b16 %v450, %v449
      %v473 = vpack.c.b16 %v452, %v451
      %v474 = vpack.c.b16 %v454, %v453
      %v475 = vpack.c.b16 %v456, %v455
      %v476 = vpack.c.b16 %v458, %v457
      %v511 = vunpack.c.l.b16 %v371
      %v512 = vunpack.c.l.b16 %v372
      %v513 = vunpack.c.l.b16 %v373
      %v514 = vunpack.c.l.b16 %v374
      %v515 = vunpack.c.l.b16 %v375
      %v516 = vunpack.c.l.b16 %v376
      %v517 = vunpack.c.l.b16 %v377
      %v518 = vunpack.c.l.b16 %v378
      %v519 = vunpack.c.l.b16 %v379
      %v520 = vunpack.c.l.b16 %v380
      %v521 = vunpack.c.l.b16 %v381
      %v522 = vunpack.c.l.b16 %v382
      %v523 = vunpack.c.l.b16 %v383
      %v524 = vunpack.c.l.b16 %v384
      %v525 = vunpack.c.l.b16 %v385
      %v526 = vunpack.c.l.b16 %v386
      %v527 = vpack.c.b16 %v512, %v511
      %v528 = vpack.c.b16 %v514, %v513
      %v529 = vpack.c.b16 %v516, %v515
      %v530 = vpack.c.b16 %v518, %v517
      %v531 = vpack.c.b16 %v520, %v519
      %v532 = vpack.c.b16 %v522, %v521
      %v533 = vpack.c.b16 %v524, %v523
      %v534 = vpack.c.b16 %v526, %v525
      %543 = vmatpush.bf16.msra.mxu0 %v534
      %544 = vmatpush.bf16.msra.mxu0 %v533
      %545 = vmatpush.bf16.msra.mxu0 %v532
      %546 = vmatpush.bf16.msra.mxu0 %v531
      %547 = vmatpush.bf16.msra.mxu0 %v530
      %548 = vmatpush.bf16.msra.mxu0 %v529
      %549 = vmatpush.bf16.msra.mxu0 %v528
      %550 = vmatpush.bf16.msra.mxu0 %v527
      %551 = vmatmul.bf16.gmra.mxu0 %v459
      %v552 = vpop.f32.mrf.mxu0
      %v553 = vadd.f32 0.0, %v552
      %v554 = vpop.f32.mrf.mxu0
      %v555 = vadd.f32 0.0, %v554
      %556 = vmatmul.bf16.gmra.mxu0 %v460
      %v557 = vpop.f32.mrf.mxu0
      %v558 = vadd.f32 0.0, %v557
      %v559 = vpop.f32.mrf.mxu0
      %v560 = vadd.f32 0.0, %v559
      %561 = vmatmul.bf16.gmra.mxu0 %v461
      %v562 = vpop.f32.mrf.mxu0
      %v563 = vadd.f32 0.0, %v562
      %v564 = vpop.f32.mrf.mxu0
      %v565 = vadd.f32 0.0, %v564
      %566 = vmatmul.bf16.gmra.mxu0 %v462
      %v567 = vpop.f32.mrf.mxu0
      %v568 = vadd.f32 0.0, %v567
      %v569 = vpop.f32.mrf.mxu0
      %v570 = vadd.f32 0.0, %v569
      %571 = vmatmul.bf16.gmra.mxu0 %v463
      %v572 = vpop.f32.mrf.mxu0
      %v573 = vadd.f32 0.0, %v572
      %v574 = vpop.f32.mrf.mxu0
      %v575 = vadd.f32 0.0, %v574
      %576 = vmatmul.bf16.gmra.mxu0 %v464
      %v577 = vpop.f32.mrf.mxu0
      %v578 = vadd.f32 0.0, %v577
      %v579 = vpop.f32.mrf.mxu0
      %v580 = vadd.f32 0.0, %v579
      %581 = vmatmul.bf16.gmra.mxu0 %v465
      %v582 = vpop.f32.mrf.mxu0
      %v583 = vadd.f32 0.0, %v582
      %v584 = vpop.f32.mrf.mxu0
      %v585 = vadd.f32 0.0, %v584
      %586 = vmatmul.bf16.gmra.mxu0 %v466
      %v587 = vpop.f32.mrf.mxu0
      %v588 = vadd.f32 0.0, %v587
      %v589 = vpop.f32.mrf.mxu0
      %v590 = vadd.f32 0.0, %v589
      %591 = vmatmul.bf16.gmra.mxu0 %v467
      %v592 = vpop.f32.mrf.mxu0
      %v593 = vadd.f32 0.0, %v592
      %v594 = vpop.f32.mrf.mxu0
      %v595 = vadd.f32 0.0, %v594
      %596 = vmatmul.bf16.gmra.mxu0 %v468
      %v597 = vpop.f32.mrf.mxu0
      %v598 = vadd.f32 0.0, %v597
      %v599 = vpop.f32.mrf.mxu0
      %v600 = vadd.f32 0.0, %v599
      %601 = vmatmul.bf16.gmra.mxu0 %v469
      %v602 = vpop.f32.mrf.mxu0
      %v603 = vadd.f32 0.0, %v602
      %v604 = vpop.f32.mrf.mxu0
      %v605 = vadd.f32 0.0, %v604
      %606 = vmatmul.bf16.gmra.mxu0 %v470
      %v607 = vpop.f32.mrf.mxu0
      %v608 = vadd.f32 0.0, %v607
      %v609 = vpop.f32.mrf.mxu0
      %v610 = vadd.f32 0.0, %v609
      %611 = vmatmul.bf16.gmra.mxu0 %v471
      %v612 = vpop.f32.mrf.mxu0
      %v613 = vadd.f32 0.0, %v612
      %v614 = vpop.f32.mrf.mxu0
      %v615 = vadd.f32 0.0, %v614
      %616 = vmatmul.bf16.gmra.mxu0 %v472
      %v617 = vpop.f32.mrf.mxu0
      %v618 = vadd.f32 0.0, %v617
      %v619 = vpop.f32.mrf.mxu0
      %v620 = vadd.f32 0.0, %v619
      %621 = vmatmul.bf16.gmra.mxu0 %v473
      %v622 = vpop.f32.mrf.mxu0
      %v623 = vadd.f32 0.0, %v622
      %v624 = vpop.f32.mrf.mxu0
      %v625 = vadd.f32 0.0, %v624
      %626 = vmatmul.bf16.gmra.mxu0 %v474
      %v627 = vpop.f32.mrf.mxu0
      %v628 = vadd.f32 0.0, %v627
      %v629 = vpop.f32.mrf.mxu0
      %v630 = vadd.f32 0.0, %v629
      %631 = vmatmul.bf16.gmra.mxu0 %v475
      %v632 = vpop.f32.mrf.mxu0
      %v633 = vadd.f32 0.0, %v632
      %v634 = vpop.f32.mrf.mxu0
      %v635 = vadd.f32 0.0, %v634
      %636 = vmatmul.bf16.gmra.mxu0 %v476
      %v637 = vpop.f32.mrf.mxu0
      %v638 = vadd.f32 0.0, %v637
      %v639 = vpop.f32.mrf.mxu0
      %v640 = vadd.f32 0.0, %v639
      %641 = vdwg.mxu0
      %v642 = vadd.f32 %v335, %v553
      %v643 = vadd.f32 %v336, %v555
      %v644 = vadd.f32 %v337, %v558
      %v645 = vadd.f32 %v338, %v560
      %v646 = vadd.f32 %v339, %v563
      %v647 = vadd.f32 %v340, %v565
      %v648 = vadd.f32 %v341, %v568
      %v649 = vadd.f32 %v342, %v570
      %v650 = vadd.f32 %v343, %v573
      %v651 = vadd.f32 %v344, %v575
      %v652 = vadd.f32 %v345, %v578
      %v653 = vadd.f32 %v346, %v580
      %v654 = vadd.f32 %v347, %v583
      %v655 = vadd.f32 %v348, %v585
      %v656 = vadd.f32 %v349, %v588
      %v657 = vadd.f32 %v350, %v590
      %v658 = vadd.f32 %v351, %v593
      %v659 = vadd.f32 %v352, %v595
      %v660 = vadd.f32 %v353, %v598
      %v661 = vadd.f32 %v354, %v600
      %v662 = vadd.f32 %v355, %v603
      %v663 = vadd.f32 %v356, %v605
      %v664 = vadd.f32 %v357, %v608
      %v665 = vadd.f32 %v358, %v610
      %v666 = vadd.f32 %v359, %v613
      %v667 = vadd.f32 %v360, %v615
      %v668 = vadd.f32 %v361, %v618
      %v669 = vadd.f32 %v362, %v620
      %v670 = vadd.f32 %v363, %v623
      %v671 = vadd.f32 %v364, %v625
      %v672 = vadd.f32 %v365, %v628
      %v673 = vadd.f32 %v366, %v630
      %v674 = vadd.f32 %v367, %v633
      %v675 = vadd.f32 %v368, %v635
      %v676 = vadd.f32 %v369, %v638
      %v677 = vadd.f32 %v370, %v640
      %678 = vst [vmem:[#allocation2] sm:$0xff] %v642
      %679 = vst [vmem:[#allocation2 + $0x8] sm:$0xff] %v643
      %680 = vst [vmem:[#allocation2 + $0x10] sm:$0xff] %v644
      %681 = vst [vmem:[#allocation2 + $0x18] sm:$0xff] %v645
      %682 = vst [vmem:[#allocation2 + $0x20] sm:$0xff] %v646
      %683 = vst [vmem:[#allocation2 + $0x28] sm:$0xff] %v647
      %684 = vst [vmem:[#allocation2 + $0x30] sm:$0xff] %v648
      %685 = vst [vmem:[#allocation2 + $0x38] sm:$0xff] %v649
      %686 = vst [vmem:[#allocation2 + $0x40] sm:$0xff] %v650
      %687 = vst [vmem:[#allocation2 + $0x48] sm:$0xff] %v651
      %688 = vst [vmem:[#allocation2 + $0x50] sm:$0xff] %v652
      %689 = vst [vmem:[#allocation2 + $0x58] sm:$0xff] %v653
      %690 = vst [vmem:[#allocation2 + $0x60] sm:$0xff] %v654
      %691 = vst [vmem:[#allocation2 + $0x68] sm:$0xff] %v655
      %692 = vst [vmem:[#allocation2 + $0x70] sm:$0xff] %v656
      %693 = vst [vmem:[#allocation2 + $0x78] sm:$0xff] %v657
      %694 = vst [vmem:[#allocation2 + $0x80] sm:$0xff] %v658
      %695 = vst [vmem:[#allocation2 + $0x88] sm:$0xff] %v659
      %696 = vst [vmem:[#allocation2 + $0x90] sm:$0xff] %v660
      %697 = vst [vmem:[#allocation2 + $0x98] sm:$0xff] %v661
      %698 = vst [vmem:[#allocation2 + $0xa0] sm:$0xff] %v662
      %699 = vst [vmem:[#allocation2 + $0xa8] sm:$0xff] %v663
      %700 = vst [vmem:[#allocation2 + $0xb0] sm:$0xff] %v664
      %701 = vst [vmem:[#allocation2 + $0xb8] sm:$0xff] %v665
      %702 = vst [vmem:[#allocation2 + $0xc0] sm:$0xff] %v666
      %703 = vst [vmem:[#allocation2 + $0xc8] sm:$0xff] %v667
      %704 = vst [vmem:[#allocation2 + $0xd0] sm:$0xff] %v668
      %705 = vst [vmem:[#allocation2 + $0xd8] sm:$0xff] %v669
      %706 = vst [vmem:[#allocation2 + $0xe0] sm:$0xff] %v670
      %707 = vst [vmem:[#allocation2 + $0xe8] sm:$0xff] %v671
      %708 = vst [vmem:[#allocation2 + $0xf0] sm:$0xff] %v672
      %709 = vst [vmem:[#allocation2 + $0xf8] sm:$0xff] %v673
      %710 = vst [vmem:[#allocation2 + $0x100] sm:$0xff] %v674
      %711 = vst [vmem:[#allocation2 + $0x108] sm:$0xff] %v675
      %712 = vst [vmem:[#allocation2 + $0x110] sm:$0xff] %v676
      %713 = vst [vmem:[#allocation2 + $0x118] sm:$0xff] %v677
      %v714 = vld [vmem:[%s244] sm:$0xf]
      %v715 = vld [vmem:[%s244 + $0x4] sm:$0xf]
      %v716 = vld [vmem:[%s244 + $0x8] sm:$0xf]
      %v717 = vld [vmem:[%s244 + $0xc] sm:$0xf]
      %v718 = vld [vmem:[%s244 + $0x10] sm:$0xf]
      %v719 = vld [vmem:[%s244 + $0x14] sm:$0xf]
      %v720 = vld [vmem:[%s244 + $0x18] sm:$0xf]
      %v721 = vld [vmem:[%s244 + $0x1c] sm:$0xf]
      %v722 = vld [vmem:[%s244 + $0x20] sm:$0xf]
      %v723 = vld [vmem:[%s244 + $0x24] sm:$0xf]
      %v724 = vld [vmem:[%s244 + $0x28] sm:$0xf]
      %v725 = vld [vmem:[%s244 + $0x2c] sm:$0xf]
      %v726 = vld [vmem:[%s244 + $0x30] sm:$0xf]
      %v727 = vld [vmem:[%s244 + $0x34] sm:$0xf]
      %v728 = vld [vmem:[%s244 + $0x38] sm:$0xf]
      %v729 = vld [vmem:[%s244 + $0x3c] sm:$0xf]
      %v730 = vld [vmem:[%s244 + $0x40] sm:$0xf]
      %v731 = vld [vmem:[%s244 + $0x44] sm:$0xf]
      %v732 = vld [vmem:[%s244 + $0x48] sm:$0xf]
      %v733 = vld [vmem:[%s244 + $0x4c] sm:$0xf]
      %v734 = vld [vmem:[%s244 + $0x50] sm:$0xf]
      %v735 = vld [vmem:[%s244 + $0x54] sm:$0xf]
      %v736 = vld [vmem:[%s244 + $0x58] sm:$0xf]
      %v737 = vld [vmem:[%s244 + $0x5c] sm:$0xf]
      %v738 = vld [vmem:[%s244 + $0x60] sm:$0xf]
      %v739 = vld [vmem:[%s244 + $0x64] sm:$0xf]
      %v740 = vld [vmem:[%s244 + $0x68] sm:$0xf]
      %v741 = vld [vmem:[%s244 + $0x6c] sm:$0xf]
      %v742 = vld [vmem:[%s244 + $0x70] sm:$0xf]
      %v743 = vld [vmem:[%s244 + $0x74] sm:$0xf]
      %v744 = vld [vmem:[%s244 + $0x78] sm:$0xf]
      %v745 = vld [vmem:[%s244 + $0x7c] sm:$0xf]
      %v746 = vld [vmem:[%s244 + $0x80] sm:$0xf]
      %v747 = vld [vmem:[%s244 + $0x84] sm:$0xf]
      %v748 = vld [vmem:[%s244 + $0x88] sm:$0xf]
      %v749 = vld [vmem:[%s244 + $0x8c] sm:$0xf]
      %v750 = vld [vmem:[%s244 + $0x90] sm:$0x1]
      %v751 = vld [vmem:[#allocation2] sm:$0xff]
      %v752 = vld [vmem:[#allocation2 + $0x8] sm:$0xff]
      %v753 = vld [vmem:[#allocation2 + $0x10] sm:$0xff]
      %v754 = vld [vmem:[#allocation2 + $0x18] sm:$0xff]
      %v755 = vld [vmem:[#allocation2 + $0x20] sm:$0xff]
      %v756 = vld [vmem:[#allocation2 + $0x28] sm:$0xff]
      %v757 = vld [vmem:[#allocation2 + $0x30] sm:$0xff]
      %v758 = vld [vmem:[#allocation2 + $0x38] sm:$0xff]
      %v759 = vld [vmem:[#allocation2 + $0x40] sm:$0xff]
      %v760 = vld [vmem:[#allocation2 + $0x48] sm:$0xff]
      %v761 = vld [vmem:[#allocation2 + $0x50] sm:$0xff]
      %v762 = vld [vmem:[#allocation2 + $0x58] sm:$0xff]
      %v763 = vld [vmem:[#allocation2 + $0x60] sm:$0xff]
      %v764 = vld [vmem:[#allocation2 + $0x68] sm:$0xff]
      %v765 = vld [vmem:[#allocation2 + $0x70] sm:$0xff]
      %v766 = vld [vmem:[#allocation2 + $0x78] sm:$0xff]
      %v767 = vld [vmem:[#allocation2 + $0x80] sm:$0xff]
      %v768 = vld [vmem:[#allocation2 + $0x88] sm:$0xff]
      %v769 = vld [vmem:[#allocation2 + $0x90] sm:$0xff]
      %v770 = vld [vmem:[#allocation2 + $0x98] sm:$0xff]
      %v771 = vld [vmem:[#allocation2 + $0xa0] sm:$0xff]
      %v772 = vld [vmem:[#allocation2 + $0xa8] sm:$0xff]
      %v773 = vld [vmem:[#allocation2 + $0xb0] sm:$0xff]
      %v774 = vld [vmem:[#allocation2 + $0xb8] sm:$0xff]
      %v775 = vld [vmem:[#allocation2 + $0xc0] sm:$0xff]
      %v776 = vld [vmem:[#allocation2 + $0xc8] sm:$0xff]
      %v777 = vld [vmem:[#allocation2 + $0xd0] sm:$0xff]
      %v778 = vld [vmem:[#allocation2 + $0xd8] sm:$0xff]
      %v779 = vld [vmem:[#allocation2 + $0xe0] sm:$0xff]
      %v780 = vld [vmem:[#allocation2 + $0xe8] sm:$0xff]
      %v781 = vld [vmem:[#allocation2 + $0xf0] sm:$0xff]
      %v782 = vld [vmem:[#allocation2 + $0xf8] sm:$0xff]
      %v783 = vld [vmem:[#allocation2 + $0x100] sm:$0xff]
      %v784 = vld [vmem:[#allocation2 + $0x108] sm:$0xff]
      %v785 = vld [vmem:[#allocation2 + $0x110] sm:$0xff]
      %v786 = vld [vmem:[#allocation2 + $0x118] sm:$0xff]
      %s787 = scalar_lea.vmem %s248, 64
      %v788 = vld [vmem:[%s787] sm:$0xf]
      %v789 = vld [vmem:[%s787 + $0x4] sm:$0xf]
      %v790 = vld [vmem:[%s787 + $0x8] sm:$0xf]
      %v791 = vld [vmem:[%s787 + $0xc] sm:$0xf]
      %v792 = vld [vmem:[%s787 + $0x10] sm:$0xf]
      %v793 = vld [vmem:[%s787 + $0x14] sm:$0xf]
      %v794 = vld [vmem:[%s787 + $0x18] sm:$0xf]
      %v795 = vld [vmem:[%s787 + $0x1c] sm:$0xf]
      %v796 = vld [vmem:[%s787 + $0x20] sm:$0xf]
      %v797 = vld [vmem:[%s787 + $0x24] sm:$0xf]
      %v798 = vld [vmem:[%s787 + $0x28] sm:$0xf]
      %v799 = vld [vmem:[%s787 + $0x2c] sm:$0xf]
      %v800 = vld [vmem:[%s787 + $0x30] sm:$0xf]
      %v801 = vld [vmem:[%s787 + $0x34] sm:$0xf]
      %v802 = vld [vmem:[%s787 + $0x38] sm:$0xf]
      %v803 = vld [vmem:[%s787 + $0x3c] sm:$0xf]
      %v841 = vunpack.c.l.b16 %v714
      %v842 = vunpack.c.l.b16 %v715
      %v843 = vunpack.c.l.b16 %v716
      %v844 = vunpack.c.l.b16 %v717
      %v845 = vunpack.c.l.b16 %v718
      %v846 = vunpack.c.l.b16 %v719
      %v847 = vunpack.c.l.b16 %v720
      %v848 = vunpack.c.l.b16 %v721
      %v849 = vunpack.c.l.b16 %v722
      %v850 = vunpack.c.l.b16 %v723
      %v851 = vunpack.c.l.b16 %v724
      %v852 = vunpack.c.l.b16 %v725
      %v853 = vunpack.c.l.b16 %v726
      %v854 = vunpack.c.l.b16 %v727
      %v855 = vunpack.c.l.b16 %v728
      %v856 = vunpack.c.l.b16 %v729
      %v857 = vunpack.c.l.b16 %v730
      %v858 = vunpack.c.l.b16 %v731
      %v859 = vunpack.c.l.b16 %v732
      %v860 = vunpack.c.l.b16 %v733
      %v861 = vunpack.c.l.b16 %v734
      %v862 = vunpack.c.l.b16 %v735
      %v863 = vunpack.c.l.b16 %v736
      %v864 = vunpack.c.l.b16 %v737
      %v865 = vunpack.c.l.b16 %v738
      %v866 = vunpack.c.l.b16 %v739
      %v867 = vunpack.c.l.b16 %v740
      %v868 = vunpack.c.l.b16 %v741
      %v869 = vunpack.c.l.b16 %v742
      %v870 = vunpack.c.l.b16 %v743
      %v871 = vunpack.c.l.b16 %v744
      %v872 = vunpack.c.l.b16 %v745
      %v873 = vunpack.c.l.b16 %v746
      %v874 = vunpack.c.l.b16 %v747
      %v875 = vunpack.c.l.b16 %v748
      %v876 = vunpack.c.l.b16 %v749
      %v877 = vunpack.c.l.b16 %v750
      %v878 = vpack.c.b16 %v842, %v841
      %v879 = vpack.c.b16 %v844, %v843
      %v880 = vpack.c.b16 %v846, %v845
      %v881 = vpack.c.b16 %v848, %v847
      %v882 = vpack.c.b16 %v850, %v849
      %v883 = vpack.c.b16 %v852, %v851
      %v884 = vpack.c.b16 %v854, %v853
      %v885 = vpack.c.b16 %v856, %v855
      %v886 = vpack.c.b16 %v858, %v857
      %v887 = vpack.c.b16 %v860, %v859
      %v888 = vpack.c.b16 %v862, %v861
      %v889 = vpack.c.b16 %v864, %v863
      %v890 = vpack.c.b16 %v866, %v865
      %v891 = vpack.c.b16 %v868, %v867
      %v892 = vpack.c.b16 %v870, %v869
      %v893 = vpack.c.b16 %v872, %v871
      %v894 = vpack.c.b16 %v874, %v873
      %v895 = vpack.c.b16 %v876, %v875
      %v896 = vpack.c.b16 %v877, %v877
      %vm897 = vsmask.f32 7424
      %v899 = vshrl.u32 %v878, 16
      %v901 = vshll.u32 %v878, 16
      %v903 = vrot.slane %v901, 1
      %v904 = vor.u32 %v899, %v903
      %v906 = vshll.u32 %v879, 16
      %v908 = vrot.slane %v906, 1
      %v909 = vsel %vm897, %v904, %v908
      %v910 = vshrl.u32 %v879, 16
      %v912 = vor.u32 %v910, %v908
      %v914 = vshll.u32 %v880, 16
      %v916 = vrot.slane %v914, 1
      %v917 = vsel %vm897, %v912, %v916
      %v918 = vshrl.u32 %v880, 16
      %v920 = vor.u32 %v918, %v916
      %v922 = vshll.u32 %v881, 16
      %v924 = vrot.slane %v922, 1
      %v925 = vsel %vm897, %v920, %v924
      %v926 = vshrl.u32 %v881, 16
      %v928 = vor.u32 %v926, %v924
      %v930 = vshll.u32 %v882, 16
      %v932 = vrot.slane %v930, 1
      %v933 = vsel %vm897, %v928, %v932
      %v934 = vshrl.u32 %v882, 16
      %v936 = vor.u32 %v934, %v932
      %v938 = vshll.u32 %v883, 16
      %v940 = vrot.slane %v938, 1
      %v941 = vsel %vm897, %v936, %v940
      %v942 = vshrl.u32 %v883, 16
      %v944 = vor.u32 %v942, %v940
      %v946 = vshll.u32 %v884, 16
      %v948 = vrot.slane %v946, 1
      %v949 = vsel %vm897, %v944, %v948
      %v950 = vshrl.u32 %v884, 16
      %v952 = vor.u32 %v950, %v948
      %v954 = vshll.u32 %v885, 16
      %v956 = vrot.slane %v954, 1
      %v957 = vsel %vm897, %v952, %v956
      %v958 = vshrl.u32 %v885, 16
      %v960 = vor.u32 %v958, %v956
      %v962 = vshll.u32 %v886, 16
      %v964 = vrot.slane %v962, 1
      %v965 = vsel %vm897, %v960, %v964
      %v966 = vshrl.u32 %v886, 16
      %v968 = vor.u32 %v966, %v964
      %v970 = vshll.u32 %v887, 16
      %v972 = vrot.slane %v970, 1
      %v973 = vsel %vm897, %v968, %v972
      %v974 = vshrl.u32 %v887, 16
      %v976 = vor.u32 %v974, %v972
      %v978 = vshll.u32 %v888, 16
      %v980 = vrot.slane %v978, 1
      %v981 = vsel %vm897, %v976, %v980
      %v982 = vshrl.u32 %v888, 16
      %v984 = vor.u32 %v982, %v980
      %v986 = vshll.u32 %v889, 16
      %v988 = vrot.slane %v986, 1
      %v989 = vsel %vm897, %v984, %v988
      %v990 = vshrl.u32 %v889, 16
      %v992 = vor.u32 %v990, %v988
      %v994 = vshll.u32 %v890, 16
      %v996 = vrot.slane %v994, 1
      %v997 = vsel %vm897, %v992, %v996
      %v998 = vshrl.u32 %v890, 16
      %v1000 = vor.u32 %v998, %v996
      %v1002 = vshll.u32 %v891, 16
      %v1004 = vrot.slane %v1002, 1
      %v1005 = vsel %vm897, %v1000, %v1004
      %v1006 = vshrl.u32 %v891, 16
      %v1008 = vor.u32 %v1006, %v1004
      %v1010 = vshll.u32 %v892, 16
      %v1012 = vrot.slane %v1010, 1
      %v1013 = vsel %vm897, %v1008, %v1012
      %v1014 = vshrl.u32 %v892, 16
      %v1016 = vor.u32 %v1014, %v1012
      %v1018 = vshll.u32 %v893, 16
      %v1020 = vrot.slane %v1018, 1
      %v1021 = vsel %vm897, %v1016, %v1020
      %v1022 = vshrl.u32 %v893, 16
      %v1024 = vor.u32 %v1022, %v1020
      %v1026 = vshll.u32 %v894, 16
      %v1028 = vrot.slane %v1026, 1
      %v1029 = vsel %vm897, %v1024, %v1028
      %v1030 = vshrl.u32 %v894, 16
      %v1032 = vor.u32 %v1030, %v1028
      %v1034 = vshll.u32 %v895, 16
      %v1036 = vrot.slane %v1034, 1
      %v1037 = vsel %vm897, %v1032, %v1036
      %v1038 = vshrl.u32 %v895, 16
      %v1040 = vor.u32 %v1038, %v1036
      %v1042 = vshll.u32 %v896, 16
      %v1044 = vrot.slane %v1042, 1
      %v1045 = vsel %vm897, %v1040, %v1044
      %v1080 = vunpack.c.l.b16 %v788
      %v1081 = vunpack.c.l.b16 %v789
      %v1082 = vunpack.c.l.b16 %v790
      %v1083 = vunpack.c.l.b16 %v791
      %v1084 = vunpack.c.l.b16 %v792
      %v1085 = vunpack.c.l.b16 %v793
      %v1086 = vunpack.c.l.b16 %v794
      %v1087 = vunpack.c.l.b16 %v795
      %v1088 = vunpack.c.l.b16 %v796
      %v1089 = vunpack.c.l.b16 %v797
      %v1090 = vunpack.c.l.b16 %v798
      %v1091 = vunpack.c.l.b16 %v799
      %v1092 = vunpack.c.l.b16 %v800
      %v1093 = vunpack.c.l.b16 %v801
      %v1094 = vunpack.c.l.b16 %v802
      %v1095 = vunpack.c.l.b16 %v803
      %v1096 = vpack.c.b16 %v1081, %v1080
      %v1097 = vpack.c.b16 %v1083, %v1082
      %v1098 = vpack.c.b16 %v1085, %v1084
      %v1099 = vpack.c.b16 %v1087, %v1086
      %v1100 = vpack.c.b16 %v1089, %v1088
      %v1101 = vpack.c.b16 %v1091, %v1090
      %v1102 = vpack.c.b16 %v1093, %v1092
      %v1103 = vpack.c.b16 %v1095, %v1094
      %1112 = vmatpush.bf16.msra.mxu0 %v1103
      %1113 = vmatpush.bf16.msra.mxu0 %v1102
      %1114 = vmatpush.bf16.msra.mxu0 %v1101
      %1115 = vmatpush.bf16.msra.mxu0 %v1100
      %1116 = vmatpush.bf16.msra.mxu0 %v1099
      %1117 = vmatpush.bf16.msra.mxu0 %v1098
      %1118 = vmatpush.bf16.msra.mxu0 %v1097
      %1119 = vmatpush.bf16.msra.mxu0 %v1096
      %1120 = vmatmul.bf16.gmra.mxu0 %v909
      %v1121 = vpop.f32.mrf.mxu0
      %v1122 = vadd.f32 0.0, %v1121
      %v1123 = vpop.f32.mrf.mxu0
      %v1124 = vadd.f32 0.0, %v1123
      %1125 = vmatmul.bf16.gmra.mxu0 %v917
      %v1126 = vpop.f32.mrf.mxu0
      %v1127 = vadd.f32 0.0, %v1126
      %v1128 = vpop.f32.mrf.mxu0
      %v1129 = vadd.f32 0.0, %v1128
      %1130 = vmatmul.bf16.gmra.mxu0 %v925
      %v1131 = vpop.f32.mrf.mxu0
      %v1132 = vadd.f32 0.0, %v1131
      %v1133 = vpop.f32.mrf.mxu0
      %v1134 = vadd.f32 0.0, %v1133
      %1135 = vmatmul.bf16.gmra.mxu0 %v933
      %v1136 = vpop.f32.mrf.mxu0
      %v1137 = vadd.f32 0.0, %v1136
      %v1138 = vpop.f32.mrf.mxu0
      %v1139 = vadd.f32 0.0, %v1138
      %1140 = vmatmul.bf16.gmra.mxu0 %v941
      %v1141 = vpop.f32.mrf.mxu0
      %v1142 = vadd.f32 0.0, %v1141
      %v1143 = vpop.f32.mrf.mxu0
      %v1144 = vadd.f32 0.0, %v1143
      %1145 = vmatmul.bf16.gmra.mxu0 %v949
      %v1146 = vpop.f32.mrf.mxu0
      %v1147 = vadd.f32 0.0, %v1146
      %v1148 = vpop.f32.mrf.mxu0
      %v1149 = vadd.f32 0.0, %v1148
      %1150 = vmatmul.bf16.gmra.mxu0 %v957
      %v1151 = vpop.f32.mrf.mxu0
      %v1152 = vadd.f32 0.0, %v1151
      %v1153 = vpop.f32.mrf.mxu0
      %v1154 = vadd.f32 0.0, %v1153
      %1155 = vmatmul.bf16.gmra.mxu0 %v965
      %v1156 = vpop.f32.mrf.mxu0
      %v1157 = vadd.f32 0.0, %v1156
      %v1158 = vpop.f32.mrf.mxu0
      %v1159 = vadd.f32 0.0, %v1158
      %1160 = vmatmul.bf16.gmra.mxu0 %v973
      %v1161 = vpop.f32.mrf.mxu0
      %v1162 = vadd.f32 0.0, %v1161
      %v1163 = vpop.f32.mrf.mxu0
      %v1164 = vadd.f32 0.0, %v1163
      %1165 = vmatmul.bf16.gmra.mxu0 %v981
      %v1166 = vpop.f32.mrf.mxu0
      %v1167 = vadd.f32 0.0, %v1166
      %v1168 = vpop.f32.mrf.mxu0
      %v1169 = vadd.f32 0.0, %v1168
      %1170 = vmatmul.bf16.gmra.mxu0 %v989
      %v1171 = vpop.f32.mrf.mxu0
      %v1172 = vadd.f32 0.0, %v1171
      %v1173 = vpop.f32.mrf.mxu0
      %v1174 = vadd.f32 0.0, %v1173
      %1175 = vmatmul.bf16.gmra.mxu0 %v997
      %v1176 = vpop.f32.mrf.mxu0
      %v1177 = vadd.f32 0.0, %v1176
      %v1178 = vpop.f32.mrf.mxu0
      %v1179 = vadd.f32 0.0, %v1178
      %1180 = vmatmul.bf16.gmra.mxu0 %v1005
      %v1181 = vpop.f32.mrf.mxu0
      %v1182 = vadd.f32 0.0, %v1181
      %v1183 = vpop.f32.mrf.mxu0
      %v1184 = vadd.f32 0.0, %v1183
      %1185 = vmatmul.bf16.gmra.mxu0 %v1013
      %v1186 = vpop.f32.mrf.mxu0
      %v1187 = vadd.f32 0.0, %v1186
      %v1188 = vpop.f32.mrf.mxu0
      %v1189 = vadd.f32 0.0, %v1188
      %1190 = vmatmul.bf16.gmra.mxu0 %v1021
      %v1191 = vpop.f32.mrf.mxu0
      %v1192 = vadd.f32 0.0, %v1191
      %v1193 = vpop.f32.mrf.mxu0
      %v1194 = vadd.f32 0.0, %v1193
      %1195 = vmatmul.bf16.gmra.mxu0 %v1029
      %v1196 = vpop.f32.mrf.mxu0
      %v1197 = vadd.f32 0.0, %v1196
      %v1198 = vpop.f32.mrf.mxu0
      %v1199 = vadd.f32 0.0, %v1198
      %1200 = vmatmul.bf16.gmra.mxu0 %v1037
      %v1201 = vpop.f32.mrf.mxu0
      %v1202 = vadd.f32 0.0, %v1201
      %v1203 = vpop.f32.mrf.mxu0
      %v1204 = vadd.f32 0.0, %v1203
      %1205 = vmatmul.bf16.gmra.mxu0 %v1045
      %v1206 = vpop.f32.mrf.mxu0
      %v1207 = vadd.f32 0.0, %v1206
      %v1208 = vpop.f32.mrf.mxu0
      %v1209 = vadd.f32 0.0, %v1208
      %1210 = vdwg.mxu0
      %v1211 = vadd.f32 %v751, %v1122
      %v1212 = vadd.f32 %v752, %v1124
      %v1213 = vadd.f32 %v753, %v1127
      %v1214 = vadd.f32 %v754, %v1129
      %v1215 = vadd.f32 %v755, %v1132
      %v1216 = vadd.f32 %v756, %v1134
      %v1217 = vadd.f32 %v757, %v1137
      %v1218 = vadd.f32 %v758, %v1139
      %v1219 = vadd.f32 %v759, %v1142
      %v1220 = vadd.f32 %v760, %v1144
      %v1221 = vadd.f32 %v761, %v1147
      %v1222 = vadd.f32 %v762, %v1149
      %v1223 = vadd.f32 %v763, %v1152
      %v1224 = vadd.f32 %v764, %v1154
      %v1225 = vadd.f32 %v765, %v1157
      %v1226 = vadd.f32 %v766, %v1159
      %v1227 = vadd.f32 %v767, %v1162
      %v1228 = vadd.f32 %v768, %v1164
      %v1229 = vadd.f32 %v769, %v1167
      %v1230 = vadd.f32 %v770, %v1169
      %v1231 = vadd.f32 %v771, %v1172
      %v1232 = vadd.f32 %v772, %v1174
      %v1233 = vadd.f32 %v773, %v1177
      %v1234 = vadd.f32 %v774, %v1179
      %v1235 = vadd.f32 %v775, %v1182
      %v1236 = vadd.f32 %v776, %v1184
      %v1237 = vadd.f32 %v777, %v1187
      %v1238 = vadd.f32 %v778, %v1189
      %v1239 = vadd.f32 %v779, %v1192
      %v1240 = vadd.f32 %v780, %v1194
      %v1241 = vadd.f32 %v781, %v1197
      %v1242 = vadd.f32 %v782, %v1199
      %v1243 = vadd.f32 %v783, %v1202
      %v1244 = vadd.f32 %v784, %v1204
      %v1245 = vadd.f32 %v785, %v1207
      %v1246 = vadd.f32 %v786, %v1209
      %1247 = vst [vmem:[#allocation2] sm:$0xff] %v1211
      %1248 = vst [vmem:[#allocation2 + $0x8] sm:$0xff] %v1212
      %1249 = vst [vmem:[#allocation2 + $0x10] sm:$0xff] %v1213
      %1250 = vst [vmem:[#allocation2 + $0x18] sm:$0xff] %v1214
      %1251 = vst [vmem:[#allocation2 + $0x20] sm:$0xff] %v1215
      %1252 = vst [vmem:[#allocation2 + $0x28] sm:$0xff] %v1216
      %1253 = vst [vmem:[#allocation2 + $0x30] sm:$0xff] %v1217
      %1254 = vst [vmem:[#allocation2 + $0x38] sm:$0xff] %v1218
      %1255 = vst [vmem:[#allocation2 + $0x40] sm:$0xff] %v1219
      %1256 = vst [vmem:[#allocation2 + $0x48] sm:$0xff] %v1220
      %1257 = vst [vmem:[#allocation2 + $0x50] sm:$0xff] %v1221
      %1258 = vst [vmem:[#allocation2 + $0x58] sm:$0xff] %v1222
      %1259 = vst [vmem:[#allocation2 + $0x60] sm:$0xff] %v1223
      %1260 = vst [vmem:[#allocation2 + $0x68] sm:$0xff] %v1224
      %1261 = vst [vmem:[#allocation2 + $0x70] sm:$0xff] %v1225
      %1262 = vst [vmem:[#allocation2 + $0x78] sm:$0xff] %v1226
      %1263 = vst [vmem:[#allocation2 + $0x80] sm:$0xff] %v1227
      %1264 = vst [vmem:[#allocation2 + $0x88] sm:$0xff] %v1228
      %1265 = vst [vmem:[#allocation2 + $0x90] sm:$0xff] %v1229
      %1266 = vst [vmem:[#allocation2 + $0x98] sm:$0xff] %v1230
      %1267 = vst [vmem:[#allocation2 + $0xa0] sm:$0xff] %v1231
      %1268 = vst [vmem:[#allocation2 + $0xa8] sm:$0xff] %v1232
      %1269 = vst [vmem:[#allocation2 + $0xb0] sm:$0xff] %v1233
      %1270 = vst [vmem:[#allocation2 + $0xb8] sm:$0xff] %v1234
      %1271 = vst [vmem:[#allocation2 + $0xc0] sm:$0xff] %v1235
      %1272 = vst [vmem:[#allocation2 + $0xc8] sm:$0xff] %v1236
      %1273 = vst [vmem:[#allocation2 + $0xd0] sm:$0xff] %v1237
      %1274 = vst [vmem:[#allocation2 + $0xd8] sm:$0xff] %v1238
      %1275 = vst [vmem:[#allocation2 + $0xe0] sm:$0xff] %v1239
      %1276 = vst [vmem:[#allocation2 + $0xe8] sm:$0xff] %v1240
      %1277 = vst [vmem:[#allocation2 + $0xf0] sm:$0xff] %v1241
      %1278 = vst [vmem:[#allocation2 + $0xf8] sm:$0xff] %v1242
      %1279 = vst [vmem:[#allocation2 + $0x100] sm:$0xff] %v1243
      %1280 = vst [vmem:[#allocation2 + $0x108] sm:$0xff] %v1244
      %1281 = vst [vmem:[#allocation2 + $0x110] sm:$0xff] %v1245
      %1282 = vst [vmem:[#allocation2 + $0x118] sm:$0xff] %v1246
      %v1283 = vld [vmem:[%s244] sm:$0xe]
      %v1284 = vld [vmem:[%s244 + $0x4] sm:$0xf]
      %v1285 = vld [vmem:[%s244 + $0x8] sm:$0xf]
      %v1286 = vld [vmem:[%s244 + $0xc] sm:$0xf]
      %v1287 = vld [vmem:[%s244 + $0x10] sm:$0xf]
      %v1288 = vld [vmem:[%s244 + $0x14] sm:$0xf]
      %v1289 = vld [vmem:[%s244 + $0x18] sm:$0xf]
      %v1290 = vld [vmem:[%s244 + $0x1c] sm:$0xf]
      %v1291 = vld [vmem:[%s244 + $0x20] sm:$0xf]
      %v1292 = vld [vmem:[%s244 + $0x24] sm:$0xf]
      %v1293 = vld [vmem:[%s244 + $0x28] sm:$0xf]
      %v1294 = vld [vmem:[%s244 + $0x2c] sm:$0xf]
      %v1295 = vld [vmem:[%s244 + $0x30] sm:$0xf]
      %v1296 = vld [vmem:[%s244 + $0x34] sm:$0xf]
      %v1297 = vld [vmem:[%s244 + $0x38] sm:$0xf]
      %v1298 = vld [vmem:[%s244 + $0x3c] sm:$0xf]
      %v1299 = vld [vmem:[%s244 + $0x40] sm:$0xf]
      %v1300 = vld [vmem:[%s244 + $0x44] sm:$0xf]
      %v1301 = vld [vmem:[%s244 + $0x48] sm:$0xf]
      %v1302 = vld [vmem:[%s244 + $0x4c] sm:$0xf]
      %v1303 = vld [vmem:[%s244 + $0x50] sm:$0xf]
      %v1304 = vld [vmem:[%s244 + $0x54] sm:$0xf]
      %v1305 = vld [vmem:[%s244 + $0x58] sm:$0xf]
      %v1306 = vld [vmem:[%s244 + $0x5c] sm:$0xf]
      %v1307 = vld [vmem:[%s244 + $0x60] sm:$0xf]
      %v1308 = vld [vmem:[%s244 + $0x64] sm:$0xf]
      %v1309 = vld [vmem:[%s244 + $0x68] sm:$0xf]
      %v1310 = vld [vmem:[%s244 + $0x6c] sm:$0xf]
      %v1311 = vld [vmem:[%s244 + $0x70] sm:$0xf]
      %v1312 = vld [vmem:[%s244 + $0x74] sm:$0xf]
      %v1313 = vld [vmem:[%s244 + $0x78] sm:$0xf]
      %v1314 = vld [vmem:[%s244 + $0x7c] sm:$0xf]
      %v1315 = vld [vmem:[%s244 + $0x80] sm:$0xf]
      %v1316 = vld [vmem:[%s244 + $0x84] sm:$0xf]
      %v1317 = vld [vmem:[%s244 + $0x88] sm:$0xf]
      %v1318 = vld [vmem:[%s244 + $0x8c] sm:$0xf]
      %v1319 = vld [vmem:[%s244 + $0x90] sm:$0x1]
      %v1320 = vld [vmem:[#allocation2] sm:$0xff]
      %v1321 = vld [vmem:[#allocation2 + $0x8] sm:$0xff]
      %v1322 = vld [vmem:[#allocation2 + $0x10] sm:$0xff]
      %v1323 = vld [vmem:[#allocation2 + $0x18] sm:$0xff]
      %v1324 = vld [vmem:[#allocation2 + $0x20] sm:$0xff]
      %v1325 = vld [vmem:[#allocation2 + $0x28] sm:$0xff]
      %v1326 = vld [vmem:[#allocation2 + $0x30] sm:$0xff]
      %v1327 = vld [vmem:[#allocation2 + $0x38] sm:$0xff]
      %v1328 = vld [vmem:[#allocation2 + $0x40] sm:$0xff]
      %v1329 = vld [vmem:[#allocation2 + $0x48] sm:$0xff]
      %v1330 = vld [vmem:[#allocation2 + $0x50] sm:$0xff]
      %v1331 = vld [vmem:[#allocation2 + $0x58] sm:$0xff]
      %v1332 = vld [vmem:[#allocation2 + $0x60] sm:$0xff]
      %v1333 = vld [vmem:[#allocation2 + $0x68] sm:$0xff]
      %v1334 = vld [vmem:[#allocation2 + $0x70] sm:$0xff]
      %v1335 = vld [vmem:[#allocation2 + $0x78] sm:$0xff]
      %v1336 = vld [vmem:[#allocation2 + $0x80] sm:$0xff]
      %v1337 = vld [vmem:[#allocation2 + $0x88] sm:$0xff]
      %v1338 = vld [vmem:[#allocation2 + $0x90] sm:$0xff]
      %v1339 = vld [vmem:[#allocation2 + $0x98] sm:$0xff]
      %v1340 = vld [vmem:[#allocation2 + $0xa0] sm:$0xff]
      %v1341 = vld [vmem:[#allocation2 + $0xa8] sm:$0xff]
      %v1342 = vld [vmem:[#allocation2 + $0xb0] sm:$0xff]
      %v1343 = vld [vmem:[#allocation2 + $0xb8] sm:$0xff]
      %v1344 = vld [vmem:[#allocation2 + $0xc0] sm:$0xff]
      %v1345 = vld [vmem:[#allocation2 + $0xc8] sm:$0xff]
      %v1346 = vld [vmem:[#allocation2 + $0xd0] sm:$0xff]
      %v1347 = vld [vmem:[#allocation2 + $0xd8] sm:$0xff]
      %v1348 = vld [vmem:[#allocation2 + $0xe0] sm:$0xff]
      %v1349 = vld [vmem:[#allocation2 + $0xe8] sm:$0xff]
      %v1350 = vld [vmem:[#allocation2 + $0xf0] sm:$0xff]
      %v1351 = vld [vmem:[#allocation2 + $0xf8] sm:$0xff]
      %v1352 = vld [vmem:[#allocation2 + $0x100] sm:$0xff]
      %v1353 = vld [vmem:[#allocation2 + $0x108] sm:$0xff]
      %v1354 = vld [vmem:[#allocation2 + $0x110] sm:$0xff]
      %v1355 = vld [vmem:[#allocation2 + $0x118] sm:$0xff]
      %s1356 = scalar_lea.vmem %s248, 128
      %v1357 = vld [vmem:[%s1356] sm:$0xf]
      %v1358 = vld [vmem:[%s1356 + $0x4] sm:$0xf]
      %v1359 = vld [vmem:[%s1356 + $0x8] sm:$0xf]
      %v1360 = vld [vmem:[%s1356 + $0xc] sm:$0xf]
      %v1361 = vld [vmem:[%s1356 + $0x10] sm:$0xf]
      %v1362 = vld [vmem:[%s1356 + $0x14] sm:$0xf]
      %v1363 = vld [vmem:[%s1356 + $0x18] sm:$0xf]
      %v1364 = vld [vmem:[%s1356 + $0x1c] sm:$0xf]
      %v1365 = vld [vmem:[%s1356 + $0x20] sm:$0xf]
      %v1366 = vld [vmem:[%s1356 + $0x24] sm:$0xf]
      %v1367 = vld [vmem:[%s1356 + $0x28] sm:$0xf]
      %v1368 = vld [vmem:[%s1356 + $0x2c] sm:$0xf]
      %v1369 = vld [vmem:[%s1356 + $0x30] sm:$0xf]
      %v1370 = vld [vmem:[%s1356 + $0x34] sm:$0xf]
      %v1371 = vld [vmem:[%s1356 + $0x38] sm:$0xf]
      %v1372 = vld [vmem:[%s1356 + $0x3c] sm:$0xf]
      %v1410 = vunpack.c.l.b16 %v1283
      %v1411 = vunpack.c.l.b16 %v1284
      %v1412 = vunpack.c.l.b16 %v1285
      %v1413 = vunpack.c.l.b16 %v1286
      %v1414 = vunpack.c.l.b16 %v1287
      %v1415 = vunpack.c.l.b16 %v1288
      %v1416 = vunpack.c.l.b16 %v1289
      %v1417 = vunpack.c.l.b16 %v1290
      %v1418 = vunpack.c.l.b16 %v1291
      %v1419 = vunpack.c.l.b16 %v1292
      %v1420 = vunpack.c.l.b16 %v1293
      %v1421 = vunpack.c.l.b16 %v1294
      %v1422 = vunpack.c.l.b16 %v1295
      %v1423 = vunpack.c.l.b16 %v1296
      %v1424 = vunpack.c.l.b16 %v1297
      %v1425 = vunpack.c.l.b16 %v1298
      %v1426 = vunpack.c.l.b16 %v1299
      %v1427 = vunpack.c.l.b16 %v1300
      %v1428 = vunpack.c.l.b16 %v1301
      %v1429 = vunpack.c.l.b16 %v1302
      %v1430 = vunpack.c.l.b16 %v1303
      %v1431 = vunpack.c.l.b16 %v1304
      %v1432 = vunpack.c.l.b16 %v1305
      %v1433 = vunpack.c.l.b16 %v1306
      %v1434 = vunpack.c.l.b16 %v1307
      %v1435 = vunpack.c.l.b16 %v1308
      %v1436 = vunpack.c.l.b16 %v1309
      %v1437 = vunpack.c.l.b16 %v1310
      %v1438 = vunpack.c.l.b16 %v1311
      %v1439 = vunpack.c.l.b16 %v1312
      %v1440 = vunpack.c.l.b16 %v1313
      %v1441 = vunpack.c.l.b16 %v1314
      %v1442 = vunpack.c.l.b16 %v1315
      %v1443 = vunpack.c.l.b16 %v1316
      %v1444 = vunpack.c.l.b16 %v1317
      %v1445 = vunpack.c.l.b16 %v1318
      %v1446 = vunpack.c.l.b16 %v1319
      %v1447 = vpack.c.b16 %v1411, %v1410
      %v1448 = vpack.c.b16 %v1413, %v1412
      %v1449 = vpack.c.b16 %v1415, %v1414
      %v1450 = vpack.c.b16 %v1417, %v1416
      %v1451 = vpack.c.b16 %v1419, %v1418
      %v1452 = vpack.c.b16 %v1421, %v1420
      %v1453 = vpack.c.b16 %v1423, %v1422
      %v1454 = vpack.c.b16 %v1425, %v1424
      %v1455 = vpack.c.b16 %v1427, %v1426
      %v1456 = vpack.c.b16 %v1429, %v1428
      %v1457 = vpack.c.b16 %v1431, %v1430
      %v1458 = vpack.c.b16 %v1433, %v1432
      %v1459 = vpack.c.b16 %v1435, %v1434
      %v1460 = vpack.c.b16 %v1437, %v1436
      %v1461 = vpack.c.b16 %v1439, %v1438
      %v1462 = vpack.c.b16 %v1441, %v1440
      %v1463 = vpack.c.b16 %v1443, %v1442
      %v1464 = vpack.c.b16 %v1445, %v1444
      %v1465 = vpack.c.b16 %v1446, %v1446
      %vm1466 = vcmask 1046528
      %v1467 = vrot.slane %v1447, 1
      %v1468 = vrot.slane %v1448, 1
      %v1469 = vsel %vm1466, %v1467, %v1468
      %v1470 = vrot.slane %v1449, 1
      %v1471 = vsel %vm1466, %v1468, %v1470
      %v1472 = vrot.slane %v1450, 1
      %v1473 = vsel %vm1466, %v1470, %v1472
      %v1474 = vrot.slane %v1451, 1
      %v1475 = vsel %vm1466, %v1472, %v1474
      %v1476 = vrot.slane %v1452, 1
      %v1477 = vsel %vm1466, %v1474, %v1476
      %v1478 = vrot.slane %v1453, 1
      %v1479 = vsel %vm1466, %v1476, %v1478
      %v1480 = vrot.slane %v1454, 1
      %v1481 = vsel %vm1466, %v1478, %v1480
      %v1482 = vrot.slane %v1455, 1
      %v1483 = vsel %vm1466, %v1480, %v1482
      %v1484 = vrot.slane %v1456, 1
      %v1485 = vsel %vm1466, %v1482, %v1484
      %v1486 = vrot.slane %v1457, 1
      %v1487 = vsel %vm1466, %v1484, %v1486
      %v1488 = vrot.slane %v1458, 1
      %v1489 = vsel %vm1466, %v1486, %v1488
      %v1490 = vrot.slane %v1459, 1
      %v1491 = vsel %vm1466, %v1488, %v1490
      %v1492 = vrot.slane %v1460, 1
      %v1493 = vsel %vm1466, %v1490, %v1492
      %v1494 = vrot.slane %v1461, 1
      %v1495 = vsel %vm1466, %v1492, %v1494
      %v1496 = vrot.slane %v1462, 1
      %v1497 = vsel %vm1466, %v1494, %v1496
      %v1498 = vrot.slane %v1463, 1
      %v1499 = vsel %vm1466, %v1496, %v1498
      %v1500 = vrot.slane %v1464, 1
      %v1501 = vsel %vm1466, %v1498, %v1500
      %v1502 = vrot.slane %v1465, 1
      %v1503 = vsel %vm1466, %v1500, %v1502
      %v1538 = vunpack.c.l.b16 %v1357
      %v1539 = vunpack.c.l.b16 %v1358
      %v1540 = vunpack.c.l.b16 %v1359
      %v1541 = vunpack.c.l.b16 %v1360
      %v1542 = vunpack.c.l.b16 %v1361
      %v1543 = vunpack.c.l.b16 %v1362
      %v1544 = vunpack.c.l.b16 %v1363
      %v1545 = vunpack.c.l.b16 %v1364
      %v1546 = vunpack.c.l.b16 %v1365
      %v1547 = vunpack.c.l.b16 %v1366
      %v1548 = vunpack.c.l.b16 %v1367
      %v1549 = vunpack.c.l.b16 %v1368
      %v1550 = vunpack.c.l.b16 %v1369
      %v1551 = vunpack.c.l.b16 %v1370
      %v1552 = vunpack.c.l.b16 %v1371
      %v1553 = vunpack.c.l.b16 %v1372
      %v1554 = vpack.c.b16 %v1539, %v1538
      %v1555 = vpack.c.b16 %v1541, %v1540
      %v1556 = vpack.c.b16 %v1543, %v1542
      %v1557 = vpack.c.b16 %v1545, %v1544
      %v1558 = vpack.c.b16 %v1547, %v1546
      %v1559 = vpack.c.b16 %v1549, %v1548
      %v1560 = vpack.c.b16 %v1551, %v1550
      %v1561 = vpack.c.b16 %v1553, %v1552
      %1570 = vmatpush.bf16.msra.mxu0 %v1561
      %1571 = vmatpush.bf16.msra.mxu0 %v1560
      %1572 = vmatpush.bf16.msra.mxu0 %v1559
      %1573 = vmatpush.bf16.msra.mxu0 %v1558
      %1574 = vmatpush.bf16.msra.mxu0 %v1557
      %1575 = vmatpush.bf16.msra.mxu0 %v1556
      %1576 = vmatpush.bf16.msra.mxu0 %v1555
      %1577 = vmatpush.bf16.msra.mxu0 %v1554
      %1578 = vmatmul.bf16.gmra.mxu0 %v1469
      %v1579 = vpop.f32.mrf.mxu0
      %v1580 = vadd.f32 0.0, %v1579
      %v1581 = vpop.f32.mrf.mxu0
      %v1582 = vadd.f32 0.0, %v1581
      %1583 = vmatmul.bf16.gmra.mxu0 %v1471
      %v1584 = vpop.f32.mrf.mxu0
      %v1585 = vadd.f32 0.0, %v1584
      %v1586 = vpop.f32.mrf.mxu0
      %v1587 = vadd.f32 0.0, %v1586
      %1588 = vmatmul.bf16.gmra.mxu0 %v1473
      %v1589 = vpop.f32.mrf.mxu0
      %v1590 = vadd.f32 0.0, %v1589
      %v1591 = vpop.f32.mrf.mxu0
      %v1592 = vadd.f32 0.0, %v1591
      %1593 = vmatmul.bf16.gmra.mxu0 %v1475
      %v1594 = vpop.f32.mrf.mxu0
      %v1595 = vadd.f32 0.0, %v1594
      %v1596 = vpop.f32.mrf.mxu0
      %v1597 = vadd.f32 0.0, %v1596
      %1598 = vmatmul.bf16.gmra.mxu0 %v1477
      %v1599 = vpop.f32.mrf.mxu0
      %v1600 = vadd.f32 0.0, %v1599
      %v1601 = vpop.f32.mrf.mxu0
      %v1602 = vadd.f32 0.0, %v1601
      %1603 = vmatmul.bf16.gmra.mxu0 %v1479
      %v1604 = vpop.f32.mrf.mxu0
      %v1605 = vadd.f32 0.0, %v1604
      %v1606 = vpop.f32.mrf.mxu0
      %v1607 = vadd.f32 0.0, %v1606
      %1608 = vmatmul.bf16.gmra.mxu0 %v1481
      %v1609 = vpop.f32.mrf.mxu0
      %v1610 = vadd.f32 0.0, %v1609
      %v1611 = vpop.f32.mrf.mxu0
      %v1612 = vadd.f32 0.0, %v1611
      %1613 = vmatmul.bf16.gmra.mxu0 %v1483
      %v1614 = vpop.f32.mrf.mxu0
      %v1615 = vadd.f32 0.0, %v1614
      %v1616 = vpop.f32.mrf.mxu0
      %v1617 = vadd.f32 0.0, %v1616
      %1618 = vmatmul.bf16.gmra.mxu0 %v1485
      %v1619 = vpop.f32.mrf.mxu0
      %v1620 = vadd.f32 0.0, %v1619
      %v1621 = vpop.f32.mrf.mxu0
      %v1622 = vadd.f32 0.0, %v1621
      %1623 = vmatmul.bf16.gmra.mxu0 %v1487
      %v1624 = vpop.f32.mrf.mxu0
      %v1625 = vadd.f32 0.0, %v1624
      %v1626 = vpop.f32.mrf.mxu0
      %v1627 = vadd.f32 0.0, %v1626
      %1628 = vmatmul.bf16.gmra.mxu0 %v1489
      %v1629 = vpop.f32.mrf.mxu0
      %v1630 = vadd.f32 0.0, %v1629
      %v1631 = vpop.f32.mrf.mxu0
      %v1632 = vadd.f32 0.0, %v1631
      %1633 = vmatmul.bf16.gmra.mxu0 %v1491
      %v1634 = vpop.f32.mrf.mxu0
      %v1635 = vadd.f32 0.0, %v1634
      %v1636 = vpop.f32.mrf.mxu0
      %v1637 = vadd.f32 0.0, %v1636
      %1638 = vmatmul.bf16.gmra.mxu0 %v1493
      %v1639 = vpop.f32.mrf.mxu0
      %v1640 = vadd.f32 0.0, %v1639
      %v1641 = vpop.f32.mrf.mxu0
      %v1642 = vadd.f32 0.0, %v1641
      %1643 = vmatmul.bf16.gmra.mxu0 %v1495
      %v1644 = vpop.f32.mrf.mxu0
      %v1645 = vadd.f32 0.0, %v1644
      %v1646 = vpop.f32.mrf.mxu0
      %v1647 = vadd.f32 0.0, %v1646
      %1648 = vmatmul.bf16.gmra.mxu0 %v1497
      %v1649 = vpop.f32.mrf.mxu0
      %v1650 = vadd.f32 0.0, %v1649
      %v1651 = vpop.f32.mrf.mxu0
      %v1652 = vadd.f32 0.0, %v1651
      %1653 = vmatmul.bf16.gmra.mxu0 %v1499
      %v1654 = vpop.f32.mrf.mxu0
      %v1655 = vadd.f32 0.0, %v1654
      %v1656 = vpop.f32.mrf.mxu0
      %v1657 = vadd.f32 0.0, %v1656
      %1658 = vmatmul.bf16.gmra.mxu0 %v1501
      %v1659 = vpop.f32.mrf.mxu0
      %v1660 = vadd.f32 0.0, %v1659
      %v1661 = vpop.f32.mrf.mxu0
      %v1662 = vadd.f32 0.0, %v1661
      %1663 = vmatmul.bf16.gmra.mxu0 %v1503
      %v1664 = vpop.f32.mrf.mxu0
      %v1665 = vadd.f32 0.0, %v1664
      %v1666 = vpop.f32.mrf.mxu0
      %v1667 = vadd.f32 0.0, %v1666
      %1668 = vdwg.mxu0
      %v1669 = vadd.f32 %v1320, %v1580
      %v1670 = vadd.f32 %v1321, %v1582
      %v1671 = vadd.f32 %v1322, %v1585
      %v1672 = vadd.f32 %v1323, %v1587
      %v1673 = vadd.f32 %v1324, %v1590
      %v1674 = vadd.f32 %v1325, %v1592
      %v1675 = vadd.f32 %v1326, %v1595
      %v1676 = vadd.f32 %v1327, %v1597
      %v1677 = vadd.f32 %v1328, %v1600
      %v1678 = vadd.f32 %v1329, %v1602
      %v1679 = vadd.f32 %v1330, %v1605
      %v1680 = vadd.f32 %v1331, %v1607
      %v1681 = vadd.f32 %v1332, %v1610
      %v1682 = vadd.f32 %v1333, %v1612
      %v1683 = vadd.f32 %v1334, %v1615
      %v1684 = vadd.f32 %v1335, %v1617
      %v1685 = vadd.f32 %v1336, %v1620
      %v1686 = vadd.f32 %v1337, %v1622
      %v1687 = vadd.f32 %v1338, %v1625
      %v1688 = vadd.f32 %v1339, %v1627
      %v1689 = vadd.f32 %v1340, %v1630
      %v1690 = vadd.f32 %v1341, %v1632
      %v1691 = vadd.f32 %v1342, %v1635
      %v1692 = vadd.f32 %v1343, %v1637
      %v1693 = vadd.f32 %v1344, %v1640
      %v1694 = vadd.f32 %v1345, %v1642
      %v1695 = vadd.f32 %v1346, %v1645
      %v1696 = vadd.f32 %v1347, %v1647
      %v1697 = vadd.f32 %v1348, %v1650
      %v1698 = vadd.f32 %v1349, %v1652
      %v1699 = vadd.f32 %v1350, %v1655
      %v1700 = vadd.f32 %v1351, %v1657
      %v1701 = vadd.f32 %v1352, %v1660
      %v1702 = vadd.f32 %v1353, %v1662
      %v1703 = vadd.f32 %v1354, %v1665
      %v1704 = vadd.f32 %v1355, %v1667
      %1705 = vst [vmem:[#allocation2] sm:$0xff] %v1669
      %1706 = vst [vmem:[#allocation2 + $0x8] sm:$0xff] %v1670
      %1707 = vst [vmem:[#allocation2 + $0x10] sm:$0xff] %v1671
      %1708 = vst [vmem:[#allocation2 + $0x18] sm:$0xff] %v1672
      %1709 = vst [vmem:[#allocation2 + $0x20] sm:$0xff] %v1673
      %1710 = vst [vmem:[#allocation2 + $0x28] sm:$0xff] %v1674
      %1711 = vst [vmem:[#allocation2 + $0x30] sm:$0xff] %v1675
      %1712 = vst [vmem:[#allocation2 + $0x38] sm:$0xff] %v1676
      %1713 = vst [vmem:[#allocation2 + $0x40] sm:$0xff] %v1677
      %1714 = vst [vmem:[#allocation2 + $0x48] sm:$0xff] %v1678
      %1715 = vst [vmem:[#allocation2 + $0x50] sm:$0xff] %v1679
      %1716 = vst [vmem:[#allocation2 + $0x58] sm:$0xff] %v1680
      %1717 = vst [vmem:[#allocation2 + $0x60] sm:$0xff] %v1681
      %1718 = vst [vmem:[#allocation2 + $0x68] sm:$0xff] %v1682
      %1719 = vst [vmem:[#allocation2 + $0x70] sm:$0xff] %v1683
      %1720 = vst [vmem:[#allocation2 + $0x78] sm:$0xff] %v1684
      %1721 = vst [vmem:[#allocation2 + $0x80] sm:$0xff] %v1685
      %1722 = vst [vmem:[#allocation2 + $0x88] sm:$0xff] %v1686
      %1723 = vst [vmem:[#allocation2 + $0x90] sm:$0xff] %v1687
      %1724 = vst [vmem:[#allocation2 + $0x98] sm:$0xff] %v1688
      %1725 = vst [vmem:[#allocation2 + $0xa0] sm:$0xff] %v1689
      %1726 = vst [vmem:[#allocation2 + $0xa8] sm:$0xff] %v1690
      %1727 = vst [vmem:[#allocation2 + $0xb0] sm:$0xff] %v1691
      %1728 = vst [vmem:[#allocation2 + $0xb8] sm:$0xff] %v1692
      %1729 = vst [vmem:[#allocation2 + $0xc0] sm:$0xff] %v1693
      %1730 = vst [vmem:[#allocation2 + $0xc8] sm:$0xff] %v1694
      %1731 = vst [vmem:[#allocation2 + $0xd0] sm:$0xff] %v1695
      %1732 = vst [vmem:[#allocation2 + $0xd8] sm:$0xff] %v1696
      %1733 = vst [vmem:[#allocation2 + $0xe0] sm:$0xff] %v1697
      %1734 = vst [vmem:[#allocation2 + $0xe8] sm:$0xff] %v1698
      %1735 = vst [vmem:[#allocation2 + $0xf0] sm:$0xff] %v1699
      %1736 = vst [vmem:[#allocation2 + $0xf8] sm:$0xff] %v1700
      %1737 = vst [vmem:[#allocation2 + $0x100] sm:$0xff] %v1701
      %1738 = vst [vmem:[#allocation2 + $0x108] sm:$0xff] %v1702
      %1739 = vst [vmem:[#allocation2 + $0x110] sm:$0xff] %v1703
      %1740 = vst [vmem:[#allocation2 + $0x118] sm:$0xff] %v1704
      %v1741 = vld [vmem:[%s244 + $0x8] sm:$0xe]
      %v1742 = vld [vmem:[%s244 + $0xc] sm:$0xf]
      %v1743 = vld [vmem:[%s244 + $0x10] sm:$0xf]
      %v1744 = vld [vmem:[%s244 + $0x14] sm:$0xf]
      %v1745 = vld [vmem:[%s244 + $0x18] sm:$0xf]
      %v1746 = vld [vmem:[%s244 + $0x1c] sm:$0xf]
      %v1747 = vld [vmem:[%s244 + $0x20] sm:$0xf]
      %v1748 = vld [vmem:[%s244 + $0x24] sm:$0xf]
      %v1749 = vld [vmem:[%s244 + $0x28] sm:$0xf]
      %v1750 = vld [vmem:[%s244 + $0x2c] sm:$0xf]
      %v1751 = vld [vmem:[%s244 + $0x30] sm:$0xf]
      %v1752 = vld [vmem:[%s244 + $0x34] sm:$0xf]
      %v1753 = vld [vmem:[%s244 + $0x38] sm:$0xf]
      %v1754 = vld [vmem:[%s244 + $0x3c] sm:$0xf]
      %v1755 = vld [vmem:[%s244 + $0x40] sm:$0xf]
      %v1756 = vld [vmem:[%s244 + $0x44] sm:$0xf]
      %v1757 = vld [vmem:[%s244 + $0x48] sm:$0xf]
      %v1758 = vld [vmem:[%s244 + $0x4c] sm:$0xf]
      %v1759 = vld [vmem:[%s244 + $0x50] sm:$0xf]
      %v1760 = vld [vmem:[%s244 + $0x54] sm:$0xf]
      %v1761 = vld [vmem:[%s244 + $0x58] sm:$0xf]
      %v1762 = vld [vmem:[%s244 + $0x5c] sm:$0xf]
      %v1763 = vld [vmem:[%s244 + $0x60] sm:$0xf]
      %v1764 = vld [vmem:[%s244 + $0x64] sm:$0xf]
      %v1765 = vld [vmem:[%s244 + $0x68] sm:$0xf]
      %v1766 = vld [vmem:[%s244 + $0x6c] sm:$0xf]
      %v1767 = vld [vmem:[%s244 + $0x70] sm:$0xf]
      %v1768 = vld [vmem:[%s244 + $0x74] sm:$0xf]
      %v1769 = vld [vmem:[%s244 + $0x78] sm:$0xf]
      %v1770 = vld [vmem:[%s244 + $0x7c] sm:$0xf]
      %v1771 = vld [vmem:[%s244 + $0x80] sm:$0xf]
      %v1772 = vld [vmem:[%s244 + $0x84] sm:$0xf]
      %v1773 = vld [vmem:[%s244 + $0x88] sm:$0xf]
      %v1774 = vld [vmem:[%s244 + $0x8c] sm:$0xf]
      %v1775 = vld [vmem:[%s244 + $0x90] sm:$0xf]
      %v1776 = vld [vmem:[%s244 + $0x94] sm:$0xf]
      %v1777 = vld [vmem:[%s244 + $0x98] sm:$0x1]
      %v1778 = vld [vmem:[#allocation2] sm:$0xff]
      %v1779 = vld [vmem:[#allocation2 + $0x8] sm:$0xff]
      %v1780 = vld [vmem:[#allocation2 + $0x10] sm:$0xff]
      %v1781 = vld [vmem:[#allocation2 + $0x18] sm:$0xff]
      %v1782 = vld [vmem:[#allocation2 + $0x20] sm:$0xff]
      %v1783 = vld [vmem:[#allocation2 + $0x28] sm:$0xff]
      %v1784 = vld [vmem:[#allocation2 + $0x30] sm:$0xff]
      %v1785 = vld [vmem:[#allocation2 + $0x38] sm:$0xff]
      %v1786 = vld [vmem:[#allocation2 + $0x40] sm:$0xff]
      %v1787 = vld [vmem:[#allocation2 + $0x48] sm:$0xff]
      %v1788 = vld [vmem:[#allocation2 + $0x50] sm:$0xff]
      %v1789 = vld [vmem:[#allocation2 + $0x58] sm:$0xff]
      %v1790 = vld [vmem:[#allocation2 + $0x60] sm:$0xff]
      %v1791 = vld [vmem:[#allocation2 + $0x68] sm:$0xff]
      %v1792 = vld [vmem:[#allocation2 + $0x70] sm:$0xff]
      %v1793 = vld [vmem:[#allocation2 + $0x78] sm:$0xff]
      %v1794 = vld [vmem:[#allocation2 + $0x80] sm:$0xff]
      %v1795 = vld [vmem:[#allocation2 + $0x88] sm:$0xff]
      %v1796 = vld [vmem:[#allocation2 + $0x90] sm:$0xff]
      %v1797 = vld [vmem:[#allocation2 + $0x98] sm:$0xff]
      %v1798 = vld [vmem:[#allocation2 + $0xa0] sm:$0xff]
      %v1799 = vld [vmem:[#allocation2 + $0xa8] sm:$0xff]
      %v1800 = vld [vmem:[#allocation2 + $0xb0] sm:$0xff]
      %v1801 = vld [vmem:[#allocation2 + $0xb8] sm:$0xff]
      %v1802 = vld [vmem:[#allocation2 + $0xc0] sm:$0xff]
      %v1803 = vld [vmem:[#allocation2 + $0xc8] sm:$0xff]
      %v1804 = vld [vmem:[#allocation2 + $0xd0] sm:$0xff]
      %v1805 = vld [vmem:[#allocation2 + $0xd8] sm:$0xff]
      %v1806 = vld [vmem:[#allocation2 + $0xe0] sm:$0xff]
      %v1807 = vld [vmem:[#allocation2 + $0xe8] sm:$0xff]
      %v1808 = vld [vmem:[#allocation2 + $0xf0] sm:$0xff]
      %v1809 = vld [vmem:[#allocation2 + $0xf8] sm:$0xff]
      %v1810 = vld [vmem:[#allocation2 + $0x100] sm:$0xff]
      %v1811 = vld [vmem:[#allocation2 + $0x108] sm:$0xff]
      %v1812 = vld [vmem:[#allocation2 + $0x110] sm:$0xff]
      %v1813 = vld [vmem:[#allocation2 + $0x118] sm:$0xff]
      %s1814 = scalar_lea.vmem %s248, 192
      %v1815 = vld [vmem:[%s1814] sm:$0xf]
      %v1816 = vld [vmem:[%s1814 + $0x4] sm:$0xf]
      %v1817 = vld [vmem:[%s1814 + $0x8] sm:$0xf]
      %v1818 = vld [vmem:[%s1814 + $0xc] sm:$0xf]
      %v1819 = vld [vmem:[%s1814 + $0x10] sm:$0xf]
      %v1820 = vld [vmem:[%s1814 + $0x14] sm:$0xf]
      %v1821 = vld [vmem:[%s1814 + $0x18] sm:$0xf]
      %v1822 = vld [vmem:[%s1814 + $0x1c] sm:$0xf]
      %v1823 = vld [vmem:[%s1814 + $0x20] sm:$0xf]
      %v1824 = vld [vmem:[%s1814 + $0x24] sm:$0xf]
      %v1825 = vld [vmem:[%s1814 + $0x28] sm:$0xf]
      %v1826 = vld [vmem:[%s1814 + $0x2c] sm:$0xf]
      %v1827 = vld [vmem:[%s1814 + $0x30] sm:$0xf]
      %v1828 = vld [vmem:[%s1814 + $0x34] sm:$0xf]
      %v1829 = vld [vmem:[%s1814 + $0x38] sm:$0xf]
      %v1830 = vld [vmem:[%s1814 + $0x3c] sm:$0xf]
      %v1868 = vunpack.c.l.b16 %v1741
      %v1869 = vunpack.c.l.b16 %v1742
      %v1870 = vunpack.c.l.b16 %v1743
      %v1871 = vunpack.c.l.b16 %v1744
      %v1872 = vunpack.c.l.b16 %v1745
      %v1873 = vunpack.c.l.b16 %v1746
      %v1874 = vunpack.c.l.b16 %v1747
      %v1875 = vunpack.c.l.b16 %v1748
      %v1876 = vunpack.c.l.b16 %v1749
      %v1877 = vunpack.c.l.b16 %v1750
      %v1878 = vunpack.c.l.b16 %v1751
      %v1879 = vunpack.c.l.b16 %v1752
      %v1880 = vunpack.c.l.b16 %v1753
      %v1881 = vunpack.c.l.b16 %v1754
      %v1882 = vunpack.c.l.b16 %v1755
      %v1883 = vunpack.c.l.b16 %v1756
      %v1884 = vunpack.c.l.b16 %v1757
      %v1885 = vunpack.c.l.b16 %v1758
      %v1886 = vunpack.c.l.b16 %v1759
      %v1887 = vunpack.c.l.b16 %v1760
      %v1888 = vunpack.c.l.b16 %v1761
      %v1889 = vunpack.c.l.b16 %v1762
      %v1890 = vunpack.c.l.b16 %v1763
      %v1891 = vunpack.c.l.b16 %v1764
      %v1892 = vunpack.c.l.b16 %v1765
      %v1893 = vunpack.c.l.b16 %v1766
      %v1894 = vunpack.c.l.b16 %v1767
      %v1895 = vunpack.c.l.b16 %v1768
      %v1896 = vunpack.c.l.b16 %v1769
      %v1897 = vunpack.c.l.b16 %v1770
      %v1898 = vunpack.c.l.b16 %v1771
      %v1899 = vunpack.c.l.b16 %v1772
      %v1900 = vunpack.c.l.b16 %v1773
      %v1901 = vunpack.c.l.b16 %v1774
      %v1902 = vunpack.c.l.b16 %v1775
      %v1903 = vunpack.c.l.b16 %v1776
      %v1904 = vunpack.c.l.b16 %v1777
      %v1905 = vpack.c.b16 %v1869, %v1868
      %v1906 = vpack.c.b16 %v1871, %v1870
      %v1907 = vpack.c.b16 %v1873, %v1872
      %v1908 = vpack.c.b16 %v1875, %v1874
      %v1909 = vpack.c.b16 %v1877, %v1876
      %v1910 = vpack.c.b16 %v1879, %v1878
      %v1911 = vpack.c.b16 %v1881, %v1880
      %v1912 = vpack.c.b16 %v1883, %v1882
      %v1913 = vpack.c.b16 %v1885, %v1884
      %v1914 = vpack.c.b16 %v1887, %v1886
      %v1915 = vpack.c.b16 %v1889, %v1888
      %v1916 = vpack.c.b16 %v1891, %v1890
      %v1917 = vpack.c.b16 %v1893, %v1892
      %v1918 = vpack.c.b16 %v1895, %v1894
      %v1919 = vpack.c.b16 %v1897, %v1896
      %v1920 = vpack.c.b16 %v1899, %v1898
      %v1921 = vpack.c.b16 %v1901, %v1900
      %v1922 = vpack.c.b16 %v1903, %v1902
      %v1923 = vpack.c.b16 %v1904, %v1904
      %v1924 = vrot.slane %v1905, 1
      %v1925 = vrot.slane %v1906, 1
      %v1926 = vsel %vm1466, %v1924, %v1925
      %v1927 = vrot.slane %v1907, 1
      %v1928 = vsel %vm1466, %v1925, %v1927
      %v1929 = vrot.slane %v1908, 1
      %v1930 = vsel %vm1466, %v1927, %v1929
      %v1931 = vrot.slane %v1909, 1
      %v1932 = vsel %vm1466, %v1929, %v1931
      %v1933 = vrot.slane %v1910, 1
      %v1934 = vsel %vm1466, %v1931, %v1933
      %v1935 = vrot.slane %v1911, 1
      %v1936 = vsel %vm1466, %v1933, %v1935
      %v1937 = vrot.slane %v1912, 1
      %v1938 = vsel %vm1466, %v1935, %v1937
      %v1939 = vrot.slane %v1913, 1
      %v1940 = vsel %vm1466, %v1937, %v1939
      %v1941 = vrot.slane %v1914, 1
      %v1942 = vsel %vm1466, %v1939, %v1941
      %v1943 = vrot.slane %v1915, 1
      %v1944 = vsel %vm1466, %v1941, %v1943
      %v1945 = vrot.slane %v1916, 1
      %v1946 = vsel %vm1466, %v1943, %v1945
      %v1947 = vrot.slane %v1917, 1
      %v1948 = vsel %vm1466, %v1945, %v1947
      %v1949 = vrot.slane %v1918, 1
      %v1950 = vsel %vm1466, %v1947, %v1949
      %v1951 = vrot.slane %v1919, 1
      %v1952 = vsel %vm1466, %v1949, %v1951
      %v1953 = vrot.slane %v1920, 1
      %v1954 = vsel %vm1466, %v1951, %v1953
      %v1955 = vrot.slane %v1921, 1
      %v1956 = vsel %vm1466, %v1953, %v1955
      %v1957 = vrot.slane %v1922, 1
      %v1958 = vsel %vm1466, %v1955, %v1957
      %v1959 = vrot.slane %v1923, 1
      %v1960 = vsel %vm1466, %v1957, %v1959
      %v1995 = vunpack.c.l.b16 %v1815
      %v1996 = vunpack.c.l.b16 %v1816
      %v1997 = vunpack.c.l.b16 %v1817
      %v1998 = vunpack.c.l.b16 %v1818
      %v1999 = vunpack.c.l.b16 %v1819
      %v2000 = vunpack.c.l.b16 %v1820
      %v2001 = vunpack.c.l.b16 %v1821
      %v2002 = vunpack.c.l.b16 %v1822
      %v2003 = vunpack.c.l.b16 %v1823
      %v2004 = vunpack.c.l.b16 %v1824
      %v2005 = vunpack.c.l.b16 %v1825
      %v2006 = vunpack.c.l.b16 %v1826
      %v2007 = vunpack.c.l.b16 %v1827
      %v2008 = vunpack.c.l.b16 %v1828
      %v2009 = vunpack.c.l.b16 %v1829
      %v2010 = vunpack.c.l.b16 %v1830
      %v2011 = vpack.c.b16 %v1996, %v1995
      %v2012 = vpack.c.b16 %v1998, %v1997
      %v2013 = vpack.c.b16 %v2000, %v1999
      %v2014 = vpack.c.b16 %v2002, %v2001
      %v2015 = vpack.c.b16 %v2004, %v2003
      %v2016 = vpack.c.b16 %v2006, %v2005
      %v2017 = vpack.c.b16 %v2008, %v2007
      %v2018 = vpack.c.b16 %v2010, %v2009
      %2027 = vmatpush.bf16.msra.mxu0 %v2018
      %2028 = vmatpush.bf16.msra.mxu0 %v2017
      %2029 = vmatpush.bf16.msra.mxu0 %v2016
      %2030 = vmatpush.bf16.msra.mxu0 %v2015
      %2031 = vmatpush.bf16.msra.mxu0 %v2014
      %2032 = vmatpush.bf16.msra.mxu0 %v2013
      %2033 = vmatpush.bf16.msra.mxu0 %v2012
      %2034 = vmatpush.bf16.msra.mxu0 %v2011
      %2035 = vmatmul.bf16.gmra.mxu0 %v1926
      %v2036 = vpop.f32.mrf.mxu0
      %v2037 = vadd.f32 0.0, %v2036
      %v2038 = vpop.f32.mrf.mxu0
      %v2039 = vadd.f32 0.0, %v2038
      %2040 = vmatmul.bf16.gmra.mxu0 %v1928
      %v2041 = vpop.f32.mrf.mxu0
      %v2042 = vadd.f32 0.0, %v2041
      %v2043 = vpop.f32.mrf.mxu0
      %v2044 = vadd.f32 0.0, %v2043
      %2045 = vmatmul.bf16.gmra.mxu0 %v1930
      %v2046 = vpop.f32.mrf.mxu0
      %v2047 = vadd.f32 0.0, %v2046
      %v2048 = vpop.f32.mrf.mxu0
      %v2049 = vadd.f32 0.0, %v2048
      %2050 = vmatmul.bf16.gmra.mxu0 %v1932
      %v2051 = vpop.f32.mrf.mxu0
      %v2052 = vadd.f32 0.0, %v2051
      %v2053 = vpop.f32.mrf.mxu0
      %v2054 = vadd.f32 0.0, %v2053
      %2055 = vmatmul.bf16.gmra.mxu0 %v1934
      %v2056 = vpop.f32.mrf.mxu0
      %v2057 = vadd.f32 0.0, %v2056
      %v2058 = vpop.f32.mrf.mxu0
      %v2059 = vadd.f32 0.0, %v2058
      %2060 = vmatmul.bf16.gmra.mxu0 %v1936
      %v2061 = vpop.f32.mrf.mxu0
      %v2062 = vadd.f32 0.0, %v2061
      %v2063 = vpop.f32.mrf.mxu0
      %v2064 = vadd.f32 0.0, %v2063
      %2065 = vmatmul.bf16.gmra.mxu0 %v1938
      %v2066 = vpop.f32.mrf.mxu0
      %v2067 = vadd.f32 0.0, %v2066
      %v2068 = vpop.f32.mrf.mxu0
      %v2069 = vadd.f32 0.0, %v2068
      %2070 = vmatmul.bf16.gmra.mxu0 %v1940
      %v2071 = vpop.f32.mrf.mxu0
      %v2072 = vadd.f32 0.0, %v2071
      %v2073 = vpop.f32.mrf.mxu0
      %v2074 = vadd.f32 0.0, %v2073
      %2075 = vmatmul.bf16.gmra.mxu0 %v1942
      %v2076 = vpop.f32.mrf.mxu0
      %v2077 = vadd.f32 0.0, %v2076
      %v2078 = vpop.f32.mrf.mxu0
      %v2079 = vadd.f32 0.0, %v2078
      %2080 = vmatmul.bf16.gmra.mxu0 %v1944
      %v2081 = vpop.f32.mrf.mxu0
      %v2082 = vadd.f32 0.0, %v2081
      %v2083 = vpop.f32.mrf.mxu0
      %v2084 = vadd.f32 0.0, %v2083
      %2085 = vmatmul.bf16.gmra.mxu0 %v1946
      %v2086 = vpop.f32.mrf.mxu0
      %v2087 = vadd.f32 0.0, %v2086
      %v2088 = vpop.f32.mrf.mxu0
      %v2089 = vadd.f32 0.0, %v2088
      %2090 = vmatmul.bf16.gmra.mxu0 %v1948
      %v2091 = vpop.f32.mrf.mxu0
      %v2092 = vadd.f32 0.0, %v2091
      %v2093 = vpop.f32.mrf.mxu0
      %v2094 = vadd.f32 0.0, %v2093
      %2095 = vmatmul.bf16.gmra.mxu0 %v1950
      %v2096 = vpop.f32.mrf.mxu0
      %v2097 = vadd.f32 0.0, %v2096
      %v2098 = vpop.f32.mrf.mxu0
      %v2099 = vadd.f32 0.0, %v2098
      %2100 = vmatmul.bf16.gmra.mxu0 %v1952
      %v2101 = vpop.f32.mrf.mxu0
      %v2102 = vadd.f32 0.0, %v2101
      %v2103 = vpop.f32.mrf.mxu0
      %v2104 = vadd.f32 0.0, %v2103
      %2105 = vmatmul.bf16.gmra.mxu0 %v1954
      %v2106 = vpop.f32.mrf.mxu0
      %v2107 = vadd.f32 0.0, %v2106
      %v2108 = vpop.f32.mrf.mxu0
      %v2109 = vadd.f32 0.0, %v2108
      %2110 = vmatmul.bf16.gmra.mxu0 %v1956
      %v2111 = vpop.f32.mrf.mxu0
      %v2112 = vadd.f32 0.0, %v2111
      %v2113 = vpop.f32.mrf.mxu0
      %v2114 = vadd.f32 0.0, %v2113
      %2115 = vmatmul.bf16.gmra.mxu0 %v1958
      %v2116 = vpop.f32.mrf.mxu0
      %v2117 = vadd.f32 0.0, %v2116
      %v2118 = vpop.f32.mrf.mxu0
      %v2119 = vadd.f32 0.0, %v2118
      %2120 = vmatmul.bf16.gmra.mxu0 %v1960
      %v2121 = vpop.f32.mrf.mxu0
      %v2122 = vadd.f32 0.0, %v2121
      %v2123 = vpop.f32.mrf.mxu0
      %v2124 = vadd.f32 0.0, %v2123
      %2125 = vdwg.mxu0
      %v2126 = vadd.f32 %v1778, %v2037
      %v2127 = vadd.f32 %v1779, %v2039
      %v2128 = vadd.f32 %v1780, %v2042
      %v2129 = vadd.f32 %v1781, %v2044
      %v2130 = vadd.f32 %v1782, %v2047
      %v2131 = vadd.f32 %v1783, %v2049
      %v2132 = vadd.f32 %v1784, %v2052
      %v2133 = vadd.f32 %v1785, %v2054
      %v2134 = vadd.f32 %v1786, %v2057
      %v2135 = vadd.f32 %v1787, %v2059
      %v2136 = vadd.f32 %v1788, %v2062
      %v2137 = vadd.f32 %v1789, %v2064
      %v2138 = vadd.f32 %v1790, %v2067
      %v2139 = vadd.f32 %v1791, %v2069
      %v2140 = vadd.f32 %v1792, %v2072
      %v2141 = vadd.f32 %v1793, %v2074
      %v2142 = vadd.f32 %v1794, %v2077
      %v2143 = vadd.f32 %v1795, %v2079
      %v2144 = vadd.f32 %v1796, %v2082
      %v2145 = vadd.f32 %v1797, %v2084
      %v2146 = vadd.f32 %v1798, %v2087
      %v2147 = vadd.f32 %v1799, %v2089
      %v2148 = vadd.f32 %v1800, %v2092
      %v2149 = vadd.f32 %v1801, %v2094
      %v2150 = vadd.f32 %v1802, %v2097
      %v2151 = vadd.f32 %v1803, %v2099
      %v2152 = vadd.f32 %v1804, %v2102
      %v2153 = vadd.f32 %v1805, %v2104
      %v2154 = vadd.f32 %v1806, %v2107
      %v2155 = vadd.f32 %v1807, %v2109
      %v2156 = vadd.f32 %v1808, %v2112
      %v2157 = vadd.f32 %v1809, %v2114
      %v2158 = vadd.f32 %v1810, %v2117
      %v2159 = vadd.f32 %v1811, %v2119
      %v2160 = vadd.f32 %v1812, %v2122
      %v2161 = vadd.f32 %v1813, %v2124
      %2162 = vst [vmem:[#allocation2] sm:$0xff] %v2126
      %2163 = vst [vmem:[#allocation2 + $0x8] sm:$0xff] %v2127
      %2164 = vst [vmem:[#allocation2 + $0x10] sm:$0xff] %v2128
      %2165 = vst [vmem:[#allocation2 + $0x18] sm:$0xff] %v2129
      %2166 = vst [vmem:[#allocation2 + $0x20] sm:$0xff] %v2130
      %2167 = vst [vmem:[#allocation2 + $0x28] sm:$0xff] %v2131
      %2168 = vst [vmem:[#allocation2 + $0x30] sm:$0xff] %v2132
      %2169 = vst [vmem:[#allocation2 + $0x38] sm:$0xff] %v2133
      %2170 = vst [vmem:[#allocation2 + $0x40] sm:$0xff] %v2134
      %2171 = vst [vmem:[#allocation2 + $0x48] sm:$0xff] %v2135
      %2172 = vst [vmem:[#allocation2 + $0x50] sm:$0xff] %v2136
      %2173 = vst [vmem:[#allocation2 + $0x58] sm:$0xff] %v2137
      %2174 = vst [vmem:[#allocation2 + $0x60] sm:$0xff] %v2138
      %2175 = vst [vmem:[#allocation2 + $0x68] sm:$0xff] %v2139
      %2176 = vst [vmem:[#allocation2 + $0x70] sm:$0xff] %v2140
      %2177 = vst [vmem:[#allocation2 + $0x78] sm:$0xff] %v2141
      %2178 = vst [vmem:[#allocation2 + $0x80] sm:$0xff] %v2142
      %2179 = vst [vmem:[#allocation2 + $0x88] sm:$0xff] %v2143
      %2180 = vst [vmem:[#allocation2 + $0x90] sm:$0xff] %v2144
      %2181 = vst [vmem:[#allocation2 + $0x98] sm:$0xff] %v2145
      %2182 = vst [vmem:[#allocation2 + $0xa0] sm:$0xff] %v2146
      %2183 = vst [vmem:[#allocation2 + $0xa8] sm:$0xff] %v2147
      %2184 = vst [vmem:[#allocation2 + $0xb0] sm:$0xff] %v2148
      %2185 = vst [vmem:[#allocation2 + $0xb8] sm:$0xff] %v2149
      %2186 = vst [vmem:[#allocation2 + $0xc0] sm:$0xff] %v2150
      %2187 = vst [vmem:[#allocation2 + $0xc8] sm:$0xff] %v2151
      %2188 = vst [vmem:[#allocation2 + $0xd0] sm:$0xff] %v2152
      %2189 = vst [vmem:[#allocation2 + $0xd8] sm:$0xff] %v2153
      %2190 = vst [vmem:[#allocation2 + $0xe0] sm:$0xff] %v2154
      %2191 = vst [vmem:[#allocation2 + $0xe8] sm:$0xff] %v2155
      %2192 = vst [vmem:[#allocation2 + $0xf0] sm:$0xff] %v2156
      %2193 = vst [vmem:[#allocation2 + $0xf8] sm:$0xff] %v2157
      %2194 = vst [vmem:[#allocation2 + $0x100] sm:$0xff] %v2158
      %2195 = vst [vmem:[#allocation2 + $0x108] sm:$0xff] %v2159
      %2196 = vst [vmem:[#allocation2 + $0x110] sm:$0xff] %v2160
      %2197 = vst [vmem:[#allocation2 + $0x118] sm:$0xff] %v2161
      %v2198 = vld [vmem:[%s244 + $0x8] sm:$0xe]
      %v2199 = vld [vmem:[%s244 + $0xc] sm:$0xf]
      %v2200 = vld [vmem:[%s244 + $0x10] sm:$0xf]
      %v2201 = vld [vmem:[%s244 + $0x14] sm:$0xf]
      %v2202 = vld [vmem:[%s244 + $0x18] sm:$0xf]
      %v2203 = vld [vmem:[%s244 + $0x1c] sm:$0xf]
      %v2204 = vld [vmem:[%s244 + $0x20] sm:$0xf]
      %v2205 = vld [vmem:[%s244 + $0x24] sm:$0xf]
      %v2206 = vld [vmem:[%s244 + $0x28] sm:$0xf]
      %v2207 = vld [vmem:[%s244 + $0x2c] sm:$0xf]
      %v2208 = vld [vmem:[%s244 + $0x30] sm:$0xf]
      %v2209 = vld [vmem:[%s244 + $0x34] sm:$0xf]
      %v2210 = vld [vmem:[%s244 + $0x38] sm:$0xf]
      %v2211 = vld [vmem:[%s244 + $0x3c] sm:$0xf]
      %v2212 = vld [vmem:[%s244 + $0x40] sm:$0xf]
      %v2213 = vld [vmem:[%s244 + $0x44] sm:$0xf]
      %v2214 = vld [vmem:[%s244 + $0x48] sm:$0xf]
      %v2215 = vld [vmem:[%s244 + $0x4c] sm:$0xf]
      %v2216 = vld [vmem:[%s244 + $0x50] sm:$0xf]
      %v2217 = vld [vmem:[%s244 + $0x54] sm:$0xf]
      %v2218 = vld [vmem:[%s244 + $0x58] sm:$0xf]
      %v2219 = vld [vmem:[%s244 + $0x5c] sm:$0xf]
      %v2220 = vld [vmem:[%s244 + $0x60] sm:$0xf]
      %v2221 = vld [vmem:[%s244 + $0x64] sm:$0xf]
      %v2222 = vld [vmem:[%s244 + $0x68] sm:$0xf]
      %v2223 = vld [vmem:[%s244 + $0x6c] sm:$0xf]
      %v2224 = vld [vmem:[%s244 + $0x70] sm:$0xf]
      %v2225 = vld [vmem:[%s244 + $0x74] sm:$0xf]
      %v2226 = vld [vmem:[%s244 + $0x78] sm:$0xf]
      %v2227 = vld [vmem:[%s244 + $0x7c] sm:$0xf]
      %v2228 = vld [vmem:[%s244 + $0x80] sm:$0xf]
      %v2229 = vld [vmem:[%s244 + $0x84] sm:$0xf]
      %v2230 = vld [vmem:[%s244 + $0x88] sm:$0xf]
      %v2231 = vld [vmem:[%s244 + $0x8c] sm:$0xf]
      %v2232 = vld [vmem:[%s244 + $0x90] sm:$0xf]
      %v2233 = vld [vmem:[%s244 + $0x94] sm:$0xf]
      %v2234 = vld [vmem:[%s244 + $0x98] sm:$0x3]
      %v2235 = vld [vmem:[#allocation2] sm:$0xff]
      %v2236 = vld [vmem:[#allocation2 + $0x8] sm:$0xff]
      %v2237 = vld [vmem:[#allocation2 + $0x10] sm:$0xff]
      %v2238 = vld [vmem:[#allocation2 + $0x18] sm:$0xff]
      %v2239 = vld [vmem:[#allocation2 + $0x20] sm:$0xff]
      %v2240 = vld [vmem:[#allocation2 + $0x28] sm:$0xff]
      %v2241 = vld [vmem:[#allocation2 + $0x30] sm:$0xff]
      %v2242 = vld [vmem:[#allocation2 + $0x38] sm:$0xff]
      %v2243 = vld [vmem:[#allocation2 + $0x40] sm:$0xff]
      %v2244 = vld [vmem:[#allocation2 + $0x48] sm:$0xff]
      %v2245 = vld [vmem:[#allocation2 + $0x50] sm:$0xff]
      %v2246 = vld [vmem:[#allocation2 + $0x58] sm:$0xff]
      %v2247 = vld [vmem:[#allocation2 + $0x60] sm:$0xff]
      %v2248 = vld [vmem:[#allocation2 + $0x68] sm:$0xff]
      %v2249 = vld [vmem:[#allocation2 + $0x70] sm:$0xff]
      %v2250 = vld [vmem:[#allocation2 + $0x78] sm:$0xff]
      %v2251 = vld [vmem:[#allocation2 + $0x80] sm:$0xff]
      %v2252 = vld [vmem:[#allocation2 + $0x88] sm:$0xff]
      %v2253 = vld [vmem:[#allocation2 + $0x90] sm:$0xff]
      %v2254 = vld [vmem:[#allocation2 + $0x98] sm:$0xff]
      %v2255 = vld [vmem:[#allocation2 + $0xa0] sm:$0xff]
      %v2256 = vld [vmem:[#allocation2 + $0xa8] sm:$0xff]
      %v2257 = vld [vmem:[#allocation2 + $0xb0] sm:$0xff]
      %v2258 = vld [vmem:[#allocation2 + $0xb8] sm:$0xff]
      %v2259 = vld [vmem:[#allocation2 + $0xc0] sm:$0xff]
      %v2260 = vld [vmem:[#allocation2 + $0xc8] sm:$0xff]
      %v2261 = vld [vmem:[#allocation2 + $0xd0] sm:$0xff]
      %v2262 = vld [vmem:[#allocation2 + $0xd8] sm:$0xff]
      %v2263 = vld [vmem:[#allocation2 + $0xe0] sm:$0xff]
      %v2264 = vld [vmem:[#allocation2 + $0xe8] sm:$0xff]
      %v2265 = vld [vmem:[#allocation2 + $0xf0] sm:$0xff]
      %v2266 = vld [vmem:[#allocation2 + $0xf8] sm:$0xff]
      %v2267 = vld [vmem:[#allocation2 + $0x100] sm:$0xff]
      %v2268 = vld [vmem:[#allocation2 + $0x108] sm:$0xff]
      %v2269 = vld [vmem:[#allocation2 + $0x110] sm:$0xff]
      %v2270 = vld [vmem:[#allocation2 + $0x118] sm:$0xff]
      %s2271 = scalar_lea.vmem %s248, 256
      %v2272 = vld [vmem:[%s2271] sm:$0xf]
      %v2273 = vld [vmem:[%s2271 + $0x4] sm:$0xf]
      %v2274 = vld [vmem:[%s2271 + $0x8] sm:$0xf]
      %v2275 = vld [vmem:[%s2271 + $0xc] sm:$0xf]
      %v2276 = vld [vmem:[%s2271 + $0x10] sm:$0xf]
      %v2277 = vld [vmem:[%s2271 + $0x14] sm:$0xf]
      %v2278 = vld [vmem:[%s2271 + $0x18] sm:$0xf]
      %v2279 = vld [vmem:[%s2271 + $0x1c] sm:$0xf]
      %v2280 = vld [vmem:[%s2271 + $0x20] sm:$0xf]
      %v2281 = vld [vmem:[%s2271 + $0x24] sm:$0xf]
      %v2282 = vld [vmem:[%s2271 + $0x28] sm:$0xf]
      %v2283 = vld [vmem:[%s2271 + $0x2c] sm:$0xf]
      %v2284 = vld [vmem:[%s2271 + $0x30] sm:$0xf]
      %v2285 = vld [vmem:[%s2271 + $0x34] sm:$0xf]
      %v2286 = vld [vmem:[%s2271 + $0x38] sm:$0xf]
      %v2287 = vld [vmem:[%s2271 + $0x3c] sm:$0xf]
      %v2325 = vunpack.c.l.b16 %v2198
      %v2326 = vunpack.c.l.b16 %v2199
      %v2327 = vunpack.c.l.b16 %v2200
      %v2328 = vunpack.c.l.b16 %v2201
      %v2329 = vunpack.c.l.b16 %v2202
      %v2330 = vunpack.c.l.b16 %v2203
      %v2331 = vunpack.c.l.b16 %v2204
      %v2332 = vunpack.c.l.b16 %v2205
      %v2333 = vunpack.c.l.b16 %v2206
      %v2334 = vunpack.c.l.b16 %v2207
      %v2335 = vunpack.c.l.b16 %v2208
      %v2336 = vunpack.c.l.b16 %v2209
      %v2337 = vunpack.c.l.b16 %v2210
      %v2338 = vunpack.c.l.b16 %v2211
      %v2339 = vunpack.c.l.b16 %v2212
      %v2340 = vunpack.c.l.b16 %v2213
      %v2341 = vunpack.c.l.b16 %v2214
      %v2342 = vunpack.c.l.b16 %v2215
      %v2343 = vunpack.c.l.b16 %v2216
      %v2344 = vunpack.c.l.b16 %v2217
      %v2345 = vunpack.c.l.b16 %v2218
      %v2346 = vunpack.c.l.b16 %v2219
      %v2347 = vunpack.c.l.b16 %v2220
      %v2348 = vunpack.c.l.b16 %v2221
      %v2349 = vunpack.c.l.b16 %v2222
      %v2350 = vunpack.c.l.b16 %v2223
      %v2351 = vunpack.c.l.b16 %v2224
      %v2352 = vunpack.c.l.b16 %v2225
      %v2353 = vunpack.c.l.b16 %v2226
      %v2354 = vunpack.c.l.b16 %v2227
      %v2355 = vunpack.c.l.b16 %v2228
      %v2356 = vunpack.c.l.b16 %v2229
      %v2357 = vunpack.c.l.b16 %v2230
      %v2358 = vunpack.c.l.b16 %v2231
      %v2359 = vunpack.c.l.b16 %v2232
      %v2360 = vunpack.c.l.b16 %v2233
      %v2361 = vunpack.c.l.b16 %v2234
      %v2362 = vpack.c.b16 %v2326, %v2325
      %v2363 = vpack.c.b16 %v2328, %v2327
      %v2364 = vpack.c.b16 %v2330, %v2329
      %v2365 = vpack.c.b16 %v2332, %v2331
      %v2366 = vpack.c.b16 %v2334, %v2333
      %v2367 = vpack.c.b16 %v2336, %v2335
      %v2368 = vpack.c.b16 %v2338, %v2337
      %v2369 = vpack.c.b16 %v2340, %v2339
      %v2370 = vpack.c.b16 %v2342, %v2341
      %v2371 = vpack.c.b16 %v2344, %v2343
      %v2372 = vpack.c.b16 %v2346, %v2345
      %v2373 = vpack.c.b16 %v2348, %v2347
      %v2374 = vpack.c.b16 %v2350, %v2349
      %v2375 = vpack.c.b16 %v2352, %v2351
      %v2376 = vpack.c.b16 %v2354, %v2353
      %v2377 = vpack.c.b16 %v2356, %v2355
      %v2378 = vpack.c.b16 %v2358, %v2357
      %v2379 = vpack.c.b16 %v2360, %v2359
      %v2380 = vpack.c.b16 %v2361, %v2361
      %vm2381 = vsmask.f32 6400
      %v2383 = vshrl.u32 %v2362, 16
      %v2385 = vrot.slane %v2383, 1
      %v2386 = vshll.u32 %v2362, 16
      %v2388 = vrot.slane %v2386, 2
      %v2389 = vor.u32 %v2385, %v2388
      %v2391 = vshrl.u32 %v2363, 16
      %v2393 = vrot.slane %v2391, 1
      %v2394 = vshll.u32 %v2363, 16
      %v2396 = vrot.slane %v2394, 2
      %v2397 = vor.u32 %v2393, %v2396
      %v2398 = vsel %vm2381, %v2389, %v2397
      %v2400 = vshrl.u32 %v2364, 16
      %v2402 = vrot.slane %v2400, 1
      %v2403 = vshll.u32 %v2364, 16
      %v2405 = vrot.slane %v2403, 2
      %v2406 = vor.u32 %v2402, %v2405
      %v2407 = vsel %vm2381, %v2397, %v2406
      %v2409 = vshrl.u32 %v2365, 16
      %v2411 = vrot.slane %v2409, 1
      %v2412 = vshll.u32 %v2365, 16
      %v2414 = vrot.slane %v2412, 2
      %v2415 = vor.u32 %v2411, %v2414
      %v2416 = vsel %vm2381, %v2406, %v2415
      %v2418 = vshrl.u32 %v2366, 16
      %v2420 = vrot.slane %v2418, 1
      %v2421 = vshll.u32 %v2366, 16
      %v2423 = vrot.slane %v2421, 2
      %v2424 = vor.u32 %v2420, %v2423
      %v2425 = vsel %vm2381, %v2415, %v2424
      %v2427 = vshrl.u32 %v2367, 16
      %v2429 = vrot.slane %v2427, 1
      %v2430 = vshll.u32 %v2367, 16
      %v2432 = vrot.slane %v2430, 2
      %v2433 = vor.u32 %v2429, %v2432
      %v2434 = vsel %vm2381, %v2424, %v2433
      %v2436 = vshrl.u32 %v2368, 16
      %v2438 = vrot.slane %v2436, 1
      %v2439 = vshll.u32 %v2368, 16
      %v2441 = vrot.slane %v2439, 2
      %v2442 = vor.u32 %v2438, %v2441
      %v2443 = vsel %vm2381, %v2433, %v2442
      %v2445 = vshrl.u32 %v2369, 16
      %v2447 = vrot.slane %v2445, 1
      %v2448 = vshll.u32 %v2369, 16
      %v2450 = vrot.slane %v2448, 2
      %v2451 = vor.u32 %v2447, %v2450
      %v2452 = vsel %vm2381, %v2442, %v2451
      %v2454 = vshrl.u32 %v2370, 16
      %v2456 = vrot.slane %v2454, 1
      %v2457 = vshll.u32 %v2370, 16
      %v2459 = vrot.slane %v2457, 2
      %v2460 = vor.u32 %v2456, %v2459
      %v2461 = vsel %vm2381, %v2451, %v2460
      %v2463 = vshrl.u32 %v2371, 16
      %v2465 = vrot.slane %v2463, 1
      %v2466 = vshll.u32 %v2371, 16
      %v2468 = vrot.slane %v2466, 2
      %v2469 = vor.u32 %v2465, %v2468
      %v2470 = vsel %vm2381, %v2460, %v2469
      %v2472 = vshrl.u32 %v2372, 16
      %v2474 = vrot.slane %v2472, 1
      %v2475 = vshll.u32 %v2372, 16
      %v2477 = vrot.slane %v2475, 2
      %v2478 = vor.u32 %v2474, %v2477
      %v2479 = vsel %vm2381, %v2469, %v2478
      %v2481 = vshrl.u32 %v2373, 16
      %v2483 = vrot.slane %v2481, 1
      %v2484 = vshll.u32 %v2373, 16
      %v2486 = vrot.slane %v2484, 2
      %v2487 = vor.u32 %v2483, %v2486
      %v2488 = vsel %vm2381, %v2478, %v2487
      %v2490 = vshrl.u32 %v2374, 16
      %v2492 = vrot.slane %v2490, 1
      %v2493 = vshll.u32 %v2374, 16
      %v2495 = vrot.slane %v2493, 2
      %v2496 = vor.u32 %v2492, %v2495
      %v2497 = vsel %vm2381, %v2487, %v2496
      %v2499 = vshrl.u32 %v2375, 16
      %v2501 = vrot.slane %v2499, 1
      %v2502 = vshll.u32 %v2375, 16
      %v2504 = vrot.slane %v2502, 2
      %v2505 = vor.u32 %v2501, %v2504
      %v2506 = vsel %vm2381, %v2496, %v2505
      %v2508 = vshrl.u32 %v2376, 16
      %v2510 = vrot.slane %v2508, 1
      %v2511 = vshll.u32 %v2376, 16
      %v2513 = vrot.slane %v2511, 2
      %v2514 = vor.u32 %v2510, %v2513
      %v2515 = vsel %vm2381, %v2505, %v2514
      %v2517 = vshrl.u32 %v2377, 16
      %v2519 = vrot.slane %v2517, 1
      %v2520 = vshll.u32 %v2377, 16
      %v2522 = vrot.slane %v2520, 2
      %v2523 = vor.u32 %v2519, %v2522
      %v2524 = vsel %vm2381, %v2514, %v2523
      %v2526 = vshrl.u32 %v2378, 16
      %v2528 = vrot.slane %v2526, 1
      %v2529 = vshll.u32 %v2378, 16
      %v2531 = vrot.slane %v2529, 2
      %v2532 = vor.u32 %v2528, %v2531
      %v2533 = vsel %vm2381, %v2523, %v2532
      %v2535 = vshrl.u32 %v2379, 16
      %v2537 = vrot.slane %v2535, 1
      %v2538 = vshll.u32 %v2379, 16
      %v2540 = vrot.slane %v2538, 2
      %v2541 = vor.u32 %v2537, %v2540
      %v2542 = vsel %vm2381, %v2532, %v2541
      %v2544 = vshrl.u32 %v2380, 16
      %v2546 = vrot.slane %v2544, 1
      %v2547 = vshll.u32 %v2380, 16
      %v2549 = vrot.slane %v2547, 2
      %v2550 = vor.u32 %v2546, %v2549
      %v2551 = vsel %vm2381, %v2541, %v2550
      %v2586 = vunpack.c.l.b16 %v2272
      %v2587 = vunpack.c.l.b16 %v2273
      %v2588 = vunpack.c.l.b16 %v2274
      %v2589 = vunpack.c.l.b16 %v2275
      %v2590 = vunpack.c.l.b16 %v2276
      %v2591 = vunpack.c.l.b16 %v2277
      %v2592 = vunpack.c.l.b16 %v2278
      %v2593 = vunpack.c.l.b16 %v2279
      %v2594 = vunpack.c.l.b16 %v2280
      %v2595 = vunpack.c.l.b16 %v2281
      %v2596 = vunpack.c.l.b16 %v2282
      %v2597 = vunpack.c.l.b16 %v2283
      %v2598 = vunpack.c.l.b16 %v2284
      %v2599 = vunpack.c.l.b16 %v2285
      %v2600 = vunpack.c.l.b16 %v2286
      %v2601 = vunpack.c.l.b16 %v2287
      %v2602 = vpack.c.b16 %v2587, %v2586
      %v2603 = vpack.c.b16 %v2589, %v2588
      %v2604 = vpack.c.b16 %v2591, %v2590
      %v2605 = vpack.c.b16 %v2593, %v2592
      %v2606 = vpack.c.b16 %v2595, %v2594
      %v2607 = vpack.c.b16 %v2597, %v2596
      %v2608 = vpack.c.b16 %v2599, %v2598
      %v2609 = vpack.c.b16 %v2601, %v2600
      %2618 = vmatpush.bf16.msra.mxu0 %v2609
      %2619 = vmatpush.bf16.msra.mxu0 %v2608
      %2620 = vmatpush.bf16.msra.mxu0 %v2607
      %2621 = vmatpush.bf16.msra.mxu0 %v2606
      %2622 = vmatpush.bf16.msra.mxu0 %v2605
      %2623 = vmatpush.bf16.msra.mxu0 %v2604
      %2624 = vmatpush.bf16.msra.mxu0 %v2603
      %2625 = vmatpush.bf16.msra.mxu0 %v2602
      %2626 = vmatmul.bf16.gmra.mxu0 %v2398
      %v2627 = vpop.f32.mrf.mxu0
      %v2628 = vadd.f32 0.0, %v2627
      %v2629 = vpop.f32.mrf.mxu0
      %v2630 = vadd.f32 0.0, %v2629
      %2631 = vmatmul.bf16.gmra.mxu0 %v2407
      %v2632 = vpop.f32.mrf.mxu0
      %v2633 = vadd.f32 0.0, %v2632
      %v2634 = vpop.f32.mrf.mxu0
      %v2635 = vadd.f32 0.0, %v2634
      %2636 = vmatmul.bf16.gmra.mxu0 %v2416
      %v2637 = vpop.f32.mrf.mxu0
      %v2638 = vadd.f32 0.0, %v2637
      %v2639 = vpop.f32.mrf.mxu0
      %v2640 = vadd.f32 0.0, %v2639
      %2641 = vmatmul.bf16.gmra.mxu0 %v2425
      %v2642 = vpop.f32.mrf.mxu0
      %v2643 = vadd.f32 0.0, %v2642
      %v2644 = vpop.f32.mrf.mxu0
      %v2645 = vadd.f32 0.0, %v2644
      %2646 = vmatmul.bf16.gmra.mxu0 %v2434
      %v2647 = vpop.f32.mrf.mxu0
      %v2648 = vadd.f32 0.0, %v2647
      %v2649 = vpop.f32.mrf.mxu0
      %v2650 = vadd.f32 0.0, %v2649
      %2651 = vmatmul.bf16.gmra.mxu0 %v2443
      %v2652 = vpop.f32.mrf.mxu0
      %v2653 = vadd.f32 0.0, %v2652
      %v2654 = vpop.f32.mrf.mxu0
      %v2655 = vadd.f32 0.0, %v2654
      %2656 = vmatmul.bf16.gmra.mxu0 %v2452
      %v2657 = vpop.f32.mrf.mxu0
      %v2658 = vadd.f32 0.0, %v2657
      %v2659 = vpop.f32.mrf.mxu0
      %v2660 = vadd.f32 0.0, %v2659
      %2661 = vmatmul.bf16.gmra.mxu0 %v2461
      %v2662 = vpop.f32.mrf.mxu0
      %v2663 = vadd.f32 0.0, %v2662
      %v2664 = vpop.f32.mrf.mxu0
      %v2665 = vadd.f32 0.0, %v2664
      %2666 = vmatmul.bf16.gmra.mxu0 %v2470
      %v2667 = vpop.f32.mrf.mxu0
      %v2668 = vadd.f32 0.0, %v2667
      %v2669 = vpop.f32.mrf.mxu0
      %v2670 = vadd.f32 0.0, %v2669
      %2671 = vmatmul.bf16.gmra.mxu0 %v2479
      %v2672 = vpop.f32.mrf.mxu0
      %v2673 = vadd.f32 0.0, %v2672
      %v2674 = vpop.f32.mrf.mxu0
      %v2675 = vadd.f32 0.0, %v2674
      %2676 = vmatmul.bf16.gmra.mxu0 %v2488
      %v2677 = vpop.f32.mrf.mxu0
      %v2678 = vadd.f32 0.0, %v2677
      %v2679 = vpop.f32.mrf.mxu0
      %v2680 = vadd.f32 0.0, %v2679
      %2681 = vmatmul.bf16.gmra.mxu0 %v2497
      %v2682 = vpop.f32.mrf.mxu0
      %v2683 = vadd.f32 0.0, %v2682
      %v2684 = vpop.f32.mrf.mxu0
      %v2685 = vadd.f32 0.0, %v2684
      %2686 = vmatmul.bf16.gmra.mxu0 %v2506
      %v2687 = vpop.f32.mrf.mxu0
      %v2688 = vadd.f32 0.0, %v2687
      %v2689 = vpop.f32.mrf.mxu0
      %v2690 = vadd.f32 0.0, %v2689
      %2691 = vmatmul.bf16.gmra.mxu0 %v2515
      %v2692 = vpop.f32.mrf.mxu0
      %v2693 = vadd.f32 0.0, %v2692
      %v2694 = vpop.f32.mrf.mxu0
      %v2695 = vadd.f32 0.0, %v2694
      %2696 = vmatmul.bf16.gmra.mxu0 %v2524
      %v2697 = vpop.f32.mrf.mxu0
      %v2698 = vadd.f32 0.0, %v2697
      %v2699 = vpop.f32.mrf.mxu0
      %v2700 = vadd.f32 0.0, %v2699
      %2701 = vmatmul.bf16.gmra.mxu0 %v2533
      %v2702 = vpop.f32.mrf.mxu0
      %v2703 = vadd.f32 0.0, %v2702
      %v2704 = vpop.f32.mrf.mxu0
      %v2705 = vadd.f32 0.0, %v2704
      %2706 = vmatmul.bf16.gmra.mxu0 %v2542
      %v2707 = vpop.f32.mrf.mxu0
      %v2708 = vadd.f32 0.0, %v2707
      %v2709 = vpop.f32.mrf.mxu0
      %v2710 = vadd.f32 0.0, %v2709
      %2711 = vmatmul.bf16.gmra.mxu0 %v2551
      %v2712 = vpop.f32.mrf.mxu0
      %v2713 = vadd.f32 0.0, %v2712
      %v2714 = vpop.f32.mrf.mxu0
      %v2715 = vadd.f32 0.0, %v2714
      %2716 = vdwg.mxu0
      %v2717 = vadd.f32 %v2235, %v2628
      %v2718 = vadd.f32 %v2236, %v2630
      %v2719 = vadd.f32 %v2237, %v2633
      %v2720 = vadd.f32 %v2238, %v2635
      %v2721 = vadd.f32 %v2239, %v2638
      %v2722 = vadd.f32 %v2240, %v2640
      %v2723 = vadd.f32 %v2241, %v2643
      %v2724 = vadd.f32 %v2242, %v2645
      %v2725 = vadd.f32 %v2243, %v2648
      %v2726 = vadd.f32 %v2244, %v2650
      %v2727 = vadd.f32 %v2245, %v2653
      %v2728 = vadd.f32 %v2246, %v2655
      %v2729 = vadd.f32 %v2247, %v2658
      %v2730 = vadd.f32 %v2248, %v2660
      %v2731 = vadd.f32 %v2249, %v2663
      %v2732 = vadd.f32 %v2250, %v2665
      %v2733 = vadd.f32 %v2251, %v2668
      %v2734 = vadd.f32 %v2252, %v2670
      %v2735 = vadd.f32 %v2253, %v2673
      %v2736 = vadd.f32 %v2254, %v2675
      %v2737 = vadd.f32 %v2255, %v2678
      %v2738 = vadd.f32 %v2256, %v2680
      %v2739 = vadd.f32 %v2257, %v2683
      %v2740 = vadd.f32 %v2258, %v2685
      %v2741 = vadd.f32 %v2259, %v2688
      %v2742 = vadd.f32 %v2260, %v2690
      %v2743 = vadd.f32 %v2261, %v2693
      %v2744 = vadd.f32 %v2262, %v2695
      %v2745 = vadd.f32 %v2263, %v2698
      %v2746 = vadd.f32 %v2264, %v2700
      %v2747 = vadd.f32 %v2265, %v2703
      %v2748 = vadd.f32 %v2266, %v2705
      %v2749 = vadd.f32 %v2267, %v2708
      %v2750 = vadd.f32 %v2268, %v2710
      %v2751 = vadd.f32 %v2269, %v2713
      %v2752 = vadd.f32 %v2270, %v2715
      %2753 = vst [vmem:[#allocation2] sm:$0xff] %v2717
      %2754 = vst [vmem:[#allocation2 + $0x8] sm:$0xff] %v2718
      %2755 = vst [vmem:[#allocation2 + $0x10] sm:$0xff] %v2719
      %2756 = vst [vmem:[#allocation2 + $0x18] sm:$0xff] %v2720
      %2757 = vst [vmem:[#allocation2 + $0x20] sm:$0xff] %v2721
      %2758 = vst [vmem:[#allocation2 + $0x28] sm:$0xff] %v2722
      %2759 = vst [vmem:[#allocation2 + $0x30] sm:$0xff] %v2723
      %2760 = vst [vmem:[#allocation2 + $0x38] sm:$0xff] %v2724
      %2761 = vst [vmem:[#allocation2 + $0x40] sm:$0xff] %v2725
      %2762 = vst [vmem:[#allocation2 + $0x48] sm:$0xff] %v2726
      %2763 = vst [vmem:[#allocation2 + $0x50] sm:$0xff] %v2727
      %2764 = vst [vmem:[#allocation2 + $0x58] sm:$0xff] %v2728
      %2765 = vst [vmem:[#allocation2 + $0x60] sm:$0xff] %v2729
      %2766 = vst [vmem:[#allocation2 + $0x68] sm:$0xff] %v2730
      %2767 = vst [vmem:[#allocation2 + $0x70] sm:$0xff] %v2731
      %2768 = vst [vmem:[#allocation2 + $0x78] sm:$0xff] %v2732
      %2769 = vst [vmem:[#allocation2 + $0x80] sm:$0xff] %v2733
      %2770 = vst [vmem:[#allocation2 + $0x88] sm:$0xff] %v2734
      %2771 = vst [vmem:[#allocation2 + $0x90] sm:$0xff] %v2735
      %2772 = vst [vmem:[#allocation2 + $0x98] sm:$0xff] %v2736
      %2773 = vst [vmem:[#allocation2 + $0xa0] sm:$0xff] %v2737
      %2774 = vst [vmem:[#allocation2 + $0xa8] sm:$0xff] %v2738
      %2775 = vst [vmem:[#allocation2 + $0xb0] sm:$0xff] %v2739
      %2776 = vst [vmem:[#allocation2 + $0xb8] sm:$0xff] %v2740
      %2777 = vst [vmem:[#allocation2 + $0xc0] sm:$0xff] %v2741
      %2778 = vst [vmem:[#allocation2 + $0xc8] sm:$0xff] %v2742
      %2779 = vst [vmem:[#allocation2 + $0xd0] sm:$0xff] %v2743
      %2780 = vst [vmem:[#allocation2 + $0xd8] sm:$0xff] %v2744
      %2781 = vst [vmem:[#allocation2 + $0xe0] sm:$0xff] %v2745
      %2782 = vst [vmem:[#allocation2 + $0xe8] sm:$0xff] %v2746
      %2783 = vst [vmem:[#allocation2 + $0xf0] sm:$0xff] %v2747
      %2784 = vst [vmem:[#allocation2 + $0xf8] sm:$0xff] %v2748
      %2785 = vst [vmem:[#allocation2 + $0x100] sm:$0xff] %v2749
      %2786 = vst [vmem:[#allocation2 + $0x108] sm:$0xff] %v2750
      %2787 = vst [vmem:[#allocation2 + $0x110] sm:$0xff] %v2751
      %2788 = vst [vmem:[#allocation2 + $0x118] sm:$0xff] %v2752
      %v2789 = vld [vmem:[%s244 + $0x8] sm:$0xc]
      %v2790 = vld [vmem:[%s244 + $0xc] sm:$0xf]
      %v2791 = vld [vmem:[%s244 + $0x10] sm:$0xf]
      %v2792 = vld [vmem:[%s244 + $0x14] sm:$0xf]
      %v2793 = vld [vmem:[%s244 + $0x18] sm:$0xf]
      %v2794 = vld [vmem:[%s244 + $0x1c] sm:$0xf]
      %v2795 = vld [vmem:[%s244 + $0x20] sm:$0xf]
      %v2796 = vld [vmem:[%s244 + $0x24] sm:$0xf]
      %v2797 = vld [vmem:[%s244 + $0x28] sm:$0xf]
      %v2798 = vld [vmem:[%s244 + $0x2c] sm:$0xf]
      %v2799 = vld [vmem:[%s244 + $0x30] sm:$0xf]
      %v2800 = vld [vmem:[%s244 + $0x34] sm:$0xf]
      %v2801 = vld [vmem:[%s244 + $0x38] sm:$0xf]
      %v2802 = vld [vmem:[%s244 + $0x3c] sm:$0xf]
      %v2803 = vld [vmem:[%s244 + $0x40] sm:$0xf]
      %v2804 = vld [vmem:[%s244 + $0x44] sm:$0xf]
      %v2805 = vld [vmem:[%s244 + $0x48] sm:$0xf]
      %v2806 = vld [vmem:[%s244 + $0x4c] sm:$0xf]
      %v2807 = vld [vmem:[%s244 + $0x50] sm:$0xf]
      %v2808 = vld [vmem:[%s244 + $0x54] sm:$0xf]
      %v2809 = vld [vmem:[%s244 + $0x58] sm:$0xf]
      %v2810 = vld [vmem:[%s244 + $0x5c] sm:$0xf]
      %v2811 = vld [vmem:[%s244 + $0x60] sm:$0xf]
      %v2812 = vld [vmem:[%s244 + $0x64] sm:$0xf]
      %v2813 = vld [vmem:[%s244 + $0x68] sm:$0xf]
      %v2814 = vld [vmem:[%s244 + $0x6c] sm:$0xf]
      %v2815 = vld [vmem:[%s244 + $0x70] sm:$0xf]
      %v2816 = vld [vmem:[%s244 + $0x74] sm:$0xf]
      %v2817 = vld [vmem:[%s244 + $0x78] sm:$0xf]
      %v2818 = vld [vmem:[%s244 + $0x7c] sm:$0xf]
      %v2819 = vld [vmem:[%s244 + $0x80] sm:$0xf]
      %v2820 = vld [vmem:[%s244 + $0x84] sm:$0xf]
      %v2821 = vld [vmem:[%s244 + $0x88] sm:$0xf]
      %v2822 = vld [vmem:[%s244 + $0x8c] sm:$0xf]
      %v2823 = vld [vmem:[%s244 + $0x90] sm:$0xf]
      %v2824 = vld [vmem:[%s244 + $0x94] sm:$0xf]
      %v2825 = vld [vmem:[%s244 + $0x98] sm:$0x3]
      %v2826 = vld [vmem:[#allocation2] sm:$0xff]
      %v2827 = vld [vmem:[#allocation2 + $0x8] sm:$0xff]
      %v2828 = vld [vmem:[#allocation2 + $0x10] sm:$0xff]
      %v2829 = vld [vmem:[#allocation2 + $0x18] sm:$0xff]
      %v2830 = vld [vmem:[#allocation2 + $0x20] sm:$0xff]
      %v2831 = vld [vmem:[#allocation2 + $0x28] sm:$0xff]
      %v2832 = vld [vmem:[#allocation2 + $0x30] sm:$0xff]
      %v2833 = vld [vmem:[#allocation2 + $0x38] sm:$0xff]
      %v2834 = vld [vmem:[#allocation2 + $0x40] sm:$0xff]
      %v2835 = vld [vmem:[#allocation2 + $0x48] sm:$0xff]
      %v2836 = vld [vmem:[#allocation2 + $0x50] sm:$0xff]
      %v2837 = vld [vmem:[#allocation2 + $0x58] sm:$0xff]
      %v2838 = vld [vmem:[#allocation2 + $0x60] sm:$0xff]
      %v2839 = vld [vmem:[#allocation2 + $0x68] sm:$0xff]
      %v2840 = vld [vmem:[#allocation2 + $0x70] sm:$0xff]
      %v2841 = vld [vmem:[#allocation2 + $0x78] sm:$0xff]
      %v2842 = vld [vmem:[#allocation2 + $0x80] sm:$0xff]
      %v2843 = vld [vmem:[#allocation2 + $0x88] sm:$0xff]
      %v2844 = vld [vmem:[#allocation2 + $0x90] sm:$0xff]
      %v2845 = vld [vmem:[#allocation2 + $0x98] sm:$0xff]
      %v2846 = vld [vmem:[#allocation2 + $0xa0] sm:$0xff]
      %v2847 = vld [vmem:[#allocation2 + $0xa8] sm:$0xff]
      %v2848 = vld [vmem:[#allocation2 + $0xb0] sm:$0xff]
      %v2849 = vld [vmem:[#allocation2 + $0xb8] sm:$0xff]
      %v2850 = vld [vmem:[#allocation2 + $0xc0] sm:$0xff]
      %v2851 = vld [vmem:[#allocation2 + $0xc8] sm:$0xff]
      %v2852 = vld [vmem:[#allocation2 + $0xd0] sm:$0xff]
      %v2853 = vld [vmem:[#allocation2 + $0xd8] sm:$0xff]
      %v2854 = vld [vmem:[#allocation2 + $0xe0] sm:$0xff]
      %v2855 = vld [vmem:[#allocation2 + $0xe8] sm:$0xff]
      %v2856 = vld [vmem:[#allocation2 + $0xf0] sm:$0xff]
      %v2857 = vld [vmem:[#allocation2 + $0xf8] sm:$0xff]
      %v2858 = vld [vmem:[#allocation2 + $0x100] sm:$0xff]
      %v2859 = vld [vmem:[#allocation2 + $0x108] sm:$0xff]
      %v2860 = vld [vmem:[#allocation2 + $0x110] sm:$0xff]
      %v2861 = vld [vmem:[#allocation2 + $0x118] sm:$0xff]
      %s2862 = scalar_lea.vmem %s248, 320
      %v2863 = vld [vmem:[%s2862] sm:$0xf]
      %v2864 = vld [vmem:[%s2862 + $0x4] sm:$0xf]
      %v2865 = vld [vmem:[%s2862 + $0x8] sm:$0xf]
      %v2866 = vld [vmem:[%s2862 + $0xc] sm:$0xf]
      %v2867 = vld [vmem:[%s2862 + $0x10] sm:$0xf]
      %v2868 = vld [vmem:[%s2862 + $0x14] sm:$0xf]
      %v2869 = vld [vmem:[%s2862 + $0x18] sm:$0xf]
      %v2870 = vld [vmem:[%s2862 + $0x1c] sm:$0xf]
      %v2871 = vld [vmem:[%s2862 + $0x20] sm:$0xf]
      %v2872 = vld [vmem:[%s2862 + $0x24] sm:$0xf]
      %v2873 = vld [vmem:[%s2862 + $0x28] sm:$0xf]
      %v2874 = vld [vmem:[%s2862 + $0x2c] sm:$0xf]
      %v2875 = vld [vmem:[%s2862 + $0x30] sm:$0xf]
      %v2876 = vld [vmem:[%s2862 + $0x34] sm:$0xf]
      %v2877 = vld [vmem:[%s2862 + $0x38] sm:$0xf]
      %v2878 = vld [vmem:[%s2862 + $0x3c] sm:$0xf]
      %v2916 = vunpack.c.l.b16 %v2789
      %v2917 = vunpack.c.l.b16 %v2790
      %v2918 = vunpack.c.l.b16 %v2791
      %v2919 = vunpack.c.l.b16 %v2792
      %v2920 = vunpack.c.l.b16 %v2793
      %v2921 = vunpack.c.l.b16 %v2794
      %v2922 = vunpack.c.l.b16 %v2795
      %v2923 = vunpack.c.l.b16 %v2796
      %v2924 = vunpack.c.l.b16 %v2797
      %v2925 = vunpack.c.l.b16 %v2798
      %v2926 = vunpack.c.l.b16 %v2799
      %v2927 = vunpack.c.l.b16 %v2800
      %v2928 = vunpack.c.l.b16 %v2801
      %v2929 = vunpack.c.l.b16 %v2802
      %v2930 = vunpack.c.l.b16 %v2803
      %v2931 = vunpack.c.l.b16 %v2804
      %v2932 = vunpack.c.l.b16 %v2805
      %v2933 = vunpack.c.l.b16 %v2806
      %v2934 = vunpack.c.l.b16 %v2807
      %v2935 = vunpack.c.l.b16 %v2808
      %v2936 = vunpack.c.l.b16 %v2809
      %v2937 = vunpack.c.l.b16 %v2810
      %v2938 = vunpack.c.l.b16 %v2811
      %v2939 = vunpack.c.l.b16 %v2812
      %v2940 = vunpack.c.l.b16 %v2813
      %v2941 = vunpack.c.l.b16 %v2814
      %v2942 = vunpack.c.l.b16 %v2815
      %v2943 = vunpack.c.l.b16 %v2816
      %v2944 = vunpack.c.l.b16 %v2817
      %v2945 = vunpack.c.l.b16 %v2818
      %v2946 = vunpack.c.l.b16 %v2819
      %v2947 = vunpack.c.l.b16 %v2820
      %v2948 = vunpack.c.l.b16 %v2821
      %v2949 = vunpack.c.l.b16 %v2822
      %v2950 = vunpack.c.l.b16 %v2823
      %v2951 = vunpack.c.l.b16 %v2824
      %v2952 = vunpack.c.l.b16 %v2825
      %v2953 = vpack.c.b16 %v2917, %v2916
      %v2954 = vpack.c.b16 %v2919, %v2918
      %v2955 = vpack.c.b16 %v2921, %v2920
      %v2956 = vpack.c.b16 %v2923, %v2922
      %v2957 = vpack.c.b16 %v2925, %v2924
      %v2958 = vpack.c.b16 %v2927, %v2926
      %v2959 = vpack.c.b16 %v2929, %v2928
      %v2960 = vpack.c.b16 %v2931, %v2930
      %v2961 = vpack.c.b16 %v2933, %v2932
      %v2962 = vpack.c.b16 %v2935, %v2934
      %v2963 = vpack.c.b16 %v2937, %v2936
      %v2964 = vpack.c.b16 %v2939, %v2938
      %v2965 = vpack.c.b16 %v2941, %v2940
      %v2966 = vpack.c.b16 %v2943, %v2942
      %v2967 = vpack.c.b16 %v2945, %v2944
      %v2968 = vpack.c.b16 %v2947, %v2946
      %v2969 = vpack.c.b16 %v2949, %v2948
      %v2970 = vpack.c.b16 %v2951, %v2950
      %v2971 = vpack.c.b16 %v2952, %v2952
      %vm2972 = vcmask 1045504
      %v2973 = vrot.slane %v2953, 2
      %v2974 = vrot.slane %v2954, 2
      %v2975 = vsel %vm2972, %v2973, %v2974
      %v2976 = vrot.slane %v2955, 2
      %v2977 = vsel %vm2972, %v2974, %v2976
      %v2978 = vrot.slane %v2956, 2
      %v2979 = vsel %vm2972, %v2976, %v2978
      %v2980 = vrot.slane %v2957, 2
      %v2981 = vsel %vm2972, %v2978, %v2980
      %v2982 = vrot.slane %v2958, 2
      %v2983 = vsel %vm2972, %v2980, %v2982
      %v2984 = vrot.slane %v2959, 2
      %v2985 = vsel %vm2972, %v2982, %v2984
      %v2986 = vrot.slane %v2960, 2
      %v2987 = vsel %vm2972, %v2984, %v2986
      %v2988 = vrot.slane %v2961, 2
      %v2989 = vsel %vm2972, %v2986, %v2988
      %v2990 = vrot.slane %v2962, 2
      %v2991 = vsel %vm2972, %v2988, %v2990
      %v2992 = vrot.slane %v2963, 2
      %v2993 = vsel %vm2972, %v2990, %v2992
      %v2994 = vrot.slane %v2964, 2
      %v2995 = vsel %vm2972, %v2992, %v2994
      %v2996 = vrot.slane %v2965, 2
      %v2997 = vsel %vm2972, %v2994, %v2996
      %v2998 = vrot.slane %v2966, 2
      %v2999 = vsel %vm2972, %v2996, %v2998
      %v3000 = vrot.slane %v2967, 2
      %v3001 = vsel %vm2972, %v2998, %v3000
      %v3002 = vrot.slane %v2968, 2
      %v3003 = vsel %vm2972, %v3000, %v3002
      %v3004 = vrot.slane %v2969, 2
      %v3005 = vsel %vm2972, %v3002, %v3004
      %v3006 = vrot.slane %v2970, 2
      %v3007 = vsel %vm2972, %v3004, %v3006
      %v3008 = vrot.slane %v2971, 2
      %v3009 = vsel %vm2972, %v3006, %v3008
      %v3044 = vunpack.c.l.b16 %v2863
      %v3045 = vunpack.c.l.b16 %v2864
      %v3046 = vunpack.c.l.b16 %v2865
      %v3047 = vunpack.c.l.b16 %v2866
      %v3048 = vunpack.c.l.b16 %v2867
      %v3049 = vunpack.c.l.b16 %v2868
      %v3050 = vunpack.c.l.b16 %v2869
      %v3051 = vunpack.c.l.b16 %v2870
      %v3052 = vunpack.c.l.b16 %v2871
      %v3053 = vunpack.c.l.b16 %v2872
      %v3054 = vunpack.c.l.b16 %v2873
      %v3055 = vunpack.c.l.b16 %v2874
      %v3056 = vunpack.c.l.b16 %v2875
      %v3057 = vunpack.c.l.b16 %v2876
      %v3058 = vunpack.c.l.b16 %v2877
      %v3059 = vunpack.c.l.b16 %v2878
      %v3060 = vpack.c.b16 %v3045, %v3044
      %v3061 = vpack.c.b16 %v3047, %v3046
      %v3062 = vpack.c.b16 %v3049, %v3048
      %v3063 = vpack.c.b16 %v3051, %v3050
      %v3064 = vpack.c.b16 %v3053, %v3052
      %v3065 = vpack.c.b16 %v3055, %v3054
      %v3066 = vpack.c.b16 %v3057, %v3056
      %v3067 = vpack.c.b16 %v3059, %v3058
      %3076 = vmatpush.bf16.msra.mxu0 %v3067
      %3077 = vmatpush.bf16.msra.mxu0 %v3066
      %3078 = vmatpush.bf16.msra.mxu0 %v3065
      %3079 = vmatpush.bf16.msra.mxu0 %v3064
      %3080 = vmatpush.bf16.msra.mxu0 %v3063
      %3081 = vmatpush.bf16.msra.mxu0 %v3062
      %3082 = vmatpush.bf16.msra.mxu0 %v3061
      %3083 = vmatpush.bf16.msra.mxu0 %v3060
      %3084 = vmatmul.bf16.gmra.mxu0 %v2975
      %v3085 = vpop.f32.mrf.mxu0
      %v3086 = vadd.f32 0.0, %v3085
      %v3087 = vpop.f32.mrf.mxu0
      %v3088 = vadd.f32 0.0, %v3087
      %3089 = vmatmul.bf16.gmra.mxu0 %v2977
      %v3090 = vpop.f32.mrf.mxu0
      %v3091 = vadd.f32 0.0, %v3090
      %v3092 = vpop.f32.mrf.mxu0
      %v3093 = vadd.f32 0.0, %v3092
      %3094 = vmatmul.bf16.gmra.mxu0 %v2979
      %v3095 = vpop.f32.mrf.mxu0
      %v3096 = vadd.f32 0.0, %v3095
      %v3097 = vpop.f32.mrf.mxu0
      %v3098 = vadd.f32 0.0, %v3097
      %3099 = vmatmul.bf16.gmra.mxu0 %v2981
      %v3100 = vpop.f32.mrf.mxu0
      %v3101 = vadd.f32 0.0, %v3100
      %v3102 = vpop.f32.mrf.mxu0
      %v3103 = vadd.f32 0.0, %v3102
      %3104 = vmatmul.bf16.gmra.mxu0 %v2983
      %v3105 = vpop.f32.mrf.mxu0
      %v3106 = vadd.f32 0.0, %v3105
      %v3107 = vpop.f32.mrf.mxu0
      %v3108 = vadd.f32 0.0, %v3107
      %3109 = vmatmul.bf16.gmra.mxu0 %v2985
      %v3110 = vpop.f32.mrf.mxu0
      %v3111 = vadd.f32 0.0, %v3110
      %v3112 = vpop.f32.mrf.mxu0
      %v3113 = vadd.f32 0.0, %v3112
      %3114 = vmatmul.bf16.gmra.mxu0 %v2987
      %v3115 = vpop.f32.mrf.mxu0
      %v3116 = vadd.f32 0.0, %v3115
      %v3117 = vpop.f32.mrf.mxu0
      %v3118 = vadd.f32 0.0, %v3117
      %3119 = vmatmul.bf16.gmra.mxu0 %v2989
      %v3120 = vpop.f32.mrf.mxu0
      %v3121 = vadd.f32 0.0, %v3120
      %v3122 = vpop.f32.mrf.mxu0
      %v3123 = vadd.f32 0.0, %v3122
      %3124 = vmatmul.bf16.gmra.mxu0 %v2991
      %v3125 = vpop.f32.mrf.mxu0
      %v3126 = vadd.f32 0.0, %v3125
      %v3127 = vpop.f32.mrf.mxu0
      %v3128 = vadd.f32 0.0, %v3127
      %3129 = vmatmul.bf16.gmra.mxu0 %v2993
      %v3130 = vpop.f32.mrf.mxu0
      %v3131 = vadd.f32 0.0, %v3130
      %v3132 = vpop.f32.mrf.mxu0
      %v3133 = vadd.f32 0.0, %v3132
      %3134 = vmatmul.bf16.gmra.mxu0 %v2995
      %v3135 = vpop.f32.mrf.mxu0
      %v3136 = vadd.f32 0.0, %v3135
      %v3137 = vpop.f32.mrf.mxu0
      %v3138 = vadd.f32 0.0, %v3137
      %3139 = vmatmul.bf16.gmra.mxu0 %v2997
      %v3140 = vpop.f32.mrf.mxu0
      %v3141 = vadd.f32 0.0, %v3140
      %v3142 = vpop.f32.mrf.mxu0
      %v3143 = vadd.f32 0.0, %v3142
      %3144 = vmatmul.bf16.gmra.mxu0 %v2999
      %v3145 = vpop.f32.mrf.mxu0
      %v3146 = vadd.f32 0.0, %v3145
      %v3147 = vpop.f32.mrf.mxu0
      %v3148 = vadd.f32 0.0, %v3147
      %3149 = vmatmul.bf16.gmra.mxu0 %v3001
      %v3150 = vpop.f32.mrf.mxu0
      %v3151 = vadd.f32 0.0, %v3150
      %v3152 = vpop.f32.mrf.mxu0
      %v3153 = vadd.f32 0.0, %v3152
      %3154 = vmatmul.bf16.gmra.mxu0 %v3003
      %v3155 = vpop.f32.mrf.mxu0
      %v3156 = vadd.f32 0.0, %v3155
      %v3157 = vpop.f32.mrf.mxu0
      %v3158 = vadd.f32 0.0, %v3157
      %3159 = vmatmul.bf16.gmra.mxu0 %v3005
      %v3160 = vpop.f32.mrf.mxu0
      %v3161 = vadd.f32 0.0, %v3160
      %v3162 = vpop.f32.mrf.mxu0
      %v3163 = vadd.f32 0.0, %v3162
      %3164 = vmatmul.bf16.gmra.mxu0 %v3007
      %v3165 = vpop.f32.mrf.mxu0
      %v3166 = vadd.f32 0.0, %v3165
      %v3167 = vpop.f32.mrf.mxu0
      %v3168 = vadd.f32 0.0, %v3167
      %3169 = vmatmul.bf16.gmra.mxu0 %v3009
      %v3170 = vpop.f32.mrf.mxu0
      %v3171 = vadd.f32 0.0, %v3170
      %v3172 = vpop.f32.mrf.mxu0
      %v3173 = vadd.f32 0.0, %v3172
      %3174 = vdwg.mxu0
      %v3175 = vadd.f32 %v2826, %v3086
      %v3176 = vadd.f32 %v2827, %v3088
      %v3177 = vadd.f32 %v2828, %v3091
      %v3178 = vadd.f32 %v2829, %v3093
      %v3179 = vadd.f32 %v2830, %v3096
      %v3180 = vadd.f32 %v2831, %v3098
      %v3181 = vadd.f32 %v2832, %v3101
      %v3182 = vadd.f32 %v2833, %v3103
      %v3183 = vadd.f32 %v2834, %v3106
      %v3184 = vadd.f32 %v2835, %v3108
      %v3185 = vadd.f32 %v2836, %v3111
      %v3186 = vadd.f32 %v2837, %v3113
      %v3187 = vadd.f32 %v2838, %v3116
      %v3188 = vadd.f32 %v2839, %v3118
      %v3189 = vadd.f32 %v2840, %v3121
      %v3190 = vadd.f32 %v2841, %v3123
      %v3191 = vadd.f32 %v2842, %v3126
      %v3192 = vadd.f32 %v2843, %v3128
      %v3193 = vadd.f32 %v2844, %v3131
      %v3194 = vadd.f32 %v2845, %v3133
      %v3195 = vadd.f32 %v2846, %v3136
      %v3196 = vadd.f32 %v2847, %v3138
      %v3197 = vadd.f32 %v2848, %v3141
      %v3198 = vadd.f32 %v2849, %v3143
      %v3199 = vadd.f32 %v2850, %v3146
      %v3200 = vadd.f32 %v2851, %v3148
      %v3201 = vadd.f32 %v2852, %v3151
      %v3202 = vadd.f32 %v2853, %v3153
      %v3203 = vadd.f32 %v2854, %v3156
      %v3204 = vadd.f32 %v2855, %v3158
      %v3205 = vadd.f32 %v2856, %v3161
      %v3206 = vadd.f32 %v2857, %v3163
      %v3207 = vadd.f32 %v2858, %v3166
      %v3208 = vadd.f32 %v2859, %v3168
      %v3209 = vadd.f32 %v2860, %v3171
      %v3210 = vadd.f32 %v2861, %v3173
      %3211 = vst [vmem:[#allocation2] sm:$0xff] %v3175
      %3212 = vst [vmem:[#allocation2 + $0x8] sm:$0xff] %v3176
      %3213 = vst [vmem:[#allocation2 + $0x10] sm:$0xff] %v3177
      %3214 = vst [vmem:[#allocation2 + $0x18] sm:$0xff] %v3178
      %3215 = vst [vmem:[#allocation2 + $0x20] sm:$0xff] %v3179
      %3216 = vst [vmem:[#allocation2 + $0x28] sm:$0xff] %v3180
      %3217 = vst [vmem:[#allocation2 + $0x30] sm:$0xff] %v3181
      %3218 = vst [vmem:[#allocation2 + $0x38] sm:$0xff] %v3182
      %3219 = vst [vmem:[#allocation2 + $0x40] sm:$0xff] %v3183
      %3220 = vst [vmem:[#allocation2 + $0x48] sm:$0xff] %v3184
      %3221 = vst [vmem:[#allocation2 + $0x50] sm:$0xff] %v3185
      %3222 = vst [vmem:[#allocation2 + $0x58] sm:$0xff] %v3186
      %3223 = vst [vmem:[#allocation2 + $0x60] sm:$0xff] %v3187
      %3224 = vst [vmem:[#allocation2 + $0x68] sm:$0xff] %v3188
      %3225 = vst [vmem:[#allocation2 + $0x70] sm:$0xff] %v3189
      %3226 = vst [vmem:[#allocation2 + $0x78] sm:$0xff] %v3190
      %3227 = vst [vmem:[#allocation2 + $0x80] sm:$0xff] %v3191
      %3228 = vst [vmem:[#allocation2 + $0x88] sm:$0xff] %v3192
      %3229 = vst [vmem:[#allocation2 + $0x90] sm:$0xff] %v3193
      %3230 = vst [vmem:[#allocation2 + $0x98] sm:$0xff] %v3194
      %3231 = vst [vmem:[#allocation2 + $0xa0] sm:$0xff] %v3195
      %3232 = vst [vmem:[#allocation2 + $0xa8] sm:$0xff] %v3196
      %3233 = vst [vmem:[#allocation2 + $0xb0] sm:$0xff] %v3197
      %3234 = vst [vmem:[#allocation2 + $0xb8] sm:$0xff] %v3198
      %3235 = vst [vmem:[#allocation2 + $0xc0] sm:$0xff] %v3199
      %3236 = vst [vmem:[#allocation2 + $0xc8] sm:$0xff] %v3200
      %3237 = vst [vmem:[#allocation2 + $0xd0] sm:$0xff] %v3201
      %3238 = vst [vmem:[#allocation2 + $0xd8] sm:$0xff] %v3202
      %3239 = vst [vmem:[#allocation2 + $0xe0] sm:$0xff] %v3203
      %3240 = vst [vmem:[#allocation2 + $0xe8] sm:$0xff] %v3204
      %3241 = vst [vmem:[#allocation2 + $0xf0] sm:$0xff] %v3205
      %3242 = vst [vmem:[#allocation2 + $0xf8] sm:$0xff] %v3206
      %3243 = vst [vmem:[#allocation2 + $0x100] sm:$0xff] %v3207
      %3244 = vst [vmem:[#allocation2 + $0x108] sm:$0xff] %v3208
      %3245 = vst [vmem:[#allocation2 + $0x110] sm:$0xff] %v3209
      %3246 = vst [vmem:[#allocation2 + $0x118] sm:$0xff] %v3210
      %v3247 = vld [vmem:[%s244 + $0x10] sm:$0xc]
      %v3248 = vld [vmem:[%s244 + $0x14] sm:$0xf]
      %v3249 = vld [vmem:[%s244 + $0x18] sm:$0xf]
      %v3250 = vld [vmem:[%s244 + $0x1c] sm:$0xf]
      %v3251 = vld [vmem:[%s244 + $0x20] sm:$0xf]
      %v3252 = vld [vmem:[%s244 + $0x24] sm:$0xf]
      %v3253 = vld [vmem:[%s244 + $0x28] sm:$0xf]
      %v3254 = vld [vmem:[%s244 + $0x2c] sm:$0xf]
      %v3255 = vld [vmem:[%s244 + $0x30] sm:$0xf]
      %v3256 = vld [vmem:[%s244 + $0x34] sm:$0xf]
      %v3257 = vld [vmem:[%s244 + $0x38] sm:$0xf]
      %v3258 = vld [vmem:[%s244 + $0x3c] sm:$0xf]
      %v3259 = vld [vmem:[%s244 + $0x40] sm:$0xf]
      %v3260 = vld [vmem:[%s244 + $0x44] sm:$0xf]
      %v3261 = vld [vmem:[%s244 + $0x48] sm:$0xf]
      %v3262 = vld [vmem:[%s244 + $0x4c] sm:$0xf]
      %v3263 = vld [vmem:[%s244 + $0x50] sm:$0xf]
      %v3264 = vld [vmem:[%s244 + $0x54] sm:$0xf]
      %v3265 = vld [vmem:[%s244 + $0x58] sm:$0xf]
      %v3266 = vld [vmem:[%s244 + $0x5c] sm:$0xf]
      %v3267 = vld [vmem:[%s244 + $0x60] sm:$0xf]
      %v3268 = vld [vmem:[%s244 + $0x64] sm:$0xf]
      %v3269 = vld [vmem:[%s244 + $0x68] sm:$0xf]
      %v3270 = vld [vmem:[%s244 + $0x6c] sm:$0xf]
      %v3271 = vld [vmem:[%s244 + $0x70] sm:$0xf]
      %v3272 = vld [vmem:[%s244 + $0x74] sm:$0xf]
      %v3273 = vld [vmem:[%s244 + $0x78] sm:$0xf]
      %v3274 = vld [vmem:[%s244 + $0x7c] sm:$0xf]
      %v3275 = vld [vmem:[%s244 + $0x80] sm:$0xf]
      %v3276 = vld [vmem:[%s244 + $0x84] sm:$0xf]
      %v3277 = vld [vmem:[%s244 + $0x88] sm:$0xf]
      %v3278 = vld [vmem:[%s244 + $0x8c] sm:$0xf]
      %v3279 = vld [vmem:[%s244 + $0x90] sm:$0xf]
      %v3280 = vld [vmem:[%s244 + $0x94] sm:$0xf]
      %v3281 = vld [vmem:[%s244 + $0x98] sm:$0xf]
      %v3282 = vld [vmem:[%s244 + $0x9c] sm:$0xf]
      %v3283 = vld [vmem:[%s244 + $0xa0] sm:$0x3]
      %v3284 = vld [vmem:[#allocation2] sm:$0xff]
      %v3285 = vld [vmem:[#allocation2 + $0x8] sm:$0xff]
      %v3286 = vld [vmem:[#allocation2 + $0x10] sm:$0xff]
      %v3287 = vld [vmem:[#allocation2 + $0x18] sm:$0xff]
      %v3288 = vld [vmem:[#allocation2 + $0x20] sm:$0xff]
      %v3289 = vld [vmem:[#allocation2 + $0x28] sm:$0xff]
      %v3290 = vld [vmem:[#allocation2 + $0x30] sm:$0xff]
      %v3291 = vld [vmem:[#allocation2 + $0x38] sm:$0xff]
      %v3292 = vld [vmem:[#allocation2 + $0x40] sm:$0xff]
      %v3293 = vld [vmem:[#allocation2 + $0x48] sm:$0xff]
      %v3294 = vld [vmem:[#allocation2 + $0x50] sm:$0xff]
      %v3295 = vld [vmem:[#allocation2 + $0x58] sm:$0xff]
      %v3296 = vld [vmem:[#allocation2 + $0x60] sm:$0xff]
      %v3297 = vld [vmem:[#allocation2 + $0x68] sm:$0xff]
      %v3298 = vld [vmem:[#allocation2 + $0x70] sm:$0xff]
      %v3299 = vld [vmem:[#allocation2 + $0x78] sm:$0xff]
      %v3300 = vld [vmem:[#allocation2 + $0x80] sm:$0xff]
      %v3301 = vld [vmem:[#allocation2 + $0x88] sm:$0xff]
      %v3302 = vld [vmem:[#allocation2 + $0x90] sm:$0xff]
      %v3303 = vld [vmem:[#allocation2 + $0x98] sm:$0xff]
      %v3304 = vld [vmem:[#allocation2 + $0xa0] sm:$0xff]
      %v3305 = vld [vmem:[#allocation2 + $0xa8] sm:$0xff]
      %v3306 = vld [vmem:[#allocation2 + $0xb0] sm:$0xff]
      %v3307 = vld [vmem:[#allocation2 + $0xb8] sm:$0xff]
      %v3308 = vld [vmem:[#allocation2 + $0xc0] sm:$0xff]
      %v3309 = vld [vmem:[#allocation2 + $0xc8] sm:$0xff]
      %v3310 = vld [vmem:[#allocation2 + $0xd0] sm:$0xff]
      %v3311 = vld [vmem:[#allocation2 + $0xd8] sm:$0xff]
      %v3312 = vld [vmem:[#allocation2 + $0xe0] sm:$0xff]
      %v3313 = vld [vmem:[#allocation2 + $0xe8] sm:$0xff]
      %v3314 = vld [vmem:[#allocation2 + $0xf0] sm:$0xff]
      %v3315 = vld [vmem:[#allocation2 + $0xf8] sm:$0xff]
      %v3316 = vld [vmem:[#allocation2 + $0x100] sm:$0xff]
      %v3317 = vld [vmem:[#allocation2 + $0x108] sm:$0xff]
      %v3318 = vld [vmem:[#allocation2 + $0x110] sm:$0xff]
      %v3319 = vld [vmem:[#allocation2 + $0x118] sm:$0xff]
      %s3320 = scalar_lea.vmem %s248, 384
      %v3321 = vld [vmem:[%s3320] sm:$0xf]
      %v3322 = vld [vmem:[%s3320 + $0x4] sm:$0xf]
      %v3323 = vld [vmem:[%s3320 + $0x8] sm:$0xf]
      %v3324 = vld [vmem:[%s3320 + $0xc] sm:$0xf]
      %v3325 = vld [vmem:[%s3320 + $0x10] sm:$0xf]
      %v3326 = vld [vmem:[%s3320 + $0x14] sm:$0xf]
      %v3327 = vld [vmem:[%s3320 + $0x18] sm:$0xf]
      %v3328 = vld [vmem:[%s3320 + $0x1c] sm:$0xf]
      %v3329 = vld [vmem:[%s3320 + $0x20] sm:$0xf]
      %v3330 = vld [vmem:[%s3320 + $0x24] sm:$0xf]
      %v3331 = vld [vmem:[%s3320 + $0x28] sm:$0xf]
      %v3332 = vld [vmem:[%s3320 + $0x2c] sm:$0xf]
      %v3333 = vld [vmem:[%s3320 + $0x30] sm:$0xf]
      %v3334 = vld [vmem:[%s3320 + $0x34] sm:$0xf]
      %v3335 = vld [vmem:[%s3320 + $0x38] sm:$0xf]
      %v3336 = vld [vmem:[%s3320 + $0x3c] sm:$0xf]
      %v3374 = vunpack.c.l.b16 %v3247
      %v3375 = vunpack.c.l.b16 %v3248
      %v3376 = vunpack.c.l.b16 %v3249
      %v3377 = vunpack.c.l.b16 %v3250
      %v3378 = vunpack.c.l.b16 %v3251
      %v3379 = vunpack.c.l.b16 %v3252
      %v3380 = vunpack.c.l.b16 %v3253
      %v3381 = vunpack.c.l.b16 %v3254
      %v3382 = vunpack.c.l.b16 %v3255
      %v3383 = vunpack.c.l.b16 %v3256
      %v3384 = vunpack.c.l.b16 %v3257
      %v3385 = vunpack.c.l.b16 %v3258
      %v3386 = vunpack.c.l.b16 %v3259
      %v3387 = vunpack.c.l.b16 %v3260
      %v3388 = vunpack.c.l.b16 %v3261
      %v3389 = vunpack.c.l.b16 %v3262
      %v3390 = vunpack.c.l.b16 %v3263
      %v3391 = vunpack.c.l.b16 %v3264
      %v3392 = vunpack.c.l.b16 %v3265
      %v3393 = vunpack.c.l.b16 %v3266
      %v3394 = vunpack.c.l.b16 %v3267
      %v3395 = vunpack.c.l.b16 %v3268
      %v3396 = vunpack.c.l.b16 %v3269
      %v3397 = vunpack.c.l.b16 %v3270
      %v3398 = vunpack.c.l.b16 %v3271
      %v3399 = vunpack.c.l.b16 %v3272
      %v3400 = vunpack.c.l.b16 %v3273
      %v3401 = vunpack.c.l.b16 %v3274
      %v3402 = vunpack.c.l.b16 %v3275
      %v3403 = vunpack.c.l.b16 %v3276
      %v3404 = vunpack.c.l.b16 %v3277
      %v3405 = vunpack.c.l.b16 %v3278
      %v3406 = vunpack.c.l.b16 %v3279
      %v3407 = vunpack.c.l.b16 %v3280
      %v3408 = vunpack.c.l.b16 %v3281
      %v3409 = vunpack.c.l.b16 %v3282
      %v3410 = vunpack.c.l.b16 %v3283
      %v3411 = vpack.c.b16 %v3375, %v3374
      %v3412 = vpack.c.b16 %v3377, %v3376
      %v3413 = vpack.c.b16 %v3379, %v3378
      %v3414 = vpack.c.b16 %v3381, %v3380
      %v3415 = vpack.c.b16 %v3383, %v3382
      %v3416 = vpack.c.b16 %v3385, %v3384
      %v3417 = vpack.c.b16 %v3387, %v3386
      %v3418 = vpack.c.b16 %v3389, %v3388
      %v3419 = vpack.c.b16 %v3391, %v3390
      %v3420 = vpack.c.b16 %v3393, %v3392
      %v3421 = vpack.c.b16 %v3395, %v3394
      %v3422 = vpack.c.b16 %v3397, %v3396
      %v3423 = vpack.c.b16 %v3399, %v3398
      %v3424 = vpack.c.b16 %v3401, %v3400
      %v3425 = vpack.c.b16 %v3403, %v3402
      %v3426 = vpack.c.b16 %v3405, %v3404
      %v3427 = vpack.c.b16 %v3407, %v3406
      %v3428 = vpack.c.b16 %v3409, %v3408
      %v3429 = vpack.c.b16 %v3410, %v3410
      %v3430 = vrot.slane %v3411, 2
      %v3431 = vrot.slane %v3412, 2
      %v3432 = vsel %vm2972, %v3430, %v3431
      %v3433 = vrot.slane %v3413, 2
      %v3434 = vsel %vm2972, %v3431, %v3433
      %v3435 = vrot.slane %v3414, 2
      %v3436 = vsel %vm2972, %v3433, %v3435
      %v3437 = vrot.slane %v3415, 2
      %v3438 = vsel %vm2972, %v3435, %v3437
      %v3439 = vrot.slane %v3416, 2
      %v3440 = vsel %vm2972, %v3437, %v3439
      %v3441 = vrot.slane %v3417, 2
      %v3442 = vsel %vm2972, %v3439, %v3441
      %v3443 = vrot.slane %v3418, 2
      %v3444 = vsel %vm2972, %v3441, %v3443
      %v3445 = vrot.slane %v3419, 2
      %v3446 = vsel %vm2972, %v3443, %v3445
      %v3447 = vrot.slane %v3420, 2
      %v3448 = vsel %vm2972, %v3445, %v3447
      %v3449 = vrot.slane %v3421, 2
      %v3450 = vsel %vm2972, %v3447, %v3449
      %v3451 = vrot.slane %v3422, 2
      %v3452 = vsel %vm2972, %v3449, %v3451
      %v3453 = vrot.slane %v3423, 2
      %v3454 = vsel %vm2972, %v3451, %v3453
      %v3455 = vrot.slane %v3424, 2
      %v3456 = vsel %vm2972, %v3453, %v3455
      %v3457 = vrot.slane %v3425, 2
      %v3458 = vsel %vm2972, %v3455, %v3457
      %v3459 = vrot.slane %v3426, 2
      %v3460 = vsel %vm2972, %v3457, %v3459
      %v3461 = vrot.slane %v3427, 2
      %v3462 = vsel %vm2972, %v3459, %v3461
      %v3463 = vrot.slane %v3428, 2
      %v3464 = vsel %vm2972, %v3461, %v3463
      %v3465 = vrot.slane %v3429, 2
      %v3466 = vsel %vm2972, %v3463, %v3465
      %v3501 = vunpack.c.l.b16 %v3321
      %v3502 = vunpack.c.l.b16 %v3322
      %v3503 = vunpack.c.l.b16 %v3323
      %v3504 = vunpack.c.l.b16 %v3324
      %v3505 = vunpack.c.l.b16 %v3325
      %v3506 = vunpack.c.l.b16 %v3326
      %v3507 = vunpack.c.l.b16 %v3327
      %v3508 = vunpack.c.l.b16 %v3328
      %v3509 = vunpack.c.l.b16 %v3329
      %v3510 = vunpack.c.l.b16 %v3330
      %v3511 = vunpack.c.l.b16 %v3331
      %v3512 = vunpack.c.l.b16 %v3332
      %v3513 = vunpack.c.l.b16 %v3333
      %v3514 = vunpack.c.l.b16 %v3334
      %v3515 = vunpack.c.l.b16 %v3335
      %v3516 = vunpack.c.l.b16 %v3336
      %v3517 = vpack.c.b16 %v3502, %v3501
      %v3518 = vpack.c.b16 %v3504, %v3503
      %v3519 = vpack.c.b16 %v3506, %v3505
      %v3520 = vpack.c.b16 %v3508, %v3507
      %v3521 = vpack.c.b16 %v3510, %v3509
      %v3522 = vpack.c.b16 %v3512, %v3511
      %v3523 = vpack.c.b16 %v3514, %v3513
      %v3524 = vpack.c.b16 %v3516, %v3515
      %3533 = vmatpush.bf16.msra.mxu0 %v3524
      %3534 = vmatpush.bf16.msra.mxu0 %v3523
      %3535 = vmatpush.bf16.msra.mxu0 %v3522
      %3536 = vmatpush.bf16.msra.mxu0 %v3521
      %3537 = vmatpush.bf16.msra.mxu0 %v3520
      %3538 = vmatpush.bf16.msra.mxu0 %v3519
      %3539 = vmatpush.bf16.msra.mxu0 %v3518
      %3540 = vmatpush.bf16.msra.mxu0 %v3517
      %3541 = vmatmul.bf16.gmra.mxu0 %v3432
      %v3542 = vpop.f32.mrf.mxu0
      %v3543 = vadd.f32 0.0, %v3542
      %v3544 = vpop.f32.mrf.mxu0
      %v3545 = vadd.f32 0.0, %v3544
      %3546 = vmatmul.bf16.gmra.mxu0 %v3434
      %v3547 = vpop.f32.mrf.mxu0
      %v3548 = vadd.f32 0.0, %v3547
      %v3549 = vpop.f32.mrf.mxu0
      %v3550 = vadd.f32 0.0, %v3549
      %3551 = vmatmul.bf16.gmra.mxu0 %v3436
      %v3552 = vpop.f32.mrf.mxu0
      %v3553 = vadd.f32 0.0, %v3552
      %v3554 = vpop.f32.mrf.mxu0
      %v3555 = vadd.f32 0.0, %v3554
      %3556 = vmatmul.bf16.gmra.mxu0 %v3438
      %v3557 = vpop.f32.mrf.mxu0
      %v3558 = vadd.f32 0.0, %v3557
      %v3559 = vpop.f32.mrf.mxu0
      %v3560 = vadd.f32 0.0, %v3559
      %3561 = vmatmul.bf16.gmra.mxu0 %v3440
      %v3562 = vpop.f32.mrf.mxu0
      %v3563 = vadd.f32 0.0, %v3562
      %v3564 = vpop.f32.mrf.mxu0
      %v3565 = vadd.f32 0.0, %v3564
      %3566 = vmatmul.bf16.gmra.mxu0 %v3442
      %v3567 = vpop.f32.mrf.mxu0
      %v3568 = vadd.f32 0.0, %v3567
      %v3569 = vpop.f32.mrf.mxu0
      %v3570 = vadd.f32 0.0, %v3569
      %3571 = vmatmul.bf16.gmra.mxu0 %v3444
      %v3572 = vpop.f32.mrf.mxu0
      %v3573 = vadd.f32 0.0, %v3572
      %v3574 = vpop.f32.mrf.mxu0
      %v3575 = vadd.f32 0.0, %v3574
      %3576 = vmatmul.bf16.gmra.mxu0 %v3446
      %v3577 = vpop.f32.mrf.mxu0
      %v3578 = vadd.f32 0.0, %v3577
      %v3579 = vpop.f32.mrf.mxu0
      %v3580 = vadd.f32 0.0, %v3579
      %3581 = vmatmul.bf16.gmra.mxu0 %v3448
      %v3582 = vpop.f32.mrf.mxu0
      %v3583 = vadd.f32 0.0, %v3582
      %v3584 = vpop.f32.mrf.mxu0
      %v3585 = vadd.f32 0.0, %v3584
      %3586 = vmatmul.bf16.gmra.mxu0 %v3450
      %v3587 = vpop.f32.mrf.mxu0
      %v3588 = vadd.f32 0.0, %v3587
      %v3589 = vpop.f32.mrf.mxu0
      %v3590 = vadd.f32 0.0, %v3589
      %3591 = vmatmul.bf16.gmra.mxu0 %v3452
      %v3592 = vpop.f32.mrf.mxu0
      %v3593 = vadd.f32 0.0, %v3592
      %v3594 = vpop.f32.mrf.mxu0
      %v3595 = vadd.f32 0.0, %v3594
      %3596 = vmatmul.bf16.gmra.mxu0 %v3454
      %v3597 = vpop.f32.mrf.mxu0
      %v3598 = vadd.f32 0.0, %v3597
      %v3599 = vpop.f32.mrf.mxu0
      %v3600 = vadd.f32 0.0, %v3599
      %3601 = vmatmul.bf16.gmra.mxu0 %v3456
      %v3602 = vpop.f32.mrf.mxu0
      %v3603 = vadd.f32 0.0, %v3602
      %v3604 = vpop.f32.mrf.mxu0
      %v3605 = vadd.f32 0.0, %v3604
      %3606 = vmatmul.bf16.gmra.mxu0 %v3458
      %v3607 = vpop.f32.mrf.mxu0
      %v3608 = vadd.f32 0.0, %v3607
      %v3609 = vpop.f32.mrf.mxu0
      %v3610 = vadd.f32 0.0, %v3609
      %3611 = vmatmul.bf16.gmra.mxu0 %v3460
      %v3612 = vpop.f32.mrf.mxu0
      %v3613 = vadd.f32 0.0, %v3612
      %v3614 = vpop.f32.mrf.mxu0
      %v3615 = vadd.f32 0.0, %v3614
      %3616 = vmatmul.bf16.gmra.mxu0 %v3462
      %v3617 = vpop.f32.mrf.mxu0
      %v3618 = vadd.f32 0.0, %v3617
      %v3619 = vpop.f32.mrf.mxu0
      %v3620 = vadd.f32 0.0, %v3619
      %3621 = vmatmul.bf16.gmra.mxu0 %v3464
      %v3622 = vpop.f32.mrf.mxu0
      %v3623 = vadd.f32 0.0, %v3622
      %v3624 = vpop.f32.mrf.mxu0
      %v3625 = vadd.f32 0.0, %v3624
      %3626 = vmatmul.bf16.gmra.mxu0 %v3466
      %v3627 = vpop.f32.mrf.mxu0
      %v3628 = vadd.f32 0.0, %v3627
      %v3629 = vpop.f32.mrf.mxu0
      %v3630 = vadd.f32 0.0, %v3629
      %3631 = vdwg.mxu0
      %v3632 = vadd.f32 %v3284, %v3543
      %v3633 = vadd.f32 %v3285, %v3545
      %v3634 = vadd.f32 %v3286, %v3548
      %v3635 = vadd.f32 %v3287, %v3550
      %v3636 = vadd.f32 %v3288, %v3553
      %v3637 = vadd.f32 %v3289, %v3555
      %v3638 = vadd.f32 %v3290, %v3558
      %v3639 = vadd.f32 %v3291, %v3560
      %v3640 = vadd.f32 %v3292, %v3563
      %v3641 = vadd.f32 %v3293, %v3565
      %v3642 = vadd.f32 %v3294, %v3568
      %v3643 = vadd.f32 %v3295, %v3570
      %v3644 = vadd.f32 %v3296, %v3573
      %v3645 = vadd.f32 %v3297, %v3575
      %v3646 = vadd.f32 %v3298, %v3578
      %v3647 = vadd.f32 %v3299, %v3580
      %v3648 = vadd.f32 %v3300, %v3583
      %v3649 = vadd.f32 %v3301, %v3585
      %v3650 = vadd.f32 %v3302, %v3588
      %v3651 = vadd.f32 %v3303, %v3590
      %v3652 = vadd.f32 %v3304, %v3593
      %v3653 = vadd.f32 %v3305, %v3595
      %v3654 = vadd.f32 %v3306, %v3598
      %v3655 = vadd.f32 %v3307, %v3600
      %v3656 = vadd.f32 %v3308, %v3603
      %v3657 = vadd.f32 %v3309, %v3605
      %v3658 = vadd.f32 %v3310, %v3608
      %v3659 = vadd.f32 %v3311, %v3610
      %v3660 = vadd.f32 %v3312, %v3613
      %v3661 = vadd.f32 %v3313, %v3615
      %v3662 = vadd.f32 %v3314, %v3618
      %v3663 = vadd.f32 %v3315, %v3620
      %v3664 = vadd.f32 %v3316, %v3623
      %v3665 = vadd.f32 %v3317, %v3625
      %v3666 = vadd.f32 %v3318, %v3628
      %v3667 = vadd.f32 %v3319, %v3630
      %3668 = vst [vmem:[#allocation2] sm:$0xff] %v3632
      %3669 = vst [vmem:[#allocation2 + $0x8] sm:$0xff] %v3633
      %3670 = vst [vmem:[#allocation2 + $0x10] sm:$0xff] %v3634
      %3671 = vst [vmem:[#allocation2 + $0x18] sm:$0xff] %v3635
      %3672 = vst [vmem:[#allocation2 + $0x20] sm:$0xff] %v3636
      %3673 = vst [vmem:[#allocation2 + $0x28] sm:$0xff] %v3637
      %3674 = vst [vmem:[#allocation2 + $0x30] sm:$0xff] %v3638
      %3675 = vst [vmem:[#allocation2 + $0x38] sm:$0xff] %v3639
      %3676 = vst [vmem:[#allocation2 + $0x40] sm:$0xff] %v3640
      %3677 = vst [vmem:[#allocation2 + $0x48] sm:$0xff] %v3641
      %3678 = vst [vmem:[#allocation2 + $0x50] sm:$0xff] %v3642
      %3679 = vst [vmem:[#allocation2 + $0x58] sm:$0xff] %v3643
      %3680 = vst [vmem:[#allocation2 + $0x60] sm:$0xff] %v3644
      %3681 = vst [vmem:[#allocation2 + $0x68] sm:$0xff] %v3645
      %3682 = vst [vmem:[#allocation2 + $0x70] sm:$0xff] %v3646
      %3683 = vst [vmem:[#allocation2 + $0x78] sm:$0xff] %v3647
      %3684 = vst [vmem:[#allocation2 + $0x80] sm:$0xff] %v3648
      %3685 = vst [vmem:[#allocation2 + $0x88] sm:$0xff] %v3649
      %3686 = vst [vmem:[#allocation2 + $0x90] sm:$0xff] %v3650
      %3687 = vst [vmem:[#allocation2 + $0x98] sm:$0xff] %v3651
      %3688 = vst [vmem:[#allocation2 + $0xa0] sm:$0xff] %v3652
      %3689 = vst [vmem:[#allocation2 + $0xa8] sm:$0xff] %v3653
      %3690 = vst [vmem:[#allocation2 + $0xb0] sm:$0xff] %v3654
      %3691 = vst [vmem:[#allocation2 + $0xb8] sm:$0xff] %v3655
      %3692 = vst [vmem:[#allocation2 + $0xc0] sm:$0xff] %v3656
      %3693 = vst [vmem:[#allocation2 + $0xc8] sm:$0xff] %v3657
      %3694 = vst [vmem:[#allocation2 + $0xd0] sm:$0xff] %v3658
      %3695 = vst [vmem:[#allocation2 + $0xd8] sm:$0xff] %v3659
      %3696 = vst [vmem:[#allocation2 + $0xe0] sm:$0xff] %v3660
      %3697 = vst [vmem:[#allocation2 + $0xe8] sm:$0xff] %v3661
      %3698 = vst [vmem:[#allocation2 + $0xf0] sm:$0xff] %v3662
      %3699 = vst [vmem:[#allocation2 + $0xf8] sm:$0xff] %v3663
      %3700 = vst [vmem:[#allocation2 + $0x100] sm:$0xff] %v3664
      %3701 = vst [vmem:[#allocation2 + $0x108] sm:$0xff] %v3665
      %3702 = vst [vmem:[#allocation2 + $0x110] sm:$0xff] %v3666
      %3703 = vst [vmem:[#allocation2 + $0x118] sm:$0xff] %v3667
      %v3704 = vld [vmem:[%s244 + $0x10] sm:$0xc]
      %v3705 = vld [vmem:[%s244 + $0x14] sm:$0xf]
      %v3706 = vld [vmem:[%s244 + $0x18] sm:$0xf]
      %v3707 = vld [vmem:[%s244 + $0x1c] sm:$0xf]
      %v3708 = vld [vmem:[%s244 + $0x20] sm:$0xf]
      %v3709 = vld [vmem:[%s244 + $0x24] sm:$0xf]
      %v3710 = vld [vmem:[%s244 + $0x28] sm:$0xf]
      %v3711 = vld [vmem:[%s244 + $0x2c] sm:$0xf]
      %v3712 = vld [vmem:[%s244 + $0x30] sm:$0xf]
      %v3713 = vld [vmem:[%s244 + $0x34] sm:$0xf]
      %v3714 = vld [vmem:[%s244 + $0x38] sm:$0xf]
      %v3715 = vld [vmem:[%s244 + $0x3c] sm:$0xf]
      %v3716 = vld [vmem:[%s244 + $0x40] sm:$0xf]
      %v3717 = vld [vmem:[%s244 + $0x44] sm:$0xf]
      %v3718 = vld [vmem:[%s244 + $0x48] sm:$0xf]
      %v3719 = vld [vmem:[%s244 + $0x4c] sm:$0xf]
      %v3720 = vld [vmem:[%s244 + $0x50] sm:$0xf]
      %v3721 = vld [vmem:[%s244 + $0x54] sm:$0xf]
      %v3722 = vld [vmem:[%s244 + $0x58] sm:$0xf]
      %v3723 = vld [vmem:[%s244 + $0x5c] sm:$0xf]
      %v3724 = vld [vmem:[%s244 + $0x60] sm:$0xf]
      %v3725 = vld [vmem:[%s244 + $0x64] sm:$0xf]
      %v3726 = vld [vmem:[%s244 + $0x68] sm:$0xf]
      %v3727 = vld [vmem:[%s244 + $0x6c] sm:$0xf]
      %v3728 = vld [vmem:[%s244 + $0x70] sm:$0xf]
      %v3729 = vld [vmem:[%s244 + $0x74] sm:$0xf]
      %v3730 = vld [vmem:[%s244 + $0x78] sm:$0xf]
      %v3731 = vld [vmem:[%s244 + $0x7c] sm:$0xf]
      %v3732 = vld [vmem:[%s244 + $0x80] sm:$0xf]
      %v3733 = vld [vmem:[%s244 + $0x84] sm:$0xf]
      %v3734 = vld [vmem:[%s244 + $0x88] sm:$0xf]
      %v3735 = vld [vmem:[%s244 + $0x8c] sm:$0xf]
      %v3736 = vld [vmem:[%s244 + $0x90] sm:$0xf]
      %v3737 = vld [vmem:[%s244 + $0x94] sm:$0xf]
      %v3738 = vld [vmem:[%s244 + $0x98] sm:$0xf]
      %v3739 = vld [vmem:[%s244 + $0x9c] sm:$0xf]
      %v3740 = vld [vmem:[%s244 + $0xa0] sm:$0x7]
      %v3741 = vld [vmem:[#allocation2] sm:$0xff]
      %v3742 = vld [vmem:[#allocation2 + $0x8] sm:$0xff]
      %v3743 = vld [vmem:[#allocation2 + $0x10] sm:$0xff]
      %v3744 = vld [vmem:[#allocation2 + $0x18] sm:$0xff]
      %v3745 = vld [vmem:[#allocation2 + $0x20] sm:$0xff]
      %v3746 = vld [vmem:[#allocation2 + $0x28] sm:$0xff]
      %v3747 = vld [vmem:[#allocation2 + $0x30] sm:$0xff]
      %v3748 = vld [vmem:[#allocation2 + $0x38] sm:$0xff]
      %v3749 = vld [vmem:[#allocation2 + $0x40] sm:$0xff]
      %v3750 = vld [vmem:[#allocation2 + $0x48] sm:$0xff]
      %v3751 = vld [vmem:[#allocation2 + $0x50] sm:$0xff]
      %v3752 = vld [vmem:[#allocation2 + $0x58] sm:$0xff]
      %v3753 = vld [vmem:[#allocation2 + $0x60] sm:$0xff]
      %v3754 = vld [vmem:[#allocation2 + $0x68] sm:$0xff]
      %v3755 = vld [vmem:[#allocation2 + $0x70] sm:$0xff]
      %v3756 = vld [vmem:[#allocation2 + $0x78] sm:$0xff]
      %v3757 = vld [vmem:[#allocation2 + $0x80] sm:$0xff]
      %v3758 = vld [vmem:[#allocation2 + $0x88] sm:$0xff]
      %v3759 = vld [vmem:[#allocation2 + $0x90] sm:$0xff]
      %v3760 = vld [vmem:[#allocation2 + $0x98] sm:$0xff]
      %v3761 = vld [vmem:[#allocation2 + $0xa0] sm:$0xff]
      %v3762 = vld [vmem:[#allocation2 + $0xa8] sm:$0xff]
      %v3763 = vld [vmem:[#allocation2 + $0xb0] sm:$0xff]
      %v3764 = vld [vmem:[#allocation2 + $0xb8] sm:$0xff]
      %v3765 = vld [vmem:[#allocation2 + $0xc0] sm:$0xff]
      %v3766 = vld [vmem:[#allocation2 + $0xc8] sm:$0xff]
      %v3767 = vld [vmem:[#allocation2 + $0xd0] sm:$0xff]
      %v3768 = vld [vmem:[#allocation2 + $0xd8] sm:$0xff]
      %v3769 = vld [vmem:[#allocation2 + $0xe0] sm:$0xff]
      %v3770 = vld [vmem:[#allocation2 + $0xe8] sm:$0xff]
      %v3771 = vld [vmem:[#allocation2 + $0xf0] sm:$0xff]
      %v3772 = vld [vmem:[#allocation2 + $0xf8] sm:$0xff]
      %v3773 = vld [vmem:[#allocation2 + $0x100] sm:$0xff]
      %v3774 = vld [vmem:[#allocation2 + $0x108] sm:$0xff]
      %v3775 = vld [vmem:[#allocation2 + $0x110] sm:$0xff]
      %v3776 = vld [vmem:[#allocation2 + $0x118] sm:$0xff]
      %s3777 = scalar_lea.vmem %s248, 448
      %v3778 = vld [vmem:[%s3777] sm:$0xf]
      %v3779 = vld [vmem:[%s3777 + $0x4] sm:$0xf]
      %v3780 = vld [vmem:[%s3777 + $0x8] sm:$0xf]
      %v3781 = vld [vmem:[%s3777 + $0xc] sm:$0xf]
      %v3782 = vld [vmem:[%s3777 + $0x10] sm:$0xf]
      %v3783 = vld [vmem:[%s3777 + $0x14] sm:$0xf]
      %v3784 = vld [vmem:[%s3777 + $0x18] sm:$0xf]
      %v3785 = vld [vmem:[%s3777 + $0x1c] sm:$0xf]
      %v3786 = vld [vmem:[%s3777 + $0x20] sm:$0xf]
      %v3787 = vld [vmem:[%s3777 + $0x24] sm:$0xf]
      %v3788 = vld [vmem:[%s3777 + $0x28] sm:$0xf]
      %v3789 = vld [vmem:[%s3777 + $0x2c] sm:$0xf]
      %v3790 = vld [vmem:[%s3777 + $0x30] sm:$0xf]
      %v3791 = vld [vmem:[%s3777 + $0x34] sm:$0xf]
      %v3792 = vld [vmem:[%s3777 + $0x38] sm:$0xf]
      %v3793 = vld [vmem:[%s3777 + $0x3c] sm:$0xf]
      %v3831 = vunpack.c.l.b16 %v3704
      %v3832 = vunpack.c.l.b16 %v3705
      %v3833 = vunpack.c.l.b16 %v3706
      %v3834 = vunpack.c.l.b16 %v3707
      %v3835 = vunpack.c.l.b16 %v3708
      %v3836 = vunpack.c.l.b16 %v3709
      %v3837 = vunpack.c.l.b16 %v3710
      %v3838 = vunpack.c.l.b16 %v3711
      %v3839 = vunpack.c.l.b16 %v3712
      %v3840 = vunpack.c.l.b16 %v3713
      %v3841 = vunpack.c.l.b16 %v3714
      %v3842 = vunpack.c.l.b16 %v3715
      %v3843 = vunpack.c.l.b16 %v3716
      %v3844 = vunpack.c.l.b16 %v3717
      %v3845 = vunpack.c.l.b16 %v3718
      %v3846 = vunpack.c.l.b16 %v3719
      %v3847 = vunpack.c.l.b16 %v3720
      %v3848 = vunpack.c.l.b16 %v3721
      %v3849 = vunpack.c.l.b16 %v3722
      %v3850 = vunpack.c.l.b16 %v3723
      %v3851 = vunpack.c.l.b16 %v3724
      %v3852 = vunpack.c.l.b16 %v3725
      %v3853 = vunpack.c.l.b16 %v3726
      %v3854 = vunpack.c.l.b16 %v3727
      %v3855 = vunpack.c.l.b16 %v3728
      %v3856 = vunpack.c.l.b16 %v3729
      %v3857 = vunpack.c.l.b16 %v3730
      %v3858 = vunpack.c.l.b16 %v3731
      %v3859 = vunpack.c.l.b16 %v3732
      %v3860 = vunpack.c.l.b16 %v3733
      %v3861 = vunpack.c.l.b16 %v3734
      %v3862 = vunpack.c.l.b16 %v3735
      %v3863 = vunpack.c.l.b16 %v3736
      %v3864 = vunpack.c.l.b16 %v3737
      %v3865 = vunpack.c.l.b16 %v3738
      %v3866 = vunpack.c.l.b16 %v3739
      %v3867 = vunpack.c.l.b16 %v3740
      %v3868 = vpack.c.b16 %v3832, %v3831
      %v3869 = vpack.c.b16 %v3834, %v3833
      %v3870 = vpack.c.b16 %v3836, %v3835
      %v3871 = vpack.c.b16 %v3838, %v3837
      %v3872 = vpack.c.b16 %v3840, %v3839
      %v3873 = vpack.c.b16 %v3842, %v3841
      %v3874 = vpack.c.b16 %v3844, %v3843
      %v3875 = vpack.c.b16 %v3846, %v3845
      %v3876 = vpack.c.b16 %v3848, %v3847
      %v3877 = vpack.c.b16 %v3850, %v3849
      %v3878 = vpack.c.b16 %v3852, %v3851
      %v3879 = vpack.c.b16 %v3854, %v3853
      %v3880 = vpack.c.b16 %v3856, %v3855
      %v3881 = vpack.c.b16 %v3858, %v3857
      %v3882 = vpack.c.b16 %v3860, %v3859
      %v3883 = vpack.c.b16 %v3862, %v3861
      %v3884 = vpack.c.b16 %v3864, %v3863
      %v3885 = vpack.c.b16 %v3866, %v3865
      %v3886 = vpack.c.b16 %v3867, %v3867
      %vm3887 = vsmask.f32 5376
      %v3889 = vshrl.u32 %v3868, 16
      %v3891 = vrot.slane %v3889, 2
      %v3892 = vshll.u32 %v3868, 16
      %v3894 = vrot.slane %v3892, 3
      %v3895 = vor.u32 %v3891, %v3894
      %v3897 = vshrl.u32 %v3869, 16
      %v3899 = vrot.slane %v3897, 2
      %v3900 = vshll.u32 %v3869, 16
      %v3902 = vrot.slane %v3900, 3
      %v3903 = vor.u32 %v3899, %v3902
      %v3904 = vsel %vm3887, %v3895, %v3903
      %v3906 = vshrl.u32 %v3870, 16
      %v3908 = vrot.slane %v3906, 2
      %v3909 = vshll.u32 %v3870, 16
      %v3911 = vrot.slane %v3909, 3
      %v3912 = vor.u32 %v3908, %v3911
      %v3913 = vsel %vm3887, %v3903, %v3912
      %v3915 = vshrl.u32 %v3871, 16
      %v3917 = vrot.slane %v3915, 2
      %v3918 = vshll.u32 %v3871, 16
      %v3920 = vrot.slane %v3918, 3
      %v3921 = vor.u32 %v3917, %v3920
      %v3922 = vsel %vm3887, %v3912, %v3921
      %v3924 = vshrl.u32 %v3872, 16
      %v3926 = vrot.slane %v3924, 2
      %v3927 = vshll.u32 %v3872, 16
      %v3929 = vrot.slane %v3927, 3
      %v3930 = vor.u32 %v3926, %v3929
      %v3931 = vsel %vm3887, %v3921, %v3930
      %v3933 = vshrl.u32 %v3873, 16
      %v3935 = vrot.slane %v3933, 2
      %v3936 = vshll.u32 %v3873, 16
      %v3938 = vrot.slane %v3936, 3
      %v3939 = vor.u32 %v3935, %v3938
      %v3940 = vsel %vm3887, %v3930, %v3939
      %v3942 = vshrl.u32 %v3874, 16
      %v3944 = vrot.slane %v3942, 2
      %v3945 = vshll.u32 %v3874, 16
      %v3947 = vrot.slane %v3945, 3
      %v3948 = vor.u32 %v3944, %v3947
      %v3949 = vsel %vm3887, %v3939, %v3948
      %v3951 = vshrl.u32 %v3875, 16
      %v3953 = vrot.slane %v3951, 2
      %v3954 = vshll.u32 %v3875, 16
      %v3956 = vrot.slane %v3954, 3
      %v3957 = vor.u32 %v3953, %v3956
      %v3958 = vsel %vm3887, %v3948, %v3957
      %v3960 = vshrl.u32 %v3876, 16
      %v3962 = vrot.slane %v3960, 2
      %v3963 = vshll.u32 %v3876, 16
      %v3965 = vrot.slane %v3963, 3
      %v3966 = vor.u32 %v3962, %v3965
      %v3967 = vsel %vm3887, %v3957, %v3966
      %v3969 = vshrl.u32 %v3877, 16
      %v3971 = vrot.slane %v3969, 2
      %v3972 = vshll.u32 %v3877, 16
      %v3974 = vrot.slane %v3972, 3
      %v3975 = vor.u32 %v3971, %v3974
      %v3976 = vsel %vm3887, %v3966, %v3975
      %v3978 = vshrl.u32 %v3878, 16
      %v3980 = vrot.slane %v3978, 2
      %v3981 = vshll.u32 %v3878, 16
      %v3983 = vrot.slane %v3981, 3
      %v3984 = vor.u32 %v3980, %v3983
      %v3985 = vsel %vm3887, %v3975, %v3984
      %v3987 = vshrl.u32 %v3879, 16
      %v3989 = vrot.slane %v3987, 2
      %v3990 = vshll.u32 %v3879, 16
      %v3992 = vrot.slane %v3990, 3
      %v3993 = vor.u32 %v3989, %v3992
      %v3994 = vsel %vm3887, %v3984, %v3993
      %v3996 = vshrl.u32 %v3880, 16
      %v3998 = vrot.slane %v3996, 2
      %v3999 = vshll.u32 %v3880, 16
      %v4001 = vrot.slane %v3999, 3
      %v4002 = vor.u32 %v3998, %v4001
      %v4003 = vsel %vm3887, %v3993, %v4002
      %v4005 = vshrl.u32 %v3881, 16
      %v4007 = vrot.slane %v4005, 2
      %v4008 = vshll.u32 %v3881, 16
      %v4010 = vrot.slane %v4008, 3
      %v4011 = vor.u32 %v4007, %v4010
      %v4012 = vsel %vm3887, %v4002, %v4011
      %v4014 = vshrl.u32 %v3882, 16
      %v4016 = vrot.slane %v4014, 2
      %v4017 = vshll.u32 %v3882, 16
      %v4019 = vrot.slane %v4017, 3
      %v4020 = vor.u32 %v4016, %v4019
      %v4021 = vsel %vm3887, %v4011, %v4020
      %v4023 = vshrl.u32 %v3883, 16
      %v4025 = vrot.slane %v4023, 2
      %v4026 = vshll.u32 %v3883, 16
      %v4028 = vrot.slane %v4026, 3
      %v4029 = vor.u32 %v4025, %v4028
      %v4030 = vsel %vm3887, %v4020, %v4029
      %v4032 = vshrl.u32 %v3884, 16
      %v4034 = vrot.slane %v4032, 2
      %v4035 = vshll.u32 %v3884, 16
      %v4037 = vrot.slane %v4035, 3
      %v4038 = vor.u32 %v4034, %v4037
      %v4039 = vsel %vm3887, %v4029, %v4038
      %v4041 = vshrl.u32 %v3885, 16
      %v4043 = vrot.slane %v4041, 2
      %v4044 = vshll.u32 %v3885, 16
      %v4046 = vrot.slane %v4044, 3
      %v4047 = vor.u32 %v4043, %v4046
      %v4048 = vsel %vm3887, %v4038, %v4047
      %v4050 = vshrl.u32 %v3886, 16
      %v4052 = vrot.slane %v4050, 2
      %v4053 = vshll.u32 %v3886, 16
      %v4055 = vrot.slane %v4053, 3
      %v4056 = vor.u32 %v4052, %v4055
      %v4057 = vsel %vm3887, %v4047, %v4056
      %v4092 = vunpack.c.l.b16 %v3778
      %v4093 = vunpack.c.l.b16 %v3779
      %v4094 = vunpack.c.l.b16 %v3780
      %v4095 = vunpack.c.l.b16 %v3781
      %v4096 = vunpack.c.l.b16 %v3782
      %v4097 = vunpack.c.l.b16 %v3783
      %v4098 = vunpack.c.l.b16 %v3784
      %v4099 = vunpack.c.l.b16 %v3785
      %v4100 = vunpack.c.l.b16 %v3786
      %v4101 = vunpack.c.l.b16 %v3787
      %v4102 = vunpack.c.l.b16 %v3788
      %v4103 = vunpack.c.l.b16 %v3789
      %v4104 = vunpack.c.l.b16 %v3790
      %v4105 = vunpack.c.l.b16 %v3791
      %v4106 = vunpack.c.l.b16 %v3792
      %v4107 = vunpack.c.l.b16 %v3793
      %v4108 = vpack.c.b16 %v4093, %v4092
      %v4109 = vpack.c.b16 %v4095, %v4094
      %v4110 = vpack.c.b16 %v4097, %v4096
      %v4111 = vpack.c.b16 %v4099, %v4098
      %v4112 = vpack.c.b16 %v4101, %v4100
      %v4113 = vpack.c.b16 %v4103, %v4102
      %v4114 = vpack.c.b16 %v4105, %v4104
      %v4115 = vpack.c.b16 %v4107, %v4106
      %4124 = vmatpush.bf16.msra.mxu0 %v4115
      %4125 = vmatpush.bf16.msra.mxu0 %v4114
      %4126 = vmatpush.bf16.msra.mxu0 %v4113
      %4127 = vmatpush.bf16.msra.mxu0 %v4112
      %4128 = vmatpush.bf16.msra.mxu0 %v4111
      %4129 = vmatpush.bf16.msra.mxu0 %v4110
      %4130 = vmatpush.bf16.msra.mxu0 %v4109
      %4131 = vmatpush.bf16.msra.mxu0 %v4108
      %4132 = vmatmul.bf16.gmra.mxu0 %v3904
      %v4133 = vpop.f32.mrf.mxu0
      %v4134 = vadd.f32 0.0, %v4133
      %v4135 = vpop.f32.mrf.mxu0
      %v4136 = vadd.f32 0.0, %v4135
      %4137 = vmatmul.bf16.gmra.mxu0 %v3913
      %v4138 = vpop.f32.mrf.mxu0
      %v4139 = vadd.f32 0.0, %v4138
      %v4140 = vpop.f32.mrf.mxu0
      %v4141 = vadd.f32 0.0, %v4140
      %4142 = vmatmul.bf16.gmra.mxu0 %v3922
      %v4143 = vpop.f32.mrf.mxu0
      %v4144 = vadd.f32 0.0, %v4143
      %v4145 = vpop.f32.mrf.mxu0
      %v4146 = vadd.f32 0.0, %v4145
      %4147 = vmatmul.bf16.gmra.mxu0 %v3931
      %v4148 = vpop.f32.mrf.mxu0
      %v4149 = vadd.f32 0.0, %v4148
      %v4150 = vpop.f32.mrf.mxu0
      %v4151 = vadd.f32 0.0, %v4150
      %4152 = vmatmul.bf16.gmra.mxu0 %v3940
      %v4153 = vpop.f32.mrf.mxu0
      %v4154 = vadd.f32 0.0, %v4153
      %v4155 = vpop.f32.mrf.mxu0
      %v4156 = vadd.f32 0.0, %v4155
      %4157 = vmatmul.bf16.gmra.mxu0 %v3949
      %v4158 = vpop.f32.mrf.mxu0
      %v4159 = vadd.f32 0.0, %v4158
      %v4160 = vpop.f32.mrf.mxu0
      %v4161 = vadd.f32 0.0, %v4160
      %4162 = vmatmul.bf16.gmra.mxu0 %v3958
      %v4163 = vpop.f32.mrf.mxu0
      %v4164 = vadd.f32 0.0, %v4163
      %v4165 = vpop.f32.mrf.mxu0
      %v4166 = vadd.f32 0.0, %v4165
      %4167 = vmatmul.bf16.gmra.mxu0 %v3967
      %v4168 = vpop.f32.mrf.mxu0
      %v4169 = vadd.f32 0.0, %v4168
      %v4170 = vpop.f32.mrf.mxu0
      %v4171 = vadd.f32 0.0, %v4170
      %4172 = vmatmul.bf16.gmra.mxu0 %v3976
      %v4173 = vpop.f32.mrf.mxu0
      %v4174 = vadd.f32 0.0, %v4173
      %v4175 = vpop.f32.mrf.mxu0
      %v4176 = vadd.f32 0.0, %v4175
      %4177 = vmatmul.bf16.gmra.mxu0 %v3985
      %v4178 = vpop.f32.mrf.mxu0
      %v4179 = vadd.f32 0.0, %v4178
      %v4180 = vpop.f32.mrf.mxu0
      %v4181 = vadd.f32 0.0, %v4180
      %4182 = vmatmul.bf16.gmra.mxu0 %v3994
      %v4183 = vpop.f32.mrf.mxu0
      %v4184 = vadd.f32 0.0, %v4183
      %v4185 = vpop.f32.mrf.mxu0
      %v4186 = vadd.f32 0.0, %v4185
      %4187 = vmatmul.bf16.gmra.mxu0 %v4003
      %v4188 = vpop.f32.mrf.mxu0
      %v4189 = vadd.f32 0.0, %v4188
      %v4190 = vpop.f32.mrf.mxu0
      %v4191 = vadd.f32 0.0, %v4190
      %4192 = vmatmul.bf16.gmra.mxu0 %v4012
      %v4193 = vpop.f32.mrf.mxu0
      %v4194 = vadd.f32 0.0, %v4193
      %v4195 = vpop.f32.mrf.mxu0
      %v4196 = vadd.f32 0.0, %v4195
      %4197 = vmatmul.bf16.gmra.mxu0 %v4021
      %v4198 = vpop.f32.mrf.mxu0
      %v4199 = vadd.f32 0.0, %v4198
      %v4200 = vpop.f32.mrf.mxu0
      %v4201 = vadd.f32 0.0, %v4200
      %4202 = vmatmul.bf16.gmra.mxu0 %v4030
      %v4203 = vpop.f32.mrf.mxu0
      %v4204 = vadd.f32 0.0, %v4203
      %v4205 = vpop.f32.mrf.mxu0
      %v4206 = vadd.f32 0.0, %v4205
      %4207 = vmatmul.bf16.gmra.mxu0 %v4039
      %v4208 = vpop.f32.mrf.mxu0
      %v4209 = vadd.f32 0.0, %v4208
      %v4210 = vpop.f32.mrf.mxu0
      %v4211 = vadd.f32 0.0, %v4210
      %4212 = vmatmul.bf16.gmra.mxu0 %v4048
      %v4213 = vpop.f32.mrf.mxu0
      %v4214 = vadd.f32 0.0, %v4213
      %v4215 = vpop.f32.mrf.mxu0
      %v4216 = vadd.f32 0.0, %v4215
      %4217 = vmatmul.bf16.gmra.mxu0 %v4057
      %v4218 = vpop.f32.mrf.mxu0
      %v4219 = vadd.f32 0.0, %v4218
      %v4220 = vpop.f32.mrf.mxu0
      %v4221 = vadd.f32 0.0, %v4220
      %4222 = vdwg.mxu0
      %v4223 = vadd.f32 %v3741, %v4134
      %v4224 = vadd.f32 %v3742, %v4136
      %v4225 = vadd.f32 %v3743, %v4139
      %v4226 = vadd.f32 %v3744, %v4141
      %v4227 = vadd.f32 %v3745, %v4144
      %v4228 = vadd.f32 %v3746, %v4146
      %v4229 = vadd.f32 %v3747, %v4149
      %v4230 = vadd.f32 %v3748, %v4151
      %v4231 = vadd.f32 %v3749, %v4154
      %v4232 = vadd.f32 %v3750, %v4156
      %v4233 = vadd.f32 %v3751, %v4159
      %v4234 = vadd.f32 %v3752, %v4161
      %v4235 = vadd.f32 %v3753, %v4164
      %v4236 = vadd.f32 %v3754, %v4166
      %v4237 = vadd.f32 %v3755, %v4169
      %v4238 = vadd.f32 %v3756, %v4171
      %v4239 = vadd.f32 %v3757, %v4174
      %v4240 = vadd.f32 %v3758, %v4176
      %v4241 = vadd.f32 %v3759, %v4179
      %v4242 = vadd.f32 %v3760, %v4181
      %v4243 = vadd.f32 %v3761, %v4184
      %v4244 = vadd.f32 %v3762, %v4186
      %v4245 = vadd.f32 %v3763, %v4189
      %v4246 = vadd.f32 %v3764, %v4191
      %v4247 = vadd.f32 %v3765, %v4194
      %v4248 = vadd.f32 %v3766, %v4196
      %v4249 = vadd.f32 %v3767, %v4199
      %v4250 = vadd.f32 %v3768, %v4201
      %v4251 = vadd.f32 %v3769, %v4204
      %v4252 = vadd.f32 %v3770, %v4206
      %v4253 = vadd.f32 %v3771, %v4209
      %v4254 = vadd.f32 %v3772, %v4211
      %v4255 = vadd.f32 %v3773, %v4214
      %v4256 = vadd.f32 %v3774, %v4216
      %v4257 = vadd.f32 %v3775, %v4219
      %v4258 = vadd.f32 %v3776, %v4221
      %4259 = vst [vmem:[#allocation2] sm:$0xff] %v4223
      %4260 = vst [vmem:[#allocation2 + $0x8] sm:$0xff] %v4224
      %4261 = vst [vmem:[#allocation2 + $0x10] sm:$0xff] %v4225
      %4262 = vst [vmem:[#allocation2 + $0x18] sm:$0xff] %v4226
      %4263 = vst [vmem:[#allocation2 + $0x20] sm:$0xff] %v4227
      %4264 = vst [vmem:[#allocation2 + $0x28] sm:$0xff] %v4228
      %4265 = vst [vmem:[#allocation2 + $0x30] sm:$0xff] %v4229
      %4266 = vst [vmem:[#allocation2 + $0x38] sm:$0xff] %v4230
      %4267 = vst [vmem:[#allocation2 + $0x40] sm:$0xff] %v4231
      %4268 = vst [vmem:[#allocation2 + $0x48] sm:$0xff] %v4232
      %4269 = vst [vmem:[#allocation2 + $0x50] sm:$0xff] %v4233
      %4270 = vst [vmem:[#allocation2 + $0x58] sm:$0xff] %v4234
      %4271 = vst [vmem:[#allocation2 + $0x60] sm:$0xff] %v4235
      %4272 = vst [vmem:[#allocation2 + $0x68] sm:$0xff] %v4236
      %4273 = vst [vmem:[#allocation2 + $0x70] sm:$0xff] %v4237
      %4274 = vst [vmem:[#allocation2 + $0x78] sm:$0xff] %v4238
      %4275 = vst [vmem:[#allocation2 + $0x80] sm:$0xff] %v4239
      %4276 = vst [vmem:[#allocation2 + $0x88] sm:$0xff] %v4240
      %4277 = vst [vmem:[#allocation2 + $0x90] sm:$0xff] %v4241
      %4278 = vst [vmem:[#allocation2 + $0x98] sm:$0xff] %v4242
      %4279 = vst [vmem:[#allocation2 + $0xa0] sm:$0xff] %v4243
      %4280 = vst [vmem:[#allocation2 + $0xa8] sm:$0xff] %v4244
      %4281 = vst [vmem:[#allocation2 + $0xb0] sm:$0xff] %v4245
      %4282 = vst [vmem:[#allocation2 + $0xb8] sm:$0xff] %v4246
      %4283 = vst [vmem:[#allocation2 + $0xc0] sm:$0xff] %v4247
      %4284 = vst [vmem:[#allocation2 + $0xc8] sm:$0xff] %v4248
      %4285 = vst [vmem:[#allocation2 + $0xd0] sm:$0xff] %v4249
      %4286 = vst [vmem:[#allocation2 + $0xd8] sm:$0xff] %v4250
      %4287 = vst [vmem:[#allocation2 + $0xe0] sm:$0xff] %v4251
      %4288 = vst [vmem:[#allocation2 + $0xe8] sm:$0xff] %v4252
      %4289 = vst [vmem:[#allocation2 + $0xf0] sm:$0xff] %v4253
      %4290 = vst [vmem:[#allocation2 + $0xf8] sm:$0xff] %v4254
      %4291 = vst [vmem:[#allocation2 + $0x100] sm:$0xff] %v4255
      %4292 = vst [vmem:[#allocation2 + $0x108] sm:$0xff] %v4256
      %4293 = vst [vmem:[#allocation2 + $0x110] sm:$0xff] %v4257
      %4294 = vst [vmem:[#allocation2 + $0x118] sm:$0xff] %v4258
      %v4295 = vld [vmem:[%s244 + $0x10] sm:$0x8]
      %v4296 = vld [vmem:[%s244 + $0x14] sm:$0xf]
      %v4297 = vld [vmem:[%s244 + $0x18] sm:$0xf]
      %v4298 = vld [vmem:[%s244 + $0x1c] sm:$0xf]
      %v4299 = vld [vmem:[%s244 + $0x20] sm:$0xf]
      %v4300 = vld [vmem:[%s244 + $0x24] sm:$0xf]
      %v4301 = vld [vmem:[%s244 + $0x28] sm:$0xf]
      %v4302 = vld [vmem:[%s244 + $0x2c] sm:$0xf]
      %v4303 = vld [vmem:[%s244 + $0x30] sm:$0xf]
      %v4304 = vld [vmem:[%s244 + $0x34] sm:$0xf]
      %v4305 = vld [vmem:[%s244 + $0x38] sm:$0xf]
      %v4306 = vld [vmem:[%s244 + $0x3c] sm:$0xf]
      %v4307 = vld [vmem:[%s244 + $0x40] sm:$0xf]
      %v4308 = vld [vmem:[%s244 + $0x44] sm:$0xf]
      %v4309 = vld [vmem:[%s244 + $0x48] sm:$0xf]
      %v4310 = vld [vmem:[%s244 + $0x4c] sm:$0xf]
      %v4311 = vld [vmem:[%s244 + $0x50] sm:$0xf]
      %v4312 = vld [vmem:[%s244 + $0x54] sm:$0xf]
      %v4313 = vld [vmem:[%s244 + $0x58] sm:$0xf]
      %v4314 = vld [vmem:[%s244 + $0x5c] sm:$0xf]
      %v4315 = vld [vmem:[%s244 + $0x60] sm:$0xf]
      %v4316 = vld [vmem:[%s244 + $0x64] sm:$0xf]
      %v4317 = vld [vmem:[%s244 + $0x68] sm:$0xf]
      %v4318 = vld [vmem:[%s244 + $0x6c] sm:$0xf]
      %v4319 = vld [vmem:[%s244 + $0x70] sm:$0xf]
      %v4320 = vld [vmem:[%s244 + $0x74] sm:$0xf]
      %v4321 = vld [vmem:[%s244 + $0x78] sm:$0xf]
      %v4322 = vld [vmem:[%s244 + $0x7c] sm:$0xf]
      %v4323 = vld [vmem:[%s244 + $0x80] sm:$0xf]
      %v4324 = vld [vmem:[%s244 + $0x84] sm:$0xf]
      %v4325 = vld [vmem:[%s244 + $0x88] sm:$0xf]
      %v4326 = vld [vmem:[%s244 + $0x8c] sm:$0xf]
      %v4327 = vld [vmem:[%s244 + $0x90] sm:$0xf]
      %v4328 = vld [vmem:[%s244 + $0x94] sm:$0xf]
      %v4329 = vld [vmem:[%s244 + $0x98] sm:$0xf]
      %v4330 = vld [vmem:[%s244 + $0x9c] sm:$0xf]
      %v4331 = vld [vmem:[%s244 + $0xa0] sm:$0x7]
      %v4332 = vld [vmem:[#allocation2] sm:$0xff]
      %v4333 = vld [vmem:[#allocation2 + $0x8] sm:$0xff]
      %v4334 = vld [vmem:[#allocation2 + $0x10] sm:$0xff]
      %v4335 = vld [vmem:[#allocation2 + $0x18] sm:$0xff]
      %v4336 = vld [vmem:[#allocation2 + $0x20] sm:$0xff]
      %v4337 = vld [vmem:[#allocation2 + $0x28] sm:$0xff]
      %v4338 = vld [vmem:[#allocation2 + $0x30] sm:$0xff]
      %v4339 = vld [vmem:[#allocation2 + $0x38] sm:$0xff]
      %v4340 = vld [vmem:[#allocation2 + $0x40] sm:$0xff]
      %v4341 = vld [vmem:[#allocation2 + $0x48] sm:$0xff]
      %v4342 = vld [vmem:[#allocation2 + $0x50] sm:$0xff]
      %v4343 = vld [vmem:[#allocation2 + $0x58] sm:$0xff]
      %v4344 = vld [vmem:[#allocation2 + $0x60] sm:$0xff]
      %v4345 = vld [vmem:[#allocation2 + $0x68] sm:$0xff]
      %v4346 = vld [vmem:[#allocation2 + $0x70] sm:$0xff]
      %v4347 = vld [vmem:[#allocation2 + $0x78] sm:$0xff]
      %v4348 = vld [vmem:[#allocation2 + $0x80] sm:$0xff]
      %v4349 = vld [vmem:[#allocation2 + $0x88] sm:$0xff]
      %v4350 = vld [vmem:[#allocation2 + $0x90] sm:$0xff]
      %v4351 = vld [vmem:[#allocation2 + $0x98] sm:$0xff]
      %v4352 = vld [vmem:[#allocation2 + $0xa0] sm:$0xff]
      %v4353 = vld [vmem:[#allocation2 + $0xa8] sm:$0xff]
      %v4354 = vld [vmem:[#allocation2 + $0xb0] sm:$0xff]
      %v4355 = vld [vmem:[#allocation2 + $0xb8] sm:$0xff]
      %v4356 = vld [vmem:[#allocation2 + $0xc0] sm:$0xff]
      %v4357 = vld [vmem:[#allocation2 + $0xc8] sm:$0xff]
      %v4358 = vld [vmem:[#allocation2 + $0xd0] sm:$0xff]
      %v4359 = vld [vmem:[#allocation2 + $0xd8] sm:$0xff]
      %v4360 = vld [vmem:[#allocation2 + $0xe0] sm:$0xff]
      %v4361 = vld [vmem:[#allocation2 + $0xe8] sm:$0xff]
      %v4362 = vld [vmem:[#allocation2 + $0xf0] sm:$0xff]
      %v4363 = vld [vmem:[#allocation2 + $0xf8] sm:$0xff]
      %v4364 = vld [vmem:[#allocation2 + $0x100] sm:$0xff]
      %v4365 = vld [vmem:[#allocation2 + $0x108] sm:$0xff]
      %v4366 = vld [vmem:[#allocation2 + $0x110] sm:$0xff]
      %v4367 = vld [vmem:[#allocation2 + $0x118] sm:$0xff]
      %s4368 = scalar_lea.vmem %s248, 512
      %v4369 = vld [vmem:[%s4368] sm:$0xf]
      %v4370 = vld [vmem:[%s4368 + $0x4] sm:$0xf]
      %v4371 = vld [vmem:[%s4368 + $0x8] sm:$0xf]
      %v4372 = vld [vmem:[%s4368 + $0xc] sm:$0xf]
      %v4373 = vld [vmem:[%s4368 + $0x10] sm:$0xf]
      %v4374 = vld [vmem:[%s4368 + $0x14] sm:$0xf]
      %v4375 = vld [vmem:[%s4368 + $0x18] sm:$0xf]
      %v4376 = vld [vmem:[%s4368 + $0x1c] sm:$0xf]
      %v4377 = vld [vmem:[%s4368 + $0x20] sm:$0xf]
      %v4378 = vld [vmem:[%s4368 + $0x24] sm:$0xf]
      %v4379 = vld [vmem:[%s4368 + $0x28] sm:$0xf]
      %v4380 = vld [vmem:[%s4368 + $0x2c] sm:$0xf]
      %v4381 = vld [vmem:[%s4368 + $0x30] sm:$0xf]
      %v4382 = vld [vmem:[%s4368 + $0x34] sm:$0xf]
      %v4383 = vld [vmem:[%s4368 + $0x38] sm:$0xf]
      %v4384 = vld [vmem:[%s4368 + $0x3c] sm:$0xf]
      %v4422 = vunpack.c.l.b16 %v4295
      %v4423 = vunpack.c.l.b16 %v4296
      %v4424 = vunpack.c.l.b16 %v4297
      %v4425 = vunpack.c.l.b16 %v4298
      %v4426 = vunpack.c.l.b16 %v4299
      %v4427 = vunpack.c.l.b16 %v4300
      %v4428 = vunpack.c.l.b16 %v4301
      %v4429 = vunpack.c.l.b16 %v4302
      %v4430 = vunpack.c.l.b16 %v4303
      %v4431 = vunpack.c.l.b16 %v4304
      %v4432 = vunpack.c.l.b16 %v4305
      %v4433 = vunpack.c.l.b16 %v4306
      %v4434 = vunpack.c.l.b16 %v4307
      %v4435 = vunpack.c.l.b16 %v4308
      %v4436 = vunpack.c.l.b16 %v4309
      %v4437 = vunpack.c.l.b16 %v4310
      %v4438 = vunpack.c.l.b16 %v4311
      %v4439 = vunpack.c.l.b16 %v4312
      %v4440 = vunpack.c.l.b16 %v4313
      %v4441 = vunpack.c.l.b16 %v4314
      %v4442 = vunpack.c.l.b16 %v4315
      %v4443 = vunpack.c.l.b16 %v4316
      %v4444 = vunpack.c.l.b16 %v4317
      %v4445 = vunpack.c.l.b16 %v4318
      %v4446 = vunpack.c.l.b16 %v4319
      %v4447 = vunpack.c.l.b16 %v4320
      %v4448 = vunpack.c.l.b16 %v4321
      %v4449 = vunpack.c.l.b16 %v4322
      %v4450 = vunpack.c.l.b16 %v4323
      %v4451 = vunpack.c.l.b16 %v4324
      %v4452 = vunpack.c.l.b16 %v4325
      %v4453 = vunpack.c.l.b16 %v4326
      %v4454 = vunpack.c.l.b16 %v4327
      %v4455 = vunpack.c.l.b16 %v4328
      %v4456 = vunpack.c.l.b16 %v4329
      %v4457 = vunpack.c.l.b16 %v4330
      %v4458 = vunpack.c.l.b16 %v4331
      %v4459 = vpack.c.b16 %v4423, %v4422
      %v4460 = vpack.c.b16 %v4425, %v4424
      %v4461 = vpack.c.b16 %v4427, %v4426
      %v4462 = vpack.c.b16 %v4429, %v4428
      %v4463 = vpack.c.b16 %v4431, %v4430
      %v4464 = vpack.c.b16 %v4433, %v4432
      %v4465 = vpack.c.b16 %v4435, %v4434
      %v4466 = vpack.c.b16 %v4437, %v4436
      %v4467 = vpack.c.b16 %v4439, %v4438
      %v4468 = vpack.c.b16 %v4441, %v4440
      %v4469 = vpack.c.b16 %v4443, %v4442
      %v4470 = vpack.c.b16 %v4445, %v4444
      %v4471 = vpack.c.b16 %v4447, %v4446
      %v4472 = vpack.c.b16 %v4449, %v4448
      %v4473 = vpack.c.b16 %v4451, %v4450
      %v4474 = vpack.c.b16 %v4453, %v4452
      %v4475 = vpack.c.b16 %v4455, %v4454
      %v4476 = vpack.c.b16 %v4457, %v4456
      %v4477 = vpack.c.b16 %v4458, %v4458
      %vm4478 = vcmask 1044480
      %v4479 = vrot.slane %v4459, 3
      %v4480 = vrot.slane %v4460, 3
      %v4481 = vsel %vm4478, %v4479, %v4480
      %v4482 = vrot.slane %v4461, 3
      %v4483 = vsel %vm4478, %v4480, %v4482
      %v4484 = vrot.slane %v4462, 3
      %v4485 = vsel %vm4478, %v4482, %v4484
      %v4486 = vrot.slane %v4463, 3
      %v4487 = vsel %vm4478, %v4484, %v4486
      %v4488 = vrot.slane %v4464, 3
      %v4489 = vsel %vm4478, %v4486, %v4488
      %v4490 = vrot.slane %v4465, 3
      %v4491 = vsel %vm4478, %v4488, %v4490
      %v4492 = vrot.slane %v4466, 3
      %v4493 = vsel %vm4478, %v4490, %v4492
      %v4494 = vrot.slane %v4467, 3
      %v4495 = vsel %vm4478, %v4492, %v4494
      %v4496 = vrot.slane %v4468, 3
      %v4497 = vsel %vm4478, %v4494, %v4496
      %v4498 = vrot.slane %v4469, 3
      %v4499 = vsel %vm4478, %v4496, %v4498
      %v4500 = vrot.slane %v4470, 3
      %v4501 = vsel %vm4478, %v4498, %v4500
      %v4502 = vrot.slane %v4471, 3
      %v4503 = vsel %vm4478, %v4500, %v4502
      %v4504 = vrot.slane %v4472, 3
      %v4505 = vsel %vm4478, %v4502, %v4504
      %v4506 = vrot.slane %v4473, 3
      %v4507 = vsel %vm4478, %v4504, %v4506
      %v4508 = vrot.slane %v4474, 3
      %v4509 = vsel %vm4478, %v4506, %v4508
      %v4510 = vrot.slane %v4475, 3
      %v4511 = vsel %vm4478, %v4508, %v4510
      %v4512 = vrot.slane %v4476, 3
      %v4513 = vsel %vm4478, %v4510, %v4512
      %v4514 = vrot.slane %v4477, 3
      %v4515 = vsel %vm4478, %v4512, %v4514
      %v4550 = vunpack.c.l.b16 %v4369
      %v4551 = vunpack.c.l.b16 %v4370
      %v4552 = vunpack.c.l.b16 %v4371
      %v4553 = vunpack.c.l.b16 %v4372
      %v4554 = vunpack.c.l.b16 %v4373
      %v4555 = vunpack.c.l.b16 %v4374
      %v4556 = vunpack.c.l.b16 %v4375
      %v4557 = vunpack.c.l.b16 %v4376
      %v4558 = vunpack.c.l.b16 %v4377
      %v4559 = vunpack.c.l.b16 %v4378
      %v4560 = vunpack.c.l.b16 %v4379
      %v4561 = vunpack.c.l.b16 %v4380
      %v4562 = vunpack.c.l.b16 %v4381
      %v4563 = vunpack.c.l.b16 %v4382
      %v4564 = vunpack.c.l.b16 %v4383
      %v4565 = vunpack.c.l.b16 %v4384
      %v4566 = vpack.c.b16 %v4551, %v4550
      %v4567 = vpack.c.b16 %v4553, %v4552
      %v4568 = vpack.c.b16 %v4555, %v4554
      %v4569 = vpack.c.b16 %v4557, %v4556
      %v4570 = vpack.c.b16 %v4559, %v4558
      %v4571 = vpack.c.b16 %v4561, %v4560
      %v4572 = vpack.c.b16 %v4563, %v4562
      %v4573 = vpack.c.b16 %v4565, %v4564
      %4582 = vmatpush.bf16.msra.mxu0 %v4573
      %4583 = vmatpush.bf16.msra.mxu0 %v4572
      %4584 = vmatpush.bf16.msra.mxu0 %v4571
      %4585 = vmatpush.bf16.msra.mxu0 %v4570
      %4586 = vmatpush.bf16.msra.mxu0 %v4569
      %4587 = vmatpush.bf16.msra.mxu0 %v4568
      %4588 = vmatpush.bf16.msra.mxu0 %v4567
      %4589 = vmatpush.bf16.msra.mxu0 %v4566
      %4590 = vmatmul.bf16.gmra.mxu0 %v4481
      %v4591 = vpop.f32.mrf.mxu0
      %v4592 = vadd.f32 0.0, %v4591
      %v4593 = vpop.f32.mrf.mxu0
      %v4594 = vadd.f32 0.0, %v4593
      %4595 = vmatmul.bf16.gmra.mxu0 %v4483
      %v4596 = vpop.f32.mrf.mxu0
      %v4597 = vadd.f32 0.0, %v4596
      %v4598 = vpop.f32.mrf.mxu0
      %v4599 = vadd.f32 0.0, %v4598
      %4600 = vmatmul.bf16.gmra.mxu0 %v4485
      %v4601 = vpop.f32.mrf.mxu0
      %v4602 = vadd.f32 0.0, %v4601
      %v4603 = vpop.f32.mrf.mxu0
      %v4604 = vadd.f32 0.0, %v4603
      %4605 = vmatmul.bf16.gmra.mxu0 %v4487
      %v4606 = vpop.f32.mrf.mxu0
      %v4607 = vadd.f32 0.0, %v4606
      %v4608 = vpop.f32.mrf.mxu0
      %v4609 = vadd.f32 0.0, %v4608
      %4610 = vmatmul.bf16.gmra.mxu0 %v4489
      %v4611 = vpop.f32.mrf.mxu0
      %v4612 = vadd.f32 0.0, %v4611
      %v4613 = vpop.f32.mrf.mxu0
      %v4614 = vadd.f32 0.0, %v4613
      %4615 = vmatmul.bf16.gmra.mxu0 %v4491
      %v4616 = vpop.f32.mrf.mxu0
      %v4617 = vadd.f32 0.0, %v4616
      %v4618 = vpop.f32.mrf.mxu0
      %v4619 = vadd.f32 0.0, %v4618
      %4620 = vmatmul.bf16.gmra.mxu0 %v4493
      %v4621 = vpop.f32.mrf.mxu0
      %v4622 = vadd.f32 0.0, %v4621
      %v4623 = vpop.f32.mrf.mxu0
      %v4624 = vadd.f32 0.0, %v4623
      %4625 = vmatmul.bf16.gmra.mxu0 %v4495
      %v4626 = vpop.f32.mrf.mxu0
      %v4627 = vadd.f32 0.0, %v4626
      %v4628 = vpop.f32.mrf.mxu0
      %v4629 = vadd.f32 0.0, %v4628
      %4630 = vmatmul.bf16.gmra.mxu0 %v4497
      %v4631 = vpop.f32.mrf.mxu0
      %v4632 = vadd.f32 0.0, %v4631
      %v4633 = vpop.f32.mrf.mxu0
      %v4634 = vadd.f32 0.0, %v4633
      %4635 = vmatmul.bf16.gmra.mxu0 %v4499
      %v4636 = vpop.f32.mrf.mxu0
      %v4637 = vadd.f32 0.0, %v4636
      %v4638 = vpop.f32.mrf.mxu0
      %v4639 = vadd.f32 0.0, %v4638
      %4640 = vmatmul.bf16.gmra.mxu0 %v4501
      %v4641 = vpop.f32.mrf.mxu0
      %v4642 = vadd.f32 0.0, %v4641
      %v4643 = vpop.f32.mrf.mxu0
      %v4644 = vadd.f32 0.0, %v4643
      %4645 = vmatmul.bf16.gmra.mxu0 %v4503
      %v4646 = vpop.f32.mrf.mxu0
      %v4647 = vadd.f32 0.0, %v4646
      %v4648 = vpop.f32.mrf.mxu0
      %v4649 = vadd.f32 0.0, %v4648
      %4650 = vmatmul.bf16.gmra.mxu0 %v4505
      %v4651 = vpop.f32.mrf.mxu0
      %v4652 = vadd.f32 0.0, %v4651
      %v4653 = vpop.f32.mrf.mxu0
      %v4654 = vadd.f32 0.0, %v4653
      %4655 = vmatmul.bf16.gmra.mxu0 %v4507
      %v4656 = vpop.f32.mrf.mxu0
      %v4657 = vadd.f32 0.0, %v4656
      %v4658 = vpop.f32.mrf.mxu0
      %v4659 = vadd.f32 0.0, %v4658
      %4660 = vmatmul.bf16.gmra.mxu0 %v4509
      %v4661 = vpop.f32.mrf.mxu0
      %v4662 = vadd.f32 0.0, %v4661
      %v4663 = vpop.f32.mrf.mxu0
      %v4664 = vadd.f32 0.0, %v4663
      %4665 = vmatmul.bf16.gmra.mxu0 %v4511
      %v4666 = vpop.f32.mrf.mxu0
      %v4667 = vadd.f32 0.0, %v4666
      %v4668 = vpop.f32.mrf.mxu0
      %v4669 = vadd.f32 0.0, %v4668
      %4670 = vmatmul.bf16.gmra.mxu0 %v4513
      %v4671 = vpop.f32.mrf.mxu0
      %v4672 = vadd.f32 0.0, %v4671
      %v4673 = vpop.f32.mrf.mxu0
      %v4674 = vadd.f32 0.0, %v4673
      %4675 = vmatmul.bf16.gmra.mxu0 %v4515
      %v4676 = vpop.f32.mrf.mxu0
      %v4677 = vadd.f32 0.0, %v4676
      %v4678 = vpop.f32.mrf.mxu0
      %v4679 = vadd.f32 0.0, %v4678
      %4680 = vdwg.mxu0
      %v4681 = vadd.f32 %v4332, %v4592
      %v4682 = vadd.f32 %v4333, %v4594
      %v4683 = vadd.f32 %v4334, %v4597
      %v4684 = vadd.f32 %v4335, %v4599
      %v4685 = vadd.f32 %v4336, %v4602
      %v4686 = vadd.f32 %v4337, %v4604
      %v4687 = vadd.f32 %v4338, %v4607
      %v4688 = vadd.f32 %v4339, %v4609
      %v4689 = vadd.f32 %v4340, %v4612
      %v4690 = vadd.f32 %v4341, %v4614
      %v4691 = vadd.f32 %v4342, %v4617
      %v4692 = vadd.f32 %v4343, %v4619
      %v4693 = vadd.f32 %v4344, %v4622
      %v4694 = vadd.f32 %v4345, %v4624
      %v4695 = vadd.f32 %v4346, %v4627
      %v4696 = vadd.f32 %v4347, %v4629
      %v4697 = vadd.f32 %v4348, %v4632
      %v4698 = vadd.f32 %v4349, %v4634
      %v4699 = vadd.f32 %v4350, %v4637
      %v4700 = vadd.f32 %v4351, %v4639
      %v4701 = vadd.f32 %v4352, %v4642
      %v4702 = vadd.f32 %v4353, %v4644
      %v4703 = vadd.f32 %v4354, %v4647
      %v4704 = vadd.f32 %v4355, %v4649
      %v4705 = vadd.f32 %v4356, %v4652
      %v4706 = vadd.f32 %v4357, %v4654
      %v4707 = vadd.f32 %v4358, %v4657
      %v4708 = vadd.f32 %v4359, %v4659
      %v4709 = vadd.f32 %v4360, %v4662
      %v4710 = vadd.f32 %v4361, %v4664
      %v4711 = vadd.f32 %v4362, %v4667
      %v4712 = vadd.f32 %v4363, %v4669
      %v4713 = vadd.f32 %v4364, %v4672
      %v4714 = vadd.f32 %v4365, %v4674
      %v4715 = vadd.f32 %v4366, %v4677
      %v4716 = vadd.f32 %v4367, %v4679
      %4717 = vst [vmem:[#allocation2] sm:$0xff] %v4681
      %4718 = vst [vmem:[#allocation2 + $0x8] sm:$0xff] %v4682
      %4719 = vst [vmem:[#allocation2 + $0x10] sm:$0xff] %v4683
      %4720 = vst [vmem:[#allocation2 + $0x18] sm:$0xff] %v4684
      %4721 = vst [vmem:[#allocation2 + $0x20] sm:$0xff] %v4685
      %4722 = vst [vmem:[#allocation2 + $0x28] sm:$0xff] %v4686
      %4723 = vst [vmem:[#allocation2 + $0x30] sm:$0xff] %v4687
      %4724 = vst [vmem:[#allocation2 + $0x38] sm:$0xff] %v4688
      %4725 = vst [vmem:[#allocation2 + $0x40] sm:$0xff] %v4689
      %4726 = vst [vmem:[#allocation2 + $0x48] sm:$0xff] %v4690
      %4727 = vst [vmem:[#allocation2 + $0x50] sm:$0xff] %v4691
      %4728 = vst [vmem:[#allocation2 + $0x58] sm:$0xff] %v4692
      %4729 = vst [vmem:[#allocation2 + $0x60] sm:$0xff] %v4693
      %4730 = vst [vmem:[#allocation2 + $0x68] sm:$0xff] %v4694
      %4731 = vst [vmem:[#allocation2 + $0x70] sm:$0xff] %v4695
      %4732 = vst [vmem:[#allocation2 + $0x78] sm:$0xff] %v4696
      %4733 = vst [vmem:[#allocation2 + $0x80] sm:$0xff] %v4697
      %4734 = vst [vmem:[#allocation2 + $0x88] sm:$0xff] %v4698
      %4735 = vst [vmem:[#allocation2 + $0x90] sm:$0xff] %v4699
      %4736 = vst [vmem:[#allocation2 + $0x98] sm:$0xff] %v4700
      %4737 = vst [vmem:[#allocation2 + $0xa0] sm:$0xff] %v4701
      %4738 = vst [vmem:[#allocation2 + $0xa8] sm:$0xff] %v4702
      %4739 = vst [vmem:[#allocation2 + $0xb0] sm:$0xff] %v4703
      %4740 = vst [vmem:[#allocation2 + $0xb8] sm:$0xff] %v4704
      %4741 = vst [vmem:[#allocation2 + $0xc0] sm:$0xff] %v4705
      %4742 = vst [vmem:[#allocation2 + $0xc8] sm:$0xff] %v4706
      %4743 = vst [vmem:[#allocation2 + $0xd0] sm:$0xff] %v4707
      %4744 = vst [vmem:[#allocation2 + $0xd8] sm:$0xff] %v4708
      %4745 = vst [vmem:[#allocation2 + $0xe0] sm:$0xff] %v4709
      %4746 = vst [vmem:[#allocation2 + $0xe8] sm:$0xff] %v4710
      %4747 = vst [vmem:[#allocation2 + $0xf0] sm:$0xff] %v4711
      %4748 = vst [vmem:[#allocation2 + $0xf8] sm:$0xff] %v4712
      %4749 = vst [vmem:[#allocation2 + $0x100] sm:$0xff] %v4713
      %4750 = vst [vmem:[#allocation2 + $0x108] sm:$0xff] %v4714
      %4751 = vst [vmem:[#allocation2 + $0x110] sm:$0xff] %v4715
      %4752 = vst [vmem:[#allocation2 + $0x118] sm:$0xff] %v4716
      %v4753 = vld [vmem:[#allocation2] sm:$0xff]
      %v4754 = vld [vmem:[#allocation2 + $0x8] sm:$0xff]
      %v4755 = vld [vmem:[#allocation2 + $0x10] sm:$0xff]
      %v4756 = vld [vmem:[#allocation2 + $0x18] sm:$0xff]
      %v4757 = vld [vmem:[#allocation2 + $0x20] sm:$0xff]
      %v4758 = vld [vmem:[#allocation2 + $0x28] sm:$0xff]
      %v4759 = vld [vmem:[#allocation2 + $0x30] sm:$0xff]
      %v4760 = vld [vmem:[#allocation2 + $0x38] sm:$0xff]
      %v4761 = vld [vmem:[#allocation2 + $0x40] sm:$0xff]
      %v4762 = vld [vmem:[#allocation2 + $0x48] sm:$0xff]
      %v4763 = vld [vmem:[#allocation2 + $0x50] sm:$0xff]
      %v4764 = vld [vmem:[#allocation2 + $0x58] sm:$0xff]
      %v4765 = vld [vmem:[#allocation2 + $0x60] sm:$0xff]
      %v4766 = vld [vmem:[#allocation2 + $0x68] sm:$0xff]
      %v4767 = vld [vmem:[#allocation2 + $0x70] sm:$0xff]
      %v4768 = vld [vmem:[#allocation2 + $0x78] sm:$0xff]
      %v4769 = vld [vmem:[#allocation2 + $0x80] sm:$0xff]
      %v4770 = vld [vmem:[#allocation2 + $0x88] sm:$0xff]
      %v4771 = vld [vmem:[#allocation2 + $0x90] sm:$0xff]
      %v4772 = vld [vmem:[#allocation2 + $0x98] sm:$0xff]
      %v4773 = vld [vmem:[#allocation2 + $0xa0] sm:$0xff]
      %v4774 = vld [vmem:[#allocation2 + $0xa8] sm:$0xff]
      %v4775 = vld [vmem:[#allocation2 + $0xb0] sm:$0xff]
      %v4776 = vld [vmem:[#allocation2 + $0xb8] sm:$0xff]
      %v4777 = vld [vmem:[#allocation2 + $0xc0] sm:$0xff]
      %v4778 = vld [vmem:[#allocation2 + $0xc8] sm:$0xff]
      %v4779 = vld [vmem:[#allocation2 + $0xd0] sm:$0xff]
      %v4780 = vld [vmem:[#allocation2 + $0xd8] sm:$0xff]
      %v4781 = vld [vmem:[#allocation2 + $0xe0] sm:$0xff]
      %v4782 = vld [vmem:[#allocation2 + $0xe8] sm:$0xff]
      %v4783 = vld [vmem:[#allocation2 + $0xf0] sm:$0xff]
      %v4784 = vld [vmem:[#allocation2 + $0xf8] sm:$0xff]
      %v4785 = vld [vmem:[#allocation2 + $0x100] sm:$0xff]
      %v4786 = vld [vmem:[#allocation2 + $0x108] sm:$0xff]
      %v4787 = vld [vmem:[#allocation2 + $0x110] sm:$0xff]
      %v4788 = vld [vmem:[#allocation2 + $0x118] sm:$0xff]
      %v4789 = vld [vmem:[%s251] sm:$0x1]
      %v4791 = vperm.slane %v4789, 0
      %v4793 = vmul.f32 %v4753, %v4791
      %v4794 = vmul.f32 %v4754, %v4791
      %v4795 = vmul.f32 %v4755, %v4791
      %v4796 = vmul.f32 %v4756, %v4791
      %v4797 = vmul.f32 %v4757, %v4791
      %v4798 = vmul.f32 %v4758, %v4791
      %v4799 = vmul.f32 %v4759, %v4791
      %v4800 = vmul.f32 %v4760, %v4791
      %v4801 = vmul.f32 %v4761, %v4791
      %v4802 = vmul.f32 %v4762, %v4791
      %v4803 = vmul.f32 %v4763, %v4791
      %v4804 = vmul.f32 %v4764, %v4791
      %v4805 = vmul.f32 %v4765, %v4791
      %v4806 = vmul.f32 %v4766, %v4791
      %v4807 = vmul.f32 %v4767, %v4791
      %v4808 = vmul.f32 %v4768, %v4791
      %v4809 = vmul.f32 %v4769, %v4791
      %v4810 = vmul.f32 %v4770, %v4791
      %v4811 = vmul.f32 %v4771, %v4791
      %v4812 = vmul.f32 %v4772, %v4791
      %v4813 = vmul.f32 %v4773, %v4791
      %v4814 = vmul.f32 %v4774, %v4791
      %v4815 = vmul.f32 %v4775, %v4791
      %v4816 = vmul.f32 %v4776, %v4791
      %v4817 = vmul.f32 %v4777, %v4791
      %v4818 = vmul.f32 %v4778, %v4791
      %v4819 = vmul.f32 %v4779, %v4791
      %v4820 = vmul.f32 %v4780, %v4791
      %v4821 = vmul.f32 %v4781, %v4791
      %v4822 = vmul.f32 %v4782, %v4791
      %v4823 = vmul.f32 %v4783, %v4791
      %v4824 = vmul.f32 %v4784, %v4791
      %v4825 = vmul.f32 %v4785, %v4791
      %v4826 = vmul.f32 %v4786, %v4791
      %v4827 = vmul.f32 %v4787, %v4791
      %v4828 = vmul.f32 %v4788, %v4791
      %v4829 = vld [vmem:[%s254] sm:$0x1]
      %v4831 = vperm.slane %v4829, 0
      %v4833 = vadd.f32 %v4793, %v4831
      %v4834 = vadd.f32 %v4794, %v4831
      %v4835 = vadd.f32 %v4795, %v4831
      %v4836 = vadd.f32 %v4796, %v4831
      %v4837 = vadd.f32 %v4797, %v4831
      %v4838 = vadd.f32 %v4798, %v4831
      %v4839 = vadd.f32 %v4799, %v4831
      %v4840 = vadd.f32 %v4800, %v4831
      %v4841 = vadd.f32 %v4801, %v4831
      %v4842 = vadd.f32 %v4802, %v4831
      %v4843 = vadd.f32 %v4803, %v4831
      %v4844 = vadd.f32 %v4804, %v4831
      %v4845 = vadd.f32 %v4805, %v4831
      %v4846 = vadd.f32 %v4806, %v4831
      %v4847 = vadd.f32 %v4807, %v4831
      %v4848 = vadd.f32 %v4808, %v4831
      %v4849 = vadd.f32 %v4809, %v4831
      %v4850 = vadd.f32 %v4810, %v4831
      %v4851 = vadd.f32 %v4811, %v4831
      %v4852 = vadd.f32 %v4812, %v4831
      %v4853 = vadd.f32 %v4813, %v4831
      %v4854 = vadd.f32 %v4814, %v4831
      %v4855 = vadd.f32 %v4815, %v4831
      %v4856 = vadd.f32 %v4816, %v4831
      %v4857 = vadd.f32 %v4817, %v4831
      %v4858 = vadd.f32 %v4818, %v4831
      %v4859 = vadd.f32 %v4819, %v4831
      %v4860 = vadd.f32 %v4820, %v4831
      %v4861 = vadd.f32 %v4821, %v4831
      %v4862 = vadd.f32 %v4822, %v4831
      %v4863 = vadd.f32 %v4823, %v4831
      %v4864 = vadd.f32 %v4824, %v4831
      %v4865 = vadd.f32 %v4825, %v4831
      %v4866 = vadd.f32 %v4826, %v4831
      %v4867 = vadd.f32 %v4827, %v4831
      %v4868 = vadd.f32 %v4828, %v4831
      %v4869 = vmax.f32 %v4833, 0.0
      %v4870 = vmax.f32 %v4834, 0.0
      %v4871 = vmax.f32 %v4835, 0.0
      %v4872 = vmax.f32 %v4836, 0.0
      %v4873 = vmax.f32 %v4837, 0.0
      %v4874 = vmax.f32 %v4838, 0.0
      %v4875 = vmax.f32 %v4839, 0.0
      %v4876 = vmax.f32 %v4840, 0.0
      %v4877 = vmax.f32 %v4841, 0.0
      %v4878 = vmax.f32 %v4842, 0.0
      %v4879 = vmax.f32 %v4843, 0.0
      %v4880 = vmax.f32 %v4844, 0.0
      %v4881 = vmax.f32 %v4845, 0.0
      %v4882 = vmax.f32 %v4846, 0.0
      %v4883 = vmax.f32 %v4847, 0.0
      %v4884 = vmax.f32 %v4848, 0.0
      %v4885 = vmax.f32 %v4849, 0.0
      %v4886 = vmax.f32 %v4850, 0.0
      %v4887 = vmax.f32 %v4851, 0.0
      %v4888 = vmax.f32 %v4852, 0.0
      %v4889 = vmax.f32 %v4853, 0.0
      %v4890 = vmax.f32 %v4854, 0.0
      %v4891 = vmax.f32 %v4855, 0.0
      %v4892 = vmax.f32 %v4856, 0.0
      %v4893 = vmax.f32 %v4857, 0.0
      %v4894 = vmax.f32 %v4858, 0.0
      %v4895 = vmax.f32 %v4859, 0.0
      %v4896 = vmax.f32 %v4860, 0.0
      %v4897 = vmax.f32 %v4861, 0.0
      %v4898 = vmax.f32 %v4862, 0.0
      %v4899 = vmax.f32 %v4863, 0.0
      %v4900 = vmax.f32 %v4864, 0.0
      %v4901 = vmax.f32 %v4865, 0.0
      %v4902 = vmax.f32 %v4866, 0.0
      %v4903 = vmax.f32 %v4867, 0.0
      %v4904 = vmax.f32 %v4868, 0.0
      %v4905 = vpack.c.bf16 %v4869, %v4869
      %v4906 = vpack.c.bf16 %v4870, %v4870
      %v4907 = vpack.c.bf16 %v4871, %v4871
      %v4908 = vpack.c.bf16 %v4872, %v4872
      %v4909 = vpack.c.bf16 %v4873, %v4873
      %v4910 = vpack.c.bf16 %v4874, %v4874
      %v4911 = vpack.c.bf16 %v4875, %v4875
      %v4912 = vpack.c.bf16 %v4876, %v4876
      %v4913 = vpack.c.bf16 %v4877, %v4877
      %v4914 = vpack.c.bf16 %v4878, %v4878
      %v4915 = vpack.c.bf16 %v4879, %v4879
      %v4916 = vpack.c.bf16 %v4880, %v4880
      %v4917 = vpack.c.bf16 %v4881, %v4881
      %v4918 = vpack.c.bf16 %v4882, %v4882
      %v4919 = vpack.c.bf16 %v4883, %v4883
      %v4920 = vpack.c.bf16 %v4884, %v4884
      %v4921 = vpack.c.bf16 %v4885, %v4885
      %v4922 = vpack.c.bf16 %v4886, %v4886
      %v4923 = vpack.c.bf16 %v4887, %v4887
      %v4924 = vpack.c.bf16 %v4888, %v4888
      %v4925 = vpack.c.bf16 %v4889, %v4889
      %v4926 = vpack.c.bf16 %v4890, %v4890
      %v4927 = vpack.c.bf16 %v4891, %v4891
      %v4928 = vpack.c.bf16 %v4892, %v4892
      %v4929 = vpack.c.bf16 %v4893, %v4893
      %v4930 = vpack.c.bf16 %v4894, %v4894
      %v4931 = vpack.c.bf16 %v4895, %v4895
      %v4932 = vpack.c.bf16 %v4896, %v4896
      %v4933 = vpack.c.bf16 %v4897, %v4897
      %v4934 = vpack.c.bf16 %v4898, %v4898
      %v4935 = vpack.c.bf16 %v4899, %v4899
      %v4936 = vpack.c.bf16 %v4900, %v4900
      %v4937 = vpack.c.bf16 %v4901, %v4901
      %v4938 = vpack.c.bf16 %v4902, %v4902
      %v4939 = vpack.c.bf16 %v4903, %v4903
      %v4940 = vpack.c.bf16 %v4904, %v4904
      %4941 = vst [vmem:[%s262] sm:$0xf] %v4905
      %4942 = vst [vmem:[%s262 + $0x4] sm:$0xf] %v4906
      %4943 = vst [vmem:[%s262 + $0x8] sm:$0xf] %v4907
      %4944 = vst [vmem:[%s262 + $0xc] sm:$0xf] %v4908
      %4945 = vst [vmem:[%s262 + $0x10] sm:$0xf] %v4909
      %4946 = vst [vmem:[%s262 + $0x14] sm:$0xf] %v4910
      %4947 = vst [vmem:[%s262 + $0x18] sm:$0xf] %v4911
      %4948 = vst [vmem:[%s262 + $0x1c] sm:$0xf] %v4912
      %4949 = vst [vmem:[%s262 + $0x20] sm:$0xf] %v4913
      %4950 = vst [vmem:[%s262 + $0x24] sm:$0xf] %v4914
      %4951 = vst [vmem:[%s262 + $0x28] sm:$0xf] %v4915
      %4952 = vst [vmem:[%s262 + $0x2c] sm:$0xf] %v4916
      %4953 = vst [vmem:[%s262 + $0x30] sm:$0xf] %v4917
      %4954 = vst [vmem:[%s262 + $0x34] sm:$0xf] %v4918
      %4955 = vst [vmem:[%s262 + $0x38] sm:$0xf] %v4919
      %4956 = vst [vmem:[%s262 + $0x3c] sm:$0xf] %v4920
      %4957 = vst [vmem:[%s262 + $0x40] sm:$0xf] %v4921
      %4958 = vst [vmem:[%s262 + $0x44] sm:$0xf] %v4922
      %4959 = vst [vmem:[%s262 + $0x48] sm:$0xf] %v4923
      %4960 = vst [vmem:[%s262 + $0x4c] sm:$0xf] %v4924
      %4961 = vst [vmem:[%s262 + $0x50] sm:$0xf] %v4925
      %4962 = vst [vmem:[%s262 + $0x54] sm:$0xf] %v4926
      %4963 = vst [vmem:[%s262 + $0x58] sm:$0xf] %v4927
      %4964 = vst [vmem:[%s262 + $0x5c] sm:$0xf] %v4928
      %4965 = vst [vmem:[%s262 + $0x60] sm:$0xf] %v4929
      %4966 = vst [vmem:[%s262 + $0x64] sm:$0xf] %v4930
      %4967 = vst [vmem:[%s262 + $0x68] sm:$0xf] %v4931
      %4968 = vst [vmem:[%s262 + $0x6c] sm:$0xf] %v4932
      %4969 = vst [vmem:[%s262 + $0x70] sm:$0xf] %v4933
      %4970 = vst [vmem:[%s262 + $0x74] sm:$0xf] %v4934
      %4971 = vst [vmem:[%s262 + $0x78] sm:$0xf] %v4935
      %4972 = vst [vmem:[%s262 + $0x7c] sm:$0xf] %v4936
      %4973 = vst [vmem:[%s262 + $0x80] sm:$0xf] %v4937
      %4974 = vst [vmem:[%s262 + $0x84] sm:$0xf] %v4938
      %4975 = vst [vmem:[%s262 + $0x88] sm:$0xf] %v4939
      %4976 = vst [vmem:[%s262 + $0x8c] sm:$0xf] %v4940
      %p4977 = scmp.lt.s32.totalorder %s19, 1
      %s4978 = scalar_select %p4977, %s19, 1
      %p4979 = scmp.lt.s32.totalorder %s20, 0
      %s4980 = scalar_select %p4979, %s20, 0
      %s4981 = smul.addr %s4978, 36
      %s4982 = sadd.s32 %s4980, %s4981
      %s4983 = smul.addr %s4982, 4
      %s4984 = scalar_lea.vmem %s4, %s4983
      // Predicated region
      $region37: #{forward.7} parent=35 // pred_check
        %p4985 = pneg %p151
      $region38: #{forward.7} parent=35 // pred_check_branch
        %4987 = sbr.rel (%p4985) target = $region40
      $region39: #{forward.7} parent=35 // pred_region
        _
      $region40: #{forward.7} parent=35 // pred_fallthru
        _
    $region36: #{forward.7} parent=5 // pred_fallthru
      _
    %p4988 = scmp.le.s32.totalorder 2, %s10
    // Predicated region
    $region41: #{forward.7} parent=5 // pred_check
      %p4989 = pneg %p4988
    $region42: #{forward.7} parent=5 // pred_check_branch
      %4991 = sbr.rel (%p4989) target = $region44
    $region43: #{forward.7} parent=5 // pred_region
      %s4992 = ssub.s32 %s10, 2
      // Predicated region
      $region45: #{forward.7} parent=43 // pred_check
        %p4993 = pneg %p157
      $region46: #{forward.7} parent=43 // pred_check_branch
        %4995 = sbr.rel (%p4993) target = $region48
      $region47: #{forward.7} parent=43 // pred_region
        %p4996 = scmp.lt.s32.totalorder %s21, 1
        %s4997 = scalar_select %p4996, %s21, 1
        %p4998 = scmp.lt.s32.totalorder %s22, 0
        %s4999 = scalar_select %p4998, %s22, 0
        %s5000 = smul.addr %s4997, 36
        %s5001 = sadd.s32 %s4999, %s5000
        %s5002 = smul.addr %s5001, 4
        %s5003 = scalar_lea.vmem %s4, %s5002
      $region48: #{forward.7} parent=43 // pred_fallthru
        _
    $region44: #{forward.7} parent=5 // pred_fallthru
      _
  $region6: #{forward.7} parent=0 // loop_footer
    %s14 = sadd.s32 1, %s10
  $region7: #{forward.7} parent=0 // loop_footer_branch
    %9 = sbr.rel target = $region3
  $region8: #{forward.7} parent=0 // loop_exit
    _

</llo_original>
